<compile_context>
chip_gen: v7x
topology: tpu7x:2x2x1
jax: 0.10.0
libtpu: 0.0.40
codegen_flags: <defaults>
</compile_context>

<pallas_src>
import functools

import numpy as np
import jax
import jax.numpy as jnp
from jax.experimental import pallas as pl
from jax.experimental.pallas import tpu as pltpu

_BF16 = jnp.bfloat16


# ----------------------------------------------------------------------------
# parameter slab packing
# ----------------------------------------------------------------------------
class _Slice2D:
    """Static (row_offset, rows, cols) of one parameter inside the packed slab."""
    __slots__ = ("off", "r", "c")

    def __init__(self, off, r, c):
        self.off, self.r, self.c = int(off), int(r), int(c)


def pack_params(params):
    """Pack every (2-D) leaf into one 128-lane-padded f32 slab + static layout."""
    leaves, treedef = jax.tree_util.tree_flatten(params)
    lane = max(int(l.shape[1]) for l in leaves)
    lane = ((lane + 127) // 128) * 128
    metas, row = [], 0
    for leaf in leaves:
        r, c = int(leaf.shape[0]), int(leaf.shape[1])
        metas.append(_Slice2D(row, r, c))
        row += ((r + 7) // 8) * 8            # keep every view sublane-aligned
    slab = np.zeros((((row + 7) // 8) * 8, lane), np.float32)
    for m, leaf in zip(metas, leaves):
        slab[m.off:m.off + m.r, :m.c] = np.asarray(leaf, np.float32)
    return jnp.asarray(slab), jax.tree_util.tree_unflatten(treedef, metas)


# ----------------------------------------------------------------------------
# in-kernel building blocks
# ----------------------------------------------------------------------------
def _mm(a, b):
    # All MXU work in bf16 with f32 accumulation; elementwise math stays f32.
    return jnp.dot(a.astype(_BF16), b.astype(_BF16),
                   preferred_element_type=jnp.float32)


def _sigmoid(x):
    # exp + reciprocal both land on the otherwise-idle EUP slot.
    return pl.reciprocal(1.0 + jnp.exp(-x), approx=True)


def _split3(v, r):
    return v[0:r], v[r:2 * r], v[2 * r:3 * r]


def _stack3(a, b, c):
    return jnp.concatenate([a, b, c], axis=0)


def _layernorm(ld, m, s, v, rows):
    """GVP LayerNorm: nn.LayerNorm on scalars, RMS-of-norms scaling on vectors."""
    mu = jnp.mean(s, axis=-1, keepdims=True)
    d = s - mu
    var = jnp.mean(d * d, axis=-1, keepdims=True)
    s = d * jax.lax.rsqrt(var + 1e-5) * ld(m["gamma"]) + ld(m["beta"])
    if v is None:
        return s, None
    vx, vy, vz = _split3(v, rows)
    vn2 = jnp.maximum(vx * vx + vy * vy + vz * vz, 1e-8)
    inv = jax.lax.rsqrt(jnp.mean(vn2, axis=-1, keepdims=True))        # (rows, 1)
    return s, v * _stack3(inv, inv, inv)


def _gvp(ld, m, s_list, v_list, rows, scalar_act=None, vector_act=None):
    """GVP forward (vector_gate=False).

    s_list : scalar blocks [rows, c_i] (interpreted as concatenated features).
    v_list : vector blocks, each xyz row-stacked as [3*rows, d_j].
    Weight row-blocks match the feature blocks, so "concat then Linear" is a sum
    of matmuls and each vector matmul is a single 3*rows-row MXU op.
    """
    v_out = None
    if "wh" in m:
        vh = _mm(v_list[0], ld(m["wh"][0]))
        for blk, w in zip(v_list[1:], m["wh"][1:]):
            vh = vh + _mm(blk, ld(w))                                 # (3*rows, h)
        hx, hy, hz = _split3(vh, rows)
        vn = jnp.sqrt(jnp.maximum(hx * hx + hy * hy + hz * hz, 1e-8))
        s = ld(m["ws_b"]) + _mm(vn, ld(m["ws_n"]))
        for blk, w in zip(s_list, m["ws_s"]):
            s = s + _mm(blk, ld(w))
        if "wv" in m:
            v_out = _mm(vh, ld(m["wv"]))                              # (3*rows, vo)
            if vector_act == "sigmoid":
                ox, oy, oz = _split3(v_out, rows)
                gate = _sigmoid(jnp.sqrt(jnp.maximum(ox * ox + oy * oy + oz * oz,
                                                     1e-8)))
                v_out = v_out * _stack3(gate, gate, gate)
    else:
        s = ld(m["ws_b"])
        for blk, w in zip(s_list, m["ws_s"]):
            s = s + _mm(blk, ld(w))
        # TODO(synk): vi == 0 with vo > 0 (zero-vector output) never occurs here.
    if scalar_act == "relu":
        s = jnp.maximum(s, 0.0)
    return s, v_out


def _gvp_conv_layer(ld, lm, s, v, es, ev, g_src, g_dst, agg, inv_deg, n, e):
    """GVPConvLayer: 3-GVP message fn, mean aggregation, residual+LN, GVP FFN."""
    s_src, s_dst = _mm(g_src, s), _mm(g_dst, s)
    vx, vy, vz = _split3(v, n)
    v_src = _stack3(_mm(g_src, vx), _mm(g_src, vy), _mm(g_src, vz))
    v_dst = _stack3(_mm(g_dst, vx), _mm(g_dst, vy), _mm(g_dst, vz))
    ms, mv = _gvp(ld, lm["conv"]["m0"], [s_src, es, s_dst], [v_src, ev, v_dst],
                  e, "relu", "sigmoid")
    ms, mv = _gvp(ld, lm["conv"]["m1"], [ms], [mv], e, "relu", "sigmoid")
    ms, mv = _gvp(ld, lm["conv"]["m2"], [ms], [mv], e, None, None)
    # mean aggregation at target nodes: exact 0/1 one-hot matmul (MXU, bf16-exact)
    # followed by an f32 1/deg rescale so no precision is lost.
    s = s + _mm(agg, ms) * inv_deg
    mx, my, mz = _split3(mv, e)
    v = v + _stack3(_mm(agg, mx) * inv_deg, _mm(agg, my) * inv_deg,
                    _mm(agg, mz) * inv_deg)
    s, v = _layernorm(ld, lm["norm0"], s, v, n)
    fs, fv = _gvp(ld, lm["ff0"], [s], [v], n, "relu", "sigmoid")
    fs, fv = _gvp(ld, lm["ff1"], [fs], [fv], n, None, None)
    s, v = _layernorm(ld, lm["norm1"], s + fs, v + fv, n)
    return s, v


# ----------------------------------------------------------------------------
# the fused whole-forward kernel
# ----------------------------------------------------------------------------
def _prediction_kernel(node_s_ref, node_v_ref, edge_s_ref, edge_v_ref,
                       src_ref, dstc_ref, dstr_ref, batch_ref,
                       maskexp_ref, tile_ref, w_ref,
                       policy_ref, value_ref, *, meta):
    n = node_s_ref.shape[0]
    e = edge_s_ref.shape[0]
    b = policy_ref.shape[0]

    def ld(m):                        # lazy static VMEM view of one packed param
        return w_ref[m.off:m.off + m.r, 0:m.c]

    # ---- one-hot gather / aggregation operators (exact 0/1, bf16 for the MXU) ----
    # TODO(synk): O(E*N) incidence matrices and a grid-less single program; for
    # large graphs switch to scalar-prefetch / edge-tiled gathers and add a
    # per-graph "parallel" grid axis (v7x megacore + pipelining).
    iota_en = jax.lax.broadcasted_iota(jnp.int32, (e, n), 1)
    g_src = jnp.where(src_ref[...] == iota_en, 1.0, 0.0).astype(_BF16)    # (E, N)
    g_dst = jnp.where(dstc_ref[...] == iota_en, 1.0, 0.0).astype(_BF16)   # (E, N)
    iota_ne = jax.lax.broadcasted_iota(jnp.int32, (n, e), 0)
    hit = jnp.where(iota_ne == dstr_ref[...], 1.0, 0.0)                   # (N, E) f32
    agg = hit.astype(_BF16)
    inv_deg = pl.reciprocal(
        jnp.maximum(jnp.sum(hit, axis=-1, keepdims=True), 1.0), approx=False)
    iota_bn = jax.lax.broadcasted_iota(jnp.int32, (b, n), 0)
    pool = jnp.where(iota_bn == batch_ref[...], 1.0, 0.0).astype(_BF16)   # (B, N)

    s = node_s_ref[...]               # (N, si)
    v = node_v_ref[...]               # (3N, vi) xyz row-stacked
    es = edge_s_ref[...]              # (E, se)
    ev = edge_v_ref[...]              # (3E, ve)

    # ---- node / edge embedding GVPs ----
    s, v = _layernorm(ld, meta["ln_node"], s, v, n)
    s, v = _gvp(ld, meta["gvp_node"], [s], [v], n, None, None)
    es, ev = _layernorm(ld, meta["ln_edge"], es, ev, e)
    es, ev = _gvp(ld, meta["gvp_edge"], [es], [ev], e, None, None)

    # ---- message-passing layers (n_layers is small -> unrolled python loop) ----
    for lm in meta["layers"]:
        s, v = _gvp_conv_layer(ld, lm, s, v, es, ev, g_src, g_dst, agg, inv_deg, n, e)

    # ---- policy head ----
    ps, pv = _layernorm(ld, meta["policy_ln"], s, v, n)
    pn, _ = _gvp(ld, meta["policy_gvp"], [ps], [pv], n, None, None)       # (N, d)
    # (B, L, d) -> (B, L*d) flatten without any in-kernel reshape:
    #   expand each node's features into its position block (pn @ [I|I|...|I])
    #   masked by maskexp (position one-hot * availability), then pool per graph.
    pn_exp = _mm(pn, tile_ref[...]) * maskexp_ref[...]                    # (N, L*d)
    z = _mm(pool, pn_exp)                                                 # (B, L*d)
    q = jnp.maximum(_mm(z, ld(meta["policy_l1"]["w"]))
                    + ld(meta["policy_l1"]["b"]), 0.0)                    # ReLU
    policy_ref[...] = _mm(q, ld(meta["policy_l2"]["w"])) + ld(meta["policy_l2"]["b"])

    # ---- value head ----
    vs, vv = _layernorm(ld, meta["value_ln"], s, v, n)
    vn_out, _ = _gvp(ld, meta["value_gvp"], [vs], [vv], n, None, None)    # (N, d)
    vp = _mm(pool, vn_out)                                                # scatter_sum
    h = _mm(vp, ld(meta["value_l1"]["w"])) + ld(meta["value_l1"]["b"])
    h = jnp.where(h >= 0.0, h, 0.01 * h)                                  # LeakyReLU
    value_ref[...] = _mm(h, ld(meta["value_l2"]["w"])) + ld(meta["value_l2"]["b"])


# ----------------------------------------------------------------------------
# parameter init (every leaf is a 2-D f32 array; weights pre-split into the
# row blocks the kernel consumes, so no in-kernel feature concatenation)
# ----------------------------------------------------------------------------
def _dense(key, din, dout, zero=False):
    if zero:  # mirrors prediction_value_output[-1].weight/bias.fill_(0)
        return {"w": jnp.zeros((din, dout), jnp.float32),
                "b": jnp.zeros((1, dout), jnp.float32)}
    kw, kb = jax.random.split(key)
    return {"w": 0.1 * jax.random.normal(kw, (din, dout), jnp.float32),
            "b": 0.1 * jax.random.normal(kb, (1, dout), jnp.float32)}


def _init_layernorm(dims):
    return {"gamma": jnp.ones((1, dims[0]), jnp.float32),
            "beta": jnp.zeros((1, dims[0]), jnp.float32)}


def _init_gvp(key, in_dims, out_dims, s_splits=None, v_splits=None):
    si, vi = in_dims
    so, vo = out_dims
    s_splits = tuple(s_splits) if s_splits is not None else (si,)
    v_splits = tuple(v_splits) if v_splits is not None else (vi,)
    keys = iter(jax.random.split(key, 16))
    nrm = lambda shp: 0.1 * jax.random.normal(next(keys), shp, jnp.float32)
    p = {}
    if vi:
        h = max(vi, vo)
        p["wh"] = [nrm((d, h)) for d in v_splits]        # no bias
        p["ws_s"] = [nrm((d, so)) for d in s_splits]     # row blocks of cat([s...])
        p["ws_n"] = nrm((h, so))                         # row block for vector norms
        p["ws_b"] = nrm((1, so))
        if vo:
            p["wv"] = nrm((h, vo))                       # no bias
    else:
        p["ws_s"] = [nrm((d, so)) for d in s_splits]
        p["ws_b"] = nrm((1, so))
    return p


def _init_gvpconv(key, node_dims, edge_dims):
    si, vi = node_dims
    se, ve = edge_dims
    in_dims = (2 * si + se, 2 * vi + ve)
    k0, k1, k2 = jax.random.split(key, 3)
    return {"m0": _init_gvp(k0, in_dims, node_dims,
                            s_splits=(si, se, si), v_splits=(vi, ve, vi)),
            "m1": _init_gvp(k1, node_dims, node_dims),
            "m2": _init_gvp(k2, node_dims, node_dims)}


def _init_gvpconvlayer(key, node_dims, edge_dims):
    kc, kf0, kf1 = jax.random.split(key, 3)
    s_h, v_h = node_dims
    hid = (4 * s_h, 2 * v_h)
    return {"conv": _init_gvpconv(kc, node_dims, edge_dims),
            "norm0": _init_layernorm(node_dims),
            "norm1": _init_layernorm(node_dims),
            "ff0": _init_gvp(kf0, node_dims, hid),
            "ff1": _init_gvp(kf1, hid, node_dims)}


def init_prediction_network(key, cfg):
    ks = jax.random.split(key, 9)
    nod = cfg["node_out_dim"]
    L = cfg["length"]
    return {
        "ln_node": _init_layernorm(cfg["node_in_dim"]),
        "gvp_node": _init_gvp(ks[0], cfg["node_in_dim"], cfg["node_h_dim"]),
        "ln_edge": _init_layernorm(cfg["edge_in_dim"]),
        "gvp_edge": _init_gvp(ks[1], cfg["edge_in_dim"], cfg["edge_h_dim"]),
        "layers": [_init_gvpconvlayer(k, cfg["node_h_dim"], cfg["edge_h_dim"])
                   for k in jax.random.split(ks[2], cfg["n_layers"])],
        "policy_ln": _init_layernorm(cfg["node_h_dim"]),
        "policy_gvp": _init_gvp(ks[3], cfg["node_h_dim"], (nod, 0)),
        "policy_l1": _dense(ks[4], L * nod, L * 20),     # acts on flattened (B, L*d)
        "policy_l2": _dense(ks[5], L * 20, L * 20),
        "value_ln": _init_layernorm(cfg["node_h_dim"]),
        "value_gvp": _init_gvp(ks[6], cfg["node_h_dim"], (nod, 0)),
        "value_l1": _dense(ks[7], nod, max(nod // 2, 1)),
        "value_l2": _dense(ks[8], max(nod // 2, 1), 2 * cfg["support_size"] + 1,
                           zero=True),
    }


# ----------------------------------------------------------------------------
# host wrapper: layout prep + one pallas_call for the whole forward
# ----------------------------------------------------------------------------
def prediction_forward(packed_params, hs, cfg):
    slab, meta = packed_params
    L = cfg["length"]
    d = cfg["node_out_dim"]
    B = hs["ptr"].shape[0] - 1
    N = hs["node_s"].shape[0]
    E = hs["edge_s"].shape[0]
    out_size = 2 * cfg["support_size"] + 1
    f32, i32 = jnp.float32, jnp.int32

    # xyz coordinate slabs row-stacked once on the host: (rows, ch, 3) -> (3*rows, ch)
    node_v3 = jnp.transpose(hs["node_v"], (2, 0, 1)).reshape(3 * N, -1).astype(f32)
    edge_v3 = jnp.transpose(hs["edge_v"], (2, 0, 1)).reshape(3 * E, -1).astype(f32)
    src_col = hs["edge_index"][0].reshape(E, 1).astype(i32)
    dst_col = hs["edge_index"][1].reshape(E, 1).astype(i32)
    dst_row = hs["edge_index"][1].reshape(1, E).astype(i32)
    batch_row = hs["batch"].reshape(1, N).astype(i32)

    # per-graph position of every node derived from ptr/batch (not just assumed).
    # TODO(synk): like the reference .reshape(B, length, -1), the policy flatten
    # requires every graph to have exactly `length` contiguous nodes.
    pos = jnp.arange(N, dtype=i32) - hs["ptr"].astype(i32)[hs["batch"]]
    avail = hs["avaliable_pos"].reshape(N, 1).astype(f32)
    posexp = (jnp.arange(L * d, dtype=i32)[None, :] // d == pos[:, None]).astype(f32)
    maskexp = posexp * avail                                    # (N, L*d)
    tile_eye = jnp.tile(jnp.eye(d, dtype=f32), (1, L))          # (d, L*d)

    vmem = pl.BlockSpec(memory_space=pltpu.MemorySpace.VMEM)
    kernel = functools.partial(_prediction_kernel, meta=meta)
    policy_out, value_out = pl.pallas_call(
        kernel,
        out_shape=(jax.ShapeDtypeStruct((B, L * 20), jnp.float32),
                   jax.ShapeDtypeStruct((B, out_size), jnp.float32)),
        in_specs=[vmem] * 11,
        out_specs=(vmem, vmem),
        # 32 MiB: above v5e's 16 MiB scoped default, safely below every
        # generation's physical VMEM (64 MiB v7x / 128 MiB v5e,v6e); raise for
        # larger graphs on v5e/v6e, keep <= ~48-56 MiB on v7x.
        compiler_params=pltpu.CompilerParams(vmem_limit_bytes=32 * 1024 * 1024),
    )(hs["node_s"].astype(f32), node_v3, hs["edge_s"].astype(f32), edge_v3,
      src_col, dst_col, dst_row, batch_row, maskexp, tile_eye, slab)
    return policy_out, value_out


# ----------------------------------------------------------------------------
if __name__ == "__main__":
    cfg = dict(
        node_in_dim=(6, 3), node_h_dim=(16, 4),
        edge_in_dim=(8, 1), edge_h_dim=(8, 2),
        node_out_dim=4, n_layers=2, length=8,
        support_size=5, dropout=0.0,
    )
    key = jax.random.PRNGKey(0)
    pkey, dkey = jax.random.split(key)
    params = init_prediction_network(pkey, cfg)
    packed = pack_params(params)

    B, L = 2, cfg["length"]
    N = B * L
    # deterministic ring edges within each graph (source j -> target i)
    src, dst = [], []
    for g in range(B):
        for i in range(L):
            for dlt in (1, 2):
                src.append(g * L + (i + dlt) % L)
                dst.append(g * L + i)
    edge_index = jnp.array([src, dst], dtype=jnp.int32)
    E = edge_index.shape[1]

    ks = jax.random.split(dkey, 5)
    hidden_state = {
        "node_s": jax.random.normal(ks[0], (N, cfg["node_in_dim"][0]), jnp.float32),
        "node_v": jax.random.normal(ks[1], (N, cfg["node_in_dim"][1], 3), jnp.float32),
        "edge_s": jax.random.normal(ks[2], (E, cfg["edge_in_dim"][0]), jnp.float32),
        "edge_v": jax.random.normal(ks[3], (E, cfg["edge_in_dim"][1], 3), jnp.float32),
        "edge_index": edge_index,
        "batch": jnp.repeat(jnp.arange(B, dtype=jnp.int32), L),
        "ptr": jnp.array([0, L, 2 * L], dtype=jnp.int32),
        "avaliable_pos": (jax.random.uniform(ks[4], (B * L,)) > 0.3).astype(jnp.float32),
    }

    policy_out, value_out = prediction_forward(packed, hidden_state, cfg)
    jax.block_until_ready((policy_out, value_out))
    assert policy_out.shape == (B, L * 20)
    assert value_out.shape == (B, 2 * cfg["support_size"] + 1)
    assert bool(jnp.isfinite(policy_out).all())
    # zero-initialized final value layer (as in the reference) -> zero value output
    assert bool(jnp.allclose(value_out, 0.0))
    print("KERNEL_OK")
</pallas_src>

<mosaic_0001>
module attributes {stable_mosaic.version = 11 : i64} {
  func.func @_prediction_kernel(%arg0: memref<16x6xf32, #tpu.memory_space<vmem>>, %arg1: memref<48x3xf32, #tpu.memory_space<vmem>>, %arg2: memref<32x8xf32, #tpu.memory_space<vmem>>, %arg3: memref<96x1xf32, #tpu.memory_space<vmem>>, %arg4: memref<32x1xi32, #tpu.memory_space<vmem>>, %arg5: memref<32x1xi32, #tpu.memory_space<vmem>>, %arg6: memref<1x32xi32, #tpu.memory_space<vmem>>, %arg7: memref<1x16xi32, #tpu.memory_space<vmem>>, %arg8: memref<16x32xf32, #tpu.memory_space<vmem>>, %arg9: memref<4x32xf32, #tpu.memory_space<vmem>>, %arg10: memref<1216x256xf32, #tpu.memory_space<vmem>>, %arg11: memref<2x160xf32, #tpu.memory_space<vmem>>, %arg12: memref<2x11xf32, #tpu.memory_space<vmem>>) attributes {dimension_semantics = [], scalar_prefetch = 0 : i64, scratch_operands = 0 : i64, tpu.core_type = #tpu.core_type<tc>} {
    %0 = tpu.iota {dimensions = array<i32: 1>} : vector<32x16xi32>
    %c0 = arith.constant 0 : index
    %c0_0 = arith.constant 0 : index
    %1 = vector.load %arg4[%c0, %c0_0] : memref<32x1xi32, #tpu.memory_space<vmem>>, vector<32x1xi32>
    %2 = vector.broadcast %1 : vector<32x1xi32> to vector<32x16xi32>
    %3 = arith.cmpi eq, %2, %0 : vector<32x16xi32>
    %cst = arith.constant 1.000000e+00 : f32
    %cst_1 = arith.constant 0.000000e+00 : f32
    %4 = vector.broadcast %cst : f32 to vector<32x16xf32>
    %5 = vector.broadcast %cst_1 : f32 to vector<32x16xf32>
    %6 = arith.select %3, %4, %5 : vector<32x16xi1>, vector<32x16xf32>
    %7 = arith.truncf %6 : vector<32x16xf32> to vector<32x16xbf16>
    %c0_2 = arith.constant 0 : index
    %c0_3 = arith.constant 0 : index
    %8 = vector.load %arg5[%c0_2, %c0_3] : memref<32x1xi32, #tpu.memory_space<vmem>>, vector<32x1xi32>
    %9 = vector.broadcast %8 : vector<32x1xi32> to vector<32x16xi32>
    %10 = arith.cmpi eq, %9, %0 : vector<32x16xi32>
    %cst_4 = arith.constant 1.000000e+00 : f32
    %cst_5 = arith.constant 0.000000e+00 : f32
    %11 = vector.broadcast %cst_4 : f32 to vector<32x16xf32>
    %12 = vector.broadcast %cst_5 : f32 to vector<32x16xf32>
    %13 = arith.select %10, %11, %12 : vector<32x16xi1>, vector<32x16xf32>
    %14 = arith.truncf %13 : vector<32x16xf32> to vector<32x16xbf16>
    %15 = tpu.iota {dimensions = array<i32: 0>} : vector<16x32xi32>
    %c0_6 = arith.constant 0 : index
    %c0_7 = arith.constant 0 : index
    %16 = vector.load %arg6[%c0_6, %c0_7] : memref<1x32xi32, #tpu.memory_space<vmem>>, vector<1x32xi32>
    %17 = vector.broadcast %16 : vector<1x32xi32> to vector<16x32xi32>
    %18 = arith.cmpi eq, %15, %17 : vector<16x32xi32>
    %cst_8 = arith.constant 1.000000e+00 : f32
    %cst_9 = arith.constant 0.000000e+00 : f32
    %19 = vector.broadcast %cst_8 : f32 to vector<16x32xf32>
    %20 = vector.broadcast %cst_9 : f32 to vector<16x32xf32>
    %21 = arith.select %18, %19, %20 : vector<16x32xi1>, vector<16x32xf32>
    %22 = arith.truncf %21 : vector<16x32xf32> to vector<16x32xbf16>
    %cst_10 = arith.constant dense<0.000000e+00> : vector<16xf32>
    %23 = vector.multi_reduction <add>, %21, %cst_10 [1] : vector<16x32xf32> to vector<16xf32>
    %24 = vector.shape_cast %23 : vector<16xf32> to vector<16x1xf32>
    %cst_11 = arith.constant 1.000000e+00 : f32
    %25 = vector.broadcast %cst_11 : f32 to vector<16x1xf32>
    %26 = arith.maximumf %24, %25 : vector<16x1xf32>
    %27 = tpu.reciprocal %26 : vector<16x1xf32> -> vector<16x1xf32>
    %28 = tpu.iota {dimensions = array<i32: 0>} : vector<2x16xi32>
    %c0_12 = arith.constant 0 : index
    %c0_13 = arith.constant 0 : index
    %29 = vector.load %arg7[%c0_12, %c0_13] : memref<1x16xi32, #tpu.memory_space<vmem>>, vector<1x16xi32>
    %30 = vector.broadcast %29 : vector<1x16xi32> to vector<2x16xi32>
    %31 = arith.cmpi eq, %28, %30 : vector<2x16xi32>
    %cst_14 = arith.constant 1.000000e+00 : f32
    %cst_15 = arith.constant 0.000000e+00 : f32
    %32 = vector.broadcast %cst_14 : f32 to vector<2x16xf32>
    %33 = vector.broadcast %cst_15 : f32 to vector<2x16xf32>
    %34 = arith.select %31, %32, %33 : vector<2x16xi1>, vector<2x16xf32>
    %35 = arith.truncf %34 : vector<2x16xf32> to vector<2x16xbf16>
    %c0_16 = arith.constant 0 : index
    %c0_17 = arith.constant 0 : index
    %36 = vector.load %arg0[%c0_16, %c0_17] : memref<16x6xf32, #tpu.memory_space<vmem>>, vector<16x6xf32>
    %c0_18 = arith.constant 0 : index
    %c0_19 = arith.constant 0 : index
    %37 = vector.load %arg1[%c0_18, %c0_19] : memref<48x3xf32, #tpu.memory_space<vmem>>, vector<48x3xf32>
    %c0_20 = arith.constant 0 : index
    %c0_21 = arith.constant 0 : index
    %38 = vector.load %arg2[%c0_20, %c0_21] : memref<32x8xf32, #tpu.memory_space<vmem>>, vector<32x8xf32>
    %c0_22 = arith.constant 0 : index
    %c0_23 = arith.constant 0 : index
    %39 = vector.load %arg3[%c0_22, %c0_23] : memref<96x1xf32, #tpu.memory_space<vmem>>, vector<96x1xf32>
    %cst_24 = arith.constant dense<0.000000e+00> : vector<16xf32>
    %40 = vector.multi_reduction <add>, %36, %cst_24 [1] : vector<16x6xf32> to vector<16xf32>
    %41 = vector.shape_cast %40 : vector<16xf32> to vector<16x1xf32>
    %cst_25 = arith.constant 6.000000e+00 : f32
    %42 = vector.broadcast %cst_25 : f32 to vector<16x1xf32>
    %43 = arith.divf %41, %42 : vector<16x1xf32>
    %44 = vector.broadcast %43 : vector<16x1xf32> to vector<16x6xf32>
    %45 = arith.subf %36, %44 : vector<16x6xf32>
    %46 = arith.mulf %45, %45 : vector<16x6xf32>
    %cst_26 = arith.constant dense<0.000000e+00> : vector<16xf32>
    %47 = vector.multi_reduction <add>, %46, %cst_26 [1] : vector<16x6xf32> to vector<16xf32>
    %48 = vector.shape_cast %47 : vector<16xf32> to vector<16x1xf32>
    %cst_27 = arith.constant 6.000000e+00 : f32
    %49 = vector.broadcast %cst_27 : f32 to vector<16x1xf32>
    %50 = arith.divf %48, %49 : vector<16x1xf32>
    %cst_28 = arith.constant 9.99999974E-6 : f32
    %51 = vector.broadcast %cst_28 : f32 to vector<16x1xf32>
    %52 = arith.addf %50, %51 : vector<16x1xf32>
    %53 = math.rsqrt %52 : vector<16x1xf32>
    %54 = vector.broadcast %53 : vector<16x1xf32> to vector<16x6xf32>
    %55 = arith.mulf %45, %54 : vector<16x6xf32>
    %c856 = arith.constant 856 : index
    %c0_29 = arith.constant 0 : index
    %56 = vector.load %arg10[%c856, %c0_29] : memref<1216x256xf32, #tpu.memory_space<vmem>>, vector<1x6xf32>
    %57 = vector.broadcast %56 : vector<1x6xf32> to vector<16x6xf32>
    %58 = arith.mulf %55, %57 : vector<16x6xf32>
    %c848 = arith.constant 848 : index
    %c0_30 = arith.constant 0 : index
    %59 = vector.load %arg10[%c848, %c0_30] : memref<1216x256xf32, #tpu.memory_space<vmem>>, vector<1x6xf32>
    %60 = vector.broadcast %59 : vector<1x6xf32> to vector<16x6xf32>
    %61 = arith.addf %58, %60 : vector<16x6xf32>
    %62 = vector.extract_strided_slice %37 {offsets = [0, 0], sizes = [16, 3], strides = [1, 1]} : vector<48x3xf32> to vector<16x3xf32>
    %63 = vector.extract_strided_slice %37 {offsets = [16, 0], sizes = [16, 3], strides = [1, 1]} : vector<48x3xf32> to vector<16x3xf32>
    %64 = vector.extract_strided_slice %37 {offsets = [32, 0], sizes = [16, 3], strides = [1, 1]} : vector<48x3xf32> to vector<16x3xf32>
    %65 = arith.mulf %62, %62 : vector<16x3xf32>
    %66 = arith.mulf %63, %63 : vector<16x3xf32>
    %67 = arith.addf %65, %66 : vector<16x3xf32>
    %68 = arith.mulf %64, %64 : vector<16x3xf32>
    %69 = arith.addf %67, %68 : vector<16x3xf32>
    %cst_31 = arith.constant 9.99999993E-9 : f32
    %70 = vector.broadcast %cst_31 : f32 to vector<16x3xf32>
    %71 = arith.maximumf %69, %70 : vector<16x3xf32>
    %cst_32 = arith.constant dense<0.000000e+00> : vector<16xf32>
    %72 = vector.multi_reduction <add>, %71, %cst_32 [1] : vector<16x3xf32> to vector<16xf32>
    %73 = vector.shape_cast %72 : vector<16xf32> to vector<16x1xf32>
    %cst_33 = arith.constant 3.000000e+00 : f32
    %74 = vector.broadcast %cst_33 : f32 to vector<16x1xf32>
    %75 = arith.divf %73, %74 : vector<16x1xf32>
    %76 = math.rsqrt %75 : vector<16x1xf32>
    %77 = tpu.concatenate %76, %76, %76 in 0 : vector<16x1xf32>, vector<16x1xf32>, vector<16x1xf32> -> vector<48x1xf32>
    %78 = vector.broadcast %77 : vector<48x1xf32> to vector<48x3xf32>
    %79 = arith.mulf %37, %78 : vector<48x3xf32>
    %c40 = arith.constant 40 : index
    %c0_34 = arith.constant 0 : index
    %80 = vector.load %arg10[%c40, %c0_34] : memref<1216x256xf32, #tpu.memory_space<vmem>>, vector<3x4xf32>
    %81 = arith.truncf %79 : vector<48x3xf32> to vector<48x3xbf16>
    %82 = arith.truncf %80 : vector<3x4xf32> to vector<3x4xbf16>
    %cst_35 = arith.constant dense<0.000000e+00> : vector<48x4xf32>
    %83 = tpu.matmul %81, %82, %cst_35 {dimension_numbers = #tpu.dot_dimension_numbers<[1], [0], [0], [1], [0, 0, 1, 1], [], []>} : vector<48x3xbf16>, vector<3x4xbf16>, vector<48x4xf32> -> vector<48x4xf32>
    %84 = vector.extract_strided_slice %83 {offsets = [0, 0], sizes = [16, 4], strides = [1, 1]} : vector<48x4xf32> to vector<16x4xf32>
    %85 = vector.extract_strided_slice %83 {offsets = [16, 0], sizes = [16, 4], strides = [1, 1]} : vector<48x4xf32> to vector<16x4xf32>
    %86 = vector.extract_strided_slice %83 {offsets = [32, 0], sizes = [16, 4], strides = [1, 1]} : vector<48x4xf32> to vector<16x4xf32>
    %87 = arith.mulf %84, %84 : vector<16x4xf32>
    %88 = arith.mulf %85, %85 : vector<16x4xf32>
    %89 = arith.addf %87, %88 : vector<16x4xf32>
    %90 = arith.mulf %86, %86 : vector<16x4xf32>
    %91 = arith.addf %89, %90 : vector<16x4xf32>
    %cst_36 = arith.constant 9.99999993E-9 : f32
    %92 = vector.broadcast %cst_36 : f32 to vector<16x4xf32>
    %93 = arith.maximumf %91, %92 : vector<16x4xf32>
    %94 = math.sqrt %93 : vector<16x4xf32>
    %c48 = arith.constant 48 : index
    %c0_37 = arith.constant 0 : index
    %95 = vector.load %arg10[%c48, %c0_37] : memref<1216x256xf32, #tpu.memory_space<vmem>>, vector<1x16xf32>
    %c56 = arith.constant 56 : index
    %c0_38 = arith.constant 0 : index
    %96 = vector.load %arg10[%c56, %c0_38] : memref<1216x256xf32, #tpu.memory_space<vmem>>, vector<4x16xf32>
    %97 = arith.truncf %94 : vector<16x4xf32> to vector<16x4xbf16>
    %98 = arith.truncf %96 : vector<4x16xf32> to vector<4x16xbf16>
    %cst_39 = arith.constant dense<0.000000e+00> : vector<16x16xf32>
    %99 = tpu.matmul %97, %98, %cst_39 {dimension_numbers = #tpu.dot_dimension_numbers<[1], [0], [0], [1], [0, 0, 1, 1], [], []>} : vector<16x4xbf16>, vector<4x16xbf16>, vector<16x16xf32> -> vector<16x16xf32>
    %100 = vector.broadcast %95 : vector<1x16xf32> to vector<16x16xf32>
    %101 = arith.addf %100, %99 : vector<16x16xf32>
    %c64 = arith.constant 64 : index
    %c0_40 = arith.constant 0 : index
    %102 = vector.load %arg10[%c64, %c0_40] : memref<1216x256xf32, #tpu.memory_space<vmem>>, vector<6x16xf32>
    %103 = arith.truncf %61 : vector<16x6xf32> to vector<16x6xbf16>
    %104 = arith.truncf %102 : vector<6x16xf32> to vector<6x16xbf16>
    %cst_41 = arith.constant dense<0.000000e+00> : vector<16x16xf32>
    %105 = tpu.matmul %103, %104, %cst_41 {dimension_numbers = #tpu.dot_dimension_numbers<[1], [0], [0], [1], [0, 0, 1, 1], [], []>} : vector<16x6xbf16>, vector<6x16xbf16>, vector<16x16xf32> -> vector<16x16xf32>
    %106 = arith.addf %101, %105 : vector<16x16xf32>
    %c72 = arith.constant 72 : index
    %c0_42 = arith.constant 0 : index
    %107 = vector.load %arg10[%c72, %c0_42] : memref<1216x256xf32, #tpu.memory_space<vmem>>, vector<4x4xf32>
    %108 = arith.truncf %83 : vector<48x4xf32> to vector<48x4xbf16>
    %109 = arith.truncf %107 : vector<4x4xf32> to vector<4x4xbf16>
    %cst_43 = arith.constant dense<0.000000e+00> : vector<48x4xf32>
    %110 = tpu.matmul %108, %109, %cst_43 {dimension_numbers = #tpu.dot_dimension_numbers<[1], [0], [0], [1], [0, 0, 1, 1], [], []>} : vector<48x4xbf16>, vector<4x4xbf16>, vector<48x4xf32> -> vector<48x4xf32>
    %cst_44 = arith.constant dense<0.000000e+00> : vector<32xf32>
    %111 = vector.multi_reduction <add>, %38, %cst_44 [1] : vector<32x8xf32> to vector<32xf32>
    %112 = vector.shape_cast %111 : vector<32xf32> to vector<32x1xf32>
    %cst_45 = arith.constant 8.000000e+00 : f32
    %113 = vector.broadcast %cst_45 : f32 to vector<32x1xf32>
    %114 = arith.divf %112, %113 : vector<32x1xf32>
    %115 = vector.broadcast %114 : vector<32x1xf32> to vector<32x8xf32>
    %116 = arith.subf %38, %115 : vector<32x8xf32>
    %117 = arith.mulf %116, %116 : vector<32x8xf32>
    %cst_46 = arith.constant dense<0.000000e+00> : vector<32xf32>
    %118 = vector.multi_reduction <add>, %117, %cst_46 [1] : vector<32x8xf32> to vector<32xf32>
    %119 = vector.shape_cast %118 : vector<32xf32> to vector<32x1xf32>
    %cst_47 = arith.constant 8.000000e+00 : f32
    %120 = vector.broadcast %cst_47 : f32 to vector<32x1xf32>
    %121 = arith.divf %119, %120 : vector<32x1xf32>
    %cst_48 = arith.constant 9.99999974E-6 : f32
    %122 = vector.broadcast %cst_48 : f32 to vector<32x1xf32>
    %123 = arith.addf %121, %122 : vector<32x1xf32>
    %124 = math.rsqrt %123 : vector<32x1xf32>
    %125 = vector.broadcast %124 : vector<32x1xf32> to vector<32x8xf32>
    %126 = arith.mulf %116, %125 : vector<32x8xf32>
    %c840 = arith.constant 840 : index
    %c0_49 = arith.constant 0 : index
    %127 = vector.load %arg10[%c840, %c0_49] : memref<1216x256xf32, #tpu.memory_space<vmem>>, vector<1x8xf32>
    %128 = vector.broadcast %127 : vector<1x8xf32> to vector<32x8xf32>
    %129 = arith.mulf %126, %128 : vector<32x8xf32>
    %c832 = arith.constant 832 : index
    %c0_50 = arith.constant 0 : index
    %130 = vector.load %arg10[%c832, %c0_50] : memref<1216x256xf32, #tpu.memory_space<vmem>>, vector<1x8xf32>
    %131 = vector.broadcast %130 : vector<1x8xf32> to vector<32x8xf32>
    %132 = arith.addf %129, %131 : vector<32x8xf32>
    %133 = vector.extract_strided_slice %39 {offsets = [0, 0], sizes = [32, 1], strides = [1, 1]} : vector<96x1xf32> to vector<32x1xf32>
    %134 = vector.extract_strided_slice %39 {offsets = [32, 0], sizes = [32, 1], strides = [1, 1]} : vector<96x1xf32> to vector<32x1xf32>
    %135 = vector.extract_strided_slice %39 {offsets = [64, 0], sizes = [32, 1], strides = [1, 1]} : vector<96x1xf32> to vector<32x1xf32>
    %136 = arith.mulf %133, %133 : vector<32x1xf32>
    %137 = arith.mulf %134, %134 : vector<32x1xf32>
    %138 = arith.addf %136, %137 : vector<32x1xf32>
    %139 = arith.mulf %135, %135 : vector<32x1xf32>
    %140 = arith.addf %138, %139 : vector<32x1xf32>
    %cst_51 = arith.constant 9.99999993E-9 : f32
    %141 = vector.broadcast %cst_51 : f32 to vector<32x1xf32>
    %142 = arith.maximumf %140, %141 : vector<32x1xf32>
    %cst_52 = arith.constant dense<0.000000e+00> : vector<32xf32>
    %143 = vector.multi_reduction <add>, %142, %cst_52 [1] : vector<32x1xf32> to vector<32xf32>
    %144 = vector.shape_cast %143 : vector<32xf32> to vector<32x1xf32>
    %cst_53 = arith.constant 1.000000e+00 : f32
    %145 = vector.broadcast %cst_53 : f32 to vector<32x1xf32>
    %146 = arith.divf %144, %145 : vector<32x1xf32>
    %147 = math.rsqrt %146 : vector<32x1xf32>
    %148 = tpu.concatenate %147, %147, %147 in 0 : vector<32x1xf32>, vector<32x1xf32>, vector<32x1xf32> -> vector<96x1xf32>
    %149 = arith.mulf %39, %148 : vector<96x1xf32>
    %c0_54 = arith.constant 0 : index
    %c0_55 = arith.constant 0 : index
    %150 = vector.load %arg10[%c0_54, %c0_55] : memref<1216x256xf32, #tpu.memory_space<vmem>>, vector<1x2xf32>
    %151 = arith.truncf %149 : vector<96x1xf32> to vector<96x1xbf16>
    %152 = arith.truncf %150 : vector<1x2xf32> to vector<1x2xbf16>
    %cst_56 = arith.constant dense<0.000000e+00> : vector<96x2xf32>
    %153 = tpu.matmul %151, %152, %cst_56 {dimension_numbers = #tpu.dot_dimension_numbers<[1], [0], [0], [1], [0, 0, 1, 1], [], []>} : vector<96x1xbf16>, vector<1x2xbf16>, vector<96x2xf32> -> vector<96x2xf32>
    %154 = vector.extract_strided_slice %153 {offsets = [0, 0], sizes = [32, 2], strides = [1, 1]} : vector<96x2xf32> to vector<32x2xf32>
    %155 = vector.extract_strided_slice %153 {offsets = [32, 0], sizes = [32, 2], strides = [1, 1]} : vector<96x2xf32> to vector<32x2xf32>
    %156 = vector.extract_strided_slice %153 {offsets = [64, 0], sizes = [32, 2], strides = [1, 1]} : vector<96x2xf32> to vector<32x2xf32>
    %157 = arith.mulf %154, %154 : vector<32x2xf32>
    %158 = arith.mulf %155, %155 : vector<32x2xf32>
    %159 = arith.addf %157, %158 : vector<32x2xf32>
    %160 = arith.mulf %156, %156 : vector<32x2xf32>
    %161 = arith.addf %159, %160 : vector<32x2xf32>
    %cst_57 = arith.constant 9.99999993E-9 : f32
    %162 = vector.broadcast %cst_57 : f32 to vector<32x2xf32>
    %163 = arith.maximumf %161, %162 : vector<32x2xf32>
    %164 = math.sqrt %163 : vector<32x2xf32>
    %c8 = arith.constant 8 : index
    %c0_58 = arith.constant 0 : index
    %165 = vector.load %arg10[%c8, %c0_58] : memref<1216x256xf32, #tpu.memory_space<vmem>>, vector<1x8xf32>
    %c16 = arith.constant 16 : index
    %c0_59 = arith.constant 0 : index
    %166 = vector.load %arg10[%c16, %c0_59] : memref<1216x256xf32, #tpu.memory_space<vmem>>, vector<2x8xf32>
    %167 = arith.truncf %164 : vector<32x2xf32> to vector<32x2xbf16>
    %168 = arith.truncf %166 : vector<2x8xf32> to vector<2x8xbf16>
    %cst_60 = arith.constant dense<0.000000e+00> : vector<32x8xf32>
    %169 = tpu.matmul %167, %168, %cst_60 {dimension_numbers = #tpu.dot_dimension_numbers<[1], [0], [0], [1], [0, 0, 1, 1], [], []>} : vector<32x2xbf16>, vector<2x8xbf16>, vector<32x8xf32> -> vector<32x8xf32>
    %170 = vector.broadcast %165 : vector<1x8xf32> to vector<32x8xf32>
    %171 = arith.addf %170, %169 : vector<32x8xf32>
    %c24 = arith.constant 24 : index
    %c0_61 = arith.constant 0 : index
    %172 = vector.load %arg10[%c24, %c0_61] : memref<1216x256xf32, #tpu.memory_space<vmem>>, vector<8x8xf32>
    %173 = arith.truncf %132 : vector<32x8xf32> to vector<32x8xbf16>
    %174 = arith.truncf %172 : vector<8x8xf32> to vector<8x8xbf16>
    %cst_62 = arith.constant dense<0.000000e+00> : vector<32x8xf32>
    %175 = tpu.matmul %173, %174, %cst_62 {dimension_numbers = #tpu.dot_dimension_numbers<[1], [0], [0], [1], [0, 0, 1, 1], [], []>} : vector<32x8xbf16>, vector<8x8xbf16>, vector<32x8xf32> -> vector<32x8xf32>
    %176 = arith.addf %171, %175 : vector<32x8xf32>
    %c32 = arith.constant 32 : index
    %c0_63 = arith.constant 0 : index
    %177 = vector.load %arg10[%c32, %c0_63] : memref<1216x256xf32, #tpu.memory_space<vmem>>, vector<2x2xf32>
    %178 = arith.truncf %153 : vector<96x2xf32> to vector<96x2xbf16>
    %179 = arith.truncf %177 : vector<2x2xf32> to vector<2x2xbf16>
    %cst_64 = arith.constant dense<0.000000e+00> : vector<96x2xf32>
    %180 = tpu.matmul %178, %179, %cst_64 {dimension_numbers = #tpu.dot_dimension_numbers<[1], [0], [0], [1], [0, 0, 1, 1], [], []>} : vector<96x2xbf16>, vector<2x2xbf16>, vector<96x2xf32> -> vector<96x2xf32>
    %181 = arith.truncf %106 : vector<16x16xf32> to vector<16x16xbf16>
    %cst_65 = arith.constant dense<0.000000e+00> : vector<32x16xf32>
    %182 = tpu.matmul %7, %181, %cst_65 {dimension_numbers = #tpu.dot_dimension_numbers<[1], [0], [0], [1], [0, 0, 1, 1], [], []>} : vector<32x16xbf16>, vector<16x16xbf16>, vector<32x16xf32> -> vector<32x16xf32>
    %183 = arith.truncf %106 : vector<16x16xf32> to vector<16x16xbf16>
    %cst_66 = arith.constant dense<0.000000e+00> : vector<32x16xf32>
    %184 = tpu.matmul %14, %183, %cst_66 {dimension_numbers = #tpu.dot_dimension_numbers<[1], [0], [0], [1], [0, 0, 1, 1], [], []>} : vector<32x16xbf16>, vector<16x16xbf16>, vector<32x16xf32> -> vector<32x16xf32>
    %185 = vector.extract_strided_slice %110 {offsets = [0, 0], sizes = [16, 4], strides = [1, 1]} : vector<48x4xf32> to vector<16x4xf32>
    %186 = vector.extract_strided_slice %110 {offsets = [16, 0], sizes = [16, 4], strides = [1, 1]} : vector<48x4xf32> to vector<16x4xf32>
    %187 = vector.extract_strided_slice %110 {offsets = [32, 0], sizes = [16, 4], strides = [1, 1]} : vector<48x4xf32> to vector<16x4xf32>
    %188 = arith.truncf %185 : vector<16x4xf32> to vector<16x4xbf16>
    %cst_67 = arith.constant dense<0.000000e+00> : vector<32x4xf32>
    %189 = tpu.matmul %7, %188, %cst_67 {dimension_numbers = #tpu.dot_dimension_numbers<[1], [0], [0], [1], [0, 0, 1, 1], [], []>} : vector<32x16xbf16>, vector<16x4xbf16>, vector<32x4xf32> -> vector<32x4xf32>
    %190 = arith.truncf %186 : vector<16x4xf32> to vector<16x4xbf16>
    %cst_68 = arith.constant dense<0.000000e+00> : vector<32x4xf32>
    %191 = tpu.matmul %7, %190, %cst_68 {dimension_numbers = #tpu.dot_dimension_numbers<[1], [0], [0], [1], [0, 0, 1, 1], [], []>} : vector<32x16xbf16>, vector<16x4xbf16>, vector<32x4xf32> -> vector<32x4xf32>
    %192 = arith.truncf %187 : vector<16x4xf32> to vector<16x4xbf16>
    %cst_69 = arith.constant dense<0.000000e+00> : vector<32x4xf32>
    %193 = tpu.matmul %7, %192, %cst_69 {dimension_numbers = #tpu.dot_dimension_numbers<[1], [0], [0], [1], [0, 0, 1, 1], [], []>} : vector<32x16xbf16>, vector<16x4xbf16>, vector<32x4xf32> -> vector<32x4xf32>
    %194 = tpu.concatenate %189, %191, %193 in 0 : vector<32x4xf32>, vector<32x4xf32>, vector<32x4xf32> -> vector<96x4xf32>
    %195 = arith.truncf %185 : vector<16x4xf32> to vector<16x4xbf16>
    %cst_70 = arith.constant dense<0.000000e+00> : vector<32x4xf32>
    %196 = tpu.matmul %14, %195, %cst_70 {dimension_numbers = #tpu.dot_dimension_numbers<[1], [0], [0], [1], [0, 0, 1, 1], [], []>} : vector<32x16xbf16>, vector<16x4xbf16>, vector<32x4xf32> -> vector<32x4xf32>
    %197 = arith.truncf %186 : vector<16x4xf32> to vector<16x4xbf16>
    %cst_71 = arith.constant dense<0.000000e+00> : vector<32x4xf32>
    %198 = tpu.matmul %14, %197, %cst_71 {dimension_numbers = #tpu.dot_dimension_numbers<[1], [0], [0], [1], [0, 0, 1, 1], [], []>} : vector<32x16xbf16>, vector<16x4xbf16>, vector<32x4xf32> -> vector<32x4xf32>
    %199 = arith.truncf %187 : vector<16x4xf32> to vector<16x4xbf16>
    %cst_72 = arith.constant dense<0.000000e+00> : vector<32x4xf32>
    %200 = tpu.matmul %14, %199, %cst_72 {dimension_numbers = #tpu.dot_dimension_numbers<[1], [0], [0], [1], [0, 0, 1, 1], [], []>} : vector<32x16xbf16>, vector<16x4xbf16>, vector<32x4xf32> -> vector<32x4xf32>
    %201 = tpu.concatenate %196, %198, %200 in 0 : vector<32x4xf32>, vector<32x4xf32>, vector<32x4xf32> -> vector<96x4xf32>
    %c80 = arith.constant 80 : index
    %c0_73 = arith.constant 0 : index
    %202 = vector.load %arg10[%c80, %c0_73] : memref<1216x256xf32, #tpu.memory_space<vmem>>, vector<4x10xf32>
    %203 = arith.truncf %194 : vector<96x4xf32> to vector<96x4xbf16>
    %204 = arith.truncf %202 : vector<4x10xf32> to vector<4x10xbf16>
    %cst_74 = arith.constant dense<0.000000e+00> : vector<96x10xf32>
    %205 = tpu.matmul %203, %204, %cst_74 {dimension_numbers = #tpu.dot_dimension_numbers<[1], [0], [0], [1], [0, 0, 1, 1], [], []>} : vector<96x4xbf16>, vector<4x10xbf16>, vector<96x10xf32> -> vector<96x10xf32>
    %c88 = arith.constant 88 : index
    %c0_75 = arith.constant 0 : index
    %206 = vector.load %arg10[%c88, %c0_75] : memref<1216x256xf32, #tpu.memory_space<vmem>>, vector<2x10xf32>
    %207 = arith.truncf %180 : vector<96x2xf32> to vector<96x2xbf16>
    %208 = arith.truncf %206 : vector<2x10xf32> to vector<2x10xbf16>
    %cst_76 = arith.constant dense<0.000000e+00> : vector<96x10xf32>
    %209 = tpu.matmul %207, %208, %cst_76 {dimension_numbers = #tpu.dot_dimension_numbers<[1], [0], [0], [1], [0, 0, 1, 1], [], []>} : vector<96x2xbf16>, vector<2x10xbf16>, vector<96x10xf32> -> vector<96x10xf32>
    %210 = arith.addf %205, %209 : vector<96x10xf32>
    %c96 = arith.constant 96 : index
    %c0_77 = arith.constant 0 : index
    %211 = vector.load %arg10[%c96, %c0_77] : memref<1216x256xf32, #tpu.memory_space<vmem>>, vector<4x10xf32>
    %212 = arith.truncf %201 : vector<96x4xf32> to vector<96x4xbf16>
    %213 = arith.truncf %211 : vector<4x10xf32> to vector<4x10xbf16>
    %cst_78 = arith.constant dense<0.000000e+00> : vector<96x10xf32>
    %214 = tpu.matmul %212, %213, %cst_78 {dimension_numbers = #tpu.dot_dimension_numbers<[1], [0], [0], [1], [0, 0, 1, 1], [], []>} : vector<96x4xbf16>, vector<4x10xbf16>, vector<96x10xf32> -> vector<96x10xf32>
    %215 = arith.addf %210, %214 : vector<96x10xf32>
    %216 = vector.extract_strided_slice %215 {offsets = [0, 0], sizes = [32, 10], strides = [1, 1]} : vector<96x10xf32> to vector<32x10xf32>
    %217 = vector.extract_strided_slice %215 {offsets = [32, 0], sizes = [32, 10], strides = [1, 1]} : vector<96x10xf32> to vector<32x10xf32>
    %218 = vector.extract_strided_slice %215 {offsets = [64, 0], sizes = [32, 10], strides = [1, 1]} : vector<96x10xf32> to vector<32x10xf32>
    %219 = arith.mulf %216, %216 : vector<32x10xf32>
    %220 = arith.mulf %217, %217 : vector<32x10xf32>
    %221 = arith.addf %219, %220 : vector<32x10xf32>
    %222 = arith.mulf %218, %218 : vector<32x10xf32>
    %223 = arith.addf %221, %222 : vector<32x10xf32>
    %cst_79 = arith.constant 9.99999993E-9 : f32
    %224 = vector.broadcast %cst_79 : f32 to vector<32x10xf32>
    %225 = arith.maximumf %223, %224 : vector<32x10xf32>
    %226 = math.sqrt %225 : vector<32x10xf32>
    %c104 = arith.constant 104 : index
    %c0_80 = arith.constant 0 : index
    %227 = vector.load %arg10[%c104, %c0_80] : memref<1216x256xf32, #tpu.memory_space<vmem>>, vector<1x16xf32>
    %c112 = arith.constant 112 : index
    %c0_81 = arith.constant 0 : index
    %228 = vector.load %arg10[%c112, %c0_81] : memref<1216x256xf32, #tpu.memory_space<vmem>>, vector<10x16xf32>
    %229 = arith.truncf %226 : vector<32x10xf32> to vector<32x10xbf16>
    %230 = arith.truncf %228 : vector<10x16xf32> to vector<10x16xbf16>
    %cst_82 = arith.constant dense<0.000000e+00> : vector<32x16xf32>
    %231 = tpu.matmul %229, %230, %cst_82 {dimension_numbers = #tpu.dot_dimension_numbers<[1], [0], [0], [1], [0, 0, 1, 1], [], []>} : vector<32x10xbf16>, vector<10x16xbf16>, vector<32x16xf32> -> vector<32x16xf32>
    %232 = vector.broadcast %227 : vector<1x16xf32> to vector<32x16xf32>
    %233 = arith.addf %232, %231 : vector<32x16xf32>
    %c128 = arith.constant 128 : index
    %c0_83 = arith.constant 0 : index
    %234 = vector.load %arg10[%c128, %c0_83] : memref<1216x256xf32, #tpu.memory_space<vmem>>, vector<16x16xf32>
    %235 = arith.truncf %182 : vector<32x16xf32> to vector<32x16xbf16>
    %236 = arith.truncf %234 : vector<16x16xf32> to vector<16x16xbf16>
    %cst_84 = arith.constant dense<0.000000e+00> : vector<32x16xf32>
    %237 = tpu.matmul %235, %236, %cst_84 {dimension_numbers = #tpu.dot_dimension_numbers<[1], [0], [0], [1], [0, 0, 1, 1], [], []>} : vector<32x16xbf16>, vector<16x16xbf16>, vector<32x16xf32> -> vector<32x16xf32>
    %238 = arith.addf %233, %237 : vector<32x16xf32>
    %c144 = arith.constant 144 : index
    %c0_85 = arith.constant 0 : index
    %239 = vector.load %arg10[%c144, %c0_85] : memref<1216x256xf32, #tpu.memory_space<vmem>>, vector<8x16xf32>
    %240 = arith.truncf %176 : vector<32x8xf32> to vector<32x8xbf16>
    %241 = arith.truncf %239 : vector<8x16xf32> to vector<8x16xbf16>
    %cst_86 = arith.constant dense<0.000000e+00> : vector<32x16xf32>
    %242 = tpu.matmul %240, %241, %cst_86 {dimension_numbers = #tpu.dot_dimension_numbers<[1], [0], [0], [1], [0, 0, 1, 1], [], []>} : vector<32x8xbf16>, vector<8x16xbf16>, vector<32x16xf32> -> vector<32x16xf32>
    %243 = arith.addf %238, %242 : vector<32x16xf32>
    %c152 = arith.constant 152 : index
    %c0_87 = arith.constant 0 : index
    %244 = vector.load %arg10[%c152, %c0_87] : memref<1216x256xf32, #tpu.memory_space<vmem>>, vector<16x16xf32>
    %245 = arith.truncf %184 : vector<32x16xf32> to vector<32x16xbf16>
    %246 = arith.truncf %244 : vector<16x16xf32> to vector<16x16xbf16>
    %cst_88 = arith.constant dense<0.000000e+00> : vector<32x16xf32>
    %247 = tpu.matmul %245, %246, %cst_88 {dimension_numbers = #tpu.dot_dimension_numbers<[1], [0], [0], [1], [0, 0, 1, 1], [], []>} : vector<32x16xbf16>, vector<16x16xbf16>, vector<32x16xf32> -> vector<32x16xf32>
    %248 = arith.addf %243, %247 : vector<32x16xf32>
    %c168 = arith.constant 168 : index
    %c0_89 = arith.constant 0 : index
    %249 = vector.load %arg10[%c168, %c0_89] : memref<1216x256xf32, #tpu.memory_space<vmem>>, vector<10x4xf32>
    %250 = arith.truncf %215 : vector<96x10xf32> to vector<96x10xbf16>
    %251 = arith.truncf %249 : vector<10x4xf32> to vector<10x4xbf16>
    %cst_90 = arith.constant dense<0.000000e+00> : vector<96x4xf32>
    %252 = tpu.matmul %250, %251, %cst_90 {dimension_numbers = #tpu.dot_dimension_numbers<[1], [0], [0], [1], [0, 0, 1, 1], [], []>} : vector<96x10xbf16>, vector<10x4xbf16>, vector<96x4xf32> -> vector<96x4xf32>
    %253 = vector.extract_strided_slice %252 {offsets = [0, 0], sizes = [32, 4], strides = [1, 1]} : vector<96x4xf32> to vector<32x4xf32>
    %254 = vector.extract_strided_slice %252 {offsets = [32, 0], sizes = [32, 4], strides = [1, 1]} : vector<96x4xf32> to vector<32x4xf32>
    %255 = vector.extract_strided_slice %252 {offsets = [64, 0], sizes = [32, 4], strides = [1, 1]} : vector<96x4xf32> to vector<32x4xf32>
    %256 = arith.mulf %253, %253 : vector<32x4xf32>
    %257 = arith.mulf %254, %254 : vector<32x4xf32>
    %258 = arith.addf %256, %257 : vector<32x4xf32>
    %259 = arith.mulf %255, %255 : vector<32x4xf32>
    %260 = arith.addf %258, %259 : vector<32x4xf32>
    %cst_91 = arith.constant 9.99999993E-9 : f32
    %261 = vector.broadcast %cst_91 : f32 to vector<32x4xf32>
    %262 = arith.maximumf %260, %261 : vector<32x4xf32>
    %263 = math.sqrt %262 : vector<32x4xf32>
    %cst_92 = arith.constant 0.000000e+00 : f32
    %264 = vector.broadcast %cst_92 : f32 to vector<32x4xf32>
    %265 = arith.subf %264, %263 : vector<32x4xf32>
    %266 = math.exp %265 : vector<32x4xf32>
    %cst_93 = arith.constant 1.000000e+00 : f32
    %267 = vector.broadcast %cst_93 : f32 to vector<32x4xf32>
    %268 = arith.addf %267, %266 : vector<32x4xf32>
    %269 = tpu.reciprocal %268 {approx = true} : vector<32x4xf32> -> vector<32x4xf32>
    %270 = tpu.concatenate %269, %269, %269 in 0 : vector<32x4xf32>, vector<32x4xf32>, vector<32x4xf32> -> vector<96x4xf32>
    %271 = arith.mulf %252, %270 : vector<96x4xf32>
    %cst_94 = arith.constant 0.000000e+00 : f32
    %272 = vector.broadcast %cst_94 : f32 to vector<32x16xf32>
    %273 = arith.maximumf %248, %272 : vector<32x16xf32>
    %c184 = arith.constant 184 : index
    %c0_95 = arith.constant 0 : index
    %274 = vector.load %arg10[%c184, %c0_95] : memref<1216x256xf32, #tpu.memory_space<vmem>>, vector<4x4xf32>
    %275 = arith.truncf %271 : vector<96x4xf32> to vector<96x4xbf16>
    %276 = arith.truncf %274 : vector<4x4xf32> to vector<4x4xbf16>
    %cst_96 = arith.constant dense<0.000000e+00> : vector<96x4xf32>
    %277 = tpu.matmul %275, %276, %cst_96 {dimension_numbers = #tpu.dot_dimension_numbers<[1], [0], [0], [1], [0, 0, 1, 1], [], []>} : vector<96x4xbf16>, vector<4x4xbf16>, vector<96x4xf32> -> vector<96x4xf32>
    %278 = vector.extract_strided_slice %277 {offsets = [0, 0], sizes = [32, 4], strides = [1, 1]} : vector<96x4xf32> to vector<32x4xf32>
    %279 = vector.extract_strided_slice %277 {offsets = [32, 0], sizes = [32, 4], strides = [1, 1]} : vector<96x4xf32> to vector<32x4xf32>
    %280 = vector.extract_strided_slice %277 {offsets = [64, 0], sizes = [32, 4], strides = [1, 1]} : vector<96x4xf32> to vector<32x4xf32>
    %281 = arith.mulf %278, %278 : vector<32x4xf32>
    %282 = arith.mulf %279, %279 : vector<32x4xf32>
    %283 = arith.addf %281, %282 : vector<32x4xf32>
    %284 = arith.mulf %280, %280 : vector<32x4xf32>
    %285 = arith.addf %283, %284 : vector<32x4xf32>
    %cst_97 = arith.constant 9.99999993E-9 : f32
    %286 = vector.broadcast %cst_97 : f32 to vector<32x4xf32>
    %287 = arith.maximumf %285, %286 : vector<32x4xf32>
    %288 = math.sqrt %287 : vector<32x4xf32>
    %c192 = arith.constant 192 : index
    %c0_98 = arith.constant 0 : index
    %289 = vector.load %arg10[%c192, %c0_98] : memref<1216x256xf32, #tpu.memory_space<vmem>>, vector<1x16xf32>
    %c200 = arith.constant 200 : index
    %c0_99 = arith.constant 0 : index
    %290 = vector.load %arg10[%c200, %c0_99] : memref<1216x256xf32, #tpu.memory_space<vmem>>, vector<4x16xf32>
    %291 = arith.truncf %288 : vector<32x4xf32> to vector<32x4xbf16>
    %292 = arith.truncf %290 : vector<4x16xf32> to vector<4x16xbf16>
    %cst_100 = arith.constant dense<0.000000e+00> : vector<32x16xf32>
    %293 = tpu.matmul %291, %292, %cst_100 {dimension_numbers = #tpu.dot_dimension_numbers<[1], [0], [0], [1], [0, 0, 1, 1], [], []>} : vector<32x4xbf16>, vector<4x16xbf16>, vector<32x16xf32> -> vector<32x16xf32>
    %294 = vector.broadcast %289 : vector<1x16xf32> to vector<32x16xf32>
    %295 = arith.addf %294, %293 : vector<32x16xf32>
    %c208 = arith.constant 208 : index
    %c0_101 = arith.constant 0 : index
    %296 = vector.load %arg10[%c208, %c0_101] : memref<1216x256xf32, #tpu.memory_space<vmem>>, vector<16x16xf32>
    %297 = arith.truncf %273 : vector<32x16xf32> to vector<32x16xbf16>
    %298 = arith.truncf %296 : vector<16x16xf32> to vector<16x16xbf16>
    %cst_102 = arith.constant dense<0.000000e+00> : vector<32x16xf32>
    %299 = tpu.matmul %297, %298, %cst_102 {dimension_numbers = #tpu.dot_dimension_numbers<[1], [0], [0], [1], [0, 0, 1, 1], [], []>} : vector<32x16xbf16>, vector<16x16xbf16>, vector<32x16xf32> -> vector<32x16xf32>
    %300 = arith.addf %295, %299 : vector<32x16xf32>
    %c224 = arith.constant 224 : index
    %c0_103 = arith.constant 0 : index
    %301 = vector.load %arg10[%c224, %c0_103] : memref<1216x256xf32, #tpu.memory_space<vmem>>, vector<4x4xf32>
    %302 = arith.truncf %277 : vector<96x4xf32> to vector<96x4xbf16>
    %303 = arith.truncf %301 : vector<4x4xf32> to vector<4x4xbf16>
    %cst_104 = arith.constant dense<0.000000e+00> : vector<96x4xf32>
    %304 = tpu.matmul %302, %303, %cst_104 {dimension_numbers = #tpu.dot_dimension_numbers<[1], [0], [0], [1], [0, 0, 1, 1], [], []>} : vector<96x4xbf16>, vector<4x4xbf16>, vector<96x4xf32> -> vector<96x4xf32>
    %305 = vector.extract_strided_slice %304 {offsets = [0, 0], sizes = [32, 4], strides = [1, 1]} : vector<96x4xf32> to vector<32x4xf32>
    %306 = vector.extract_strided_slice %304 {offsets = [32, 0], sizes = [32, 4], strides = [1, 1]} : vector<96x4xf32> to vector<32x4xf32>
    %307 = vector.extract_strided_slice %304 {offsets = [64, 0], sizes = [32, 4], strides = [1, 1]} : vector<96x4xf32> to vector<32x4xf32>
    %308 = arith.mulf %305, %305 : vector<32x4xf32>
    %309 = arith.mulf %306, %306 : vector<32x4xf32>
    %310 = arith.addf %308, %309 : vector<32x4xf32>
    %311 = arith.mulf %307, %307 : vector<32x4xf32>
    %312 = arith.addf %310, %311 : vector<32x4xf32>
    %cst_105 = arith.constant 9.99999993E-9 : f32
    %313 = vector.broadcast %cst_105 : f32 to vector<32x4xf32>
    %314 = arith.maximumf %312, %313 : vector<32x4xf32>
    %315 = math.sqrt %314 : vector<32x4xf32>
    %cst_106 = arith.constant 0.000000e+00 : f32
    %316 = vector.broadcast %cst_106 : f32 to vector<32x4xf32>
    %317 = arith.subf %316, %315 : vector<32x4xf32>
    %318 = math.exp %317 : vector<32x4xf32>
    %cst_107 = arith.constant 1.000000e+00 : f32
    %319 = vector.broadcast %cst_107 : f32 to vector<32x4xf32>
    %320 = arith.addf %319, %318 : vector<32x4xf32>
    %321 = tpu.reciprocal %320 {approx = true} : vector<32x4xf32> -> vector<32x4xf32>
    %322 = tpu.concatenate %321, %321, %321 in 0 : vector<32x4xf32>, vector<32x4xf32>, vector<32x4xf32> -> vector<96x4xf32>
    %323 = arith.mulf %304, %322 : vector<96x4xf32>
    %cst_108 = arith.constant 0.000000e+00 : f32
    %324 = vector.broadcast %cst_108 : f32 to vector<32x16xf32>
    %325 = arith.maximumf %300, %324 : vector<32x16xf32>
    %c232 = arith.constant 232 : index
    %c0_109 = arith.constant 0 : index
    %326 = vector.load %arg10[%c232, %c0_109] : memref<1216x256xf32, #tpu.memory_space<vmem>>, vector<4x4xf32>
    %327 = arith.truncf %323 : vector<96x4xf32> to vector<96x4xbf16>
    %328 = arith.truncf %326 : vector<4x4xf32> to vector<4x4xbf16>
    %cst_110 = arith.constant dense<0.000000e+00> : vector<96x4xf32>
    %329 = tpu.matmul %327, %328, %cst_110 {dimension_numbers = #tpu.dot_dimension_numbers<[1], [0], [0], [1], [0, 0, 1, 1], [], []>} : vector<96x4xbf16>, vector<4x4xbf16>, vector<96x4xf32> -> vector<96x4xf32>
    %330 = vector.extract_strided_slice %329 {offsets = [0, 0], sizes = [32, 4], strides = [1, 1]} : vector<96x4xf32> to vector<32x4xf32>
    %331 = vector.extract_strided_slice %329 {offsets = [32, 0], sizes = [32, 4], strides = [1, 1]} : vector<96x4xf32> to vector<32x4xf32>
    %332 = vector.extract_strided_slice %329 {offsets = [64, 0], sizes = [32, 4], strides = [1, 1]} : vector<96x4xf32> to vector<32x4xf32>
    %333 = arith.mulf %330, %330 : vector<32x4xf32>
    %334 = arith.mulf %331, %331 : vector<32x4xf32>
    %335 = arith.addf %333, %334 : vector<32x4xf32>
    %336 = arith.mulf %332, %332 : vector<32x4xf32>
    %337 = arith.addf %335, %336 : vector<32x4xf32>
    %cst_111 = arith.constant 9.99999993E-9 : f32
    %338 = vector.broadcast %cst_111 : f32 to vector<32x4xf32>
    %339 = arith.maximumf %337, %338 : vector<32x4xf32>
    %340 = math.sqrt %339 : vector<32x4xf32>
    %c240 = arith.constant 240 : index
    %c0_112 = arith.constant 0 : index
    %341 = vector.load %arg10[%c240, %c0_112] : memref<1216x256xf32, #tpu.memory_space<vmem>>, vector<1x16xf32>
    %c248 = arith.constant 248 : index
    %c0_113 = arith.constant 0 : index
    %342 = vector.load %arg10[%c248, %c0_113] : memref<1216x256xf32, #tpu.memory_space<vmem>>, vector<4x16xf32>
    %343 = arith.truncf %340 : vector<32x4xf32> to vector<32x4xbf16>
    %344 = arith.truncf %342 : vector<4x16xf32> to vector<4x16xbf16>
    %cst_114 = arith.constant dense<0.000000e+00> : vector<32x16xf32>
    %345 = tpu.matmul %343, %344, %cst_114 {dimension_numbers = #tpu.dot_dimension_numbers<[1], [0], [0], [1], [0, 0, 1, 1], [], []>} : vector<32x4xbf16>, vector<4x16xbf16>, vector<32x16xf32> -> vector<32x16xf32>
    %346 = vector.broadcast %341 : vector<1x16xf32> to vector<32x16xf32>
    %347 = arith.addf %346, %345 : vector<32x16xf32>
    %c256 = arith.constant 256 : index
    %c0_115 = arith.constant 0 : index
    %348 = vector.load %arg10[%c256, %c0_115] : memref<1216x256xf32, #tpu.memory_space<vmem>>, vector<16x16xf32>
    %349 = arith.truncf %325 : vector<32x16xf32> to vector<32x16xbf16>
    %350 = arith.truncf %348 : vector<16x16xf32> to vector<16x16xbf16>
    %cst_116 = arith.constant dense<0.000000e+00> : vector<32x16xf32>
    %351 = tpu.matmul %349, %350, %cst_116 {dimension_numbers = #tpu.dot_dimension_numbers<[1], [0], [0], [1], [0, 0, 1, 1], [], []>} : vector<32x16xbf16>, vector<16x16xbf16>, vector<32x16xf32> -> vector<32x16xf32>
    %352 = arith.addf %347, %351 : vector<32x16xf32>
    %c272 = arith.constant 272 : index
    %c0_117 = arith.constant 0 : index
    %353 = vector.load %arg10[%c272, %c0_117] : memref<1216x256xf32, #tpu.memory_space<vmem>>, vector<4x4xf32>
    %354 = arith.truncf %329 : vector<96x4xf32> to vector<96x4xbf16>
    %355 = arith.truncf %353 : vector<4x4xf32> to vector<4x4xbf16>
    %cst_118 = arith.constant dense<0.000000e+00> : vector<96x4xf32>
    %356 = tpu.matmul %354, %355, %cst_118 {dimension_numbers = #tpu.dot_dimension_numbers<[1], [0], [0], [1], [0, 0, 1, 1], [], []>} : vector<96x4xbf16>, vector<4x4xbf16>, vector<96x4xf32> -> vector<96x4xf32>
    %357 = arith.truncf %352 : vector<32x16xf32> to vector<32x16xbf16>
    %cst_119 = arith.constant dense<0.000000e+00> : vector<16x16xf32>
    %358 = tpu.matmul %22, %357, %cst_119 {dimension_numbers = #tpu.dot_dimension_numbers<[1], [0], [0], [1], [0, 0, 1, 1], [], []>} : vector<16x32xbf16>, vector<32x16xbf16>, vector<16x16xf32> -> vector<16x16xf32>
    %359 = vector.broadcast %27 : vector<16x1xf32> to vector<16x16xf32>
    %360 = arith.mulf %358, %359 : vector<16x16xf32>
    %361 = arith.addf %106, %360 : vector<16x16xf32>
    %362 = vector.extract_strided_slice %356 {offsets = [0, 0], sizes = [32, 4], strides = [1, 1]} : vector<96x4xf32> to vector<32x4xf32>
    %363 = vector.extract_strided_slice %356 {offsets = [32, 0], sizes = [32, 4], strides = [1, 1]} : vector<96x4xf32> to vector<32x4xf32>
    %364 = vector.extract_strided_slice %356 {offsets = [64, 0], sizes = [32, 4], strides = [1, 1]} : vector<96x4xf32> to vector<32x4xf32>
    %365 = arith.truncf %362 : vector<32x4xf32> to vector<32x4xbf16>
    %cst_120 = arith.constant dense<0.000000e+00> : vector<16x4xf32>
    %366 = tpu.matmul %22, %365, %cst_120 {dimension_numbers = #tpu.dot_dimension_numbers<[1], [0], [0], [1], [0, 0, 1, 1], [], []>} : vector<16x32xbf16>, vector<32x4xbf16>, vector<16x4xf32> -> vector<16x4xf32>
    %367 = vector.broadcast %27 : vector<16x1xf32> to vector<16x4xf32>
    %368 = arith.mulf %366, %367 : vector<16x4xf32>
    %369 = arith.truncf %363 : vector<32x4xf32> to vector<32x4xbf16>
    %cst_121 = arith.constant dense<0.000000e+00> : vector<16x4xf32>
    %370 = tpu.matmul %22, %369, %cst_121 {dimension_numbers = #tpu.dot_dimension_numbers<[1], [0], [0], [1], [0, 0, 1, 1], [], []>} : vector<16x32xbf16>, vector<32x4xbf16>, vector<16x4xf32> -> vector<16x4xf32>
    %371 = vector.broadcast %27 : vector<16x1xf32> to vector<16x4xf32>
    %372 = arith.mulf %370, %371 : vector<16x4xf32>
    %373 = arith.truncf %364 : vector<32x4xf32> to vector<32x4xbf16>
    %cst_122 = arith.constant dense<0.000000e+00> : vector<16x4xf32>
    %374 = tpu.matmul %22, %373, %cst_122 {dimension_numbers = #tpu.dot_dimension_numbers<[1], [0], [0], [1], [0, 0, 1, 1], [], []>} : vector<16x32xbf16>, vector<32x4xbf16>, vector<16x4xf32> -> vector<16x4xf32>
    %375 = vector.broadcast %27 : vector<16x1xf32> to vector<16x4xf32>
    %376 = arith.mulf %374, %375 : vector<16x4xf32>
    %377 = tpu.concatenate %368, %372, %376 in 0 : vector<16x4xf32>, vector<16x4xf32>, vector<16x4xf32> -> vector<48x4xf32>
    %378 = arith.addf %110, %377 : vector<48x4xf32>
    %cst_123 = arith.constant dense<0.000000e+00> : vector<16xf32>
    %379 = vector.multi_reduction <add>, %361, %cst_123 [1] : vector<16x16xf32> to vector<16xf32>
    %380 = vector.shape_cast %379 : vector<16xf32> to vector<16x1xf32>
    %cst_124 = arith.constant 1.600000e+01 : f32
    %381 = vector.broadcast %cst_124 : f32 to vector<16x1xf32>
    %382 = arith.divf %380, %381 : vector<16x1xf32>
    %383 = vector.broadcast %382 : vector<16x1xf32> to vector<16x16xf32>
    %384 = arith.subf %361, %383 : vector<16x16xf32>
    %385 = arith.mulf %384, %384 : vector<16x16xf32>
    %cst_125 = arith.constant dense<0.000000e+00> : vector<16xf32>
    %386 = vector.multi_reduction <add>, %385, %cst_125 [1] : vector<16x16xf32> to vector<16xf32>
    %387 = vector.shape_cast %386 : vector<16xf32> to vector<16x1xf32>
    %cst_126 = arith.constant 1.600000e+01 : f32
    %388 = vector.broadcast %cst_126 : f32 to vector<16x1xf32>
    %389 = arith.divf %387, %388 : vector<16x1xf32>
    %cst_127 = arith.constant 9.99999974E-6 : f32
    %390 = vector.broadcast %cst_127 : f32 to vector<16x1xf32>
    %391 = arith.addf %389, %390 : vector<16x1xf32>
    %392 = math.rsqrt %391 : vector<16x1xf32>
    %393 = vector.broadcast %392 : vector<16x1xf32> to vector<16x16xf32>
    %394 = arith.mulf %384, %393 : vector<16x16xf32>
    %c432 = arith.constant 432 : index
    %c0_128 = arith.constant 0 : index
    %395 = vector.load %arg10[%c432, %c0_128] : memref<1216x256xf32, #tpu.memory_space<vmem>>, vector<1x16xf32>
    %396 = vector.broadcast %395 : vector<1x16xf32> to vector<16x16xf32>
    %397 = arith.mulf %394, %396 : vector<16x16xf32>
    %c424 = arith.constant 424 : index
    %c0_129 = arith.constant 0 : index
    %398 = vector.load %arg10[%c424, %c0_129] : memref<1216x256xf32, #tpu.memory_space<vmem>>, vector<1x16xf32>
    %399 = vector.broadcast %398 : vector<1x16xf32> to vector<16x16xf32>
    %400 = arith.addf %397, %399 : vector<16x16xf32>
    %401 = vector.extract_strided_slice %378 {offsets = [0, 0], sizes = [16, 4], strides = [1, 1]} : vector<48x4xf32> to vector<16x4xf32>
    %402 = vector.extract_strided_slice %378 {offsets = [16, 0], sizes = [16, 4], strides = [1, 1]} : vector<48x4xf32> to vector<16x4xf32>
    %403 = vector.extract_strided_slice %378 {offsets = [32, 0], sizes = [16, 4], strides = [1, 1]} : vector<48x4xf32> to vector<16x4xf32>
    %404 = arith.mulf %401, %401 : vector<16x4xf32>
    %405 = arith.mulf %402, %402 : vector<16x4xf32>
    %406 = arith.addf %404, %405 : vector<16x4xf32>
    %407 = arith.mulf %403, %403 : vector<16x4xf32>
    %408 = arith.addf %406, %407 : vector<16x4xf32>
    %cst_130 = arith.constant 9.99999993E-9 : f32
    %409 = vector.broadcast %cst_130 : f32 to vector<16x4xf32>
    %410 = arith.maximumf %408, %409 : vector<16x4xf32>
    %cst_131 = arith.constant dense<0.000000e+00> : vector<16xf32>
    %411 = vector.multi_reduction <add>, %410, %cst_131 [1] : vector<16x4xf32> to vector<16xf32>
    %412 = vector.shape_cast %411 : vector<16xf32> to vector<16x1xf32>
    %cst_132 = arith.constant 4.000000e+00 : f32
    %413 = vector.broadcast %cst_132 : f32 to vector<16x1xf32>
    %414 = arith.divf %412, %413 : vector<16x1xf32>
    %415 = math.rsqrt %414 : vector<16x1xf32>
    %416 = tpu.concatenate %415, %415, %415 in 0 : vector<16x1xf32>, vector<16x1xf32>, vector<16x1xf32> -> vector<48x1xf32>
    %417 = vector.broadcast %416 : vector<48x1xf32> to vector<48x4xf32>
    %418 = arith.mulf %378, %417 : vector<48x4xf32>
    %c280 = arith.constant 280 : index
    %c0_133 = arith.constant 0 : index
    %419 = vector.load %arg10[%c280, %c0_133] : memref<1216x256xf32, #tpu.memory_space<vmem>>, vector<4x8xf32>
    %420 = arith.truncf %418 : vector<48x4xf32> to vector<48x4xbf16>
    %421 = arith.truncf %419 : vector<4x8xf32> to vector<4x8xbf16>
    %cst_134 = arith.constant dense<0.000000e+00> : vector<48x8xf32>
    %422 = tpu.matmul %420, %421, %cst_134 {dimension_numbers = #tpu.dot_dimension_numbers<[1], [0], [0], [1], [0, 0, 1, 1], [], []>} : vector<48x4xbf16>, vector<4x8xbf16>, vector<48x8xf32> -> vector<48x8xf32>
    %423 = vector.extract_strided_slice %422 {offsets = [0, 0], sizes = [16, 8], strides = [1, 1]} : vector<48x8xf32> to vector<16x8xf32>
    %424 = vector.extract_strided_slice %422 {offsets = [16, 0], sizes = [16, 8], strides = [1, 1]} : vector<48x8xf32> to vector<16x8xf32>
    %425 = vector.extract_strided_slice %422 {offsets = [32, 0], sizes = [16, 8], strides = [1, 1]} : vector<48x8xf32> to vector<16x8xf32>
    %426 = arith.mulf %423, %423 : vector<16x8xf32>
    %427 = arith.mulf %424, %424 : vector<16x8xf32>
    %428 = arith.addf %426, %427 : vector<16x8xf32>
    %429 = arith.mulf %425, %425 : vector<16x8xf32>
    %430 = arith.addf %428, %429 : vector<16x8xf32>
    %cst_135 = arith.constant 9.99999993E-9 : f32
    %431 = vector.broadcast %cst_135 : f32 to vector<16x8xf32>
    %432 = arith.maximumf %430, %431 : vector<16x8xf32>
    %433 = math.sqrt %432 : vector<16x8xf32>
    %c288 = arith.constant 288 : index
    %c0_136 = arith.constant 0 : index
    %434 = vector.load %arg10[%c288, %c0_136] : memref<1216x256xf32, #tpu.memory_space<vmem>>, vector<1x64xf32>
    %c296 = arith.constant 296 : index
    %c0_137 = arith.constant 0 : index
    %435 = vector.load %arg10[%c296, %c0_137] : memref<1216x256xf32, #tpu.memory_space<vmem>>, vector<8x64xf32>
    %436 = arith.truncf %433 : vector<16x8xf32> to vector<16x8xbf16>
    %437 = arith.truncf %435 : vector<8x64xf32> to vector<8x64xbf16>
    %cst_138 = arith.constant dense<0.000000e+00> : vector<16x64xf32>
    %438 = tpu.matmul %436, %437, %cst_138 {dimension_numbers = #tpu.dot_dimension_numbers<[1], [0], [0], [1], [0, 0, 1, 1], [], []>} : vector<16x8xbf16>, vector<8x64xbf16>, vector<16x64xf32> -> vector<16x64xf32>
    %439 = vector.broadcast %434 : vector<1x64xf32> to vector<16x64xf32>
    %440 = arith.addf %439, %438 : vector<16x64xf32>
    %c304 = arith.constant 304 : index
    %c0_139 = arith.constant 0 : index
    %441 = vector.load %arg10[%c304, %c0_139] : memref<1216x256xf32, #tpu.memory_space<vmem>>, vector<16x64xf32>
    %442 = arith.truncf %400 : vector<16x16xf32> to vector<16x16xbf16>
    %443 = arith.truncf %441 : vector<16x64xf32> to vector<16x64xbf16>
    %cst_140 = arith.constant dense<0.000000e+00> : vector<16x64xf32>
    %444 = tpu.matmul %442, %443, %cst_140 {dimension_numbers = #tpu.dot_dimension_numbers<[1], [0], [0], [1], [0, 0, 1, 1], [], []>} : vector<16x16xbf16>, vector<16x64xbf16>, vector<16x64xf32> -> vector<16x64xf32>
    %445 = arith.addf %440, %444 : vector<16x64xf32>
    %c320 = arith.constant 320 : index
    %c0_141 = arith.constant 0 : index
    %446 = vector.load %arg10[%c320, %c0_141] : memref<1216x256xf32, #tpu.memory_space<vmem>>, vector<8x8xf32>
    %447 = arith.truncf %422 : vector<48x8xf32> to vector<48x8xbf16>
    %448 = arith.truncf %446 : vector<8x8xf32> to vector<8x8xbf16>
    %cst_142 = arith.constant dense<0.000000e+00> : vector<48x8xf32>
    %449 = tpu.matmul %447, %448, %cst_142 {dimension_numbers = #tpu.dot_dimension_numbers<[1], [0], [0], [1], [0, 0, 1, 1], [], []>} : vector<48x8xbf16>, vector<8x8xbf16>, vector<48x8xf32> -> vector<48x8xf32>
    %450 = vector.extract_strided_slice %449 {offsets = [0, 0], sizes = [16, 8], strides = [1, 1]} : vector<48x8xf32> to vector<16x8xf32>
    %451 = vector.extract_strided_slice %449 {offsets = [16, 0], sizes = [16, 8], strides = [1, 1]} : vector<48x8xf32> to vector<16x8xf32>
    %452 = vector.extract_strided_slice %449 {offsets = [32, 0], sizes = [16, 8], strides = [1, 1]} : vector<48x8xf32> to vector<16x8xf32>
    %453 = arith.mulf %450, %450 : vector<16x8xf32>
    %454 = arith.mulf %451, %451 : vector<16x8xf32>
    %455 = arith.addf %453, %454 : vector<16x8xf32>
    %456 = arith.mulf %452, %452 : vector<16x8xf32>
    %457 = arith.addf %455, %456 : vector<16x8xf32>
    %cst_143 = arith.constant 9.99999993E-9 : f32
    %458 = vector.broadcast %cst_143 : f32 to vector<16x8xf32>
    %459 = arith.maximumf %457, %458 : vector<16x8xf32>
    %460 = math.sqrt %459 : vector<16x8xf32>
    %cst_144 = arith.constant 0.000000e+00 : f32
    %461 = vector.broadcast %cst_144 : f32 to vector<16x8xf32>
    %462 = arith.subf %461, %460 : vector<16x8xf32>
    %463 = math.exp %462 : vector<16x8xf32>
    %cst_145 = arith.constant 1.000000e+00 : f32
    %464 = vector.broadcast %cst_145 : f32 to vector<16x8xf32>
    %465 = arith.addf %464, %463 : vector<16x8xf32>
    %466 = tpu.reciprocal %465 {approx = true} : vector<16x8xf32> -> vector<16x8xf32>
    %467 = tpu.concatenate %466, %466, %466 in 0 : vector<16x8xf32>, vector<16x8xf32>, vector<16x8xf32> -> vector<48x8xf32>
    %468 = arith.mulf %449, %467 : vector<48x8xf32>
    %cst_146 = arith.constant 0.000000e+00 : f32
    %469 = vector.broadcast %cst_146 : f32 to vector<16x64xf32>
    %470 = arith.maximumf %445, %469 : vector<16x64xf32>
    %c328 = arith.constant 328 : index
    %c0_147 = arith.constant 0 : index
    %471 = vector.load %arg10[%c328, %c0_147] : memref<1216x256xf32, #tpu.memory_space<vmem>>, vector<8x8xf32>
    %472 = arith.truncf %468 : vector<48x8xf32> to vector<48x8xbf16>
    %473 = arith.truncf %471 : vector<8x8xf32> to vector<8x8xbf16>
    %cst_148 = arith.constant dense<0.000000e+00> : vector<48x8xf32>
    %474 = tpu.matmul %472, %473, %cst_148 {dimension_numbers = #tpu.dot_dimension_numbers<[1], [0], [0], [1], [0, 0, 1, 1], [], []>} : vector<48x8xbf16>, vector<8x8xbf16>, vector<48x8xf32> -> vector<48x8xf32>
    %475 = vector.extract_strided_slice %474 {offsets = [0, 0], sizes = [16, 8], strides = [1, 1]} : vector<48x8xf32> to vector<16x8xf32>
    %476 = vector.extract_strided_slice %474 {offsets = [16, 0], sizes = [16, 8], strides = [1, 1]} : vector<48x8xf32> to vector<16x8xf32>
    %477 = vector.extract_strided_slice %474 {offsets = [32, 0], sizes = [16, 8], strides = [1, 1]} : vector<48x8xf32> to vector<16x8xf32>
    %478 = arith.mulf %475, %475 : vector<16x8xf32>
    %479 = arith.mulf %476, %476 : vector<16x8xf32>
    %480 = arith.addf %478, %479 : vector<16x8xf32>
    %481 = arith.mulf %477, %477 : vector<16x8xf32>
    %482 = arith.addf %480, %481 : vector<16x8xf32>
    %cst_149 = arith.constant 9.99999993E-9 : f32
    %483 = vector.broadcast %cst_149 : f32 to vector<16x8xf32>
    %484 = arith.maximumf %482, %483 : vector<16x8xf32>
    %485 = math.sqrt %484 : vector<16x8xf32>
    %c336 = arith.constant 336 : index
    %c0_150 = arith.constant 0 : index
    %486 = vector.load %arg10[%c336, %c0_150] : memref<1216x256xf32, #tpu.memory_space<vmem>>, vector<1x16xf32>
    %c344 = arith.constant 344 : index
    %c0_151 = arith.constant 0 : index
    %487 = vector.load %arg10[%c344, %c0_151] : memref<1216x256xf32, #tpu.memory_space<vmem>>, vector<8x16xf32>
    %488 = arith.truncf %485 : vector<16x8xf32> to vector<16x8xbf16>
    %489 = arith.truncf %487 : vector<8x16xf32> to vector<8x16xbf16>
    %cst_152 = arith.constant dense<0.000000e+00> : vector<16x16xf32>
    %490 = tpu.matmul %488, %489, %cst_152 {dimension_numbers = #tpu.dot_dimension_numbers<[1], [0], [0], [1], [0, 0, 1, 1], [], []>} : vector<16x8xbf16>, vector<8x16xbf16>, vector<16x16xf32> -> vector<16x16xf32>
    %491 = vector.broadcast %486 : vector<1x16xf32> to vector<16x16xf32>
    %492 = arith.addf %491, %490 : vector<16x16xf32>
    %c352 = arith.constant 352 : index
    %c0_153 = arith.constant 0 : index
    %493 = vector.load %arg10[%c352, %c0_153] : memref<1216x256xf32, #tpu.memory_space<vmem>>, vector<64x16xf32>
    %494 = arith.truncf %470 : vector<16x64xf32> to vector<16x64xbf16>
    %495 = arith.truncf %493 : vector<64x16xf32> to vector<64x16xbf16>
    %cst_154 = arith.constant dense<0.000000e+00> : vector<16x16xf32>
    %496 = tpu.matmul %494, %495, %cst_154 {dimension_numbers = #tpu.dot_dimension_numbers<[1], [0], [0], [1], [0, 0, 1, 1], [], []>} : vector<16x64xbf16>, vector<64x16xbf16>, vector<16x16xf32> -> vector<16x16xf32>
    %497 = arith.addf %492, %496 : vector<16x16xf32>
    %c416 = arith.constant 416 : index
    %c0_155 = arith.constant 0 : index
    %498 = vector.load %arg10[%c416, %c0_155] : memref<1216x256xf32, #tpu.memory_space<vmem>>, vector<8x4xf32>
    %499 = arith.truncf %474 : vector<48x8xf32> to vector<48x8xbf16>
    %500 = arith.truncf %498 : vector<8x4xf32> to vector<8x4xbf16>
    %cst_156 = arith.constant dense<0.000000e+00> : vector<48x4xf32>
    %501 = tpu.matmul %499, %500, %cst_156 {dimension_numbers = #tpu.dot_dimension_numbers<[1], [0], [0], [1], [0, 0, 1, 1], [], []>} : vector<48x8xbf16>, vector<8x4xbf16>, vector<48x4xf32> -> vector<48x4xf32>
    %502 = arith.addf %400, %497 : vector<16x16xf32>
    %503 = arith.addf %418, %501 : vector<48x4xf32>
    %cst_157 = arith.constant dense<0.000000e+00> : vector<16xf32>
    %504 = vector.multi_reduction <add>, %502, %cst_157 [1] : vector<16x16xf32> to vector<16xf32>
    %505 = vector.shape_cast %504 : vector<16xf32> to vector<16x1xf32>
    %cst_158 = arith.constant 1.600000e+01 : f32
    %506 = vector.broadcast %cst_158 : f32 to vector<16x1xf32>
    %507 = arith.divf %505, %506 : vector<16x1xf32>
    %508 = vector.broadcast %507 : vector<16x1xf32> to vector<16x16xf32>
    %509 = arith.subf %502, %508 : vector<16x16xf32>
    %510 = arith.mulf %509, %509 : vector<16x16xf32>
    %cst_159 = arith.constant dense<0.000000e+00> : vector<16xf32>
    %511 = vector.multi_reduction <add>, %510, %cst_159 [1] : vector<16x16xf32> to vector<16xf32>
    %512 = vector.shape_cast %511 : vector<16xf32> to vector<16x1xf32>
    %cst_160 = arith.constant 1.600000e+01 : f32
    %513 = vector.broadcast %cst_160 : f32 to vector<16x1xf32>
    %514 = arith.divf %512, %513 : vector<16x1xf32>
    %cst_161 = arith.constant 9.99999974E-6 : f32
    %515 = vector.broadcast %cst_161 : f32 to vector<16x1xf32>
    %516 = arith.addf %514, %515 : vector<16x1xf32>
    %517 = math.rsqrt %516 : vector<16x1xf32>
    %518 = vector.broadcast %517 : vector<16x1xf32> to vector<16x16xf32>
    %519 = arith.mulf %509, %518 : vector<16x16xf32>
    %c448 = arith.constant 448 : index
    %c0_162 = arith.constant 0 : index
    %520 = vector.load %arg10[%c448, %c0_162] : memref<1216x256xf32, #tpu.memory_space<vmem>>, vector<1x16xf32>
    %521 = vector.broadcast %520 : vector<1x16xf32> to vector<16x16xf32>
    %522 = arith.mulf %519, %521 : vector<16x16xf32>
    %c440 = arith.constant 440 : index
    %c0_163 = arith.constant 0 : index
    %523 = vector.load %arg10[%c440, %c0_163] : memref<1216x256xf32, #tpu.memory_space<vmem>>, vector<1x16xf32>
    %524 = vector.broadcast %523 : vector<1x16xf32> to vector<16x16xf32>
    %525 = arith.addf %522, %524 : vector<16x16xf32>
    %526 = vector.extract_strided_slice %503 {offsets = [0, 0], sizes = [16, 4], strides = [1, 1]} : vector<48x4xf32> to vector<16x4xf32>
    %527 = vector.extract_strided_slice %503 {offsets = [16, 0], sizes = [16, 4], strides = [1, 1]} : vector<48x4xf32> to vector<16x4xf32>
    %528 = vector.extract_strided_slice %503 {offsets = [32, 0], sizes = [16, 4], strides = [1, 1]} : vector<48x4xf32> to vector<16x4xf32>
    %529 = arith.mulf %526, %526 : vector<16x4xf32>
    %530 = arith.mulf %527, %527 : vector<16x4xf32>
    %531 = arith.addf %529, %530 : vector<16x4xf32>
    %532 = arith.mulf %528, %528 : vector<16x4xf32>
    %533 = arith.addf %531, %532 : vector<16x4xf32>
    %cst_164 = arith.constant 9.99999993E-9 : f32
    %534 = vector.broadcast %cst_164 : f32 to vector<16x4xf32>
    %535 = arith.maximumf %533, %534 : vector<16x4xf32>
    %cst_165 = arith.constant dense<0.000000e+00> : vector<16xf32>
    %536 = vector.multi_reduction <add>, %535, %cst_165 [1] : vector<16x4xf32> to vector<16xf32>
    %537 = vector.shape_cast %536 : vector<16xf32> to vector<16x1xf32>
    %cst_166 = arith.constant 4.000000e+00 : f32
    %538 = vector.broadcast %cst_166 : f32 to vector<16x1xf32>
    %539 = arith.divf %537, %538 : vector<16x1xf32>
    %540 = math.rsqrt %539 : vector<16x1xf32>
    %541 = tpu.concatenate %540, %540, %540 in 0 : vector<16x1xf32>, vector<16x1xf32>, vector<16x1xf32> -> vector<48x1xf32>
    %542 = vector.broadcast %541 : vector<48x1xf32> to vector<48x4xf32>
    %543 = arith.mulf %503, %542 : vector<48x4xf32>
    %544 = arith.truncf %525 : vector<16x16xf32> to vector<16x16xbf16>
    %cst_167 = arith.constant dense<0.000000e+00> : vector<32x16xf32>
    %545 = tpu.matmul %7, %544, %cst_167 {dimension_numbers = #tpu.dot_dimension_numbers<[1], [0], [0], [1], [0, 0, 1, 1], [], []>} : vector<32x16xbf16>, vector<16x16xbf16>, vector<32x16xf32> -> vector<32x16xf32>
    %546 = arith.truncf %525 : vector<16x16xf32> to vector<16x16xbf16>
    %cst_168 = arith.constant dense<0.000000e+00> : vector<32x16xf32>
    %547 = tpu.matmul %14, %546, %cst_168 {dimension_numbers = #tpu.dot_dimension_numbers<[1], [0], [0], [1], [0, 0, 1, 1], [], []>} : vector<32x16xbf16>, vector<16x16xbf16>, vector<32x16xf32> -> vector<32x16xf32>
    %548 = vector.extract_strided_slice %543 {offsets = [0, 0], sizes = [16, 4], strides = [1, 1]} : vector<48x4xf32> to vector<16x4xf32>
    %549 = vector.extract_strided_slice %543 {offsets = [16, 0], sizes = [16, 4], strides = [1, 1]} : vector<48x4xf32> to vector<16x4xf32>
    %550 = vector.extract_strided_slice %543 {offsets = [32, 0], sizes = [16, 4], strides = [1, 1]} : vector<48x4xf32> to vector<16x4xf32>
    %551 = arith.truncf %548 : vector<16x4xf32> to vector<16x4xbf16>
    %cst_169 = arith.constant dense<0.000000e+00> : vector<32x4xf32>
    %552 = tpu.matmul %7, %551, %cst_169 {dimension_numbers = #tpu.dot_dimension_numbers<[1], [0], [0], [1], [0, 0, 1, 1], [], []>} : vector<32x16xbf16>, vector<16x4xbf16>, vector<32x4xf32> -> vector<32x4xf32>
    %553 = arith.truncf %549 : vector<16x4xf32> to vector<16x4xbf16>
    %cst_170 = arith.constant dense<0.000000e+00> : vector<32x4xf32>
    %554 = tpu.matmul %7, %553, %cst_170 {dimension_numbers = #tpu.dot_dimension_numbers<[1], [0], [0], [1], [0, 0, 1, 1], [], []>} : vector<32x16xbf16>, vector<16x4xbf16>, vector<32x4xf32> -> vector<32x4xf32>
    %555 = arith.truncf %550 : vector<16x4xf32> to vector<16x4xbf16>
    %cst_171 = arith.constant dense<0.000000e+00> : vector<32x4xf32>
    %556 = tpu.matmul %7, %555, %cst_171 {dimension_numbers = #tpu.dot_dimension_numbers<[1], [0], [0], [1], [0, 0, 1, 1], [], []>} : vector<32x16xbf16>, vector<16x4xbf16>, vector<32x4xf32> -> vector<32x4xf32>
    %557 = tpu.concatenate %552, %554, %556 in 0 : vector<32x4xf32>, vector<32x4xf32>, vector<32x4xf32> -> vector<96x4xf32>
    %558 = arith.truncf %548 : vector<16x4xf32> to vector<16x4xbf16>
    %cst_172 = arith.constant dense<0.000000e+00> : vector<32x4xf32>
    %559 = tpu.matmul %14, %558, %cst_172 {dimension_numbers = #tpu.dot_dimension_numbers<[1], [0], [0], [1], [0, 0, 1, 1], [], []>} : vector<32x16xbf16>, vector<16x4xbf16>, vector<32x4xf32> -> vector<32x4xf32>
    %560 = arith.truncf %549 : vector<16x4xf32> to vector<16x4xbf16>
    %cst_173 = arith.constant dense<0.000000e+00> : vector<32x4xf32>
    %561 = tpu.matmul %14, %560, %cst_173 {dimension_numbers = #tpu.dot_dimension_numbers<[1], [0], [0], [1], [0, 0, 1, 1], [], []>} : vector<32x16xbf16>, vector<16x4xbf16>, vector<32x4xf32> -> vector<32x4xf32>
    %562 = arith.truncf %550 : vector<16x4xf32> to vector<16x4xbf16>
    %cst_174 = arith.constant dense<0.000000e+00> : vector<32x4xf32>
    %563 = tpu.matmul %14, %562, %cst_174 {dimension_numbers = #tpu.dot_dimension_numbers<[1], [0], [0], [1], [0, 0, 1, 1], [], []>} : vector<32x16xbf16>, vector<16x4xbf16>, vector<32x4xf32> -> vector<32x4xf32>
    %564 = tpu.concatenate %559, %561, %563 in 0 : vector<32x4xf32>, vector<32x4xf32>, vector<32x4xf32> -> vector<96x4xf32>
    %c456 = arith.constant 456 : index
    %c0_175 = arith.constant 0 : index
    %565 = vector.load %arg10[%c456, %c0_175] : memref<1216x256xf32, #tpu.memory_space<vmem>>, vector<4x10xf32>
    %566 = arith.truncf %557 : vector<96x4xf32> to vector<96x4xbf16>
    %567 = arith.truncf %565 : vector<4x10xf32> to vector<4x10xbf16>
    %cst_176 = arith.constant dense<0.000000e+00> : vector<96x10xf32>
    %568 = tpu.matmul %566, %567, %cst_176 {dimension_numbers = #tpu.dot_dimension_numbers<[1], [0], [0], [1], [0, 0, 1, 1], [], []>} : vector<96x4xbf16>, vector<4x10xbf16>, vector<96x10xf32> -> vector<96x10xf32>
    %c464 = arith.constant 464 : index
    %c0_177 = arith.constant 0 : index
    %569 = vector.load %arg10[%c464, %c0_177] : memref<1216x256xf32, #tpu.memory_space<vmem>>, vector<2x10xf32>
    %570 = arith.truncf %180 : vector<96x2xf32> to vector<96x2xbf16>
    %571 = arith.truncf %569 : vector<2x10xf32> to vector<2x10xbf16>
    %cst_178 = arith.constant dense<0.000000e+00> : vector<96x10xf32>
    %572 = tpu.matmul %570, %571, %cst_178 {dimension_numbers = #tpu.dot_dimension_numbers<[1], [0], [0], [1], [0, 0, 1, 1], [], []>} : vector<96x2xbf16>, vector<2x10xbf16>, vector<96x10xf32> -> vector<96x10xf32>
    %573 = arith.addf %568, %572 : vector<96x10xf32>
    %c472 = arith.constant 472 : index
    %c0_179 = arith.constant 0 : index
    %574 = vector.load %arg10[%c472, %c0_179] : memref<1216x256xf32, #tpu.memory_space<vmem>>, vector<4x10xf32>
    %575 = arith.truncf %564 : vector<96x4xf32> to vector<96x4xbf16>
    %576 = arith.truncf %574 : vector<4x10xf32> to vector<4x10xbf16>
    %cst_180 = arith.constant dense<0.000000e+00> : vector<96x10xf32>
    %577 = tpu.matmul %575, %576, %cst_180 {dimension_numbers = #tpu.dot_dimension_numbers<[1], [0], [0], [1], [0, 0, 1, 1], [], []>} : vector<96x4xbf16>, vector<4x10xbf16>, vector<96x10xf32> -> vector<96x10xf32>
    %578 = arith.addf %573, %577 : vector<96x10xf32>
    %579 = vector.extract_strided_slice %578 {offsets = [0, 0], sizes = [32, 10], strides = [1, 1]} : vector<96x10xf32> to vector<32x10xf32>
    %580 = vector.extract_strided_slice %578 {offsets = [32, 0], sizes = [32, 10], strides = [1, 1]} : vector<96x10xf32> to vector<32x10xf32>
    %581 = vector.extract_strided_slice %578 {offsets = [64, 0], sizes = [32, 10], strides = [1, 1]} : vector<96x10xf32> to vector<32x10xf32>
    %582 = arith.mulf %579, %579 : vector<32x10xf32>
    %583 = arith.mulf %580, %580 : vector<32x10xf32>
    %584 = arith.addf %582, %583 : vector<32x10xf32>
    %585 = arith.mulf %581, %581 : vector<32x10xf32>
    %586 = arith.addf %584, %585 : vector<32x10xf32>
    %cst_181 = arith.constant 9.99999993E-9 : f32
    %587 = vector.broadcast %cst_181 : f32 to vector<32x10xf32>
    %588 = arith.maximumf %586, %587 : vector<32x10xf32>
    %589 = math.sqrt %588 : vector<32x10xf32>
    %c480 = arith.constant 480 : index
    %c0_182 = arith.constant 0 : index
    %590 = vector.load %arg10[%c480, %c0_182] : memref<1216x256xf32, #tpu.memory_space<vmem>>, vector<1x16xf32>
    %c488 = arith.constant 488 : index
    %c0_183 = arith.constant 0 : index
    %591 = vector.load %arg10[%c488, %c0_183] : memref<1216x256xf32, #tpu.memory_space<vmem>>, vector<10x16xf32>
    %592 = arith.truncf %589 : vector<32x10xf32> to vector<32x10xbf16>
    %593 = arith.truncf %591 : vector<10x16xf32> to vector<10x16xbf16>
    %cst_184 = arith.constant dense<0.000000e+00> : vector<32x16xf32>
    %594 = tpu.matmul %592, %593, %cst_184 {dimension_numbers = #tpu.dot_dimension_numbers<[1], [0], [0], [1], [0, 0, 1, 1], [], []>} : vector<32x10xbf16>, vector<10x16xbf16>, vector<32x16xf32> -> vector<32x16xf32>
    %595 = vector.broadcast %590 : vector<1x16xf32> to vector<32x16xf32>
    %596 = arith.addf %595, %594 : vector<32x16xf32>
    %c504 = arith.constant 504 : index
    %c0_185 = arith.constant 0 : index
    %597 = vector.load %arg10[%c504, %c0_185] : memref<1216x256xf32, #tpu.memory_space<vmem>>, vector<16x16xf32>
    %598 = arith.truncf %545 : vector<32x16xf32> to vector<32x16xbf16>
    %599 = arith.truncf %597 : vector<16x16xf32> to vector<16x16xbf16>
    %cst_186 = arith.constant dense<0.000000e+00> : vector<32x16xf32>
    %600 = tpu.matmul %598, %599, %cst_186 {dimension_numbers = #tpu.dot_dimension_numbers<[1], [0], [0], [1], [0, 0, 1, 1], [], []>} : vector<32x16xbf16>, vector<16x16xbf16>, vector<32x16xf32> -> vector<32x16xf32>
    %601 = arith.addf %596, %600 : vector<32x16xf32>
    %c520 = arith.constant 520 : index
    %c0_187 = arith.constant 0 : index
    %602 = vector.load %arg10[%c520, %c0_187] : memref<1216x256xf32, #tpu.memory_space<vmem>>, vector<8x16xf32>
    %603 = arith.truncf %176 : vector<32x8xf32> to vector<32x8xbf16>
    %604 = arith.truncf %602 : vector<8x16xf32> to vector<8x16xbf16>
    %cst_188 = arith.constant dense<0.000000e+00> : vector<32x16xf32>
    %605 = tpu.matmul %603, %604, %cst_188 {dimension_numbers = #tpu.dot_dimension_numbers<[1], [0], [0], [1], [0, 0, 1, 1], [], []>} : vector<32x8xbf16>, vector<8x16xbf16>, vector<32x16xf32> -> vector<32x16xf32>
    %606 = arith.addf %601, %605 : vector<32x16xf32>
    %c528 = arith.constant 528 : index
    %c0_189 = arith.constant 0 : index
    %607 = vector.load %arg10[%c528, %c0_189] : memref<1216x256xf32, #tpu.memory_space<vmem>>, vector<16x16xf32>
    %608 = arith.truncf %547 : vector<32x16xf32> to vector<32x16xbf16>
    %609 = arith.truncf %607 : vector<16x16xf32> to vector<16x16xbf16>
    %cst_190 = arith.constant dense<0.000000e+00> : vector<32x16xf32>
    %610 = tpu.matmul %608, %609, %cst_190 {dimension_numbers = #tpu.dot_dimension_numbers<[1], [0], [0], [1], [0, 0, 1, 1], [], []>} : vector<32x16xbf16>, vector<16x16xbf16>, vector<32x16xf32> -> vector<32x16xf32>
    %611 = arith.addf %606, %610 : vector<32x16xf32>
    %c544 = arith.constant 544 : index
    %c0_191 = arith.constant 0 : index
    %612 = vector.load %arg10[%c544, %c0_191] : memref<1216x256xf32, #tpu.memory_space<vmem>>, vector<10x4xf32>
    %613 = arith.truncf %578 : vector<96x10xf32> to vector<96x10xbf16>
    %614 = arith.truncf %612 : vector<10x4xf32> to vector<10x4xbf16>
    %cst_192 = arith.constant dense<0.000000e+00> : vector<96x4xf32>
    %615 = tpu.matmul %613, %614, %cst_192 {dimension_numbers = #tpu.dot_dimension_numbers<[1], [0], [0], [1], [0, 0, 1, 1], [], []>} : vector<96x10xbf16>, vector<10x4xbf16>, vector<96x4xf32> -> vector<96x4xf32>
    %616 = vector.extract_strided_slice %615 {offsets = [0, 0], sizes = [32, 4], strides = [1, 1]} : vector<96x4xf32> to vector<32x4xf32>
    %617 = vector.extract_strided_slice %615 {offsets = [32, 0], sizes = [32, 4], strides = [1, 1]} : vector<96x4xf32> to vector<32x4xf32>
    %618 = vector.extract_strided_slice %615 {offsets = [64, 0], sizes = [32, 4], strides = [1, 1]} : vector<96x4xf32> to vector<32x4xf32>
    %619 = arith.mulf %616, %616 : vector<32x4xf32>
    %620 = arith.mulf %617, %617 : vector<32x4xf32>
    %621 = arith.addf %619, %620 : vector<32x4xf32>
    %622 = arith.mulf %618, %618 : vector<32x4xf32>
    %623 = arith.addf %621, %622 : vector<32x4xf32>
    %cst_193 = arith.constant 9.99999993E-9 : f32
    %624 = vector.broadcast %cst_193 : f32 to vector<32x4xf32>
    %625 = arith.maximumf %623, %624 : vector<32x4xf32>
    %626 = math.sqrt %625 : vector<32x4xf32>
    %cst_194 = arith.constant 0.000000e+00 : f32
    %627 = vector.broadcast %cst_194 : f32 to vector<32x4xf32>
    %628 = arith.subf %627, %626 : vector<32x4xf32>
    %629 = math.exp %628 : vector<32x4xf32>
    %cst_195 = arith.constant 1.000000e+00 : f32
    %630 = vector.broadcast %cst_195 : f32 to vector<32x4xf32>
    %631 = arith.addf %630, %629 : vector<32x4xf32>
    %632 = tpu.reciprocal %631 {approx = true} : vector<32x4xf32> -> vector<32x4xf32>
    %633 = tpu.concatenate %632, %632, %632 in 0 : vector<32x4xf32>, vector<32x4xf32>, vector<32x4xf32> -> vector<96x4xf32>
    %634 = arith.mulf %615, %633 : vector<96x4xf32>
    %cst_196 = arith.constant 0.000000e+00 : f32
    %635 = vector.broadcast %cst_196 : f32 to vector<32x16xf32>
    %636 = arith.maximumf %611, %635 : vector<32x16xf32>
    %c560 = arith.constant 560 : index
    %c0_197 = arith.constant 0 : index
    %637 = vector.load %arg10[%c560, %c0_197] : memref<1216x256xf32, #tpu.memory_space<vmem>>, vector<4x4xf32>
    %638 = arith.truncf %634 : vector<96x4xf32> to vector<96x4xbf16>
    %639 = arith.truncf %637 : vector<4x4xf32> to vector<4x4xbf16>
    %cst_198 = arith.constant dense<0.000000e+00> : vector<96x4xf32>
    %640 = tpu.matmul %638, %639, %cst_198 {dimension_numbers = #tpu.dot_dimension_numbers<[1], [0], [0], [1], [0, 0, 1, 1], [], []>} : vector<96x4xbf16>, vector<4x4xbf16>, vector<96x4xf32> -> vector<96x4xf32>
    %641 = vector.extract_strided_slice %640 {offsets = [0, 0], sizes = [32, 4], strides = [1, 1]} : vector<96x4xf32> to vector<32x4xf32>
    %642 = vector.extract_strided_slice %640 {offsets = [32, 0], sizes = [32, 4], strides = [1, 1]} : vector<96x4xf32> to vector<32x4xf32>
    %643 = vector.extract_strided_slice %640 {offsets = [64, 0], sizes = [32, 4], strides = [1, 1]} : vector<96x4xf32> to vector<32x4xf32>
    %644 = arith.mulf %641, %641 : vector<32x4xf32>
    %645 = arith.mulf %642, %642 : vector<32x4xf32>
    %646 = arith.addf %644, %645 : vector<32x4xf32>
    %647 = arith.mulf %643, %643 : vector<32x4xf32>
    %648 = arith.addf %646, %647 : vector<32x4xf32>
    %cst_199 = arith.constant 9.99999993E-9 : f32
    %649 = vector.broadcast %cst_199 : f32 to vector<32x4xf32>
    %650 = arith.maximumf %648, %649 : vector<32x4xf32>
    %651 = math.sqrt %650 : vector<32x4xf32>
    %c568 = arith.constant 568 : index
    %c0_200 = arith.constant 0 : index
    %652 = vector.load %arg10[%c568, %c0_200] : memref<1216x256xf32, #tpu.memory_space<vmem>>, vector<1x16xf32>
    %c576 = arith.constant 576 : index
    %c0_201 = arith.constant 0 : index
    %653 = vector.load %arg10[%c576, %c0_201] : memref<1216x256xf32, #tpu.memory_space<vmem>>, vector<4x16xf32>
    %654 = arith.truncf %651 : vector<32x4xf32> to vector<32x4xbf16>
    %655 = arith.truncf %653 : vector<4x16xf32> to vector<4x16xbf16>
    %cst_202 = arith.constant dense<0.000000e+00> : vector<32x16xf32>
    %656 = tpu.matmul %654, %655, %cst_202 {dimension_numbers = #tpu.dot_dimension_numbers<[1], [0], [0], [1], [0, 0, 1, 1], [], []>} : vector<32x4xbf16>, vector<4x16xbf16>, vector<32x16xf32> -> vector<32x16xf32>
    %657 = vector.broadcast %652 : vector<1x16xf32> to vector<32x16xf32>
    %658 = arith.addf %657, %656 : vector<32x16xf32>
    %c584 = arith.constant 584 : index
    %c0_203 = arith.constant 0 : index
    %659 = vector.load %arg10[%c584, %c0_203] : memref<1216x256xf32, #tpu.memory_space<vmem>>, vector<16x16xf32>
    %660 = arith.truncf %636 : vector<32x16xf32> to vector<32x16xbf16>
    %661 = arith.truncf %659 : vector<16x16xf32> to vector<16x16xbf16>
    %cst_204 = arith.constant dense<0.000000e+00> : vector<32x16xf32>
    %662 = tpu.matmul %660, %661, %cst_204 {dimension_numbers = #tpu.dot_dimension_numbers<[1], [0], [0], [1], [0, 0, 1, 1], [], []>} : vector<32x16xbf16>, vector<16x16xbf16>, vector<32x16xf32> -> vector<32x16xf32>
    %663 = arith.addf %658, %662 : vector<32x16xf32>
    %c600 = arith.constant 600 : index
    %c0_205 = arith.constant 0 : index
    %664 = vector.load %arg10[%c600, %c0_205] : memref<1216x256xf32, #tpu.memory_space<vmem>>, vector<4x4xf32>
    %665 = arith.truncf %640 : vector<96x4xf32> to vector<96x4xbf16>
    %666 = arith.truncf %664 : vector<4x4xf32> to vector<4x4xbf16>
    %cst_206 = arith.constant dense<0.000000e+00> : vector<96x4xf32>
    %667 = tpu.matmul %665, %666, %cst_206 {dimension_numbers = #tpu.dot_dimension_numbers<[1], [0], [0], [1], [0, 0, 1, 1], [], []>} : vector<96x4xbf16>, vector<4x4xbf16>, vector<96x4xf32> -> vector<96x4xf32>
    %668 = vector.extract_strided_slice %667 {offsets = [0, 0], sizes = [32, 4], strides = [1, 1]} : vector<96x4xf32> to vector<32x4xf32>
    %669 = vector.extract_strided_slice %667 {offsets = [32, 0], sizes = [32, 4], strides = [1, 1]} : vector<96x4xf32> to vector<32x4xf32>
    %670 = vector.extract_strided_slice %667 {offsets = [64, 0], sizes = [32, 4], strides = [1, 1]} : vector<96x4xf32> to vector<32x4xf32>
    %671 = arith.mulf %668, %668 : vector<32x4xf32>
    %672 = arith.mulf %669, %669 : vector<32x4xf32>
    %673 = arith.addf %671, %672 : vector<32x4xf32>
    %674 = arith.mulf %670, %670 : vector<32x4xf32>
    %675 = arith.addf %673, %674 : vector<32x4xf32>
    %cst_207 = arith.constant 9.99999993E-9 : f32
    %676 = vector.broadcast %cst_207 : f32 to vector<32x4xf32>
    %677 = arith.maximumf %675, %676 : vector<32x4xf32>
    %678 = math.sqrt %677 : vector<32x4xf32>
    %cst_208 = arith.constant 0.000000e+00 : f32
    %679 = vector.broadcast %cst_208 : f32 to vector<32x4xf32>
    %680 = arith.subf %679, %678 : vector<32x4xf32>
    %681 = math.exp %680 : vector<32x4xf32>
    %cst_209 = arith.constant 1.000000e+00 : f32
    %682 = vector.broadcast %cst_209 : f32 to vector<32x4xf32>
    %683 = arith.addf %682, %681 : vector<32x4xf32>
    %684 = tpu.reciprocal %683 {approx = true} : vector<32x4xf32> -> vector<32x4xf32>
    %685 = tpu.concatenate %684, %684, %684 in 0 : vector<32x4xf32>, vector<32x4xf32>, vector<32x4xf32> -> vector<96x4xf32>
    %686 = arith.mulf %667, %685 : vector<96x4xf32>
    %cst_210 = arith.constant 0.000000e+00 : f32
    %687 = vector.broadcast %cst_210 : f32 to vector<32x16xf32>
    %688 = arith.maximumf %663, %687 : vector<32x16xf32>
    %c608 = arith.constant 608 : index
    %c0_211 = arith.constant 0 : index
    %689 = vector.load %arg10[%c608, %c0_211] : memref<1216x256xf32, #tpu.memory_space<vmem>>, vector<4x4xf32>
    %690 = arith.truncf %686 : vector<96x4xf32> to vector<96x4xbf16>
    %691 = arith.truncf %689 : vector<4x4xf32> to vector<4x4xbf16>
    %cst_212 = arith.constant dense<0.000000e+00> : vector<96x4xf32>
    %692 = tpu.matmul %690, %691, %cst_212 {dimension_numbers = #tpu.dot_dimension_numbers<[1], [0], [0], [1], [0, 0, 1, 1], [], []>} : vector<96x4xbf16>, vector<4x4xbf16>, vector<96x4xf32> -> vector<96x4xf32>
    %693 = vector.extract_strided_slice %692 {offsets = [0, 0], sizes = [32, 4], strides = [1, 1]} : vector<96x4xf32> to vector<32x4xf32>
    %694 = vector.extract_strided_slice %692 {offsets = [32, 0], sizes = [32, 4], strides = [1, 1]} : vector<96x4xf32> to vector<32x4xf32>
    %695 = vector.extract_strided_slice %692 {offsets = [64, 0], sizes = [32, 4], strides = [1, 1]} : vector<96x4xf32> to vector<32x4xf32>
    %696 = arith.mulf %693, %693 : vector<32x4xf32>
    %697 = arith.mulf %694, %694 : vector<32x4xf32>
    %698 = arith.addf %696, %697 : vector<32x4xf32>
    %699 = arith.mulf %695, %695 : vector<32x4xf32>
    %700 = arith.addf %698, %699 : vector<32x4xf32>
    %cst_213 = arith.constant 9.99999993E-9 : f32
    %701 = vector.broadcast %cst_213 : f32 to vector<32x4xf32>
    %702 = arith.maximumf %700, %701 : vector<32x4xf32>
    %703 = math.sqrt %702 : vector<32x4xf32>
    %c616 = arith.constant 616 : index
    %c0_214 = arith.constant 0 : index
    %704 = vector.load %arg10[%c616, %c0_214] : memref<1216x256xf32, #tpu.memory_space<vmem>>, vector<1x16xf32>
    %c624 = arith.constant 624 : index
    %c0_215 = arith.constant 0 : index
    %705 = vector.load %arg10[%c624, %c0_215] : memref<1216x256xf32, #tpu.memory_space<vmem>>, vector<4x16xf32>
    %706 = arith.truncf %703 : vector<32x4xf32> to vector<32x4xbf16>
    %707 = arith.truncf %705 : vector<4x16xf32> to vector<4x16xbf16>
    %cst_216 = arith.constant dense<0.000000e+00> : vector<32x16xf32>
    %708 = tpu.matmul %706, %707, %cst_216 {dimension_numbers = #tpu.dot_dimension_numbers<[1], [0], [0], [1], [0, 0, 1, 1], [], []>} : vector<32x4xbf16>, vector<4x16xbf16>, vector<32x16xf32> -> vector<32x16xf32>
    %709 = vector.broadcast %704 : vector<1x16xf32> to vector<32x16xf32>
    %710 = arith.addf %709, %708 : vector<32x16xf32>
    %c632 = arith.constant 632 : index
    %c0_217 = arith.constant 0 : index
    %711 = vector.load %arg10[%c632, %c0_217] : memref<1216x256xf32, #tpu.memory_space<vmem>>, vector<16x16xf32>
    %712 = arith.truncf %688 : vector<32x16xf32> to vector<32x16xbf16>
    %713 = arith.truncf %711 : vector<16x16xf32> to vector<16x16xbf16>
    %cst_218 = arith.constant dense<0.000000e+00> : vector<32x16xf32>
    %714 = tpu.matmul %712, %713, %cst_218 {dimension_numbers = #tpu.dot_dimension_numbers<[1], [0], [0], [1], [0, 0, 1, 1], [], []>} : vector<32x16xbf16>, vector<16x16xbf16>, vector<32x16xf32> -> vector<32x16xf32>
    %715 = arith.addf %710, %714 : vector<32x16xf32>
    %c648 = arith.constant 648 : index
    %c0_219 = arith.constant 0 : index
    %716 = vector.load %arg10[%c648, %c0_219] : memref<1216x256xf32, #tpu.memory_space<vmem>>, vector<4x4xf32>
    %717 = arith.truncf %692 : vector<96x4xf32> to vector<96x4xbf16>
    %718 = arith.truncf %716 : vector<4x4xf32> to vector<4x4xbf16>
    %cst_220 = arith.constant dense<0.000000e+00> : vector<96x4xf32>
    %719 = tpu.matmul %717, %718, %cst_220 {dimension_numbers = #tpu.dot_dimension_numbers<[1], [0], [0], [1], [0, 0, 1, 1], [], []>} : vector<96x4xbf16>, vector<4x4xbf16>, vector<96x4xf32> -> vector<96x4xf32>
    %720 = arith.truncf %715 : vector<32x16xf32> to vector<32x16xbf16>
    %cst_221 = arith.constant dense<0.000000e+00> : vector<16x16xf32>
    %721 = tpu.matmul %22, %720, %cst_221 {dimension_numbers = #tpu.dot_dimension_numbers<[1], [0], [0], [1], [0, 0, 1, 1], [], []>} : vector<16x32xbf16>, vector<32x16xbf16>, vector<16x16xf32> -> vector<16x16xf32>
    %722 = vector.broadcast %27 : vector<16x1xf32> to vector<16x16xf32>
    %723 = arith.mulf %721, %722 : vector<16x16xf32>
    %724 = arith.addf %525, %723 : vector<16x16xf32>
    %725 = vector.extract_strided_slice %719 {offsets = [0, 0], sizes = [32, 4], strides = [1, 1]} : vector<96x4xf32> to vector<32x4xf32>
    %726 = vector.extract_strided_slice %719 {offsets = [32, 0], sizes = [32, 4], strides = [1, 1]} : vector<96x4xf32> to vector<32x4xf32>
    %727 = vector.extract_strided_slice %719 {offsets = [64, 0], sizes = [32, 4], strides = [1, 1]} : vector<96x4xf32> to vector<32x4xf32>
    %728 = arith.truncf %725 : vector<32x4xf32> to vector<32x4xbf16>
    %cst_222 = arith.constant dense<0.000000e+00> : vector<16x4xf32>
    %729 = tpu.matmul %22, %728, %cst_222 {dimension_numbers = #tpu.dot_dimension_numbers<[1], [0], [0], [1], [0, 0, 1, 1], [], []>} : vector<16x32xbf16>, vector<32x4xbf16>, vector<16x4xf32> -> vector<16x4xf32>
    %730 = vector.broadcast %27 : vector<16x1xf32> to vector<16x4xf32>
    %731 = arith.mulf %729, %730 : vector<16x4xf32>
    %732 = arith.truncf %726 : vector<32x4xf32> to vector<32x4xbf16>
    %cst_223 = arith.constant dense<0.000000e+00> : vector<16x4xf32>
    %733 = tpu.matmul %22, %732, %cst_223 {dimension_numbers = #tpu.dot_dimension_numbers<[1], [0], [0], [1], [0, 0, 1, 1], [], []>} : vector<16x32xbf16>, vector<32x4xbf16>, vector<16x4xf32> -> vector<16x4xf32>
    %734 = vector.broadcast %27 : vector<16x1xf32> to vector<16x4xf32>
    %735 = arith.mulf %733, %734 : vector<16x4xf32>
    %736 = arith.truncf %727 : vector<32x4xf32> to vector<32x4xbf16>
    %cst_224 = arith.constant dense<0.000000e+00> : vector<16x4xf32>
    %737 = tpu.matmul %22, %736, %cst_224 {dimension_numbers = #tpu.dot_dimension_numbers<[1], [0], [0], [1], [0, 0, 1, 1], [], []>} : vector<16x32xbf16>, vector<32x4xbf16>, vector<16x4xf32> -> vector<16x4xf32>
    %738 = vector.broadcast %27 : vector<16x1xf32> to vector<16x4xf32>
    %739 = arith.mulf %737, %738 : vector<16x4xf32>
    %740 = tpu.concatenate %731, %735, %739 in 0 : vector<16x4xf32>, vector<16x4xf32>, vector<16x4xf32> -> vector<48x4xf32>
    %741 = arith.addf %543, %740 : vector<48x4xf32>
    %cst_225 = arith.constant dense<0.000000e+00> : vector<16xf32>
    %742 = vector.multi_reduction <add>, %724, %cst_225 [1] : vector<16x16xf32> to vector<16xf32>
    %743 = vector.shape_cast %742 : vector<16xf32> to vector<16x1xf32>
    %cst_226 = arith.constant 1.600000e+01 : f32
    %744 = vector.broadcast %cst_226 : f32 to vector<16x1xf32>
    %745 = arith.divf %743, %744 : vector<16x1xf32>
    %746 = vector.broadcast %745 : vector<16x1xf32> to vector<16x16xf32>
    %747 = arith.subf %724, %746 : vector<16x16xf32>
    %748 = arith.mulf %747, %747 : vector<16x16xf32>
    %cst_227 = arith.constant dense<0.000000e+00> : vector<16xf32>
    %749 = vector.multi_reduction <add>, %748, %cst_227 [1] : vector<16x16xf32> to vector<16xf32>
    %750 = vector.shape_cast %749 : vector<16xf32> to vector<16x1xf32>
    %cst_228 = arith.constant 1.600000e+01 : f32
    %751 = vector.broadcast %cst_228 : f32 to vector<16x1xf32>
    %752 = arith.divf %750, %751 : vector<16x1xf32>
    %cst_229 = arith.constant 9.99999974E-6 : f32
    %753 = vector.broadcast %cst_229 : f32 to vector<16x1xf32>
    %754 = arith.addf %752, %753 : vector<16x1xf32>
    %755 = math.rsqrt %754 : vector<16x1xf32>
    %756 = vector.broadcast %755 : vector<16x1xf32> to vector<16x16xf32>
    %757 = arith.mulf %747, %756 : vector<16x16xf32>
    %c808 = arith.constant 808 : index
    %c0_230 = arith.constant 0 : index
    %758 = vector.load %arg10[%c808, %c0_230] : memref<1216x256xf32, #tpu.memory_space<vmem>>, vector<1x16xf32>
    %759 = vector.broadcast %758 : vector<1x16xf32> to vector<16x16xf32>
    %760 = arith.mulf %757, %759 : vector<16x16xf32>
    %c800 = arith.constant 800 : index
    %c0_231 = arith.constant 0 : index
    %761 = vector.load %arg10[%c800, %c0_231] : memref<1216x256xf32, #tpu.memory_space<vmem>>, vector<1x16xf32>
    %762 = vector.broadcast %761 : vector<1x16xf32> to vector<16x16xf32>
    %763 = arith.addf %760, %762 : vector<16x16xf32>
    %764 = vector.extract_strided_slice %741 {offsets = [0, 0], sizes = [16, 4], strides = [1, 1]} : vector<48x4xf32> to vector<16x4xf32>
    %765 = vector.extract_strided_slice %741 {offsets = [16, 0], sizes = [16, 4], strides = [1, 1]} : vector<48x4xf32> to vector<16x4xf32>
    %766 = vector.extract_strided_slice %741 {offsets = [32, 0], sizes = [16, 4], strides = [1, 1]} : vector<48x4xf32> to vector<16x4xf32>
    %767 = arith.mulf %764, %764 : vector<16x4xf32>
    %768 = arith.mulf %765, %765 : vector<16x4xf32>
    %769 = arith.addf %767, %768 : vector<16x4xf32>
    %770 = arith.mulf %766, %766 : vector<16x4xf32>
    %771 = arith.addf %769, %770 : vector<16x4xf32>
    %cst_232 = arith.constant 9.99999993E-9 : f32
    %772 = vector.broadcast %cst_232 : f32 to vector<16x4xf32>
    %773 = arith.maximumf %771, %772 : vector<16x4xf32>
    %cst_233 = arith.constant dense<0.000000e+00> : vector<16xf32>
    %774 = vector.multi_reduction <add>, %773, %cst_233 [1] : vector<16x4xf32> to vector<16xf32>
    %775 = vector.shape_cast %774 : vector<16xf32> to vector<16x1xf32>
    %cst_234 = arith.constant 4.000000e+00 : f32
    %776 = vector.broadcast %cst_234 : f32 to vector<16x1xf32>
    %777 = arith.divf %775, %776 : vector<16x1xf32>
    %778 = math.rsqrt %777 : vector<16x1xf32>
    %779 = tpu.concatenate %778, %778, %778 in 0 : vector<16x1xf32>, vector<16x1xf32>, vector<16x1xf32> -> vector<48x1xf32>
    %780 = vector.broadcast %779 : vector<48x1xf32> to vector<48x4xf32>
    %781 = arith.mulf %741, %780 : vector<48x4xf32>
    %c656 = arith.constant 656 : index
    %c0_235 = arith.constant 0 : index
    %782 = vector.load %arg10[%c656, %c0_235] : memref<1216x256xf32, #tpu.memory_space<vmem>>, vector<4x8xf32>
    %783 = arith.truncf %781 : vector<48x4xf32> to vector<48x4xbf16>
    %784 = arith.truncf %782 : vector<4x8xf32> to vector<4x8xbf16>
    %cst_236 = arith.constant dense<0.000000e+00> : vector<48x8xf32>
    %785 = tpu.matmul %783, %784, %cst_236 {dimension_numbers = #tpu.dot_dimension_numbers<[1], [0], [0], [1], [0, 0, 1, 1], [], []>} : vector<48x4xbf16>, vector<4x8xbf16>, vector<48x8xf32> -> vector<48x8xf32>
    %786 = vector.extract_strided_slice %785 {offsets = [0, 0], sizes = [16, 8], strides = [1, 1]} : vector<48x8xf32> to vector<16x8xf32>
    %787 = vector.extract_strided_slice %785 {offsets = [16, 0], sizes = [16, 8], strides = [1, 1]} : vector<48x8xf32> to vector<16x8xf32>
    %788 = vector.extract_strided_slice %785 {offsets = [32, 0], sizes = [16, 8], strides = [1, 1]} : vector<48x8xf32> to vector<16x8xf32>
    %789 = arith.mulf %786, %786 : vector<16x8xf32>
    %790 = arith.mulf %787, %787 : vector<16x8xf32>
    %791 = arith.addf %789, %790 : vector<16x8xf32>
    %792 = arith.mulf %788, %788 : vector<16x8xf32>
    %793 = arith.addf %791, %792 : vector<16x8xf32>
    %cst_237 = arith.constant 9.99999993E-9 : f32
    %794 = vector.broadcast %cst_237 : f32 to vector<16x8xf32>
    %795 = arith.maximumf %793, %794 : vector<16x8xf32>
    %796 = math.sqrt %795 : vector<16x8xf32>
    %c664 = arith.constant 664 : index
    %c0_238 = arith.constant 0 : index
    %797 = vector.load %arg10[%c664, %c0_238] : memref<1216x256xf32, #tpu.memory_space<vmem>>, vector<1x64xf32>
    %c672 = arith.constant 672 : index
    %c0_239 = arith.constant 0 : index
    %798 = vector.load %arg10[%c672, %c0_239] : memref<1216x256xf32, #tpu.memory_space<vmem>>, vector<8x64xf32>
    %799 = arith.truncf %796 : vector<16x8xf32> to vector<16x8xbf16>
    %800 = arith.truncf %798 : vector<8x64xf32> to vector<8x64xbf16>
    %cst_240 = arith.constant dense<0.000000e+00> : vector<16x64xf32>
    %801 = tpu.matmul %799, %800, %cst_240 {dimension_numbers = #tpu.dot_dimension_numbers<[1], [0], [0], [1], [0, 0, 1, 1], [], []>} : vector<16x8xbf16>, vector<8x64xbf16>, vector<16x64xf32> -> vector<16x64xf32>
    %802 = vector.broadcast %797 : vector<1x64xf32> to vector<16x64xf32>
    %803 = arith.addf %802, %801 : vector<16x64xf32>
    %c680 = arith.constant 680 : index
    %c0_241 = arith.constant 0 : index
    %804 = vector.load %arg10[%c680, %c0_241] : memref<1216x256xf32, #tpu.memory_space<vmem>>, vector<16x64xf32>
    %805 = arith.truncf %763 : vector<16x16xf32> to vector<16x16xbf16>
    %806 = arith.truncf %804 : vector<16x64xf32> to vector<16x64xbf16>
    %cst_242 = arith.constant dense<0.000000e+00> : vector<16x64xf32>
    %807 = tpu.matmul %805, %806, %cst_242 {dimension_numbers = #tpu.dot_dimension_numbers<[1], [0], [0], [1], [0, 0, 1, 1], [], []>} : vector<16x16xbf16>, vector<16x64xbf16>, vector<16x64xf32> -> vector<16x64xf32>
    %808 = arith.addf %803, %807 : vector<16x64xf32>
    %c696 = arith.constant 696 : index
    %c0_243 = arith.constant 0 : index
    %809 = vector.load %arg10[%c696, %c0_243] : memref<1216x256xf32, #tpu.memory_space<vmem>>, vector<8x8xf32>
    %810 = arith.truncf %785 : vector<48x8xf32> to vector<48x8xbf16>
    %811 = arith.truncf %809 : vector<8x8xf32> to vector<8x8xbf16>
    %cst_244 = arith.constant dense<0.000000e+00> : vector<48x8xf32>
    %812 = tpu.matmul %810, %811, %cst_244 {dimension_numbers = #tpu.dot_dimension_numbers<[1], [0], [0], [1], [0, 0, 1, 1], [], []>} : vector<48x8xbf16>, vector<8x8xbf16>, vector<48x8xf32> -> vector<48x8xf32>
    %813 = vector.extract_strided_slice %812 {offsets = [0, 0], sizes = [16, 8], strides = [1, 1]} : vector<48x8xf32> to vector<16x8xf32>
    %814 = vector.extract_strided_slice %812 {offsets = [16, 0], sizes = [16, 8], strides = [1, 1]} : vector<48x8xf32> to vector<16x8xf32>
    %815 = vector.extract_strided_slice %812 {offsets = [32, 0], sizes = [16, 8], strides = [1, 1]} : vector<48x8xf32> to vector<16x8xf32>
    %816 = arith.mulf %813, %813 : vector<16x8xf32>
    %817 = arith.mulf %814, %814 : vector<16x8xf32>
    %818 = arith.addf %816, %817 : vector<16x8xf32>
    %819 = arith.mulf %815, %815 : vector<16x8xf32>
    %820 = arith.addf %818, %819 : vector<16x8xf32>
    %cst_245 = arith.constant 9.99999993E-9 : f32
    %821 = vector.broadcast %cst_245 : f32 to vector<16x8xf32>
    %822 = arith.maximumf %820, %821 : vector<16x8xf32>
    %823 = math.sqrt %822 : vector<16x8xf32>
    %cst_246 = arith.constant 0.000000e+00 : f32
    %824 = vector.broadcast %cst_246 : f32 to vector<16x8xf32>
    %825 = arith.subf %824, %823 : vector<16x8xf32>
    %826 = math.exp %825 : vector<16x8xf32>
    %cst_247 = arith.constant 1.000000e+00 : f32
    %827 = vector.broadcast %cst_247 : f32 to vector<16x8xf32>
    %828 = arith.addf %827, %826 : vector<16x8xf32>
    %829 = tpu.reciprocal %828 {approx = true} : vector<16x8xf32> -> vector<16x8xf32>
    %830 = tpu.concatenate %829, %829, %829 in 0 : vector<16x8xf32>, vector<16x8xf32>, vector<16x8xf32> -> vector<48x8xf32>
    %831 = arith.mulf %812, %830 : vector<48x8xf32>
    %cst_248 = arith.constant 0.000000e+00 : f32
    %832 = vector.broadcast %cst_248 : f32 to vector<16x64xf32>
    %833 = arith.maximumf %808, %832 : vector<16x64xf32>
    %c704 = arith.constant 704 : index
    %c0_249 = arith.constant 0 : index
    %834 = vector.load %arg10[%c704, %c0_249] : memref<1216x256xf32, #tpu.memory_space<vmem>>, vector<8x8xf32>
    %835 = arith.truncf %831 : vector<48x8xf32> to vector<48x8xbf16>
    %836 = arith.truncf %834 : vector<8x8xf32> to vector<8x8xbf16>
    %cst_250 = arith.constant dense<0.000000e+00> : vector<48x8xf32>
    %837 = tpu.matmul %835, %836, %cst_250 {dimension_numbers = #tpu.dot_dimension_numbers<[1], [0], [0], [1], [0, 0, 1, 1], [], []>} : vector<48x8xbf16>, vector<8x8xbf16>, vector<48x8xf32> -> vector<48x8xf32>
    %838 = vector.extract_strided_slice %837 {offsets = [0, 0], sizes = [16, 8], strides = [1, 1]} : vector<48x8xf32> to vector<16x8xf32>
    %839 = vector.extract_strided_slice %837 {offsets = [16, 0], sizes = [16, 8], strides = [1, 1]} : vector<48x8xf32> to vector<16x8xf32>
    %840 = vector.extract_strided_slice %837 {offsets = [32, 0], sizes = [16, 8], strides = [1, 1]} : vector<48x8xf32> to vector<16x8xf32>
    %841 = arith.mulf %838, %838 : vector<16x8xf32>
    %842 = arith.mulf %839, %839 : vector<16x8xf32>
    %843 = arith.addf %841, %842 : vector<16x8xf32>
    %844 = arith.mulf %840, %840 : vector<16x8xf32>
    %845 = arith.addf %843, %844 : vector<16x8xf32>
    %cst_251 = arith.constant 9.99999993E-9 : f32
    %846 = vector.broadcast %cst_251 : f32 to vector<16x8xf32>
    %847 = arith.maximumf %845, %846 : vector<16x8xf32>
    %848 = math.sqrt %847 : vector<16x8xf32>
    %c712 = arith.constant 712 : index
    %c0_252 = arith.constant 0 : index
    %849 = vector.load %arg10[%c712, %c0_252] : memref<1216x256xf32, #tpu.memory_space<vmem>>, vector<1x16xf32>
    %c720 = arith.constant 720 : index
    %c0_253 = arith.constant 0 : index
    %850 = vector.load %arg10[%c720, %c0_253] : memref<1216x256xf32, #tpu.memory_space<vmem>>, vector<8x16xf32>
    %851 = arith.truncf %848 : vector<16x8xf32> to vector<16x8xbf16>
    %852 = arith.truncf %850 : vector<8x16xf32> to vector<8x16xbf16>
    %cst_254 = arith.constant dense<0.000000e+00> : vector<16x16xf32>
    %853 = tpu.matmul %851, %852, %cst_254 {dimension_numbers = #tpu.dot_dimension_numbers<[1], [0], [0], [1], [0, 0, 1, 1], [], []>} : vector<16x8xbf16>, vector<8x16xbf16>, vector<16x16xf32> -> vector<16x16xf32>
    %854 = vector.broadcast %849 : vector<1x16xf32> to vector<16x16xf32>
    %855 = arith.addf %854, %853 : vector<16x16xf32>
    %c728 = arith.constant 728 : index
    %c0_255 = arith.constant 0 : index
    %856 = vector.load %arg10[%c728, %c0_255] : memref<1216x256xf32, #tpu.memory_space<vmem>>, vector<64x16xf32>
    %857 = arith.truncf %833 : vector<16x64xf32> to vector<16x64xbf16>
    %858 = arith.truncf %856 : vector<64x16xf32> to vector<64x16xbf16>
    %cst_256 = arith.constant dense<0.000000e+00> : vector<16x16xf32>
    %859 = tpu.matmul %857, %858, %cst_256 {dimension_numbers = #tpu.dot_dimension_numbers<[1], [0], [0], [1], [0, 0, 1, 1], [], []>} : vector<16x64xbf16>, vector<64x16xbf16>, vector<16x16xf32> -> vector<16x16xf32>
    %860 = arith.addf %855, %859 : vector<16x16xf32>
    %c792 = arith.constant 792 : index
    %c0_257 = arith.constant 0 : index
    %861 = vector.load %arg10[%c792, %c0_257] : memref<1216x256xf32, #tpu.memory_space<vmem>>, vector<8x4xf32>
    %862 = arith.truncf %837 : vector<48x8xf32> to vector<48x8xbf16>
    %863 = arith.truncf %861 : vector<8x4xf32> to vector<8x4xbf16>
    %cst_258 = arith.constant dense<0.000000e+00> : vector<48x4xf32>
    %864 = tpu.matmul %862, %863, %cst_258 {dimension_numbers = #tpu.dot_dimension_numbers<[1], [0], [0], [1], [0, 0, 1, 1], [], []>} : vector<48x8xbf16>, vector<8x4xbf16>, vector<48x4xf32> -> vector<48x4xf32>
    %865 = arith.addf %763, %860 : vector<16x16xf32>
    %866 = arith.addf %781, %864 : vector<48x4xf32>
    %cst_259 = arith.constant dense<0.000000e+00> : vector<16xf32>
    %867 = vector.multi_reduction <add>, %865, %cst_259 [1] : vector<16x16xf32> to vector<16xf32>
    %868 = vector.shape_cast %867 : vector<16xf32> to vector<16x1xf32>
    %cst_260 = arith.constant 1.600000e+01 : f32
    %869 = vector.broadcast %cst_260 : f32 to vector<16x1xf32>
    %870 = arith.divf %868, %869 : vector<16x1xf32>
    %871 = vector.broadcast %870 : vector<16x1xf32> to vector<16x16xf32>
    %872 = arith.subf %865, %871 : vector<16x16xf32>
    %873 = arith.mulf %872, %872 : vector<16x16xf32>
    %cst_261 = arith.constant dense<0.000000e+00> : vector<16xf32>
    %874 = vector.multi_reduction <add>, %873, %cst_261 [1] : vector<16x16xf32> to vector<16xf32>
    %875 = vector.shape_cast %874 : vector<16xf32> to vector<16x1xf32>
    %cst_262 = arith.constant 1.600000e+01 : f32
    %876 = vector.broadcast %cst_262 : f32 to vector<16x1xf32>
    %877 = arith.divf %875, %876 : vector<16x1xf32>
    %cst_263 = arith.constant 9.99999974E-6 : f32
    %878 = vector.broadcast %cst_263 : f32 to vector<16x1xf32>
    %879 = arith.addf %877, %878 : vector<16x1xf32>
    %880 = math.rsqrt %879 : vector<16x1xf32>
    %881 = vector.broadcast %880 : vector<16x1xf32> to vector<16x16xf32>
    %882 = arith.mulf %872, %881 : vector<16x16xf32>
    %c824 = arith.constant 824 : index
    %c0_264 = arith.constant 0 : index
    %883 = vector.load %arg10[%c824, %c0_264] : memref<1216x256xf32, #tpu.memory_space<vmem>>, vector<1x16xf32>
    %884 = vector.broadcast %883 : vector<1x16xf32> to vector<16x16xf32>
    %885 = arith.mulf %882, %884 : vector<16x16xf32>
    %c816 = arith.constant 816 : index
    %c0_265 = arith.constant 0 : index
    %886 = vector.load %arg10[%c816, %c0_265] : memref<1216x256xf32, #tpu.memory_space<vmem>>, vector<1x16xf32>
    %887 = vector.broadcast %886 : vector<1x16xf32> to vector<16x16xf32>
    %888 = arith.addf %885, %887 : vector<16x16xf32>
    %889 = vector.extract_strided_slice %866 {offsets = [0, 0], sizes = [16, 4], strides = [1, 1]} : vector<48x4xf32> to vector<16x4xf32>
    %890 = vector.extract_strided_slice %866 {offsets = [16, 0], sizes = [16, 4], strides = [1, 1]} : vector<48x4xf32> to vector<16x4xf32>
    %891 = vector.extract_strided_slice %866 {offsets = [32, 0], sizes = [16, 4], strides = [1, 1]} : vector<48x4xf32> to vector<16x4xf32>
    %892 = arith.mulf %889, %889 : vector<16x4xf32>
    %893 = arith.mulf %890, %890 : vector<16x4xf32>
    %894 = arith.addf %892, %893 : vector<16x4xf32>
    %895 = arith.mulf %891, %891 : vector<16x4xf32>
    %896 = arith.addf %894, %895 : vector<16x4xf32>
    %cst_266 = arith.constant 9.99999993E-9 : f32
    %897 = vector.broadcast %cst_266 : f32 to vector<16x4xf32>
    %898 = arith.maximumf %896, %897 : vector<16x4xf32>
    %cst_267 = arith.constant dense<0.000000e+00> : vector<16xf32>
    %899 = vector.multi_reduction <add>, %898, %cst_267 [1] : vector<16x4xf32> to vector<16xf32>
    %900 = vector.shape_cast %899 : vector<16xf32> to vector<16x1xf32>
    %cst_268 = arith.constant 4.000000e+00 : f32
    %901 = vector.broadcast %cst_268 : f32 to vector<16x1xf32>
    %902 = arith.divf %900, %901 : vector<16x1xf32>
    %903 = math.rsqrt %902 : vector<16x1xf32>
    %904 = tpu.concatenate %903, %903, %903 in 0 : vector<16x1xf32>, vector<16x1xf32>, vector<16x1xf32> -> vector<48x1xf32>
    %905 = vector.broadcast %904 : vector<48x1xf32> to vector<48x4xf32>
    %906 = arith.mulf %866, %905 : vector<48x4xf32>
    %cst_269 = arith.constant dense<0.000000e+00> : vector<16xf32>
    %907 = vector.multi_reduction <add>, %888, %cst_269 [1] : vector<16x16xf32> to vector<16xf32>
    %908 = vector.shape_cast %907 : vector<16xf32> to vector<16x1xf32>
    %cst_270 = arith.constant 1.600000e+01 : f32
    %909 = vector.broadcast %cst_270 : f32 to vector<16x1xf32>
    %910 = arith.divf %908, %909 : vector<16x1xf32>
    %911 = vector.broadcast %910 : vector<16x1xf32> to vector<16x16xf32>
    %912 = arith.subf %888, %911 : vector<16x16xf32>
    %913 = arith.mulf %912, %912 : vector<16x16xf32>
    %cst_271 = arith.constant dense<0.000000e+00> : vector<16xf32>
    %914 = vector.multi_reduction <add>, %913, %cst_271 [1] : vector<16x16xf32> to vector<16xf32>
    %915 = vector.shape_cast %914 : vector<16xf32> to vector<16x1xf32>
    %cst_272 = arith.constant 1.600000e+01 : f32
    %916 = vector.broadcast %cst_272 : f32 to vector<16x1xf32>
    %917 = arith.divf %915, %916 : vector<16x1xf32>
    %cst_273 = arith.constant 9.99999974E-6 : f32
    %918 = vector.broadcast %cst_273 : f32 to vector<16x1xf32>
    %919 = arith.addf %917, %918 : vector<16x1xf32>
    %920 = math.rsqrt %919 : vector<16x1xf32>
    %921 = vector.broadcast %920 : vector<16x1xf32> to vector<16x16xf32>
    %922 = arith.mulf %912, %921 : vector<16x16xf32>
    %c1120 = arith.constant 1120 : index
    %c0_274 = arith.constant 0 : index
    %923 = vector.load %arg10[%c1120, %c0_274] : memref<1216x256xf32, #tpu.memory_space<vmem>>, vector<1x16xf32>
    %924 = vector.broadcast %923 : vector<1x16xf32> to vector<16x16xf32>
    %925 = arith.mulf %922, %924 : vector<16x16xf32>
    %c1112 = arith.constant 1112 : index
    %c0_275 = arith.constant 0 : index
    %926 = vector.load %arg10[%c1112, %c0_275] : memref<1216x256xf32, #tpu.memory_space<vmem>>, vector<1x16xf32>
    %927 = vector.broadcast %926 : vector<1x16xf32> to vector<16x16xf32>
    %928 = arith.addf %925, %927 : vector<16x16xf32>
    %929 = vector.extract_strided_slice %906 {offsets = [0, 0], sizes = [16, 4], strides = [1, 1]} : vector<48x4xf32> to vector<16x4xf32>
    %930 = vector.extract_strided_slice %906 {offsets = [16, 0], sizes = [16, 4], strides = [1, 1]} : vector<48x4xf32> to vector<16x4xf32>
    %931 = vector.extract_strided_slice %906 {offsets = [32, 0], sizes = [16, 4], strides = [1, 1]} : vector<48x4xf32> to vector<16x4xf32>
    %932 = arith.mulf %929, %929 : vector<16x4xf32>
    %933 = arith.mulf %930, %930 : vector<16x4xf32>
    %934 = arith.addf %932, %933 : vector<16x4xf32>
    %935 = arith.mulf %931, %931 : vector<16x4xf32>
    %936 = arith.addf %934, %935 : vector<16x4xf32>
    %cst_276 = arith.constant 9.99999993E-9 : f32
    %937 = vector.broadcast %cst_276 : f32 to vector<16x4xf32>
    %938 = arith.maximumf %936, %937 : vector<16x4xf32>
    %cst_277 = arith.constant dense<0.000000e+00> : vector<16xf32>
    %939 = vector.multi_reduction <add>, %938, %cst_277 [1] : vector<16x4xf32> to vector<16xf32>
    %940 = vector.shape_cast %939 : vector<16xf32> to vector<16x1xf32>
    %cst_278 = arith.constant 4.000000e+00 : f32
    %941 = vector.broadcast %cst_278 : f32 to vector<16x1xf32>
    %942 = arith.divf %940, %941 : vector<16x1xf32>
    %943 = math.rsqrt %942 : vector<16x1xf32>
    %944 = tpu.concatenate %943, %943, %943 in 0 : vector<16x1xf32>, vector<16x1xf32>, vector<16x1xf32> -> vector<48x1xf32>
    %945 = vector.broadcast %944 : vector<48x1xf32> to vector<48x4xf32>
    %946 = arith.mulf %906, %945 : vector<48x4xf32>
    %c864 = arith.constant 864 : index
    %c0_279 = arith.constant 0 : index
    %947 = vector.load %arg10[%c864, %c0_279] : memref<1216x256xf32, #tpu.memory_space<vmem>>, vector<4x4xf32>
    %948 = arith.truncf %946 : vector<48x4xf32> to vector<48x4xbf16>
    %949 = arith.truncf %947 : vector<4x4xf32> to vector<4x4xbf16>
    %cst_280 = arith.constant dense<0.000000e+00> : vector<48x4xf32>
    %950 = tpu.matmul %948, %949, %cst_280 {dimension_numbers = #tpu.dot_dimension_numbers<[1], [0], [0], [1], [0, 0, 1, 1], [], []>} : vector<48x4xbf16>, vector<4x4xbf16>, vector<48x4xf32> -> vector<48x4xf32>
    %951 = vector.extract_strided_slice %950 {offsets = [0, 0], sizes = [16, 4], strides = [1, 1]} : vector<48x4xf32> to vector<16x4xf32>
    %952 = vector.extract_strided_slice %950 {offsets = [16, 0], sizes = [16, 4], strides = [1, 1]} : vector<48x4xf32> to vector<16x4xf32>
    %953 = vector.extract_strided_slice %950 {offsets = [32, 0], sizes = [16, 4], strides = [1, 1]} : vector<48x4xf32> to vector<16x4xf32>
    %954 = arith.mulf %951, %951 : vector<16x4xf32>
    %955 = arith.mulf %952, %952 : vector<16x4xf32>
    %956 = arith.addf %954, %955 : vector<16x4xf32>
    %957 = arith.mulf %953, %953 : vector<16x4xf32>
    %958 = arith.addf %956, %957 : vector<16x4xf32>
    %cst_281 = arith.constant 9.99999993E-9 : f32
    %959 = vector.broadcast %cst_281 : f32 to vector<16x4xf32>
    %960 = arith.maximumf %958, %959 : vector<16x4xf32>
    %961 = math.sqrt %960 : vector<16x4xf32>
    %c872 = arith.constant 872 : index
    %c0_282 = arith.constant 0 : index
    %962 = vector.load %arg10[%c872, %c0_282] : memref<1216x256xf32, #tpu.memory_space<vmem>>, vector<1x4xf32>
    %c880 = arith.constant 880 : index
    %c0_283 = arith.constant 0 : index
    %963 = vector.load %arg10[%c880, %c0_283] : memref<1216x256xf32, #tpu.memory_space<vmem>>, vector<4x4xf32>
    %964 = arith.truncf %961 : vector<16x4xf32> to vector<16x4xbf16>
    %965 = arith.truncf %963 : vector<4x4xf32> to vector<4x4xbf16>
    %cst_284 = arith.constant dense<0.000000e+00> : vector<16x4xf32>
    %966 = tpu.matmul %964, %965, %cst_284 {dimension_numbers = #tpu.dot_dimension_numbers<[1], [0], [0], [1], [0, 0, 1, 1], [], []>} : vector<16x4xbf16>, vector<4x4xbf16>, vector<16x4xf32> -> vector<16x4xf32>
    %967 = vector.broadcast %962 : vector<1x4xf32> to vector<16x4xf32>
    %968 = arith.addf %967, %966 : vector<16x4xf32>
    %c888 = arith.constant 888 : index
    %c0_285 = arith.constant 0 : index
    %969 = vector.load %arg10[%c888, %c0_285] : memref<1216x256xf32, #tpu.memory_space<vmem>>, vector<16x4xf32>
    %970 = arith.truncf %928 : vector<16x16xf32> to vector<16x16xbf16>
    %971 = arith.truncf %969 : vector<16x4xf32> to vector<16x4xbf16>
    %cst_286 = arith.constant dense<0.000000e+00> : vector<16x4xf32>
    %972 = tpu.matmul %970, %971, %cst_286 {dimension_numbers = #tpu.dot_dimension_numbers<[1], [0], [0], [1], [0, 0, 1, 1], [], []>} : vector<16x16xbf16>, vector<16x4xbf16>, vector<16x4xf32> -> vector<16x4xf32>
    %973 = arith.addf %968, %972 : vector<16x4xf32>
    %c0_287 = arith.constant 0 : index
    %c0_288 = arith.constant 0 : index
    %974 = vector.load %arg9[%c0_287, %c0_288] : memref<4x32xf32, #tpu.memory_space<vmem>>, vector<4x32xf32>
    %975 = arith.truncf %973 : vector<16x4xf32> to vector<16x4xbf16>
    %976 = arith.truncf %974 : vector<4x32xf32> to vector<4x32xbf16>
    %cst_289 = arith.constant dense<0.000000e+00> : vector<16x32xf32>
    %977 = tpu.matmul %975, %976, %cst_289 {dimension_numbers = #tpu.dot_dimension_numbers<[1], [0], [0], [1], [0, 0, 1, 1], [], []>} : vector<16x4xbf16>, vector<4x32xbf16>, vector<16x32xf32> -> vector<16x32xf32>
    %c0_290 = arith.constant 0 : index
    %c0_291 = arith.constant 0 : index
    %978 = vector.load %arg8[%c0_290, %c0_291] : memref<16x32xf32, #tpu.memory_space<vmem>>, vector<16x32xf32>
    %979 = arith.mulf %977, %978 : vector<16x32xf32>
    %980 = arith.truncf %979 : vector<16x32xf32> to vector<16x32xbf16>
    %cst_292 = arith.constant dense<0.000000e+00> : vector<2x32xf32>
    %981 = tpu.matmul %35, %980, %cst_292 {dimension_numbers = #tpu.dot_dimension_numbers<[1], [0], [0], [1], [0, 0, 1, 1], [], []>} : vector<2x16xbf16>, vector<16x32xbf16>, vector<2x32xf32> -> vector<2x32xf32>
    %c912 = arith.constant 912 : index
    %c0_293 = arith.constant 0 : index
    %982 = vector.load %arg10[%c912, %c0_293] : memref<1216x256xf32, #tpu.memory_space<vmem>>, vector<32x160xf32>
    %983 = arith.truncf %981 : vector<2x32xf32> to vector<2x32xbf16>
    %984 = arith.truncf %982 : vector<32x160xf32> to vector<32x160xbf16>
    %cst_294 = arith.constant dense<0.000000e+00> : vector<2x160xf32>
    %985 = tpu.matmul %983, %984, %cst_294 {dimension_numbers = #tpu.dot_dimension_numbers<[1], [0], [0], [1], [0, 0, 1, 1], [], []>} : vector<2x32xbf16>, vector<32x160xbf16>, vector<2x160xf32> -> vector<2x160xf32>
    %c904 = arith.constant 904 : index
    %c0_295 = arith.constant 0 : index
    %986 = vector.load %arg10[%c904, %c0_295] : memref<1216x256xf32, #tpu.memory_space<vmem>>, vector<1x160xf32>
    %987 = vector.broadcast %986 : vector<1x160xf32> to vector<2x160xf32>
    %988 = arith.addf %985, %987 : vector<2x160xf32>
    %cst_296 = arith.constant 0.000000e+00 : f32
    %989 = vector.broadcast %cst_296 : f32 to vector<2x160xf32>
    %990 = arith.maximumf %988, %989 : vector<2x160xf32>
    %c952 = arith.constant 952 : index
    %c0_297 = arith.constant 0 : index
    %991 = vector.load %arg10[%c952, %c0_297] : memref<1216x256xf32, #tpu.memory_space<vmem>>, vector<160x160xf32>
    %992 = arith.truncf %990 : vector<2x160xf32> to vector<2x160xbf16>
    %993 = arith.truncf %991 : vector<160x160xf32> to vector<160x160xbf16>
    %cst_298 = arith.constant dense<0.000000e+00> : vector<2x160xf32>
    %994 = tpu.matmul %992, %993, %cst_298 {dimension_numbers = #tpu.dot_dimension_numbers<[1], [0], [0], [1], [0, 0, 1, 1], [], []>} : vector<2x160xbf16>, vector<160x160xbf16>, vector<2x160xf32> -> vector<2x160xf32>
    %c944 = arith.constant 944 : index
    %c0_299 = arith.constant 0 : index
    %995 = vector.load %arg10[%c944, %c0_299] : memref<1216x256xf32, #tpu.memory_space<vmem>>, vector<1x160xf32>
    %996 = vector.broadcast %995 : vector<1x160xf32> to vector<2x160xf32>
    %997 = arith.addf %994, %996 : vector<2x160xf32>
    %c0_300 = arith.constant 0 : index
    %c0_301 = arith.constant 0 : index
    %998 = vector.load %arg11[%c0_300, %c0_301] : memref<2x160xf32, #tpu.memory_space<vmem>>, vector<2x160xf32>
    tpu.vector_store %arg11[%c0_300, %c0_301], %997 {strides = array<i32>} : memref<2x160xf32, #tpu.memory_space<vmem>>, vector<2x160xf32>,
    %cst_302 = arith.constant dense<0.000000e+00> : vector<16xf32>
    %999 = vector.multi_reduction <add>, %888, %cst_302 [1] : vector<16x16xf32> to vector<16xf32>
    %1000 = vector.shape_cast %999 : vector<16xf32> to vector<16x1xf32>
    %cst_303 = arith.constant 1.600000e+01 : f32
    %1001 = vector.broadcast %cst_303 : f32 to vector<16x1xf32>
    %1002 = arith.divf %1000, %1001 : vector<16x1xf32>
    %1003 = vector.broadcast %1002 : vector<16x1xf32> to vector<16x16xf32>
    %1004 = arith.subf %888, %1003 : vector<16x16xf32>
    %1005 = arith.mulf %1004, %1004 : vector<16x16xf32>
    %cst_304 = arith.constant dense<0.000000e+00> : vector<16xf32>
    %1006 = vector.multi_reduction <add>, %1005, %cst_304 [1] : vector<16x16xf32> to vector<16xf32>
    %1007 = vector.shape_cast %1006 : vector<16xf32> to vector<16x1xf32>
    %cst_305 = arith.constant 1.600000e+01 : f32
    %1008 = vector.broadcast %cst_305 : f32 to vector<16x1xf32>
    %1009 = arith.divf %1007, %1008 : vector<16x1xf32>
    %cst_306 = arith.constant 9.99999974E-6 : f32
    %1010 = vector.broadcast %cst_306 : f32 to vector<16x1xf32>
    %1011 = arith.addf %1009, %1010 : vector<16x1xf32>
    %1012 = math.rsqrt %1011 : vector<16x1xf32>
    %1013 = vector.broadcast %1012 : vector<16x1xf32> to vector<16x16xf32>
    %1014 = arith.mulf %1004, %1013 : vector<16x16xf32>
    %c1208 = arith.constant 1208 : index
    %c0_307 = arith.constant 0 : index
    %1015 = vector.load %arg10[%c1208, %c0_307] : memref<1216x256xf32, #tpu.memory_space<vmem>>, vector<1x16xf32>
    %1016 = vector.broadcast %1015 : vector<1x16xf32> to vector<16x16xf32>
    %1017 = arith.mulf %1014, %1016 : vector<16x16xf32>
    %c1200 = arith.constant 1200 : index
    %c0_308 = arith.constant 0 : index
    %1018 = vector.load %arg10[%c1200, %c0_308] : memref<1216x256xf32, #tpu.memory_space<vmem>>, vector<1x16xf32>
    %1019 = vector.broadcast %1018 : vector<1x16xf32> to vector<16x16xf32>
    %1020 = arith.addf %1017, %1019 : vector<16x16xf32>
    %1021 = vector.extract_strided_slice %906 {offsets = [0, 0], sizes = [16, 4], strides = [1, 1]} : vector<48x4xf32> to vector<16x4xf32>
    %1022 = vector.extract_strided_slice %906 {offsets = [16, 0], sizes = [16, 4], strides = [1, 1]} : vector<48x4xf32> to vector<16x4xf32>
    %1023 = vector.extract_strided_slice %906 {offsets = [32, 0], sizes = [16, 4], strides = [1, 1]} : vector<48x4xf32> to vector<16x4xf32>
    %1024 = arith.mulf %1021, %1021 : vector<16x4xf32>
    %1025 = arith.mulf %1022, %1022 : vector<16x4xf32>
    %1026 = arith.addf %1024, %1025 : vector<16x4xf32>
    %1027 = arith.mulf %1023, %1023 : vector<16x4xf32>
    %1028 = arith.addf %1026, %1027 : vector<16x4xf32>
    %cst_309 = arith.constant 9.99999993E-9 : f32
    %1029 = vector.broadcast %cst_309 : f32 to vector<16x4xf32>
    %1030 = arith.maximumf %1028, %1029 : vector<16x4xf32>
    %cst_310 = arith.constant dense<0.000000e+00> : vector<16xf32>
    %1031 = vector.multi_reduction <add>, %1030, %cst_310 [1] : vector<16x4xf32> to vector<16xf32>
    %1032 = vector.shape_cast %1031 : vector<16xf32> to vector<16x1xf32>
    %cst_311 = arith.constant 4.000000e+00 : f32
    %1033 = vector.broadcast %cst_311 : f32 to vector<16x1xf32>
    %1034 = arith.divf %1032, %1033 : vector<16x1xf32>
    %1035 = math.rsqrt %1034 : vector<16x1xf32>
    %1036 = tpu.concatenate %1035, %1035, %1035 in 0 : vector<16x1xf32>, vector<16x1xf32>, vector<16x1xf32> -> vector<48x1xf32>
    %1037 = vector.broadcast %1036 : vector<48x1xf32> to vector<48x4xf32>
    %1038 = arith.mulf %906, %1037 : vector<48x4xf32>
    %c1128 = arith.constant 1128 : index
    %c0_312 = arith.constant 0 : index
    %1039 = vector.load %arg10[%c1128, %c0_312] : memref<1216x256xf32, #tpu.memory_space<vmem>>, vector<4x4xf32>
    %1040 = arith.truncf %1038 : vector<48x4xf32> to vector<48x4xbf16>
    %1041 = arith.truncf %1039 : vector<4x4xf32> to vector<4x4xbf16>
    %cst_313 = arith.constant dense<0.000000e+00> : vector<48x4xf32>
    %1042 = tpu.matmul %1040, %1041, %cst_313 {dimension_numbers = #tpu.dot_dimension_numbers<[1], [0], [0], [1], [0, 0, 1, 1], [], []>} : vector<48x4xbf16>, vector<4x4xbf16>, vector<48x4xf32> -> vector<48x4xf32>
    %1043 = vector.extract_strided_slice %1042 {offsets = [0, 0], sizes = [16, 4], strides = [1, 1]} : vector<48x4xf32> to vector<16x4xf32>
    %1044 = vector.extract_strided_slice %1042 {offsets = [16, 0], sizes = [16, 4], strides = [1, 1]} : vector<48x4xf32> to vector<16x4xf32>
    %1045 = vector.extract_strided_slice %1042 {offsets = [32, 0], sizes = [16, 4], strides = [1, 1]} : vector<48x4xf32> to vector<16x4xf32>
    %1046 = arith.mulf %1043, %1043 : vector<16x4xf32>
    %1047 = arith.mulf %1044, %1044 : vector<16x4xf32>
    %1048 = arith.addf %1046, %1047 : vector<16x4xf32>
    %1049 = arith.mulf %1045, %1045 : vector<16x4xf32>
    %1050 = arith.addf %1048, %1049 : vector<16x4xf32>
    %cst_314 = arith.constant 9.99999993E-9 : f32
    %1051 = vector.broadcast %cst_314 : f32 to vector<16x4xf32>
    %1052 = arith.maximumf %1050, %1051 : vector<16x4xf32>
    %1053 = math.sqrt %1052 : vector<16x4xf32>
    %c1136 = arith.constant 1136 : index
    %c0_315 = arith.constant 0 : index
    %1054 = vector.load %arg10[%c1136, %c0_315] : memref<1216x256xf32, #tpu.memory_space<vmem>>, vector<1x4xf32>
    %c1144 = arith.constant 1144 : index
    %c0_316 = arith.constant 0 : index
    %1055 = vector.load %arg10[%c1144, %c0_316] : memref<1216x256xf32, #tpu.memory_space<vmem>>, vector<4x4xf32>
    %1056 = arith.truncf %1053 : vector<16x4xf32> to vector<16x4xbf16>
    %1057 = arith.truncf %1055 : vector<4x4xf32> to vector<4x4xbf16>
    %cst_317 = arith.constant dense<0.000000e+00> : vector<16x4xf32>
    %1058 = tpu.matmul %1056, %1057, %cst_317 {dimension_numbers = #tpu.dot_dimension_numbers<[1], [0], [0], [1], [0, 0, 1, 1], [], []>} : vector<16x4xbf16>, vector<4x4xbf16>, vector<16x4xf32> -> vector<16x4xf32>
    %1059 = vector.broadcast %1054 : vector<1x4xf32> to vector<16x4xf32>
    %1060 = arith.addf %1059, %1058 : vector<16x4xf32>
    %c1152 = arith.constant 1152 : index
    %c0_318 = arith.constant 0 : index
    %1061 = vector.load %arg10[%c1152, %c0_318] : memref<1216x256xf32, #tpu.memory_space<vmem>>, vector<16x4xf32>
    %1062 = arith.truncf %1020 : vector<16x16xf32> to vector<16x16xbf16>
    %1063 = arith.truncf %1061 : vector<16x4xf32> to vector<16x4xbf16>
    %cst_319 = arith.constant dense<0.000000e+00> : vector<16x4xf32>
    %1064 = tpu.matmul %1062, %1063, %cst_319 {dimension_numbers = #tpu.dot_dimension_numbers<[1], [0], [0], [1], [0, 0, 1, 1], [], []>} : vector<16x16xbf16>, vector<16x4xbf16>, vector<16x4xf32> -> vector<16x4xf32>
    %1065 = arith.addf %1060, %1064 : vector<16x4xf32>
    %1066 = arith.truncf %1065 : vector<16x4xf32> to vector<16x4xbf16>
    %cst_320 = arith.constant dense<0.000000e+00> : vector<2x4xf32>
    %1067 = tpu.matmul %35, %1066, %cst_320 {dimension_numbers = #tpu.dot_dimension_numbers<[1], [0], [0], [1], [0, 0, 1, 1], [], []>} : vector<2x16xbf16>, vector<16x4xbf16>, vector<2x4xf32> -> vector<2x4xf32>
    %c1176 = arith.constant 1176 : index
    %c0_321 = arith.constant 0 : index
    %1068 = vector.load %arg10[%c1176, %c0_321] : memref<1216x256xf32, #tpu.memory_space<vmem>>, vector<4x2xf32>
    %1069 = arith.truncf %1067 : vector<2x4xf32> to vector<2x4xbf16>
    %1070 = arith.truncf %1068 : vector<4x2xf32> to vector<4x2xbf16>
    %cst_322 = arith.constant dense<0.000000e+00> : vector<2x2xf32>
    %1071 = tpu.matmul %1069, %1070, %cst_322 {dimension_numbers = #tpu.dot_dimension_numbers<[1], [0], [0], [1], [0, 0, 1, 1], [], []>} : vector<2x4xbf16>, vector<4x2xbf16>, vector<2x2xf32> -> vector<2x2xf32>
    %c1168 = arith.constant 1168 : index
    %c0_323 = arith.constant 0 : index
    %1072 = vector.load %arg10[%c1168, %c0_323] : memref<1216x256xf32, #tpu.memory_space<vmem>>, vector<1x2xf32>
    %1073 = vector.broadcast %1072 : vector<1x2xf32> to vector<2x2xf32>
    %1074 = arith.addf %1071, %1073 : vector<2x2xf32>
    %cst_324 = arith.constant 0.000000e+00 : f32
    %1075 = vector.broadcast %cst_324 : f32 to vector<2x2xf32>
    %1076 = arith.cmpf oge, %1074, %1075 : vector<2x2xf32>
    %cst_325 = arith.constant 0.00999999977 : f32
    %1077 = vector.broadcast %cst_325 : f32 to vector<2x2xf32>
    %1078 = arith.mulf %1077, %1074 : vector<2x2xf32>
    %1079 = arith.select %1076, %1074, %1078 : vector<2x2xi1>, vector<2x2xf32>
    %c1192 = arith.constant 1192 : index
    %c0_326 = arith.constant 0 : index
    %1080 = vector.load %arg10[%c1192, %c0_326] : memref<1216x256xf32, #tpu.memory_space<vmem>>, vector<2x11xf32>
    %1081 = arith.truncf %1079 : vector<2x2xf32> to vector<2x2xbf16>
    %1082 = arith.truncf %1080 : vector<2x11xf32> to vector<2x11xbf16>
    %cst_327 = arith.constant dense<0.000000e+00> : vector<2x11xf32>
    %1083 = tpu.matmul %1081, %1082, %cst_327 {dimension_numbers = #tpu.dot_dimension_numbers<[1], [0], [0], [1], [0, 0, 1, 1], [], []>} : vector<2x2xbf16>, vector<2x11xbf16>, vector<2x11xf32> -> vector<2x11xf32>
    %c1184 = arith.constant 1184 : index
    %c0_328 = arith.constant 0 : index
    %1084 = vector.load %arg10[%c1184, %c0_328] : memref<1216x256xf32, #tpu.memory_space<vmem>>, vector<1x11xf32>
    %1085 = vector.broadcast %1084 : vector<1x11xf32> to vector<2x11xf32>
    %1086 = arith.addf %1083, %1085 : vector<2x11xf32>
    %c0_329 = arith.constant 0 : index
    %c0_330 = arith.constant 0 : index
    %1087 = vector.load %arg12[%c0_329, %c0_330] : memref<2x11xf32, #tpu.memory_space<vmem>>, vector<2x11xf32>
    tpu.vector_store %arg12[%c0_329, %c0_330], %1086 {strides = array<i32>} : memref<2x11xf32, #tpu.memory_space<vmem>>, vector<2x11xf32>,
    return
  }
}

</mosaic_0001>

<llo_original>
// kernel: tpu_custom_call.1
$region0: #{tpu_custom_call.1}
  #allocation0 [shape = 'u32[]', space=smem, size = 0x4, offset = 0x4, fixed_abs, tag = 'smem constant byte address 0x4 - core index']
  #allocation1 [shape = 'u32[144,128]{1,0:T(1,128)}', space=vmem, size = 0x12000, scoped, tag = 'internal scratch']
  %s0 = inlined_call_operand.vmem [shape: f32[16,6], index: 0, kind: input, shape index: {}]
  %s1 = inlined_call_operand.vmem [shape: f32[48,3], index: 1, kind: input, shape index: {}]
  %s2 = inlined_call_operand.vmem [shape: f32[32,8], index: 2, kind: input, shape index: {}]
  %s3 = inlined_call_operand.vmem [shape: f32[96,1], index: 3, kind: input, shape index: {}]
  %s4 = inlined_call_operand.vmem [shape: s32[32,1], index: 4, kind: input, shape index: {}]
  %s5 = inlined_call_operand.vmem [shape: s32[32,1], index: 5, kind: input, shape index: {}]
  %s6 = inlined_call_operand.hbm [shape: s32[1,32], index: 6, kind: input, shape index: {}]
  %s7 = inlined_call_operand.hbm [shape: s32[1,16], index: 7, kind: input, shape index: {}]
  %s8 = inlined_call_operand.hbm [shape: f32[16,32], index: 8, kind: input, shape index: {}]
  %s9 = inlined_call_operand.hbm [shape: f32[4,32], index: 9, kind: input, shape index: {}]
  %s10 = inlined_call_operand.hbm [shape: f32[1216,256], index: 10, kind: input, shape index: {}]
  %s11 = inlined_call_operand.hbm [shape: f32[2,160], index: 11, kind: output, shape index: {0}]
  %s12 = inlined_call_operand.hbm [shape: f32[2,11], index: 12, kind: output, shape index: {1}]
  %13 = xla_tuple %s11, %s12
  %s14 = sld [smem:[#allocation0]]
  $region82: #{tpu_custom_call.1} parent=0
    _
  %s16 = ssub.s32 1, %s14
  %s17 = scalar_select 0, %s16, %s14
  $region1: #{tpu_custom_call.1} parent=0
    #allocation2 [shape = 'u8[512]{0}', space=vmem, size = 0x400, scoped, tag = 'input window, operand 6, single buffered']
    #allocation3 [shape = 's32[1]{0}', space=sflag, size = 0x4, scoped, tag = 'scoped memory for tpu_custom_call.1']
    #allocation4 [shape = 's32[1]{0}', space=sflag, size = 0x4, scoped, tag = 'scoped memory for tpu_custom_call.1']
    #allocation5 [shape = 'u8[512]{0}', space=vmem, size = 0x400, scoped, tag = 'input window, operand 7, single buffered']
    #allocation6 [shape = 's32[1]{0}', space=sflag, size = 0x4, scoped, tag = 'scoped memory for tpu_custom_call.1']
    #allocation7 [shape = 'u8[8192]{0}', space=vmem, size = 0x2000, scoped, tag = 'input window, operand 8, single buffered']
    #allocation8 [shape = 'u8[2048]{0}', space=vmem, size = 0x800, scoped, tag = 'input window, operand 9, single buffered']
    #allocation9 [shape = 's32[1]{0}', space=sflag, size = 0x4, scoped, tag = 'scoped memory for tpu_custom_call.1']
    #allocation10 [shape = 'u8[1245184]{0}', space=vmem, size = 0x130000, scoped, tag = 'input window, operand 10, single buffered']
    #allocation11 [shape = 'u8[2048]{0}', space=vmem, size = 0x800, scoped, tag = 'output window, operand 0, single buffered']
    #allocation12 [shape = 'u8[1024]{0}', space=vmem, size = 0x400, scoped, tag = 'output window, operand 1, single buffered']
    #allocation13 [shape = 's32[1]{0}', space=sflag, size = 0x4, scoped, tag = 'scoped memory for tpu_custom_call.1']
    %18 = vsyncpa [#allocation3], 0
    %19 = vsyncpa [#allocation6], 0
    %20 = vsyncpa [#allocation9], 0
    %21 = vsyncpa [#allocation4], 0
    %22 = vsyncpa [#allocation13], 0
    // Predicated region
    $region2: #{tpu_custom_call.1} parent=1 // pred_check
      _
    $region3: #{tpu_custom_call.1} parent=1 // pred_check_branch
      %24 = sbr.rel (0) target = $region5
    $region4: #{tpu_custom_call.1} parent=1 // pred_region
      _
    $region5: #{tpu_custom_call.1} parent=1 // pred_fallthru
      _
    // Predicated region
    $region6: #{tpu_custom_call.1} parent=1 // pred_check
      _
    $region7: #{tpu_custom_call.1} parent=1 // pred_check_branch
      %26 = sbr.rel (0) target = $region9
    $region8: #{tpu_custom_call.1} parent=1 // pred_region
      _
    $region9: #{tpu_custom_call.1} parent=1 // pred_fallthru
      _
    // Predicated region
    $region10: #{tpu_custom_call.1} parent=1 // pred_check
      _
    $region11: #{tpu_custom_call.1} parent=1 // pred_check_branch
      %28 = sbr.rel (0) target = $region13
    $region12: #{tpu_custom_call.1} parent=1 // pred_region
      _
    $region13: #{tpu_custom_call.1} parent=1 // pred_fallthru
      _
    // Predicated region
    $region14: #{tpu_custom_call.1} parent=1 // pred_check
      _
    $region15: #{tpu_custom_call.1} parent=1 // pred_check_branch
      %30 = sbr.rel (0) target = $region17
    $region16: #{tpu_custom_call.1} parent=1 // pred_region
      _
    $region17: #{tpu_custom_call.1} parent=1 // pred_fallthru
      _
    // Predicated region
    $region18: #{tpu_custom_call.1} parent=1 // pred_check
      _
    $region19: #{tpu_custom_call.1} parent=1 // pred_check_branch
      %32 = sbr.rel (0) target = $region21
    $region20: #{tpu_custom_call.1} parent=1 // pred_region
      _
    $region21: #{tpu_custom_call.1} parent=1 // pred_fallthru
      _
    // Predicated region
    $region22: #{tpu_custom_call.1} parent=1 // pred_check
      _
    $region23: #{tpu_custom_call.1} parent=1 // pred_check_branch
      %34 = sbr.rel (0) target = $region25
    $region24: #{tpu_custom_call.1} parent=1 // pred_region
      _
    $region25: #{tpu_custom_call.1} parent=1 // pred_fallthru
      _
    // Predicated region
    $region26: #{tpu_custom_call.1} parent=1 // pred_check
      _
    $region27: #{tpu_custom_call.1} parent=1 // pred_check_branch
      %36 = sbr.rel (0) target = $region29
    $region28: #{tpu_custom_call.1} parent=1 // pred_region
      %s38 = ssub.s32 16, 16
      %39 = vsyncadd [#allocation3], %s38
      %s41 = sshll.u32 [#allocation2], 4
      %s42 = int_to_ptr.vmem [resolvable:$true] %s41
      %44 = dma.hbm_to_vmem [thread:$0]  %s6, 16, %s42, [#allocation3]
    $region29: #{tpu_custom_call.1} parent=1 // pred_fallthru
      _
    // Predicated region
    $region30: #{tpu_custom_call.1} parent=1 // pred_check
      _
    $region31: #{tpu_custom_call.1} parent=1 // pred_check_branch
      %46 = sbr.rel (0) target = $region33
    $region32: #{tpu_custom_call.1} parent=1 // pred_region
      %s48 = ssub.s32 16, 16
      %49 = vsyncadd [#allocation6], %s48
      %s51 = sshll.u32 [#allocation5], 4
      %s52 = int_to_ptr.vmem [resolvable:$true] %s51
      %54 = dma.hbm_to_vmem [thread:$0]  %s7, 16, %s52, [#allocation6]
    $region33: #{tpu_custom_call.1} parent=1 // pred_fallthru
      _
    // Predicated region
    $region34: #{tpu_custom_call.1} parent=1 // pred_check
      _
    $region35: #{tpu_custom_call.1} parent=1 // pred_check_branch
      %56 = sbr.rel (0) target = $region37
    $region36: #{tpu_custom_call.1} parent=1 // pred_region
      %s58 = ssub.s32 256, 256
      %59 = vsyncadd [#allocation6], %s58
      %s60 = sshll.u32 [#allocation7], 4
      %s61 = int_to_ptr.vmem [resolvable:$true] %s60
      %66 = dma.hbm_to_vmem [thread:$0]  %s8, 256, %s61, [#allocation6], 128, 128, 8
    $region37: #{tpu_custom_call.1} parent=1 // pred_fallthru
      _
    // Predicated region
    $region38: #{tpu_custom_call.1} parent=1 // pred_check
      _
    $region39: #{tpu_custom_call.1} parent=1 // pred_check_branch
      %68 = sbr.rel (0) target = $region41
    $region40: #{tpu_custom_call.1} parent=1 // pred_region
      %s70 = ssub.s32 64, 64
      %71 = vsyncadd [#allocation9], %s70
      %s73 = sshll.u32 [#allocation8], 4
      %s74 = int_to_ptr.vmem [resolvable:$true] %s73
      %76 = dma.hbm_to_vmem [thread:$0]  %s9, 64, %s74, [#allocation9]
    $region41: #{tpu_custom_call.1} parent=1 // pred_fallthru
      _
    // Predicated region
    $region42: #{tpu_custom_call.1} parent=1 // pred_check
      _
    $region43: #{tpu_custom_call.1} parent=1 // pred_check_branch
      %78 = sbr.rel (0) target = $region45
    $region44: #{tpu_custom_call.1} parent=1 // pred_region
      %s80 = ssub.s32 38912, 38912
      %81 = vsyncadd [#allocation9], %s80
      %s82 = sshll.u32 [#allocation10], 4
      %s83 = int_to_ptr.vmem [resolvable:$true] %s82
      %88 = dma.hbm_to_vmem [thread:$0]  %s10, 38912, %s83, [#allocation9], 256, 256, 16
    $region45: #{tpu_custom_call.1} parent=1 // pred_fallthru
      _
    // Predicated region
    $region46: #{tpu_custom_call.1} parent=1 // pred_check
      _
    $region47: #{tpu_custom_call.1} parent=1 // pred_check_branch
      %90 = sbr.rel (0) target = $region49
    $region48: #{tpu_custom_call.1} parent=1 // pred_region
      %91 = dma.done [#allocation3], 16
    $region49: #{tpu_custom_call.1} parent=1 // pred_fallthru
      _
    // Predicated region
    $region50: #{tpu_custom_call.1} parent=1 // pred_check
      _
    $region51: #{tpu_custom_call.1} parent=1 // pred_check_branch
      %93 = sbr.rel (0) target = $region53
    $region52: #{tpu_custom_call.1} parent=1 // pred_region
      %94 = dma.done [#allocation6], 16
    $region53: #{tpu_custom_call.1} parent=1 // pred_fallthru
      _
    // Predicated region
    $region54: #{tpu_custom_call.1} parent=1 // pred_check
      _
    $region55: #{tpu_custom_call.1} parent=1 // pred_check_branch
      %96 = sbr.rel (0) target = $region57
    $region56: #{tpu_custom_call.1} parent=1 // pred_region
      %97 = dma.done [#allocation6], 256
    $region57: #{tpu_custom_call.1} parent=1 // pred_fallthru
      _
    // Predicated region
    $region58: #{tpu_custom_call.1} parent=1 // pred_check
      _
    $region59: #{tpu_custom_call.1} parent=1 // pred_check_branch
      %99 = sbr.rel (0) target = $region61
    $region60: #{tpu_custom_call.1} parent=1 // pred_region
      %100 = dma.done [#allocation9], 64
    $region61: #{tpu_custom_call.1} parent=1 // pred_fallthru
      _
    // Predicated region
    $region62: #{tpu_custom_call.1} parent=1 // pred_check
      _
    $region63: #{tpu_custom_call.1} parent=1 // pred_check_branch
      %102 = sbr.rel (0) target = $region65
    $region64: #{tpu_custom_call.1} parent=1 // pred_region
      %103 = dma.done [#allocation9], 38912
    $region65: #{tpu_custom_call.1} parent=1 // pred_fallthru
      _
    %v105 = vlaneseq
    %v106 = vand.u32 %v105, 127
    %v107 = vld [vmem:[%s4] sm:$0xff]
    %v108 = vld [vmem:[%s4 + $0x8] sm:$0xff]
    %v109 = vld [vmem:[%s4 + $0x10] sm:$0xff]
    %v110 = vld [vmem:[%s4 + $0x18] sm:$0xff]
    %111 = vset.pattern.permute.xlu0 0
    %112 = vperm.xlu0 %111, %v107
    %v113 = vpop.permute.xlu0 %112
    %114 = vset.pattern.permute.xlu0 0
    %115 = vperm.xlu0 %114, %v108
    %v116 = vpop.permute.xlu0 %115
    %117 = vset.pattern.permute.xlu0 0
    %118 = vperm.xlu0 %117, %v109
    %v119 = vpop.permute.xlu0 %118
    %120 = vset.pattern.permute.xlu0 0
    %121 = vperm.xlu0 %120, %v110
    %v122 = vpop.permute.xlu0 %121
    %vm123 = vcmp.eq.s32.totalorder %v113, %v106
    %vm124 = vcmp.eq.s32.totalorder %v116, %v106
    %vm125 = vcmp.eq.s32.totalorder %v119, %v106
    %vm126 = vcmp.eq.s32.totalorder %v122, %v106
    %v127 = vsel %vm123, 1.0, 0.0
    %v128 = vsel %vm124, 1.0, 0.0
    %v129 = vsel %vm125, 1.0, 0.0
    %v130 = vsel %vm126, 1.0, 0.0
    %v131 = vpack.c.bf16 %v128, %v127
    %v132 = vpack.c.bf16 %v130, %v129
    %v133 = vld [vmem:[%s5] sm:$0xff]
    %v134 = vld [vmem:[%s5 + $0x8] sm:$0xff]
    %v135 = vld [vmem:[%s5 + $0x10] sm:$0xff]
    %v136 = vld [vmem:[%s5 + $0x18] sm:$0xff]
    %137 = vset.pattern.permute.xlu0 0
    %138 = vperm.xlu0 %137, %v133
    %v139 = vpop.permute.xlu0 %138
    %140 = vset.pattern.permute.xlu0 0
    %141 = vperm.xlu0 %140, %v134
    %v142 = vpop.permute.xlu0 %141
    %143 = vset.pattern.permute.xlu0 0
    %144 = vperm.xlu0 %143, %v135
    %v145 = vpop.permute.xlu0 %144
    %146 = vset.pattern.permute.xlu0 0
    %147 = vperm.xlu0 %146, %v136
    %v148 = vpop.permute.xlu0 %147
    %vm149 = vcmp.eq.s32.totalorder %v139, %v106
    %vm150 = vcmp.eq.s32.totalorder %v142, %v106
    %vm151 = vcmp.eq.s32.totalorder %v145, %v106
    %vm152 = vcmp.eq.s32.totalorder %v148, %v106
    %v153 = vsel %vm149, 1.0, 0.0
    %v154 = vsel %vm150, 1.0, 0.0
    %v155 = vsel %vm151, 1.0, 0.0
    %v156 = vsel %vm152, 1.0, 0.0
    %v157 = vpack.c.bf16 %v154, %v153
    %v158 = vpack.c.bf16 %v156, %v155
    %v159 = vlaneseq
    %v160 = vshrl.u32 %v159, 7
    %v161 = vadd.s32 %v160, 8
    %v162 = vld [vmem:[#allocation2] sm:$0x1]
    %v163 = vlaneseq
    %v164 = vshrl.u32 %v163, 7
    %v165 = vsub.s32 0, %v164
    %v166 = vrot.slane %v162, %v165
    %vm167 = vcmp.eq.s32.totalorder %v160, %v166
    %vm168 = vcmp.eq.s32.totalorder %v161, %v166
    %v169 = vsel %vm167, 1.0, 0.0
    %v170 = vsel %vm168, 1.0, 0.0
    %v171 = vpack.c.bf16 %v170, %v169
    %vm172 = vcmask 261120
    %v173 = vsel %vm172, %v169, 0.0
    %174 = vadd.xlane.f32.xlu0 %v173
    %v175 = vpop.xlane.xlu0 %174
    %v176 = vsel %vm172, %v170, 0.0
    %177 = vadd.xlane.f32.xlu0 %v176
    %v178 = vpop.xlane.xlu0 %177
    %v179 = vmax.f32 %v175, 1.0
    %v180 = vmax.f32 %v178, 1.0
    %v181 = vrcp.pop %v179
    %v182 = vrcp.pop %v180
    %v183 = vld [vmem:[#allocation5] sm:$0x1]
    %v184 = vlaneseq
    %v185 = vshrl.u32 %v184, 7
    %v186 = vsub.s32 0, %v185
    %v187 = vrot.slane %v183, %v186
    %vm188 = vcmp.eq.s32.totalorder %v160, %v187
    %v189 = vsel %vm188, 1.0, 0.0
    %v190 = vpack.c.bf16 %v189, %v189
    %v191 = vld [vmem:[%s0] sm:$0xff]
    %v192 = vld [vmem:[%s0 + $0x8] sm:$0xff]
    %v193 = vld [vmem:[%s1] sm:$0xff]
    %v194 = vld [vmem:[%s1 + $0x8] sm:$0xff]
    %v195 = vld [vmem:[%s1 + $0x10] sm:$0xff]
    %v196 = vld [vmem:[%s1 + $0x18] sm:$0xff]
    %v197 = vld [vmem:[%s1 + $0x20] sm:$0xff]
    %v198 = vld [vmem:[%s1 + $0x28] sm:$0xff]
    %v199 = vld [vmem:[%s2] sm:$0xff]
    %v200 = vld [vmem:[%s2 + $0x8] sm:$0xff]
    %v201 = vld [vmem:[%s2 + $0x10] sm:$0xff]
    %v202 = vld [vmem:[%s2 + $0x18] sm:$0xff]
    %v203 = vld [vmem:[%s3] sm:$0xff]
    %v204 = vld [vmem:[%s3 + $0x8] sm:$0xff]
    %v205 = vld [vmem:[%s3 + $0x10] sm:$0xff]
    %v206 = vld [vmem:[%s3 + $0x18] sm:$0xff]
    %v207 = vld [vmem:[%s3 + $0x20] sm:$0xff]
    %v208 = vld [vmem:[%s3 + $0x28] sm:$0xff]
    %v209 = vld [vmem:[%s3 + $0x30] sm:$0xff]
    %v210 = vld [vmem:[%s3 + $0x38] sm:$0xff]
    %v211 = vld [vmem:[%s3 + $0x40] sm:$0xff]
    %v212 = vld [vmem:[%s3 + $0x48] sm:$0xff]
    %v213 = vld [vmem:[%s3 + $0x50] sm:$0xff]
    %v214 = vld [vmem:[%s3 + $0x58] sm:$0xff]
    %vm215 = vcmask 48128
    %v216 = vsel %vm215, %v191, 0.0
    %217 = vadd.xlane.f32.xlu0 %v216
    %v218 = vpop.xlane.xlu0 %217
    %v219 = vsel %vm215, %v192, 0.0
    %220 = vadd.xlane.f32.xlu0 %v219
    %v221 = vpop.xlane.xlu0 %220
    %v222 = vrcp.pop 6.0
    %v223 = vmul.f32 %v218, %v222
    %v224 = vmul.f32 %v221, %v222
    %v225 = vsub.f32 %v191, %v223
    %v226 = vsub.f32 %v192, %v224
    %v227 = vmul.f32 %v225, %v225
    %v228 = vmul.f32 %v226, %v226
    %v229 = vsel %vm215, %v227, 0.0
    %230 = vadd.xlane.f32.xlu0 %v229
    %v231 = vpop.xlane.xlu0 %230
    %v232 = vsel %vm215, %v228, 0.0
    %233 = vadd.xlane.f32.xlu0 %v232
    %v234 = vpop.xlane.xlu0 %233
    %v235 = vmul.f32 %v231, %v222
    %v236 = vmul.f32 %v234, %v222
    %v237 = vadd.f32 %v235, 1e-05
    %v238 = vadd.f32 %v236, 1e-05
    %v239 = vrsqrt.pop %v237
    %v240 = vrsqrt.pop %v238
    %v241 = vmul.f32 %v225, %v239
    %v242 = vmul.f32 %v226, %v240
    %v243 = vld [vmem:[#allocation10 + $0x6b0] ss:$0 sm:$0xff]
    %v244 = vmul.f32 %v241, %v243
    %v245 = vmul.f32 %v242, %v243
    %v246 = vld [vmem:[#allocation10 + $0x6a0] ss:$0 sm:$0xff]
    %v247 = vadd.f32 %v244, %v246
    %v248 = vadd.f32 %v245, %v246
    %v249 = vmul.f32 %v193, %v193
    %v250 = vmul.f32 %v194, %v194
    %v251 = vmul.f32 %v195, %v195
    %v252 = vmul.f32 %v196, %v196
    %v253 = vadd.f32 %v249, %v251
    %v254 = vadd.f32 %v250, %v252
    %v255 = vmul.f32 %v197, %v197
    %v256 = vmul.f32 %v198, %v198
    %v257 = vadd.f32 %v253, %v255
    %v258 = vadd.f32 %v254, %v256
    %v259 = vmax.f32 %v257, 1e-08
    %v260 = vmax.f32 %v258, 1e-08
    %vm261 = vcmask 23552
    %v262 = vsel %vm261, %v259, 0.0
    %263 = vadd.xlane.f32.xlu0 %v262
    %v264 = vpop.xlane.xlu0 %263
    %v265 = vsel %vm261, %v260, 0.0
    %266 = vadd.xlane.f32.xlu0 %v265
    %v267 = vpop.xlane.xlu0 %266
    %v268 = vrcp.pop 3.0
    %v269 = vmul.f32 %v264, %v268
    %v270 = vmul.f32 %v267, %v268
    %v271 = vrsqrt.pop %v269
    %v272 = vrsqrt.pop %v270
    %274 = vset.pattern.permute.xlu0 0
    %275 = vperm.xlu0 %274, %v271
    %v276 = vpop.permute.xlu0 %275
    %279 = vset.pattern.permute.xlu0 0
    %280 = vperm.xlu0 %279, %v272
    %v281 = vpop.permute.xlu0 %280
    %v283 = vmul.f32 %v193, %v276
    %v284 = vmul.f32 %v194, %v281
    %v285 = vmul.f32 %v195, %v276
    %v286 = vmul.f32 %v196, %v281
    %v287 = vmul.f32 %v197, %v276
    %v288 = vmul.f32 %v198, %v281
    %v289 = vld [vmem:[#allocation10 + $0x50] sm:$0x7]
    %v290 = vpack.c.bf16 %v284, %v283
    %v291 = vpack.c.bf16 %v286, %v285
    %v292 = vpack.c.bf16 %v288, %v287
    %v293 = vpack.c.bf16 %v289, %v289
    %v295 = vsel %vm261, %v290, 0
    %v298 = vsel %vm261, %v291, 0
    %v301 = vsel %vm261, %v292, 0
    %vm303 = vcmask 1040384
    %vm304 = vcmask 1041408
    %v305 = vsel %vm303, 4294967295, 65535
    %v306 = vsel %vm304, %v305, 0
    %v308 = vand.u32 %v293, %v306
    %310 = vmatprep.subr.bf16.mxu0 0
    %311 = vmatpush1.bf16.msra.mxu0 %v308
    %312 = vmatprep.subr.bf16.mxu0 0
    %313 = vmatpush1.bf16.msra.mxu0 0
    %314 = vmatprep.subr.bf16.mxu0 0
    %315 = vmatpush1.bf16.msra.mxu0 0
    %316 = vmatprep.subr.bf16.mxu0 0
    %317 = vmatpush1.bf16.msra.mxu0 0
    %318 = vmatprep.subr.bf16.mxu0 0
    %319 = vmatpush1.bf16.msra.mxu0 0
    %320 = vmatprep.subr.bf16.mxu0 0
    %321 = vmatpush1.bf16.msra.mxu0 0
    %322 = vmatprep.subr.bf16.mxu0 0
    %323 = vmatpush1.bf16.msra.mxu0 0
    %324 = vmatprep.subr.bf16.mxu0 0
    %325 = vmatpush1.bf16.msra.mxu0 0
    %326 = vmatprep.subr.bf16.mxu0 0
    %327 = vmatpush1.bf16.msra.mxu0 0
    %328 = vmatprep.subr.bf16.mxu0 0
    %329 = vmatpush1.bf16.msra.mxu0 0
    %330 = vmatprep.subr.bf16.mxu0 0
    %331 = vmatpush1.bf16.msra.mxu0 0
    %332 = vmatprep.subr.bf16.mxu0 0
    %333 = vmatpush1.bf16.msra.mxu0 0
    %334 = vmatprep.subr.bf16.mxu0 0
    %335 = vmatpush1.bf16.msra.mxu0 0
    %336 = vmatprep.subr.bf16.mxu0 0
    %337 = vmatpush1.bf16.msra.mxu0 0
    %338 = vmatprep.subr.bf16.mxu0 0
    %339 = vmatpush1.bf16.msra.mxu0 0
    %340 = vmatprep.subr.bf16.mxu0 0
    %341 = vmatpush1.bf16.msra.mxu0 0
    %342 = vmatprep.mubr.bf16.mxu0 0
    %343 = vmatmul.mubr.bf16.gmra.mrb[0].mxu0 %v295
    %v344 = vpop.f32.mrb[0].mxu0
    %v345 = vadd.f32 0.0, %v344
    %v346 = vpop.f32.mrb[0].mxu0
    %v347 = vpop.f32.mrb[0].mxu0
    %v348 = vadd.f32 0.0, %v347
    %v349 = vpop.f32.mrb[0].mxu0
    %350 = vmatprep.mubr.bf16.mxu0 0
    %351 = vmatmul.mubr.bf16.gmra.mrb[0].mxu0 %v298
    %v352 = vpop.f32.mrb[0].mxu0
    %v353 = vadd.f32 0.0, %v352
    %v354 = vpop.f32.mrb[0].mxu0
    %v355 = vpop.f32.mrb[0].mxu0
    %v356 = vadd.f32 0.0, %v355
    %v357 = vpop.f32.mrb[0].mxu0
    %358 = vmatprep.mubr.bf16.mxu0 0
    %359 = vmatmul.mubr.bf16.gmra.mrb[0].mxu0 %v301
    %v360 = vpop.f32.mrb[0].mxu0
    %v361 = vadd.f32 0.0, %v360
    %v362 = vpop.f32.mrb[0].mxu0
    %v363 = vpop.f32.mrb[0].mxu0
    %v364 = vadd.f32 0.0, %v363
    %v365 = vpop.f32.mrb[0].mxu0
    %366 = vdwg.mxu0
    %v367 = vmul.f32 %v345, %v345
    %v368 = vmul.f32 %v348, %v348
    %v369 = vmul.f32 %v353, %v353
    %v370 = vmul.f32 %v356, %v356
    %v371 = vadd.f32 %v367, %v369
    %v372 = vadd.f32 %v368, %v370
    %v373 = vmul.f32 %v361, %v361
    %v374 = vmul.f32 %v364, %v364
    %v375 = vadd.f32 %v371, %v373
    %v376 = vadd.f32 %v372, %v374
    %v377 = vmax.f32 %v375, 1e-08
    %v378 = vmax.f32 %v376, 1e-08
    %v379 = vrsqrt.pop %v377
    %v380 = vmul.f32 %v377, %v379
    %vm381 = vcmp.eq.f32.partialorder %v377, inf
    %v382 = vsel %vm381, %v377, %v380
    %vm383 = vcmp.eq.f32.partialorder %v377, 0.0
    %v384 = vand.u32 %v377, 2147483648
    %v385 = vsel %vm383, %v384, %v382
    %v386 = vrsqrt.pop %v378
    %v387 = vmul.f32 %v378, %v386
    %vm388 = vcmp.eq.f32.partialorder %v378, inf
    %v389 = vsel %vm388, %v378, %v387
    %vm390 = vcmp.eq.f32.partialorder %v378, 0.0
    %v391 = vand.u32 %v378, 2147483648
    %v392 = vsel %vm390, %v391, %v389
    %v393 = vld [vmem:[#allocation10 + $0x60] ss:$0 sm:$0xff]
    %v394 = vld [vmem:[#allocation10 + $0x70] sm:$0xf]
    %v395 = vpack.c.bf16 %v392, %v385
    %v396 = vpack.c.bf16 %v394, %v394
    %vm397 = vcmask 31744
    %v399 = vsel %vm397, %v395, 0
    %v402 = vsel %vm304, %v396, 0
    %404 = vmatprep.subr.bf16.mxu0 0
    %405 = vmatpush1.bf16.msra.mxu0 %v402
    %406 = vmatprep.subr.bf16.mxu0 0
    %407 = vmatpush1.bf16.msra.mxu0 0
    %408 = vmatprep.subr.bf16.mxu0 0
    %409 = vmatpush1.bf16.msra.mxu0 0
    %410 = vmatprep.subr.bf16.mxu0 0
    %411 = vmatpush1.bf16.msra.mxu0 0
    %412 = vmatprep.subr.bf16.mxu0 0
    %413 = vmatpush1.bf16.msra.mxu0 0
    %414 = vmatprep.subr.bf16.mxu0 0
    %415 = vmatpush1.bf16.msra.mxu0 0
    %416 = vmatprep.subr.bf16.mxu0 0
    %417 = vmatpush1.bf16.msra.mxu0 0
    %418 = vmatprep.subr.bf16.mxu0 0
    %419 = vmatpush1.bf16.msra.mxu0 0
    %420 = vmatprep.subr.bf16.mxu0 0
    %421 = vmatpush1.bf16.msra.mxu0 0
    %422 = vmatprep.subr.bf16.mxu0 0
    %423 = vmatpush1.bf16.msra.mxu0 0
    %424 = vmatprep.subr.bf16.mxu0 0
    %425 = vmatpush1.bf16.msra.mxu0 0
    %426 = vmatprep.subr.bf16.mxu0 0
    %427 = vmatpush1.bf16.msra.mxu0 0
    %428 = vmatprep.subr.bf16.mxu0 0
    %429 = vmatpush1.bf16.msra.mxu0 0
    %430 = vmatprep.subr.bf16.mxu0 0
    %431 = vmatpush1.bf16.msra.mxu0 0
    %432 = vmatprep.subr.bf16.mxu0 0
    %433 = vmatpush1.bf16.msra.mxu0 0
    %434 = vmatprep.subr.bf16.mxu0 0
    %435 = vmatpush1.bf16.msra.mxu0 0
    %436 = vmatprep.mubr.bf16.mxu0 0
    %437 = vmatmul.mubr.bf16.gmra.mrb[0].mxu0 %v399
    %v438 = vpop.f32.mrb[0].mxu0
    %v439 = vadd.f32 0.0, %v438
    %v440 = vpop.f32.mrb[0].mxu0
    %v441 = vpop.f32.mrb[0].mxu0
    %v442 = vadd.f32 0.0, %v441
    %v443 = vpop.f32.mrb[0].mxu0
    %444 = vdwg.mxu0
    %v445 = vadd.f32 %v393, %v439
    %v446 = vadd.f32 %v393, %v442
    %v447 = vld [vmem:[#allocation10 + $0x80] sm:$0x3f]
    %v448 = vpack.c.bf16 %v248, %v247
    %v449 = vpack.c.bf16 %v447, %v447
    %v451 = vsel %vm215, %v448, 0
    %vm453 = vcmask 1042432
    %v455 = vsel %vm453, %v449, 0
    %457 = vmatprep.subr.bf16.mxu0 0
    %458 = vmatpush1.bf16.msra.mxu0 %v455
    %459 = vmatprep.subr.bf16.mxu0 0
    %460 = vmatpush1.bf16.msra.mxu0 0
    %461 = vmatprep.subr.bf16.mxu0 0
    %462 = vmatpush1.bf16.msra.mxu0 0
    %463 = vmatprep.subr.bf16.mxu0 0
    %464 = vmatpush1.bf16.msra.mxu0 0
    %465 = vmatprep.subr.bf16.mxu0 0
    %466 = vmatpush1.bf16.msra.mxu0 0
    %467 = vmatprep.subr.bf16.mxu0 0
    %468 = vmatpush1.bf16.msra.mxu0 0
    %469 = vmatprep.subr.bf16.mxu0 0
    %470 = vmatpush1.bf16.msra.mxu0 0
    %471 = vmatprep.subr.bf16.mxu0 0
    %472 = vmatpush1.bf16.msra.mxu0 0
    %473 = vmatprep.subr.bf16.mxu0 0
    %474 = vmatpush1.bf16.msra.mxu0 0
    %475 = vmatprep.subr.bf16.mxu0 0
    %476 = vmatpush1.bf16.msra.mxu0 0
    %477 = vmatprep.subr.bf16.mxu0 0
    %478 = vmatpush1.bf16.msra.mxu0 0
    %479 = vmatprep.subr.bf16.mxu0 0
    %480 = vmatpush1.bf16.msra.mxu0 0
    %481 = vmatprep.subr.bf16.mxu0 0
    %482 = vmatpush1.bf16.msra.mxu0 0
    %483 = vmatprep.subr.bf16.mxu0 0
    %484 = vmatpush1.bf16.msra.mxu0 0
    %485 = vmatprep.subr.bf16.mxu0 0
    %486 = vmatpush1.bf16.msra.mxu0 0
    %487 = vmatprep.subr.bf16.mxu0 0
    %488 = vmatpush1.bf16.msra.mxu0 0
    %489 = vmatprep.mubr.bf16.mxu0 0
    %490 = vmatmul.mubr.bf16.gmra.mrb[0].mxu0 %v451
    %v491 = vpop.f32.mrb[0].mxu0
    %v492 = vadd.f32 0.0, %v491
    %v493 = vpop.f32.mrb[0].mxu0
    %v494 = vpop.f32.mrb[0].mxu0
    %v495 = vadd.f32 0.0, %v494
    %v496 = vpop.f32.mrb[0].mxu0
    %497 = vdwg.mxu0
    %v498 = vadd.f32 %v445, %v492
    %v499 = vadd.f32 %v446, %v495
    %v500 = vld [vmem:[#allocation10 + $0x90] sm:$0xf]
    %v501 = vpack.c.bf16 %v348, %v345
    %v502 = vpack.c.bf16 %v356, %v353
    %v503 = vpack.c.bf16 %v364, %v361
    %v504 = vpack.c.bf16 %v500, %v500
    %v506 = vsel %vm397, %v501, 0
    %v509 = vsel %vm397, %v502, 0
    %v512 = vsel %vm397, %v503, 0
    %v515 = vsel %vm304, %v504, 0
    %517 = vmatprep.subr.bf16.mxu0 0
    %518 = vmatpush1.bf16.msra.mxu0 %v515
    %519 = vmatprep.subr.bf16.mxu0 0
    %520 = vmatpush1.bf16.msra.mxu0 0
    %521 = vmatprep.subr.bf16.mxu0 0
    %522 = vmatpush1.bf16.msra.mxu0 0
    %523 = vmatprep.subr.bf16.mxu0 0
    %524 = vmatpush1.bf16.msra.mxu0 0
    %525 = vmatprep.subr.bf16.mxu0 0
    %526 = vmatpush1.bf16.msra.mxu0 0
    %527 = vmatprep.subr.bf16.mxu0 0
    %528 = vmatpush1.bf16.msra.mxu0 0
    %529 = vmatprep.subr.bf16.mxu0 0
    %530 = vmatpush1.bf16.msra.mxu0 0
    %531 = vmatprep.subr.bf16.mxu0 0
    %532 = vmatpush1.bf16.msra.mxu0 0
    %533 = vmatprep.subr.bf16.mxu0 0
    %534 = vmatpush1.bf16.msra.mxu0 0
    %535 = vmatprep.subr.bf16.mxu0 0
    %536 = vmatpush1.bf16.msra.mxu0 0
    %537 = vmatprep.subr.bf16.mxu0 0
    %538 = vmatpush1.bf16.msra.mxu0 0
    %539 = vmatprep.subr.bf16.mxu0 0
    %540 = vmatpush1.bf16.msra.mxu0 0
    %541 = vmatprep.subr.bf16.mxu0 0
    %542 = vmatpush1.bf16.msra.mxu0 0
    %543 = vmatprep.subr.bf16.mxu0 0
    %544 = vmatpush1.bf16.msra.mxu0 0
    %545 = vmatprep.subr.bf16.mxu0 0
    %546 = vmatpush1.bf16.msra.mxu0 0
    %547 = vmatprep.subr.bf16.mxu0 0
    %548 = vmatpush1.bf16.msra.mxu0 0
    %549 = vmatprep.mubr.bf16.mxu0 0
    %550 = vmatmul.mubr.bf16.gmra.mrb[0].mxu0 %v506
    %v551 = vpop.f32.mrb[0].mxu0
    %v552 = vadd.f32 0.0, %v551
    %v553 = vpop.f32.mrb[0].mxu0
    %v554 = vpop.f32.mrb[0].mxu0
    %v555 = vadd.f32 0.0, %v554
    %v556 = vpop.f32.mrb[0].mxu0
    %557 = vmatprep.mubr.bf16.mxu0 0
    %558 = vmatmul.mubr.bf16.gmra.mrb[0].mxu0 %v509
    %v559 = vpop.f32.mrb[0].mxu0
    %v560 = vadd.f32 0.0, %v559
    %v561 = vpop.f32.mrb[0].mxu0
    %v562 = vpop.f32.mrb[0].mxu0
    %v563 = vadd.f32 0.0, %v562
    %v564 = vpop.f32.mrb[0].mxu0
    %565 = vmatprep.mubr.bf16.mxu0 0
    %566 = vmatmul.mubr.bf16.gmra.mrb[0].mxu0 %v512
    %v567 = vpop.f32.mrb[0].mxu0
    %v568 = vadd.f32 0.0, %v567
    %v569 = vpop.f32.mrb[0].mxu0
    %v570 = vpop.f32.mrb[0].mxu0
    %v571 = vadd.f32 0.0, %v570
    %v572 = vpop.f32.mrb[0].mxu0
    %573 = vdwg.mxu0
    %vm574 = vcmask 64512
    %v575 = vsel %vm574, %v199, 0.0
    %576 = vadd.xlane.f32.xlu0 %v575
    %v577 = vpop.xlane.xlu0 %576
    %v578 = vsel %vm574, %v200, 0.0
    %579 = vadd.xlane.f32.xlu0 %v578
    %v580 = vpop.xlane.xlu0 %579
    %v581 = vsel %vm574, %v201, 0.0
    %582 = vadd.xlane.f32.xlu0 %v581
    %v583 = vpop.xlane.xlu0 %582
    %v584 = vsel %vm574, %v202, 0.0
    %585 = vadd.xlane.f32.xlu0 %v584
    %v586 = vpop.xlane.xlu0 %585
    %v587 = vrcp.pop 8.0
    %v588 = vmul.f32 %v577, %v587
    %v589 = vmul.f32 %v580, %v587
    %v590 = vmul.f32 %v583, %v587
    %v591 = vmul.f32 %v586, %v587
    %v592 = vsub.f32 %v199, %v588
    %v593 = vsub.f32 %v200, %v589
    %v594 = vsub.f32 %v201, %v590
    %v595 = vsub.f32 %v202, %v591
    %v596 = vmul.f32 %v592, %v592
    %v597 = vmul.f32 %v593, %v593
    %v598 = vmul.f32 %v594, %v594
    %v599 = vmul.f32 %v595, %v595
    %v600 = vsel %vm574, %v596, 0.0
    %601 = vadd.xlane.f32.xlu0 %v600
    %v602 = vpop.xlane.xlu0 %601
    %v603 = vsel %vm574, %v597, 0.0
    %604 = vadd.xlane.f32.xlu0 %v603
    %v605 = vpop.xlane.xlu0 %604
    %v606 = vsel %vm574, %v598, 0.0
    %607 = vadd.xlane.f32.xlu0 %v606
    %v608 = vpop.xlane.xlu0 %607
    %v609 = vsel %vm574, %v599, 0.0
    %610 = vadd.xlane.f32.xlu0 %v609
    %v611 = vpop.xlane.xlu0 %610
    %v612 = vmul.f32 %v602, %v587
    %v613 = vmul.f32 %v605, %v587
    %v614 = vmul.f32 %v608, %v587
    %v615 = vmul.f32 %v611, %v587
    %v616 = vadd.f32 %v612, 1e-05
    %v617 = vadd.f32 %v613, 1e-05
    %v618 = vadd.f32 %v614, 1e-05
    %v619 = vadd.f32 %v615, 1e-05
    %v620 = vrsqrt.pop %v616
    %v621 = vrsqrt.pop %v617
    %v622 = vrsqrt.pop %v618
    %v623 = vrsqrt.pop %v619
    %v624 = vmul.f32 %v592, %v620
    %v625 = vmul.f32 %v593, %v621
    %v626 = vmul.f32 %v594, %v622
    %v627 = vmul.f32 %v595, %v623
    %v628 = vld [vmem:[#allocation10 + $0x690] ss:$0 sm:$0xff]
    %v629 = vmul.f32 %v624, %v628
    %v630 = vmul.f32 %v625, %v628
    %v631 = vmul.f32 %v626, %v628
    %v632 = vmul.f32 %v627, %v628
    %v633 = vld [vmem:[#allocation10 + $0x680] ss:$0 sm:$0xff]
    %v634 = vadd.f32 %v629, %v633
    %v635 = vadd.f32 %v630, %v633
    %v636 = vadd.f32 %v631, %v633
    %v637 = vadd.f32 %v632, %v633
    %v638 = vmul.f32 %v203, %v203
    %v639 = vmul.f32 %v204, %v204
    %v640 = vmul.f32 %v205, %v205
    %v641 = vmul.f32 %v206, %v206
    %v642 = vmul.f32 %v207, %v207
    %v643 = vmul.f32 %v208, %v208
    %v644 = vmul.f32 %v209, %v209
    %v645 = vmul.f32 %v210, %v210
    %v646 = vadd.f32 %v638, %v642
    %v647 = vadd.f32 %v639, %v643
    %v648 = vadd.f32 %v640, %v644
    %v649 = vadd.f32 %v641, %v645
    %v650 = vmul.f32 %v211, %v211
    %v651 = vmul.f32 %v212, %v212
    %v652 = vmul.f32 %v213, %v213
    %v653 = vmul.f32 %v214, %v214
    %v654 = vadd.f32 %v646, %v650
    %v655 = vadd.f32 %v647, %v651
    %v656 = vadd.f32 %v648, %v652
    %v657 = vadd.f32 %v649, %v653
    %v658 = vmax.f32 %v654, 1e-08
    %v659 = vmax.f32 %v655, 1e-08
    %v660 = vmax.f32 %v656, 1e-08
    %v661 = vmax.f32 %v657, 1e-08
    %v662 = vadd.f32 %v658, 0.0
    %v663 = vadd.f32 %v659, 0.0
    %v664 = vadd.f32 %v660, 0.0
    %v665 = vadd.f32 %v661, 0.0
    %v666 = vrsqrt.pop %v662
    %v667 = vrsqrt.pop %v663
    %v668 = vrsqrt.pop %v664
    %v669 = vrsqrt.pop %v665
    %v670 = vmul.f32 %v203, %v666
    %v671 = vmul.f32 %v204, %v667
    %v672 = vmul.f32 %v205, %v668
    %v673 = vmul.f32 %v206, %v669
    %v674 = vmul.f32 %v207, %v666
    %v675 = vmul.f32 %v208, %v667
    %v676 = vmul.f32 %v209, %v668
    %v677 = vmul.f32 %v210, %v669
    %v678 = vmul.f32 %v211, %v666
    %v679 = vmul.f32 %v212, %v667
    %v680 = vmul.f32 %v213, %v668
    %v681 = vmul.f32 %v214, %v669
    %v682 = vld [vmem:[#allocation10] ss:$0 sm:$0xff]
    %v683 = vpack.c.bf16 %v671, %v670
    %v684 = vpack.c.bf16 %v673, %v672
    %v685 = vpack.c.bf16 %v675, %v674
    %v686 = vpack.c.bf16 %v677, %v676
    %v687 = vpack.c.bf16 %v679, %v678
    %v688 = vpack.c.bf16 %v681, %v680
    %v689 = vpack.c.bf16 %v682, %v682
    %vm690 = vcmask 7168
    %v692 = vsel %vm690, %v683, 0
    %v695 = vsel %vm690, %v684, 0
    %v698 = vsel %vm690, %v685, 0
    %v701 = vsel %vm690, %v686, 0
    %v704 = vsel %vm690, %v687, 0
    %v707 = vsel %vm690, %v688, 0
    %v709 = vsel 0, 4294967295, 65535
    %v710 = vsel %vm303, %v709, 0
    %v712 = vand.u32 %v689, %v710
    %714 = vmatprep.subr.bf16.mxu0 0
    %715 = vmatpush1.bf16.msra.mxu0 %v712
    %716 = vmatprep.subr.bf16.mxu0 0
    %717 = vmatpush1.bf16.msra.mxu0 0
    %718 = vmatprep.subr.bf16.mxu0 0
    %719 = vmatpush1.bf16.msra.mxu0 0
    %720 = vmatprep.subr.bf16.mxu0 0
    %721 = vmatpush1.bf16.msra.mxu0 0
    %722 = vmatprep.subr.bf16.mxu0 0
    %723 = vmatpush1.bf16.msra.mxu0 0
    %724 = vmatprep.subr.bf16.mxu0 0
    %725 = vmatpush1.bf16.msra.mxu0 0
    %726 = vmatprep.subr.bf16.mxu0 0
    %727 = vmatpush1.bf16.msra.mxu0 0
    %728 = vmatprep.subr.bf16.mxu0 0
    %729 = vmatpush1.bf16.msra.mxu0 0
    %730 = vmatprep.subr.bf16.mxu0 0
    %731 = vmatpush1.bf16.msra.mxu0 0
    %732 = vmatprep.subr.bf16.mxu0 0
    %733 = vmatpush1.bf16.msra.mxu0 0
    %734 = vmatprep.subr.bf16.mxu0 0
    %735 = vmatpush1.bf16.msra.mxu0 0
    %736 = vmatprep.subr.bf16.mxu0 0
    %737 = vmatpush1.bf16.msra.mxu0 0
    %738 = vmatprep.subr.bf16.mxu0 0
    %739 = vmatpush1.bf16.msra.mxu0 0
    %740 = vmatprep.subr.bf16.mxu0 0
    %741 = vmatpush1.bf16.msra.mxu0 0
    %742 = vmatprep.subr.bf16.mxu0 0
    %743 = vmatpush1.bf16.msra.mxu0 0
    %744 = vmatprep.subr.bf16.mxu0 0
    %745 = vmatpush1.bf16.msra.mxu0 0
    %746 = vmatprep.mubr.bf16.mxu0 0
    %747 = vmatmul.mubr.bf16.gmra.mrb[0].mxu0 %v692
    %v748 = vpop.f32.mrb[0].mxu0
    %v749 = vadd.f32 0.0, %v748
    %v750 = vpop.f32.mrb[0].mxu0
    %v751 = vpop.f32.mrb[0].mxu0
    %v752 = vadd.f32 0.0, %v751
    %v753 = vpop.f32.mrb[0].mxu0
    %754 = vmatprep.mubr.bf16.mxu0 0
    %755 = vmatmul.mubr.bf16.gmra.mrb[0].mxu0 %v695
    %v756 = vpop.f32.mrb[0].mxu0
    %v757 = vadd.f32 0.0, %v756
    %v758 = vpop.f32.mrb[0].mxu0
    %v759 = vpop.f32.mrb[0].mxu0
    %v760 = vadd.f32 0.0, %v759
    %v761 = vpop.f32.mrb[0].mxu0
    %762 = vmatprep.mubr.bf16.mxu0 0
    %763 = vmatmul.mubr.bf16.gmra.mrb[0].mxu0 %v698
    %v764 = vpop.f32.mrb[0].mxu0
    %v765 = vadd.f32 0.0, %v764
    %v766 = vpop.f32.mrb[0].mxu0
    %v767 = vpop.f32.mrb[0].mxu0
    %v768 = vadd.f32 0.0, %v767
    %v769 = vpop.f32.mrb[0].mxu0
    %770 = vmatprep.mubr.bf16.mxu0 0
    %771 = vmatmul.mubr.bf16.gmra.mrb[0].mxu0 %v701
    %v772 = vpop.f32.mrb[0].mxu0
    %v773 = vadd.f32 0.0, %v772
    %v774 = vpop.f32.mrb[0].mxu0
    %v775 = vpop.f32.mrb[0].mxu0
    %v776 = vadd.f32 0.0, %v775
    %v777 = vpop.f32.mrb[0].mxu0
    %778 = vmatprep.mubr.bf16.mxu0 0
    %779 = vmatmul.mubr.bf16.gmra.mrb[0].mxu0 %v704
    %v780 = vpop.f32.mrb[0].mxu0
    %v781 = vadd.f32 0.0, %v780
    %v782 = vpop.f32.mrb[0].mxu0
    %v783 = vpop.f32.mrb[0].mxu0
    %v784 = vadd.f32 0.0, %v783
    %v785 = vpop.f32.mrb[0].mxu0
    %786 = vmatprep.mubr.bf16.mxu0 0
    %787 = vmatmul.mubr.bf16.gmra.mrb[0].mxu0 %v707
    %v788 = vpop.f32.mrb[0].mxu0
    %v789 = vadd.f32 0.0, %v788
    %v790 = vpop.f32.mrb[0].mxu0
    %v791 = vpop.f32.mrb[0].mxu0
    %v792 = vadd.f32 0.0, %v791
    %v793 = vpop.f32.mrb[0].mxu0
    %794 = vdwg.mxu0
    %v795 = vmul.f32 %v749, %v749
    %v796 = vmul.f32 %v752, %v752
    %v797 = vmul.f32 %v757, %v757
    %v798 = vmul.f32 %v760, %v760
    %v799 = vmul.f32 %v765, %v765
    %v800 = vmul.f32 %v768, %v768
    %v801 = vmul.f32 %v773, %v773
    %v802 = vmul.f32 %v776, %v776
    %v803 = vadd.f32 %v795, %v799
    %v804 = vadd.f32 %v796, %v800
    %v805 = vadd.f32 %v797, %v801
    %v806 = vadd.f32 %v798, %v802
    %v807 = vmul.f32 %v781, %v781
    %v808 = vmul.f32 %v784, %v784
    %v809 = vmul.f32 %v789, %v789
    %v810 = vmul.f32 %v792, %v792
    %v811 = vadd.f32 %v803, %v807
    %v812 = vadd.f32 %v804, %v808
    %v813 = vadd.f32 %v805, %v809
    %v814 = vadd.f32 %v806, %v810
    %v815 = vmax.f32 %v811, 1e-08
    %v816 = vmax.f32 %v812, 1e-08
    %v817 = vmax.f32 %v813, 1e-08
    %v818 = vmax.f32 %v814, 1e-08
    %v819 = vrsqrt.pop %v815
    %v820 = vmul.f32 %v815, %v819
    %vm821 = vcmp.eq.f32.partialorder %v815, inf
    %v822 = vsel %vm821, %v815, %v820
    %vm823 = vcmp.eq.f32.partialorder %v815, 0.0
    %v824 = vand.u32 %v815, 2147483648
    %v825 = vsel %vm823, %v824, %v822
    %v826 = vrsqrt.pop %v816
    %v827 = vmul.f32 %v816, %v826
    %vm828 = vcmp.eq.f32.partialorder %v816, inf
    %v829 = vsel %vm828, %v816, %v827
    %vm830 = vcmp.eq.f32.partialorder %v816, 0.0
    %v831 = vand.u32 %v816, 2147483648
    %v832 = vsel %vm830, %v831, %v829
    %v833 = vrsqrt.pop %v817
    %v834 = vmul.f32 %v817, %v833
    %vm835 = vcmp.eq.f32.partialorder %v817, inf
    %v836 = vsel %vm835, %v817, %v834
    %vm837 = vcmp.eq.f32.partialorder %v817, 0.0
    %v838 = vand.u32 %v817, 2147483648
    %v839 = vsel %vm837, %v838, %v836
    %v840 = vrsqrt.pop %v818
    %v841 = vmul.f32 %v818, %v840
    %vm842 = vcmp.eq.f32.partialorder %v818, inf
    %v843 = vsel %vm842, %v818, %v841
    %vm844 = vcmp.eq.f32.partialorder %v818, 0.0
    %v845 = vand.u32 %v818, 2147483648
    %v846 = vsel %vm844, %v845, %v843
    %v847 = vld [vmem:[#allocation10 + $0x10] ss:$0 sm:$0xff]
    %v848 = vld [vmem:[#allocation10 + $0x20] sm:$0x3]
    %v849 = vpack.c.bf16 %v832, %v825
    %v850 = vpack.c.bf16 %v846, %v839
    %v851 = vpack.c.bf16 %v848, %v848
    %vm852 = vcmask 15360
    %v854 = vsel %vm852, %v849, 0
    %v857 = vsel %vm852, %v850, 0
    %v860 = vsel %vm303, %v851, 0
    %862 = vmatprep.subr.bf16.mxu0 0
    %863 = vmatpush1.bf16.msra.mxu0 %v860
    %864 = vmatprep.subr.bf16.mxu0 0
    %865 = vmatpush1.bf16.msra.mxu0 0
    %866 = vmatprep.subr.bf16.mxu0 0
    %867 = vmatpush1.bf16.msra.mxu0 0
    %868 = vmatprep.subr.bf16.mxu0 0
    %869 = vmatpush1.bf16.msra.mxu0 0
    %870 = vmatprep.subr.bf16.mxu0 0
    %871 = vmatpush1.bf16.msra.mxu0 0
    %872 = vmatprep.subr.bf16.mxu0 0
    %873 = vmatpush1.bf16.msra.mxu0 0
    %874 = vmatprep.subr.bf16.mxu0 0
    %875 = vmatpush1.bf16.msra.mxu0 0
    %876 = vmatprep.subr.bf16.mxu0 0
    %877 = vmatpush1.bf16.msra.mxu0 0
    %878 = vmatprep.subr.bf16.mxu0 0
    %879 = vmatpush1.bf16.msra.mxu0 0
    %880 = vmatprep.subr.bf16.mxu0 0
    %881 = vmatpush1.bf16.msra.mxu0 0
    %882 = vmatprep.subr.bf16.mxu0 0
    %883 = vmatpush1.bf16.msra.mxu0 0
    %884 = vmatprep.subr.bf16.mxu0 0
    %885 = vmatpush1.bf16.msra.mxu0 0
    %886 = vmatprep.subr.bf16.mxu0 0
    %887 = vmatpush1.bf16.msra.mxu0 0
    %888 = vmatprep.subr.bf16.mxu0 0
    %889 = vmatpush1.bf16.msra.mxu0 0
    %890 = vmatprep.subr.bf16.mxu0 0
    %891 = vmatpush1.bf16.msra.mxu0 0
    %892 = vmatprep.subr.bf16.mxu0 0
    %893 = vmatpush1.bf16.msra.mxu0 0
    %894 = vmatprep.mubr.bf16.mxu0 0
    %895 = vmatmul.mubr.bf16.gmra.mrb[0].mxu0 %v854
    %v896 = vpop.f32.mrb[0].mxu0
    %v897 = vadd.f32 0.0, %v896
    %v898 = vpop.f32.mrb[0].mxu0
    %v899 = vpop.f32.mrb[0].mxu0
    %v900 = vadd.f32 0.0, %v899
    %v901 = vpop.f32.mrb[0].mxu0
    %902 = vmatprep.mubr.bf16.mxu0 0
    %903 = vmatmul.mubr.bf16.gmra.mrb[0].mxu0 %v857
    %v904 = vpop.f32.mrb[0].mxu0
    %v905 = vadd.f32 0.0, %v904
    %v906 = vpop.f32.mrb[0].mxu0
    %v907 = vpop.f32.mrb[0].mxu0
    %v908 = vadd.f32 0.0, %v907
    %v909 = vpop.f32.mrb[0].mxu0
    %910 = vdwg.mxu0
    %v911 = vadd.f32 %v847, %v897
    %v912 = vadd.f32 %v847, %v900
    %v913 = vadd.f32 %v847, %v905
    %v914 = vadd.f32 %v847, %v908
    %v915 = vld [vmem:[#allocation10 + $0x30] sm:$0xff]
    %v916 = vpack.c.bf16 %v635, %v634
    %v917 = vpack.c.bf16 %v637, %v636
    %v918 = vpack.c.bf16 %v915, %v915
    %v920 = vsel %vm574, %v916, 0
    %v923 = vsel %vm574, %v917, 0
    %vm925 = vcmask 1043456
    %v927 = vsel %vm925, %v918, 0
    %929 = vmatprep.subr.bf16.mxu0 0
    %930 = vmatpush1.bf16.msra.mxu0 %v927
    %931 = vmatprep.subr.bf16.mxu0 0
    %932 = vmatpush1.bf16.msra.mxu0 0
    %933 = vmatprep.subr.bf16.mxu0 0
    %934 = vmatpush1.bf16.msra.mxu0 0
    %935 = vmatprep.subr.bf16.mxu0 0
    %936 = vmatpush1.bf16.msra.mxu0 0
    %937 = vmatprep.subr.bf16.mxu0 0
    %938 = vmatpush1.bf16.msra.mxu0 0
    %939 = vmatprep.subr.bf16.mxu0 0
    %940 = vmatpush1.bf16.msra.mxu0 0
    %941 = vmatprep.subr.bf16.mxu0 0
    %942 = vmatpush1.bf16.msra.mxu0 0
    %943 = vmatprep.subr.bf16.mxu0 0
    %944 = vmatpush1.bf16.msra.mxu0 0
    %945 = vmatprep.subr.bf16.mxu0 0
    %946 = vmatpush1.bf16.msra.mxu0 0
    %947 = vmatprep.subr.bf16.mxu0 0
    %948 = vmatpush1.bf16.msra.mxu0 0
    %949 = vmatprep.subr.bf16.mxu0 0
    %950 = vmatpush1.bf16.msra.mxu0 0
    %951 = vmatprep.subr.bf16.mxu0 0
    %952 = vmatpush1.bf16.msra.mxu0 0
    %953 = vmatprep.subr.bf16.mxu0 0
    %954 = vmatpush1.bf16.msra.mxu0 0
    %955 = vmatprep.subr.bf16.mxu0 0
    %956 = vmatpush1.bf16.msra.mxu0 0
    %957 = vmatprep.subr.bf16.mxu0 0
    %958 = vmatpush1.bf16.msra.mxu0 0
    %959 = vmatprep.subr.bf16.mxu0 0
    %960 = vmatpush1.bf16.msra.mxu0 0
    %961 = vmatprep.mubr.bf16.mxu0 0
    %962 = vmatmul.mubr.bf16.gmra.mrb[0].mxu0 %v920
    %v963 = vpop.f32.mrb[0].mxu0
    %v964 = vadd.f32 0.0, %v963
    %v965 = vpop.f32.mrb[0].mxu0
    %v966 = vpop.f32.mrb[0].mxu0
    %v967 = vadd.f32 0.0, %v966
    %v968 = vpop.f32.mrb[0].mxu0
    %969 = vmatprep.mubr.bf16.mxu0 0
    %970 = vmatmul.mubr.bf16.gmra.mrb[0].mxu0 %v923
    %v971 = vpop.f32.mrb[0].mxu0
    %v972 = vadd.f32 0.0, %v971
    %v973 = vpop.f32.mrb[0].mxu0
    %v974 = vpop.f32.mrb[0].mxu0
    %v975 = vadd.f32 0.0, %v974
    %v976 = vpop.f32.mrb[0].mxu0
    %977 = vdwg.mxu0
    %v978 = vadd.f32 %v911, %v964
    %v979 = vadd.f32 %v912, %v967
    %v980 = vadd.f32 %v913, %v972
    %v981 = vadd.f32 %v914, %v975
    %v982 = vld [vmem:[#allocation10 + $0x40] sm:$0x3]
    %v983 = vpack.c.bf16 %v752, %v749
    %v984 = vpack.c.bf16 %v760, %v757
    %v985 = vpack.c.bf16 %v768, %v765
    %v986 = vpack.c.bf16 %v776, %v773
    %v987 = vpack.c.bf16 %v784, %v781
    %v988 = vpack.c.bf16 %v792, %v789
    %v989 = vpack.c.bf16 %v982, %v982
    %v991 = vsel %vm852, %v983, 0
    %v994 = vsel %vm852, %v984, 0
    %v997 = vsel %vm852, %v985, 0
    %v1000 = vsel %vm852, %v986, 0
    %v1003 = vsel %vm852, %v987, 0
    %v1006 = vsel %vm852, %v988, 0
    %v1009 = vsel %vm303, %v989, 0
    %1011 = vmatprep.subr.bf16.mxu0 0
    %1012 = vmatpush1.bf16.msra.mxu0 %v1009
    %1013 = vmatprep.subr.bf16.mxu0 0
    %1014 = vmatpush1.bf16.msra.mxu0 0
    %1015 = vmatprep.subr.bf16.mxu0 0
    %1016 = vmatpush1.bf16.msra.mxu0 0
    %1017 = vmatprep.subr.bf16.mxu0 0
    %1018 = vmatpush1.bf16.msra.mxu0 0
    %1019 = vmatprep.subr.bf16.mxu0 0
    %1020 = vmatpush1.bf16.msra.mxu0 0
    %1021 = vmatprep.subr.bf16.mxu0 0
    %1022 = vmatpush1.bf16.msra.mxu0 0
    %1023 = vmatprep.subr.bf16.mxu0 0
    %1024 = vmatpush1.bf16.msra.mxu0 0
    %1025 = vmatprep.subr.bf16.mxu0 0
    %1026 = vmatpush1.bf16.msra.mxu0 0
    %1027 = vmatprep.subr.bf16.mxu0 0
    %1028 = vmatpush1.bf16.msra.mxu0 0
    %1029 = vmatprep.subr.bf16.mxu0 0
    %1030 = vmatpush1.bf16.msra.mxu0 0
    %1031 = vmatprep.subr.bf16.mxu0 0
    %1032 = vmatpush1.bf16.msra.mxu0 0
    %1033 = vmatprep.subr.bf16.mxu0 0
    %1034 = vmatpush1.bf16.msra.mxu0 0
    %1035 = vmatprep.subr.bf16.mxu0 0
    %1036 = vmatpush1.bf16.msra.mxu0 0
    %1037 = vmatprep.subr.bf16.mxu0 0
    %1038 = vmatpush1.bf16.msra.mxu0 0
    %1039 = vmatprep.subr.bf16.mxu0 0
    %1040 = vmatpush1.bf16.msra.mxu0 0
    %1041 = vmatprep.subr.bf16.mxu0 0
    %1042 = vmatpush1.bf16.msra.mxu0 0
    %1043 = vmatprep.mubr.bf16.mxu0 0
    %1044 = vmatmul.mubr.bf16.gmra.mrb[0].mxu0 %v991
    %v1045 = vpop.f32.mrb[0].mxu0
    %v1046 = vadd.f32 0.0, %v1045
    %v1047 = vpop.f32.mrb[0].mxu0
    %v1048 = vpop.f32.mrb[0].mxu0
    %v1049 = vadd.f32 0.0, %v1048
    %v1050 = vpop.f32.mrb[0].mxu0
    %1051 = vmatprep.mubr.bf16.mxu0 0
    %1052 = vmatmul.mubr.bf16.gmra.mrb[0].mxu0 %v994
    %v1053 = vpop.f32.mrb[0].mxu0
    %v1054 = vadd.f32 0.0, %v1053
    %v1055 = vpop.f32.mrb[0].mxu0
    %v1056 = vpop.f32.mrb[0].mxu0
    %v1057 = vadd.f32 0.0, %v1056
    %v1058 = vpop.f32.mrb[0].mxu0
    %1059 = vmatprep.mubr.bf16.mxu0 0
    %1060 = vmatmul.mubr.bf16.gmra.mrb[0].mxu0 %v997
    %v1061 = vpop.f32.mrb[0].mxu0
    %v1062 = vadd.f32 0.0, %v1061
    %v1063 = vpop.f32.mrb[0].mxu0
    %v1064 = vpop.f32.mrb[0].mxu0
    %v1065 = vadd.f32 0.0, %v1064
    %v1066 = vpop.f32.mrb[0].mxu0
    %1067 = vmatprep.mubr.bf16.mxu0 0
    %1068 = vmatmul.mubr.bf16.gmra.mrb[0].mxu0 %v1000
    %v1069 = vpop.f32.mrb[0].mxu0
    %v1070 = vadd.f32 0.0, %v1069
    %v1071 = vpop.f32.mrb[0].mxu0
    %v1072 = vpop.f32.mrb[0].mxu0
    %v1073 = vadd.f32 0.0, %v1072
    %v1074 = vpop.f32.mrb[0].mxu0
    %1075 = vmatprep.mubr.bf16.mxu0 0
    %1076 = vmatmul.mubr.bf16.gmra.mrb[0].mxu0 %v1003
    %v1077 = vpop.f32.mrb[0].mxu0
    %v1078 = vadd.f32 0.0, %v1077
    %v1079 = vpop.f32.mrb[0].mxu0
    %v1080 = vpop.f32.mrb[0].mxu0
    %v1081 = vadd.f32 0.0, %v1080
    %v1082 = vpop.f32.mrb[0].mxu0
    %1083 = vmatprep.mubr.bf16.mxu0 0
    %1084 = vmatmul.mubr.bf16.gmra.mrb[0].mxu0 %v1006
    %v1085 = vpop.f32.mrb[0].mxu0
    %v1086 = vadd.f32 0.0, %v1085
    %v1087 = vpop.f32.mrb[0].mxu0
    %v1088 = vpop.f32.mrb[0].mxu0
    %v1089 = vadd.f32 0.0, %v1088
    %v1090 = vpop.f32.mrb[0].mxu0
    %1091 = vdwg.mxu0
    %v1092 = vpack.c.bf16 %v499, %v498
    %vm1093 = vcmask 130048
    %v1095 = vsel %vm1093, %v131, 0
    %v1098 = vsel %vm1093, %v132, 0
    %1100 = vmatprep.subr.bf16.mxu0 0
    %1101 = vmatpush1.bf16.msra.mxu0 %v1092
    %1102 = vmatprep.subr.bf16.mxu0 0
    %1103 = vmatpush1.bf16.msra.mxu0 0
    %1104 = vmatprep.subr.bf16.mxu0 0
    %1105 = vmatpush1.bf16.msra.mxu0 0
    %1106 = vmatprep.subr.bf16.mxu0 0
    %1107 = vmatpush1.bf16.msra.mxu0 0
    %1108 = vmatprep.subr.bf16.mxu0 0
    %1109 = vmatpush1.bf16.msra.mxu0 0
    %1110 = vmatprep.subr.bf16.mxu0 0
    %1111 = vmatpush1.bf16.msra.mxu0 0
    %1112 = vmatprep.subr.bf16.mxu0 0
    %1113 = vmatpush1.bf16.msra.mxu0 0
    %1114 = vmatprep.subr.bf16.mxu0 0
    %1115 = vmatpush1.bf16.msra.mxu0 0
    %1116 = vmatprep.subr.bf16.mxu0 0
    %1117 = vmatpush1.bf16.msra.mxu0 0
    %1118 = vmatprep.subr.bf16.mxu0 0
    %1119 = vmatpush1.bf16.msra.mxu0 0
    %1120 = vmatprep.subr.bf16.mxu0 0
    %1121 = vmatpush1.bf16.msra.mxu0 0
    %1122 = vmatprep.subr.bf16.mxu0 0
    %1123 = vmatpush1.bf16.msra.mxu0 0
    %1124 = vmatprep.subr.bf16.mxu0 0
    %1125 = vmatpush1.bf16.msra.mxu0 0
    %1126 = vmatprep.subr.bf16.mxu0 0
    %1127 = vmatpush1.bf16.msra.mxu0 0
    %1128 = vmatprep.subr.bf16.mxu0 0
    %1129 = vmatpush1.bf16.msra.mxu0 0
    %1130 = vmatprep.subr.bf16.mxu0 0
    %1131 = vmatpush1.bf16.msra.mxu0 0
    %1132 = vmatprep.mubr.bf16.mxu0 0
    %1133 = vmatmul.mubr.bf16.gmra.mrb[0].mxu0 %v1095
    %v1134 = vpop.f32.mrb[0].mxu0
    %v1135 = vadd.f32 0.0, %v1134
    %v1136 = vpop.f32.mrb[0].mxu0
    %v1137 = vpop.f32.mrb[0].mxu0
    %v1138 = vadd.f32 0.0, %v1137
    %v1139 = vpop.f32.mrb[0].mxu0
    %1140 = vmatprep.mubr.bf16.mxu0 0
    %1141 = vmatmul.mubr.bf16.gmra.mrb[0].mxu0 %v1098
    %v1142 = vpop.f32.mrb[0].mxu0
    %v1143 = vadd.f32 0.0, %v1142
    %v1144 = vpop.f32.mrb[0].mxu0
    %v1145 = vpop.f32.mrb[0].mxu0
    %v1146 = vadd.f32 0.0, %v1145
    %v1147 = vpop.f32.mrb[0].mxu0
    %1148 = vdwg.mxu0
    %v1150 = vsel %vm1093, %v157, 0
    %v1153 = vsel %vm1093, %v158, 0
    %1155 = vmatprep.subr.bf16.mxu0 0
    %1156 = vmatpush1.bf16.msra.mxu0 %v1092
    %1157 = vmatprep.subr.bf16.mxu0 0
    %1158 = vmatpush1.bf16.msra.mxu0 0
    %1159 = vmatprep.subr.bf16.mxu0 0
    %1160 = vmatpush1.bf16.msra.mxu0 0
    %1161 = vmatprep.subr.bf16.mxu0 0
    %1162 = vmatpush1.bf16.msra.mxu0 0
    %1163 = vmatprep.subr.bf16.mxu0 0
    %1164 = vmatpush1.bf16.msra.mxu0 0
    %1165 = vmatprep.subr.bf16.mxu0 0
    %1166 = vmatpush1.bf16.msra.mxu0 0
    %1167 = vmatprep.subr.bf16.mxu0 0
    %1168 = vmatpush1.bf16.msra.mxu0 0
    %1169 = vmatprep.subr.bf16.mxu0 0
    %1170 = vmatpush1.bf16.msra.mxu0 0
    %1171 = vmatprep.subr.bf16.mxu0 0
    %1172 = vmatpush1.bf16.msra.mxu0 0
    %1173 = vmatprep.subr.bf16.mxu0 0
    %1174 = vmatpush1.bf16.msra.mxu0 0
    %1175 = vmatprep.subr.bf16.mxu0 0
    %1176 = vmatpush1.bf16.msra.mxu0 0
    %1177 = vmatprep.subr.bf16.mxu0 0
    %1178 = vmatpush1.bf16.msra.mxu0 0
    %1179 = vmatprep.subr.bf16.mxu0 0
    %1180 = vmatpush1.bf16.msra.mxu0 0
    %1181 = vmatprep.subr.bf16.mxu0 0
    %1182 = vmatpush1.bf16.msra.mxu0 0
    %1183 = vmatprep.subr.bf16.mxu0 0
    %1184 = vmatpush1.bf16.msra.mxu0 0
    %1185 = vmatprep.subr.bf16.mxu0 0
    %1186 = vmatpush1.bf16.msra.mxu0 0
    %1187 = vmatprep.mubr.bf16.mxu0 0
    %1188 = vmatmul.mubr.bf16.gmra.mrb[0].mxu0 %v1150
    %v1189 = vpop.f32.mrb[0].mxu0
    %v1190 = vadd.f32 0.0, %v1189
    %v1191 = vpop.f32.mrb[0].mxu0
    %v1192 = vpop.f32.mrb[0].mxu0
    %v1193 = vadd.f32 0.0, %v1192
    %v1194 = vpop.f32.mrb[0].mxu0
    %1195 = vmatprep.mubr.bf16.mxu0 0
    %1196 = vmatmul.mubr.bf16.gmra.mrb[0].mxu0 %v1153
    %v1197 = vpop.f32.mrb[0].mxu0
    %v1198 = vadd.f32 0.0, %v1197
    %v1199 = vpop.f32.mrb[0].mxu0
    %v1200 = vpop.f32.mrb[0].mxu0
    %v1201 = vadd.f32 0.0, %v1200
    %v1202 = vpop.f32.mrb[0].mxu0
    %1203 = vdwg.mxu0
    %v1204 = vpack.c.bf16 %v555, %v552
    %1205 = vmatprep.subr.bf16.mxu0 0
    %1206 = vmatpush1.bf16.msra.mxu0 %v1204
    %1207 = vmatprep.subr.bf16.mxu0 0
    %1208 = vmatpush1.bf16.msra.mxu0 0
    %1209 = vmatprep.subr.bf16.mxu0 0
    %1210 = vmatpush1.bf16.msra.mxu0 0
    %1211 = vmatprep.subr.bf16.mxu0 0
    %1212 = vmatpush1.bf16.msra.mxu0 0
    %1213 = vmatprep.subr.bf16.mxu0 0
    %1214 = vmatpush1.bf16.msra.mxu0 0
    %1215 = vmatprep.subr.bf16.mxu0 0
    %1216 = vmatpush1.bf16.msra.mxu0 0
    %1217 = vmatprep.subr.bf16.mxu0 0
    %1218 = vmatpush1.bf16.msra.mxu0 0
    %1219 = vmatprep.subr.bf16.mxu0 0
    %1220 = vmatpush1.bf16.msra.mxu0 0
    %1221 = vmatprep.subr.bf16.mxu0 0
    %1222 = vmatpush1.bf16.msra.mxu0 0
    %1223 = vmatprep.subr.bf16.mxu0 0
    %1224 = vmatpush1.bf16.msra.mxu0 0
    %1225 = vmatprep.subr.bf16.mxu0 0
    %1226 = vmatpush1.bf16.msra.mxu0 0
    %1227 = vmatprep.subr.bf16.mxu0 0
    %1228 = vmatpush1.bf16.msra.mxu0 0
    %1229 = vmatprep.subr.bf16.mxu0 0
    %1230 = vmatpush1.bf16.msra.mxu0 0
    %1231 = vmatprep.subr.bf16.mxu0 0
    %1232 = vmatpush1.bf16.msra.mxu0 0
    %1233 = vmatprep.subr.bf16.mxu0 0
    %1234 = vmatpush1.bf16.msra.mxu0 0
    %1235 = vmatprep.subr.bf16.mxu0 0
    %1236 = vmatpush1.bf16.msra.mxu0 0
    %1237 = vmatprep.mubr.bf16.mxu0 0
    %1238 = vmatmul.mubr.bf16.gmra.mrb[0].mxu0 %v1095
    %v1239 = vpop.f32.mrb[0].mxu0
    %v1240 = vadd.f32 0.0, %v1239
    %v1241 = vpop.f32.mrb[0].mxu0
    %v1242 = vpop.f32.mrb[0].mxu0
    %v1243 = vadd.f32 0.0, %v1242
    %v1244 = vpop.f32.mrb[0].mxu0
    %1245 = vmatprep.mubr.bf16.mxu0 0
    %1246 = vmatmul.mubr.bf16.gmra.mrb[0].mxu0 %v1098
    %v1247 = vpop.f32.mrb[0].mxu0
    %v1248 = vadd.f32 0.0, %v1247
    %v1249 = vpop.f32.mrb[0].mxu0
    %v1250 = vpop.f32.mrb[0].mxu0
    %v1251 = vadd.f32 0.0, %v1250
    %v1252 = vpop.f32.mrb[0].mxu0
    %1253 = vdwg.mxu0
    %v1254 = vpack.c.bf16 %v563, %v560
    %1255 = vmatprep.subr.bf16.mxu0 0
    %1256 = vmatpush1.bf16.msra.mxu0 %v1254
    %1257 = vmatprep.subr.bf16.mxu0 0
    %1258 = vmatpush1.bf16.msra.mxu0 0
    %1259 = vmatprep.subr.bf16.mxu0 0
    %1260 = vmatpush1.bf16.msra.mxu0 0
    %1261 = vmatprep.subr.bf16.mxu0 0
    %1262 = vmatpush1.bf16.msra.mxu0 0
    %1263 = vmatprep.subr.bf16.mxu0 0
    %1264 = vmatpush1.bf16.msra.mxu0 0
    %1265 = vmatprep.subr.bf16.mxu0 0
    %1266 = vmatpush1.bf16.msra.mxu0 0
    %1267 = vmatprep.subr.bf16.mxu0 0
    %1268 = vmatpush1.bf16.msra.mxu0 0
    %1269 = vmatprep.subr.bf16.mxu0 0
    %1270 = vmatpush1.bf16.msra.mxu0 0
    %1271 = vmatprep.subr.bf16.mxu0 0
    %1272 = vmatpush1.bf16.msra.mxu0 0
    %1273 = vmatprep.subr.bf16.mxu0 0
    %1274 = vmatpush1.bf16.msra.mxu0 0
    %1275 = vmatprep.subr.bf16.mxu0 0
    %1276 = vmatpush1.bf16.msra.mxu0 0
    %1277 = vmatprep.subr.bf16.mxu0 0
    %1278 = vmatpush1.bf16.msra.mxu0 0
    %1279 = vmatprep.subr.bf16.mxu0 0
    %1280 = vmatpush1.bf16.msra.mxu0 0
    %1281 = vmatprep.subr.bf16.mxu0 0
    %1282 = vmatpush1.bf16.msra.mxu0 0
    %1283 = vmatprep.subr.bf16.mxu0 0
    %1284 = vmatpush1.bf16.msra.mxu0 0
    %1285 = vmatprep.subr.bf16.mxu0 0
    %1286 = vmatpush1.bf16.msra.mxu0 0
    %1287 = vmatprep.mubr.bf16.mxu0 0
    %1288 = vmatmul.mubr.bf16.gmra.mrb[0].mxu0 %v1095
    %v1289 = vpop.f32.mrb[0].mxu0
    %v1290 = vadd.f32 0.0, %v1289
    %v1291 = vpop.f32.mrb[0].mxu0
    %v1292 = vpop.f32.mrb[0].mxu0
    %v1293 = vadd.f32 0.0, %v1292
    %v1294 = vpop.f32.mrb[0].mxu0
    %1295 = vmatprep.mubr.bf16.mxu0 0
    %1296 = vmatmul.mubr.bf16.gmra.mrb[0].mxu0 %v1098
    %v1297 = vpop.f32.mrb[0].mxu0
    %v1298 = vadd.f32 0.0, %v1297
    %v1299 = vpop.f32.mrb[0].mxu0
    %v1300 = vpop.f32.mrb[0].mxu0
    %v1301 = vadd.f32 0.0, %v1300
    %v1302 = vpop.f32.mrb[0].mxu0
    %1303 = vdwg.mxu0
    %v1304 = vpack.c.bf16 %v571, %v568
    %1305 = vmatprep.subr.bf16.mxu0 0
    %1306 = vmatpush1.bf16.msra.mxu0 %v1304
    %1307 = vmatprep.subr.bf16.mxu0 0
    %1308 = vmatpush1.bf16.msra.mxu0 0
    %1309 = vmatprep.subr.bf16.mxu0 0
    %1310 = vmatpush1.bf16.msra.mxu0 0
    %1311 = vmatprep.subr.bf16.mxu0 0
    %1312 = vmatpush1.bf16.msra.mxu0 0
    %1313 = vmatprep.subr.bf16.mxu0 0
    %1314 = vmatpush1.bf16.msra.mxu0 0
    %1315 = vmatprep.subr.bf16.mxu0 0
    %1316 = vmatpush1.bf16.msra.mxu0 0
    %1317 = vmatprep.subr.bf16.mxu0 0
    %1318 = vmatpush1.bf16.msra.mxu0 0
    %1319 = vmatprep.subr.bf16.mxu0 0
    %1320 = vmatpush1.bf16.msra.mxu0 0
    %1321 = vmatprep.subr.bf16.mxu0 0
    %1322 = vmatpush1.bf16.msra.mxu0 0
    %1323 = vmatprep.subr.bf16.mxu0 0
    %1324 = vmatpush1.bf16.msra.mxu0 0
    %1325 = vmatprep.subr.bf16.mxu0 0
    %1326 = vmatpush1.bf16.msra.mxu0 0
    %1327 = vmatprep.subr.bf16.mxu0 0
    %1328 = vmatpush1.bf16.msra.mxu0 0
    %1329 = vmatprep.subr.bf16.mxu0 0
    %1330 = vmatpush1.bf16.msra.mxu0 0
    %1331 = vmatprep.subr.bf16.mxu0 0
    %1332 = vmatpush1.bf16.msra.mxu0 0
    %1333 = vmatprep.subr.bf16.mxu0 0
    %1334 = vmatpush1.bf16.msra.mxu0 0
    %1335 = vmatprep.subr.bf16.mxu0 0
    %1336 = vmatpush1.bf16.msra.mxu0 0
    %1337 = vmatprep.mubr.bf16.mxu0 0
    %1338 = vmatmul.mubr.bf16.gmra.mrb[0].mxu0 %v1095
    %v1339 = vpop.f32.mrb[0].mxu0
    %v1340 = vadd.f32 0.0, %v1339
    %v1341 = vpop.f32.mrb[0].mxu0
    %v1342 = vpop.f32.mrb[0].mxu0
    %v1343 = vadd.f32 0.0, %v1342
    %v1344 = vpop.f32.mrb[0].mxu0
    %1345 = vmatprep.mubr.bf16.mxu0 0
    %1346 = vmatmul.mubr.bf16.gmra.mrb[0].mxu0 %v1098
    %v1347 = vpop.f32.mrb[0].mxu0
    %v1348 = vadd.f32 0.0, %v1347
    %v1349 = vpop.f32.mrb[0].mxu0
    %v1350 = vpop.f32.mrb[0].mxu0
    %v1351 = vadd.f32 0.0, %v1350
    %v1352 = vpop.f32.mrb[0].mxu0
    %1353 = vdwg.mxu0
    %1354 = vmatprep.subr.bf16.mxu0 0
    %1355 = vmatpush1.bf16.msra.mxu0 %v1204
    %1356 = vmatprep.subr.bf16.mxu0 0
    %1357 = vmatpush1.bf16.msra.mxu0 0
    %1358 = vmatprep.subr.bf16.mxu0 0
    %1359 = vmatpush1.bf16.msra.mxu0 0
    %1360 = vmatprep.subr.bf16.mxu0 0
    %1361 = vmatpush1.bf16.msra.mxu0 0
    %1362 = vmatprep.subr.bf16.mxu0 0
    %1363 = vmatpush1.bf16.msra.mxu0 0
    %1364 = vmatprep.subr.bf16.mxu0 0
    %1365 = vmatpush1.bf16.msra.mxu0 0
    %1366 = vmatprep.subr.bf16.mxu0 0
    %1367 = vmatpush1.bf16.msra.mxu0 0
    %1368 = vmatprep.subr.bf16.mxu0 0
    %1369 = vmatpush1.bf16.msra.mxu0 0
    %1370 = vmatprep.subr.bf16.mxu0 0
    %1371 = vmatpush1.bf16.msra.mxu0 0
    %1372 = vmatprep.subr.bf16.mxu0 0
    %1373 = vmatpush1.bf16.msra.mxu0 0
    %1374 = vmatprep.subr.bf16.mxu0 0
    %1375 = vmatpush1.bf16.msra.mxu0 0
    %1376 = vmatprep.subr.bf16.mxu0 0
    %1377 = vmatpush1.bf16.msra.mxu0 0
    %1378 = vmatprep.subr.bf16.mxu0 0
    %1379 = vmatpush1.bf16.msra.mxu0 0
    %1380 = vmatprep.subr.bf16.mxu0 0
    %1381 = vmatpush1.bf16.msra.mxu0 0
    %1382 = vmatprep.subr.bf16.mxu0 0
    %1383 = vmatpush1.bf16.msra.mxu0 0
    %1384 = vmatprep.subr.bf16.mxu0 0
    %1385 = vmatpush1.bf16.msra.mxu0 0
    %1386 = vmatprep.mubr.bf16.mxu0 0
    %1387 = vmatmul.mubr.bf16.gmra.mrb[0].mxu0 %v1150
    %v1388 = vpop.f32.mrb[0].mxu0
    %v1389 = vadd.f32 0.0, %v1388
    %v1390 = vpop.f32.mrb[0].mxu0
    %v1391 = vpop.f32.mrb[0].mxu0
    %v1392 = vadd.f32 0.0, %v1391
    %v1393 = vpop.f32.mrb[0].mxu0
    %1394 = vmatprep.mubr.bf16.mxu0 0
    %1395 = vmatmul.mubr.bf16.gmra.mrb[0].mxu0 %v1153
    %v1396 = vpop.f32.mrb[0].mxu0
    %v1397 = vadd.f32 0.0, %v1396
    %v1398 = vpop.f32.mrb[0].mxu0
    %v1399 = vpop.f32.mrb[0].mxu0
    %v1400 = vadd.f32 0.0, %v1399
    %v1401 = vpop.f32.mrb[0].mxu0
    %1402 = vdwg.mxu0
    %1403 = vmatprep.subr.bf16.mxu0 0
    %1404 = vmatpush1.bf16.msra.mxu0 %v1254
    %1405 = vmatprep.subr.bf16.mxu0 0
    %1406 = vmatpush1.bf16.msra.mxu0 0
    %1407 = vmatprep.subr.bf16.mxu0 0
    %1408 = vmatpush1.bf16.msra.mxu0 0
    %1409 = vmatprep.subr.bf16.mxu0 0
    %1410 = vmatpush1.bf16.msra.mxu0 0
    %1411 = vmatprep.subr.bf16.mxu0 0
    %1412 = vmatpush1.bf16.msra.mxu0 0
    %1413 = vmatprep.subr.bf16.mxu0 0
    %1414 = vmatpush1.bf16.msra.mxu0 0
    %1415 = vmatprep.subr.bf16.mxu0 0
    %1416 = vmatpush1.bf16.msra.mxu0 0
    %1417 = vmatprep.subr.bf16.mxu0 0
    %1418 = vmatpush1.bf16.msra.mxu0 0
    %1419 = vmatprep.subr.bf16.mxu0 0
    %1420 = vmatpush1.bf16.msra.mxu0 0
    %1421 = vmatprep.subr.bf16.mxu0 0
    %1422 = vmatpush1.bf16.msra.mxu0 0
    %1423 = vmatprep.subr.bf16.mxu0 0
    %1424 = vmatpush1.bf16.msra.mxu0 0
    %1425 = vmatprep.subr.bf16.mxu0 0
    %1426 = vmatpush1.bf16.msra.mxu0 0
    %1427 = vmatprep.subr.bf16.mxu0 0
    %1428 = vmatpush1.bf16.msra.mxu0 0
    %1429 = vmatprep.subr.bf16.mxu0 0
    %1430 = vmatpush1.bf16.msra.mxu0 0
    %1431 = vmatprep.subr.bf16.mxu0 0
    %1432 = vmatpush1.bf16.msra.mxu0 0
    %1433 = vmatprep.subr.bf16.mxu0 0
    %1434 = vmatpush1.bf16.msra.mxu0 0
    %1435 = vmatprep.mubr.bf16.mxu0 0
    %1436 = vmatmul.mubr.bf16.gmra.mrb[0].mxu0 %v1150
    %v1437 = vpop.f32.mrb[0].mxu0
    %v1438 = vadd.f32 0.0, %v1437
    %v1439 = vpop.f32.mrb[0].mxu0
    %v1440 = vpop.f32.mrb[0].mxu0
    %v1441 = vadd.f32 0.0, %v1440
    %v1442 = vpop.f32.mrb[0].mxu0
    %1443 = vmatprep.mubr.bf16.mxu0 0
    %1444 = vmatmul.mubr.bf16.gmra.mrb[0].mxu0 %v1153
    %v1445 = vpop.f32.mrb[0].mxu0
    %v1446 = vadd.f32 0.0, %v1445
    %v1447 = vpop.f32.mrb[0].mxu0
    %v1448 = vpop.f32.mrb[0].mxu0
    %v1449 = vadd.f32 0.0, %v1448
    %v1450 = vpop.f32.mrb[0].mxu0
    %1451 = vdwg.mxu0
    %1452 = vmatprep.subr.bf16.mxu0 0
    %1453 = vmatpush1.bf16.msra.mxu0 %v1304
    %1454 = vmatprep.subr.bf16.mxu0 0
    %1455 = vmatpush1.bf16.msra.mxu0 0
    %1456 = vmatprep.subr.bf16.mxu0 0
    %1457 = vmatpush1.bf16.msra.mxu0 0
    %1458 = vmatprep.subr.bf16.mxu0 0
    %1459 = vmatpush1.bf16.msra.mxu0 0
    %1460 = vmatprep.subr.bf16.mxu0 0
    %1461 = vmatpush1.bf16.msra.mxu0 0
    %1462 = vmatprep.subr.bf16.mxu0 0
    %1463 = vmatpush1.bf16.msra.mxu0 0
    %1464 = vmatprep.subr.bf16.mxu0 0
    %1465 = vmatpush1.bf16.msra.mxu0 0
    %1466 = vmatprep.subr.bf16.mxu0 0
    %1467 = vmatpush1.bf16.msra.mxu0 0
    %1468 = vmatprep.subr.bf16.mxu0 0
    %1469 = vmatpush1.bf16.msra.mxu0 0
    %1470 = vmatprep.subr.bf16.mxu0 0
    %1471 = vmatpush1.bf16.msra.mxu0 0
    %1472 = vmatprep.subr.bf16.mxu0 0
    %1473 = vmatpush1.bf16.msra.mxu0 0
    %1474 = vmatprep.subr.bf16.mxu0 0
    %1475 = vmatpush1.bf16.msra.mxu0 0
    %1476 = vmatprep.subr.bf16.mxu0 0
    %1477 = vmatpush1.bf16.msra.mxu0 0
    %1478 = vmatprep.subr.bf16.mxu0 0
    %1479 = vmatpush1.bf16.msra.mxu0 0
    %1480 = vmatprep.subr.bf16.mxu0 0
    %1481 = vmatpush1.bf16.msra.mxu0 0
    %1482 = vmatprep.subr.bf16.mxu0 0
    %1483 = vmatpush1.bf16.msra.mxu0 0
    %1484 = vmatprep.mubr.bf16.mxu0 0
    %1485 = vmatmul.mubr.bf16.gmra.mrb[0].mxu0 %v1150
    %v1486 = vpop.f32.mrb[0].mxu0
    %v1487 = vadd.f32 0.0, %v1486
    %v1488 = vpop.f32.mrb[0].mxu0
    %v1489 = vpop.f32.mrb[0].mxu0
    %v1490 = vadd.f32 0.0, %v1489
    %v1491 = vpop.f32.mrb[0].mxu0
    %1492 = vmatprep.mubr.bf16.mxu0 0
    %1493 = vmatmul.mubr.bf16.gmra.mrb[0].mxu0 %v1153
    %v1494 = vpop.f32.mrb[0].mxu0
    %v1495 = vadd.f32 0.0, %v1494
    %v1496 = vpop.f32.mrb[0].mxu0
    %v1497 = vpop.f32.mrb[0].mxu0
    %v1498 = vadd.f32 0.0, %v1497
    %v1499 = vpop.f32.mrb[0].mxu0
    %1500 = vdwg.mxu0
    %v1501 = vld [vmem:[#allocation10 + $0xa0] sm:$0xf]
    %v1502 = vpack.c.bf16 %v1243, %v1240
    %v1503 = vpack.c.bf16 %v1251, %v1248
    %v1504 = vpack.c.bf16 %v1293, %v1290
    %v1505 = vpack.c.bf16 %v1301, %v1298
    %v1506 = vpack.c.bf16 %v1343, %v1340
    %v1507 = vpack.c.bf16 %v1351, %v1348
    %v1508 = vpack.c.bf16 %v1501, %v1501
    %v1509 = vld [vmem:[#allocation10 + $0xb0] sm:$0x3]
    %v1510 = vpack.c.bf16 %v1049, %v1046
    %v1511 = vpack.c.bf16 %v1057, %v1054
    %v1512 = vpack.c.bf16 %v1065, %v1062
    %v1513 = vpack.c.bf16 %v1073, %v1070
    %v1514 = vpack.c.bf16 %v1081, %v1078
    %v1515 = vpack.c.bf16 %v1089, %v1086
    %v1516 = vpack.c.bf16 %v1509, %v1509
    %v1518 = vsel %vm852, %v1510, 0
    %v1521 = vsel %vm852, %v1511, 0
    %v1524 = vsel %vm852, %v1512, 0
    %v1527 = vsel %vm852, %v1513, 0
    %v1530 = vsel %vm852, %v1514, 0
    %v1533 = vsel %vm852, %v1515, 0
    %v1536 = vsel %vm303, %v1516, 0
    %1538 = vmatprep.subr.bf16.mxu0 0
    %1539 = vmatpush1.bf16.msra.mxu0 %v1536
    %1540 = vmatprep.subr.bf16.mxu0 0
    %1541 = vmatpush1.bf16.msra.mxu0 0
    %1542 = vmatprep.subr.bf16.mxu0 0
    %1543 = vmatpush1.bf16.msra.mxu0 0
    %1544 = vmatprep.subr.bf16.mxu0 0
    %1545 = vmatpush1.bf16.msra.mxu0 0
    %1546 = vmatprep.subr.bf16.mxu0 0
    %1547 = vmatpush1.bf16.msra.mxu0 0
    %1548 = vmatprep.subr.bf16.mxu0 0
    %1549 = vmatpush1.bf16.msra.mxu0 0
    %1550 = vmatprep.subr.bf16.mxu0 0
    %1551 = vmatpush1.bf16.msra.mxu0 0
    %1552 = vmatprep.subr.bf16.mxu0 0
    %1553 = vmatpush1.bf16.msra.mxu0 0
    %1554 = vmatprep.subr.bf16.mxu0 0
    %1555 = vmatpush1.bf16.msra.mxu0 0
    %1556 = vmatprep.subr.bf16.mxu0 0
    %1557 = vmatpush1.bf16.msra.mxu0 0
    %1558 = vmatprep.subr.bf16.mxu0 0
    %1559 = vmatpush1.bf16.msra.mxu0 0
    %1560 = vmatprep.subr.bf16.mxu0 0
    %1561 = vmatpush1.bf16.msra.mxu0 0
    %1562 = vmatprep.subr.bf16.mxu0 0
    %1563 = vmatpush1.bf16.msra.mxu0 0
    %1564 = vmatprep.subr.bf16.mxu0 0
    %1565 = vmatpush1.bf16.msra.mxu0 0
    %1566 = vmatprep.subr.bf16.mxu0 0
    %1567 = vmatpush1.bf16.msra.mxu0 0
    %1568 = vmatprep.subr.bf16.mxu0 0
    %1569 = vmatpush1.bf16.msra.mxu0 0
    %1570 = vmatprep.mubr.bf16.mxu0 0
    %1571 = vmatmul.mubr.bf16.gmra.mrb[0].mxu0 %v1518
    %v1572 = vpop.f32.mrb[0].mxu0
    %v1573 = vadd.f32 0.0, %v1572
    %v1574 = vpop.f32.mrb[0].mxu0
    %v1575 = vpop.f32.mrb[0].mxu0
    %v1576 = vadd.f32 0.0, %v1575
    %v1577 = vpop.f32.mrb[0].mxu0
    %1578 = vmatprep.mubr.bf16.mxu0 0
    %1579 = vmatmul.mubr.bf16.gmra.mrb[0].mxu0 %v1521
    %v1580 = vpop.f32.mrb[0].mxu0
    %v1581 = vadd.f32 0.0, %v1580
    %v1582 = vpop.f32.mrb[0].mxu0
    %v1583 = vpop.f32.mrb[0].mxu0
    %v1584 = vadd.f32 0.0, %v1583
    %v1585 = vpop.f32.mrb[0].mxu0
    %1586 = vmatprep.mubr.bf16.mxu0 0
    %1587 = vmatmul.mubr.bf16.gmra.mrb[0].mxu0 %v1524
    %v1588 = vpop.f32.mrb[0].mxu0
    %v1589 = vadd.f32 0.0, %v1588
    %v1590 = vpop.f32.mrb[0].mxu0
    %v1591 = vpop.f32.mrb[0].mxu0
    %v1592 = vadd.f32 0.0, %v1591
    %v1593 = vpop.f32.mrb[0].mxu0
    %1594 = vmatprep.mubr.bf16.mxu0 0
    %1595 = vmatmul.mubr.bf16.gmra.mrb[0].mxu0 %v1527
    %v1596 = vpop.f32.mrb[0].mxu0
    %v1597 = vadd.f32 0.0, %v1596
    %v1598 = vpop.f32.mrb[0].mxu0
    %v1599 = vpop.f32.mrb[0].mxu0
    %v1600 = vadd.f32 0.0, %v1599
    %v1601 = vpop.f32.mrb[0].mxu0
    %1602 = vmatprep.mubr.bf16.mxu0 0
    %1603 = vmatmul.mubr.bf16.gmra.mrb[0].mxu0 %v1530
    %v1604 = vpop.f32.mrb[0].mxu0
    %v1605 = vadd.f32 0.0, %v1604
    %v1606 = vpop.f32.mrb[0].mxu0
    %v1607 = vpop.f32.mrb[0].mxu0
    %v1608 = vadd.f32 0.0, %v1607
    %v1609 = vpop.f32.mrb[0].mxu0
    %1610 = vmatprep.mubr.bf16.mxu0 0
    %1611 = vmatmul.mubr.bf16.gmra.mrb[0].mxu0 %v1533
    %v1612 = vpop.f32.mrb[0].mxu0
    %v1613 = vadd.f32 0.0, %v1612
    %v1614 = vpop.f32.mrb[0].mxu0
    %v1615 = vpop.f32.mrb[0].mxu0
    %v1616 = vadd.f32 0.0, %v1615
    %v1617 = vpop.f32.mrb[0].mxu0
    %1618 = vdwg.mxu0
    %v1620 = vsel %vm397, %v1502, 0
    %v1623 = vsel %vm397, %v1503, 0
    %v1626 = vsel %vm397, %v1504, 0
    %v1629 = vsel %vm397, %v1505, 0
    %v1632 = vsel %vm397, %v1506, 0
    %v1635 = vsel %vm397, %v1507, 0
    %v1638 = vsel %vm304, %v1508, 0
    %1640 = vmatprep.subr.bf16.mxu0 0
    %1641 = vmatpush1.bf16.msra.mxu0 %v1638
    %1642 = vmatprep.subr.bf16.mxu0 0
    %1643 = vmatpush1.bf16.msra.mxu0 0
    %1644 = vmatprep.subr.bf16.mxu0 0
    %1645 = vmatpush1.bf16.msra.mxu0 0
    %1646 = vmatprep.subr.bf16.mxu0 0
    %1647 = vmatpush1.bf16.msra.mxu0 0
    %1648 = vmatprep.subr.bf16.mxu0 0
    %1649 = vmatpush1.bf16.msra.mxu0 0
    %1650 = vmatprep.subr.bf16.mxu0 0
    %1651 = vmatpush1.bf16.msra.mxu0 0
    %1652 = vmatprep.subr.bf16.mxu0 0
    %1653 = vmatpush1.bf16.msra.mxu0 0
    %1654 = vmatprep.subr.bf16.mxu0 0
    %1655 = vmatpush1.bf16.msra.mxu0 0
    %1656 = vmatprep.subr.bf16.mxu0 0
    %1657 = vmatpush1.bf16.msra.mxu0 0
    %1658 = vmatprep.subr.bf16.mxu0 0
    %1659 = vmatpush1.bf16.msra.mxu0 0
    %1660 = vmatprep.subr.bf16.mxu0 0
    %1661 = vmatpush1.bf16.msra.mxu0 0
    %1662 = vmatprep.subr.bf16.mxu0 0
    %1663 = vmatpush1.bf16.msra.mxu0 0
    %1664 = vmatprep.subr.bf16.mxu0 0
    %1665 = vmatpush1.bf16.msra.mxu0 0
    %1666 = vmatprep.subr.bf16.mxu0 0
    %1667 = vmatpush1.bf16.msra.mxu0 0
    %1668 = vmatprep.subr.bf16.mxu0 0
    %1669 = vmatpush1.bf16.msra.mxu0 0
    %1670 = vmatprep.subr.bf16.mxu0 0
    %1671 = vmatpush1.bf16.msra.mxu0 0
    %1672 = vmatprep.mubr.bf16.mxu0 0
    %1673 = vmatmul.mubr.bf16.gmra.mrb[0].mxu0 %v1620
    %v1674 = vpop.f32.mrb[0].mxu0
    %v1675 = vadd.f32 %v1573, %v1674
    %v1676 = vpop.f32.mrb[0].mxu0
    %v1677 = vpop.f32.mrb[0].mxu0
    %v1678 = vadd.f32 %v1576, %v1677
    %v1679 = vpop.f32.mrb[0].mxu0
    %1680 = vmatprep.mubr.bf16.mxu0 0
    %1681 = vmatmul.mubr.bf16.gmra.mrb[0].mxu0 %v1623
    %v1682 = vpop.f32.mrb[0].mxu0
    %v1683 = vadd.f32 %v1581, %v1682
    %v1684 = vpop.f32.mrb[0].mxu0
    %v1685 = vpop.f32.mrb[0].mxu0
    %v1686 = vadd.f32 %v1584, %v1685
    %v1687 = vpop.f32.mrb[0].mxu0
    %1688 = vmatprep.mubr.bf16.mxu0 0
    %1689 = vmatmul.mubr.bf16.gmra.mrb[0].mxu0 %v1626
    %v1690 = vpop.f32.mrb[0].mxu0
    %v1691 = vadd.f32 %v1589, %v1690
    %v1692 = vpop.f32.mrb[0].mxu0
    %v1693 = vpop.f32.mrb[0].mxu0
    %v1694 = vadd.f32 %v1592, %v1693
    %v1695 = vpop.f32.mrb[0].mxu0
    %1696 = vmatprep.mubr.bf16.mxu0 0
    %1697 = vmatmul.mubr.bf16.gmra.mrb[0].mxu0 %v1629
    %v1698 = vpop.f32.mrb[0].mxu0
    %v1699 = vadd.f32 %v1597, %v1698
    %v1700 = vpop.f32.mrb[0].mxu0
    %v1701 = vpop.f32.mrb[0].mxu0
    %v1702 = vadd.f32 %v1600, %v1701
    %v1703 = vpop.f32.mrb[0].mxu0
    %1704 = vmatprep.mubr.bf16.mxu0 0
    %1705 = vmatmul.mubr.bf16.gmra.mrb[0].mxu0 %v1632
    %v1706 = vpop.f32.mrb[0].mxu0
    %v1707 = vadd.f32 %v1605, %v1706
    %v1708 = vpop.f32.mrb[0].mxu0
    %v1709 = vpop.f32.mrb[0].mxu0
    %v1710 = vadd.f32 %v1608, %v1709
    %v1711 = vpop.f32.mrb[0].mxu0
    %1712 = vmatprep.mubr.bf16.mxu0 0
    %1713 = vmatmul.mubr.bf16.gmra.mrb[0].mxu0 %v1635
    %v1714 = vpop.f32.mrb[0].mxu0
    %v1715 = vadd.f32 %v1613, %v1714
    %v1716 = vpop.f32.mrb[0].mxu0
    %v1717 = vpop.f32.mrb[0].mxu0
    %v1718 = vadd.f32 %v1616, %v1717
    %v1719 = vpop.f32.mrb[0].mxu0
    %1720 = vdwg.mxu0
    %v1721 = vld [vmem:[#allocation10 + $0xc0] sm:$0xf]
    %v1722 = vpack.c.bf16 %v1392, %v1389
    %v1723 = vpack.c.bf16 %v1400, %v1397
    %v1724 = vpack.c.bf16 %v1441, %v1438
    %v1725 = vpack.c.bf16 %v1449, %v1446
    %v1726 = vpack.c.bf16 %v1490, %v1487
    %v1727 = vpack.c.bf16 %v1498, %v1495
    %v1728 = vpack.c.bf16 %v1721, %v1721
    %v1730 = vsel %vm397, %v1722, 0
    %v1733 = vsel %vm397, %v1723, 0
    %v1736 = vsel %vm397, %v1724, 0
    %v1739 = vsel %vm397, %v1725, 0
    %v1742 = vsel %vm397, %v1726, 0
    %v1745 = vsel %vm397, %v1727, 0
    %v1748 = vsel %vm304, %v1728, 0
    %1750 = vmatprep.subr.bf16.mxu0 0
    %1751 = vmatpush1.bf16.msra.mxu0 %v1748
    %1752 = vmatprep.subr.bf16.mxu0 0
    %1753 = vmatpush1.bf16.msra.mxu0 0
    %1754 = vmatprep.subr.bf16.mxu0 0
    %1755 = vmatpush1.bf16.msra.mxu0 0
    %1756 = vmatprep.subr.bf16.mxu0 0
    %1757 = vmatpush1.bf16.msra.mxu0 0
    %1758 = vmatprep.subr.bf16.mxu0 0
    %1759 = vmatpush1.bf16.msra.mxu0 0
    %1760 = vmatprep.subr.bf16.mxu0 0
    %1761 = vmatpush1.bf16.msra.mxu0 0
    %1762 = vmatprep.subr.bf16.mxu0 0
    %1763 = vmatpush1.bf16.msra.mxu0 0
    %1764 = vmatprep.subr.bf16.mxu0 0
    %1765 = vmatpush1.bf16.msra.mxu0 0
    %1766 = vmatprep.subr.bf16.mxu0 0
    %1767 = vmatpush1.bf16.msra.mxu0 0
    %1768 = vmatprep.subr.bf16.mxu0 0
    %1769 = vmatpush1.bf16.msra.mxu0 0
    %1770 = vmatprep.subr.bf16.mxu0 0
    %1771 = vmatpush1.bf16.msra.mxu0 0
    %1772 = vmatprep.subr.bf16.mxu0 0
    %1773 = vmatpush1.bf16.msra.mxu0 0
    %1774 = vmatprep.subr.bf16.mxu0 0
    %1775 = vmatpush1.bf16.msra.mxu0 0
    %1776 = vmatprep.subr.bf16.mxu0 0
    %1777 = vmatpush1.bf16.msra.mxu0 0
    %1778 = vmatprep.subr.bf16.mxu0 0
    %1779 = vmatpush1.bf16.msra.mxu0 0
    %1780 = vmatprep.subr.bf16.mxu0 0
    %1781 = vmatpush1.bf16.msra.mxu0 0
    %1782 = vmatprep.mubr.bf16.mxu0 0
    %1783 = vmatmul.mubr.bf16.gmra.mrb[0].mxu0 %v1730
    %v1784 = vpop.f32.mrb[0].mxu0
    %v1785 = vadd.f32 0.0, %v1784
    %v1786 = vpop.f32.mrb[0].mxu0
    %v1787 = vpop.f32.mrb[0].mxu0
    %v1788 = vadd.f32 0.0, %v1787
    %v1789 = vpop.f32.mrb[0].mxu0
    %1790 = vmatprep.mubr.bf16.mxu0 0
    %1791 = vmatmul.mubr.bf16.gmra.mrb[0].mxu0 %v1733
    %v1792 = vpop.f32.mrb[0].mxu0
    %v1793 = vadd.f32 0.0, %v1792
    %v1794 = vpop.f32.mrb[0].mxu0
    %v1795 = vpop.f32.mrb[0].mxu0
    %v1796 = vadd.f32 0.0, %v1795
    %v1797 = vpop.f32.mrb[0].mxu0
    %1798 = vmatprep.mubr.bf16.mxu0 0
    %1799 = vmatmul.mubr.bf16.gmra.mrb[0].mxu0 %v1736
    %v1800 = vpop.f32.mrb[0].mxu0
    %v1801 = vadd.f32 0.0, %v1800
    %v1802 = vpop.f32.mrb[0].mxu0
    %v1803 = vpop.f32.mrb[0].mxu0
    %v1804 = vadd.f32 0.0, %v1803
    %v1805 = vpop.f32.mrb[0].mxu0
    %1806 = vmatprep.mubr.bf16.mxu0 0
    %1807 = vmatmul.mubr.bf16.gmra.mrb[0].mxu0 %v1739
    %v1808 = vpop.f32.mrb[0].mxu0
    %v1809 = vadd.f32 0.0, %v1808
    %v1810 = vpop.f32.mrb[0].mxu0
    %v1811 = vpop.f32.mrb[0].mxu0
    %v1812 = vadd.f32 0.0, %v1811
    %v1813 = vpop.f32.mrb[0].mxu0
    %1814 = vmatprep.mubr.bf16.mxu0 0
    %1815 = vmatmul.mubr.bf16.gmra.mrb[0].mxu0 %v1742
    %v1816 = vpop.f32.mrb[0].mxu0
    %v1817 = vadd.f32 0.0, %v1816
    %v1818 = vpop.f32.mrb[0].mxu0
    %v1819 = vpop.f32.mrb[0].mxu0
    %v1820 = vadd.f32 0.0, %v1819
    %v1821 = vpop.f32.mrb[0].mxu0
    %1822 = vmatprep.mubr.bf16.mxu0 0
    %1823 = vmatmul.mubr.bf16.gmra.mrb[0].mxu0 %v1745
    %v1824 = vpop.f32.mrb[0].mxu0
    %v1825 = vadd.f32 0.0, %v1824
    %v1826 = vpop.f32.mrb[0].mxu0
    %v1827 = vpop.f32.mrb[0].mxu0
    %v1828 = vadd.f32 0.0, %v1827
    %v1829 = vpop.f32.mrb[0].mxu0
    %1830 = vdwg.mxu0
    %v1831 = vadd.f32 %v1675, %v1785
    %v1832 = vadd.f32 %v1678, %v1788
    %v1833 = vadd.f32 %v1683, %v1793
    %v1834 = vadd.f32 %v1686, %v1796
    %v1835 = vadd.f32 %v1691, %v1801
    %v1836 = vadd.f32 %v1694, %v1804
    %v1837 = vadd.f32 %v1699, %v1809
    %v1838 = vadd.f32 %v1702, %v1812
    %v1839 = vadd.f32 %v1707, %v1817
    %v1840 = vadd.f32 %v1710, %v1820
    %v1841 = vadd.f32 %v1715, %v1825
    %v1842 = vadd.f32 %v1718, %v1828
    %v1843 = vmul.f32 %v1831, %v1831
    %v1844 = vmul.f32 %v1832, %v1832
    %v1845 = vmul.f32 %v1833, %v1833
    %v1846 = vmul.f32 %v1834, %v1834
    %v1847 = vmul.f32 %v1835, %v1835
    %v1848 = vmul.f32 %v1836, %v1836
    %v1849 = vmul.f32 %v1837, %v1837
    %v1850 = vmul.f32 %v1838, %v1838
    %v1851 = vadd.f32 %v1843, %v1847
    %v1852 = vadd.f32 %v1844, %v1848
    %v1853 = vadd.f32 %v1845, %v1849
    %v1854 = vadd.f32 %v1846, %v1850
    %v1855 = vmul.f32 %v1839, %v1839
    %v1856 = vmul.f32 %v1840, %v1840
    %v1857 = vmul.f32 %v1841, %v1841
    %v1858 = vmul.f32 %v1842, %v1842
    %v1859 = vadd.f32 %v1851, %v1855
    %v1860 = vadd.f32 %v1852, %v1856
    %v1861 = vadd.f32 %v1853, %v1857
    %v1862 = vadd.f32 %v1854, %v1858
    %v1863 = vmax.f32 %v1859, 1e-08
    %v1864 = vmax.f32 %v1860, 1e-08
    %v1865 = vmax.f32 %v1861, 1e-08
    %v1866 = vmax.f32 %v1862, 1e-08
    %v1867 = vrsqrt.pop %v1863
    %v1868 = vmul.f32 %v1863, %v1867
    %vm1869 = vcmp.eq.f32.partialorder %v1863, inf
    %v1870 = vsel %vm1869, %v1863, %v1868
    %vm1871 = vcmp.eq.f32.partialorder %v1863, 0.0
    %v1872 = vand.u32 %v1863, 2147483648
    %v1873 = vsel %vm1871, %v1872, %v1870
    %v1874 = vrsqrt.pop %v1864
    %v1875 = vmul.f32 %v1864, %v1874
    %vm1876 = vcmp.eq.f32.partialorder %v1864, inf
    %v1877 = vsel %vm1876, %v1864, %v1875
    %vm1878 = vcmp.eq.f32.partialorder %v1864, 0.0
    %v1879 = vand.u32 %v1864, 2147483648
    %v1880 = vsel %vm1878, %v1879, %v1877
    %v1881 = vrsqrt.pop %v1865
    %v1882 = vmul.f32 %v1865, %v1881
    %vm1883 = vcmp.eq.f32.partialorder %v1865, inf
    %v1884 = vsel %vm1883, %v1865, %v1882
    %vm1885 = vcmp.eq.f32.partialorder %v1865, 0.0
    %v1886 = vand.u32 %v1865, 2147483648
    %v1887 = vsel %vm1885, %v1886, %v1884
    %v1888 = vrsqrt.pop %v1866
    %v1889 = vmul.f32 %v1866, %v1888
    %vm1890 = vcmp.eq.f32.partialorder %v1866, inf
    %v1891 = vsel %vm1890, %v1866, %v1889
    %vm1892 = vcmp.eq.f32.partialorder %v1866, 0.0
    %v1893 = vand.u32 %v1866, 2147483648
    %v1894 = vsel %vm1892, %v1893, %v1891
    %v1895 = vld [vmem:[#allocation10 + $0xd0] ss:$0 sm:$0xff]
    %v1896 = vld [vmem:[#allocation10 + $0xe0] sm:$0xff]
    %v1897 = vld [vmem:[#allocation10 + $0xf0] sm:$0x3]
    %v1898 = vpack.c.bf16 %v1880, %v1873
    %v1899 = vpack.c.bf16 %v1894, %v1887
    %v1900 = vpack.c.bf16 %v1897, %v1896
    %vm1901 = vcmask 80896
    %v1903 = vsel %vm1901, %v1898, 0
    %v1906 = vsel %vm1901, %v1899, 0
    %vm1908 = vcmask 1044480
    %v1910 = vsel %vm1908, %v1900, 0
    %1912 = vmatprep.subr.bf16.mxu0 0
    %1913 = vmatpush1.bf16.msra.mxu0 %v1910
    %1914 = vmatprep.subr.bf16.mxu0 0
    %1915 = vmatpush1.bf16.msra.mxu0 0
    %1916 = vmatprep.subr.bf16.mxu0 0
    %1917 = vmatpush1.bf16.msra.mxu0 0
    %1918 = vmatprep.subr.bf16.mxu0 0
    %1919 = vmatpush1.bf16.msra.mxu0 0
    %1920 = vmatprep.subr.bf16.mxu0 0
    %1921 = vmatpush1.bf16.msra.mxu0 0
    %1922 = vmatprep.subr.bf16.mxu0 0
    %1923 = vmatpush1.bf16.msra.mxu0 0
    %1924 = vmatprep.subr.bf16.mxu0 0
    %1925 = vmatpush1.bf16.msra.mxu0 0
    %1926 = vmatprep.subr.bf16.mxu0 0
    %1927 = vmatpush1.bf16.msra.mxu0 0
    %1928 = vmatprep.subr.bf16.mxu0 0
    %1929 = vmatpush1.bf16.msra.mxu0 0
    %1930 = vmatprep.subr.bf16.mxu0 0
    %1931 = vmatpush1.bf16.msra.mxu0 0
    %1932 = vmatprep.subr.bf16.mxu0 0
    %1933 = vmatpush1.bf16.msra.mxu0 0
    %1934 = vmatprep.subr.bf16.mxu0 0
    %1935 = vmatpush1.bf16.msra.mxu0 0
    %1936 = vmatprep.subr.bf16.mxu0 0
    %1937 = vmatpush1.bf16.msra.mxu0 0
    %1938 = vmatprep.subr.bf16.mxu0 0
    %1939 = vmatpush1.bf16.msra.mxu0 0
    %1940 = vmatprep.subr.bf16.mxu0 0
    %1941 = vmatpush1.bf16.msra.mxu0 0
    %1942 = vmatprep.subr.bf16.mxu0 0
    %1943 = vmatpush1.bf16.msra.mxu0 0
    %1944 = vmatprep.mubr.bf16.mxu0 0
    %1945 = vmatmul.mubr.bf16.gmra.mrb[0].mxu0 %v1903
    %v1946 = vpop.f32.mrb[0].mxu0
    %v1947 = vadd.f32 0.0, %v1946
    %v1948 = vpop.f32.mrb[0].mxu0
    %v1949 = vpop.f32.mrb[0].mxu0
    %v1950 = vadd.f32 0.0, %v1949
    %v1951 = vpop.f32.mrb[0].mxu0
    %1952 = vmatprep.mubr.bf16.mxu0 0
    %1953 = vmatmul.mubr.bf16.gmra.mrb[0].mxu0 %v1906
    %v1954 = vpop.f32.mrb[0].mxu0
    %v1955 = vadd.f32 0.0, %v1954
    %v1956 = vpop.f32.mrb[0].mxu0
    %v1957 = vpop.f32.mrb[0].mxu0
    %v1958 = vadd.f32 0.0, %v1957
    %v1959 = vpop.f32.mrb[0].mxu0
    %1960 = vdwg.mxu0
    %v1961 = vadd.f32 %v1895, %v1947
    %v1962 = vadd.f32 %v1895, %v1950
    %v1963 = vadd.f32 %v1895, %v1955
    %v1964 = vadd.f32 %v1895, %v1958
    %v1965 = vld [vmem:[#allocation10 + $0x100] sm:$0xff]
    %v1966 = vld [vmem:[#allocation10 + $0x110] sm:$0xff]
    %v1967 = vpack.c.bf16 %v1138, %v1135
    %v1968 = vpack.c.bf16 %v1146, %v1143
    %v1969 = vpack.c.bf16 %v1966, %v1965
    %v1971 = vsel %vm1093, %v1967, 0
    %v1974 = vsel %vm1093, %v1968, 0
    %1976 = vmatprep.subr.bf16.mxu0 0
    %1977 = vmatpush1.bf16.msra.mxu0 %v1969
    %1978 = vmatprep.subr.bf16.mxu0 0
    %1979 = vmatpush1.bf16.msra.mxu0 0
    %1980 = vmatprep.subr.bf16.mxu0 0
    %1981 = vmatpush1.bf16.msra.mxu0 0
    %1982 = vmatprep.subr.bf16.mxu0 0
    %1983 = vmatpush1.bf16.msra.mxu0 0
    %1984 = vmatprep.subr.bf16.mxu0 0
    %1985 = vmatpush1.bf16.msra.mxu0 0
    %1986 = vmatprep.subr.bf16.mxu0 0
    %1987 = vmatpush1.bf16.msra.mxu0 0
    %1988 = vmatprep.subr.bf16.mxu0 0
    %1989 = vmatpush1.bf16.msra.mxu0 0
    %1990 = vmatprep.subr.bf16.mxu0 0
    %1991 = vmatpush1.bf16.msra.mxu0 0
    %1992 = vmatprep.subr.bf16.mxu0 0
    %1993 = vmatpush1.bf16.msra.mxu0 0
    %1994 = vmatprep.subr.bf16.mxu0 0
    %1995 = vmatpush1.bf16.msra.mxu0 0
    %1996 = vmatprep.subr.bf16.mxu0 0
    %1997 = vmatpush1.bf16.msra.mxu0 0
    %1998 = vmatprep.subr.bf16.mxu0 0
    %1999 = vmatpush1.bf16.msra.mxu0 0
    %2000 = vmatprep.subr.bf16.mxu0 0
    %2001 = vmatpush1.bf16.msra.mxu0 0
    %2002 = vmatprep.subr.bf16.mxu0 0
    %2003 = vmatpush1.bf16.msra.mxu0 0
    %2004 = vmatprep.subr.bf16.mxu0 0
    %2005 = vmatpush1.bf16.msra.mxu0 0
    %2006 = vmatprep.subr.bf16.mxu0 0
    %2007 = vmatpush1.bf16.msra.mxu0 0
    %2008 = vmatprep.mubr.bf16.mxu0 0
    %2009 = vmatmul.mubr.bf16.gmra.mrb[0].mxu0 %v1971
    %v2010 = vpop.f32.mrb[0].mxu0
    %v2011 = vadd.f32 0.0, %v2010
    %v2012 = vpop.f32.mrb[0].mxu0
    %v2013 = vpop.f32.mrb[0].mxu0
    %v2014 = vadd.f32 0.0, %v2013
    %v2015 = vpop.f32.mrb[0].mxu0
    %2016 = vmatprep.mubr.bf16.mxu0 0
    %2017 = vmatmul.mubr.bf16.gmra.mrb[0].mxu0 %v1974
    %v2018 = vpop.f32.mrb[0].mxu0
    %v2019 = vadd.f32 0.0, %v2018
    %v2020 = vpop.f32.mrb[0].mxu0
    %v2021 = vpop.f32.mrb[0].mxu0
    %v2022 = vadd.f32 0.0, %v2021
    %v2023 = vpop.f32.mrb[0].mxu0
    %2024 = vdwg.mxu0
    %v2025 = vadd.f32 %v1961, %v2011
    %v2026 = vadd.f32 %v1962, %v2014
    %v2027 = vadd.f32 %v1963, %v2019
    %v2028 = vadd.f32 %v1964, %v2022
    %v2029 = vld [vmem:[#allocation10 + $0x120] sm:$0xff]
    %v2030 = vpack.c.bf16 %v979, %v978
    %v2031 = vpack.c.bf16 %v981, %v980
    %v2032 = vpack.c.bf16 %v2029, %v2029
    %v2034 = vsel %vm574, %v2030, 0
    %v2037 = vsel %vm574, %v2031, 0
    %v2040 = vsel %vm925, %v2032, 0
    %2042 = vmatprep.subr.bf16.mxu0 0
    %2043 = vmatpush1.bf16.msra.mxu0 %v2040
    %2044 = vmatprep.subr.bf16.mxu0 0
    %2045 = vmatpush1.bf16.msra.mxu0 0
    %2046 = vmatprep.subr.bf16.mxu0 0
    %2047 = vmatpush1.bf16.msra.mxu0 0
    %2048 = vmatprep.subr.bf16.mxu0 0
    %2049 = vmatpush1.bf16.msra.mxu0 0
    %2050 = vmatprep.subr.bf16.mxu0 0
    %2051 = vmatpush1.bf16.msra.mxu0 0
    %2052 = vmatprep.subr.bf16.mxu0 0
    %2053 = vmatpush1.bf16.msra.mxu0 0
    %2054 = vmatprep.subr.bf16.mxu0 0
    %2055 = vmatpush1.bf16.msra.mxu0 0
    %2056 = vmatprep.subr.bf16.mxu0 0
    %2057 = vmatpush1.bf16.msra.mxu0 0
    %2058 = vmatprep.subr.bf16.mxu0 0
    %2059 = vmatpush1.bf16.msra.mxu0 0
    %2060 = vmatprep.subr.bf16.mxu0 0
    %2061 = vmatpush1.bf16.msra.mxu0 0
    %2062 = vmatprep.subr.bf16.mxu0 0
    %2063 = vmatpush1.bf16.msra.mxu0 0
    %2064 = vmatprep.subr.bf16.mxu0 0
    %2065 = vmatpush1.bf16.msra.mxu0 0
    %2066 = vmatprep.subr.bf16.mxu0 0
    %2067 = vmatpush1.bf16.msra.mxu0 0
    %2068 = vmatprep.subr.bf16.mxu0 0
    %2069 = vmatpush1.bf16.msra.mxu0 0
    %2070 = vmatprep.subr.bf16.mxu0 0
    %2071 = vmatpush1.bf16.msra.mxu0 0
    %2072 = vmatprep.subr.bf16.mxu0 0
    %2073 = vmatpush1.bf16.msra.mxu0 0
    %2074 = vmatprep.mubr.bf16.mxu0 0
    %2075 = vmatmul.mubr.bf16.gmra.mrb[0].mxu0 %v2034
    %v2076 = vpop.f32.mrb[0].mxu0
    %v2077 = vadd.f32 0.0, %v2076
    %v2078 = vpop.f32.mrb[0].mxu0
    %v2079 = vpop.f32.mrb[0].mxu0
    %v2080 = vadd.f32 0.0, %v2079
    %v2081 = vpop.f32.mrb[0].mxu0
    %2082 = vmatprep.mubr.bf16.mxu0 0
    %2083 = vmatmul.mubr.bf16.gmra.mrb[0].mxu0 %v2037
    %v2084 = vpop.f32.mrb[0].mxu0
    %v2085 = vadd.f32 0.0, %v2084
    %v2086 = vpop.f32.mrb[0].mxu0
    %v2087 = vpop.f32.mrb[0].mxu0
    %v2088 = vadd.f32 0.0, %v2087
    %v2089 = vpop.f32.mrb[0].mxu0
    %2090 = vdwg.mxu0
    %v2091 = vadd.f32 %v2025, %v2077
    %v2092 = vadd.f32 %v2026, %v2080
    %v2093 = vadd.f32 %v2027, %v2085
    %v2094 = vadd.f32 %v2028, %v2088
    %v2095 = vld [vmem:[#allocation10 + $0x130] sm:$0xff]
    %v2096 = vld [vmem:[#allocation10 + $0x140] sm:$0xff]
    %v2097 = vpack.c.bf16 %v1193, %v1190
    %v2098 = vpack.c.bf16 %v1201, %v1198
    %v2099 = vpack.c.bf16 %v2096, %v2095
    %v2101 = vsel %vm1093, %v2097, 0
    %v2104 = vsel %vm1093, %v2098, 0
    %2106 = vmatprep.subr.bf16.mxu0 0
    %2107 = vmatpush1.bf16.msra.mxu0 %v2099
    %2108 = vmatprep.subr.bf16.mxu0 0
    %2109 = vmatpush1.bf16.msra.mxu0 0
    %2110 = vmatprep.subr.bf16.mxu0 0
    %2111 = vmatpush1.bf16.msra.mxu0 0
    %2112 = vmatprep.subr.bf16.mxu0 0
    %2113 = vmatpush1.bf16.msra.mxu0 0
    %2114 = vmatprep.subr.bf16.mxu0 0
    %2115 = vmatpush1.bf16.msra.mxu0 0
    %2116 = vmatprep.subr.bf16.mxu0 0
    %2117 = vmatpush1.bf16.msra.mxu0 0
    %2118 = vmatprep.subr.bf16.mxu0 0
    %2119 = vmatpush1.bf16.msra.mxu0 0
    %2120 = vmatprep.subr.bf16.mxu0 0
    %2121 = vmatpush1.bf16.msra.mxu0 0
    %2122 = vmatprep.subr.bf16.mxu0 0
    %2123 = vmatpush1.bf16.msra.mxu0 0
    %2124 = vmatprep.subr.bf16.mxu0 0
    %2125 = vmatpush1.bf16.msra.mxu0 0
    %2126 = vmatprep.subr.bf16.mxu0 0
    %2127 = vmatpush1.bf16.msra.mxu0 0
    %2128 = vmatprep.subr.bf16.mxu0 0
    %2129 = vmatpush1.bf16.msra.mxu0 0
    %2130 = vmatprep.subr.bf16.mxu0 0
    %2131 = vmatpush1.bf16.msra.mxu0 0
    %2132 = vmatprep.subr.bf16.mxu0 0
    %2133 = vmatpush1.bf16.msra.mxu0 0
    %2134 = vmatprep.subr.bf16.mxu0 0
    %2135 = vmatpush1.bf16.msra.mxu0 0
    %2136 = vmatprep.subr.bf16.mxu0 0
    %2137 = vmatpush1.bf16.msra.mxu0 0
    %2138 = vmatprep.mubr.bf16.mxu0 0
    %2139 = vmatmul.mubr.bf16.gmra.mrb[0].mxu0 %v2101
    %v2140 = vpop.f32.mrb[0].mxu0
    %v2141 = vadd.f32 0.0, %v2140
    %v2142 = vpop.f32.mrb[0].mxu0
    %v2143 = vpop.f32.mrb[0].mxu0
    %v2144 = vadd.f32 0.0, %v2143
    %v2145 = vpop.f32.mrb[0].mxu0
    %2146 = vmatprep.mubr.bf16.mxu0 0
    %2147 = vmatmul.mubr.bf16.gmra.mrb[0].mxu0 %v2104
    %v2148 = vpop.f32.mrb[0].mxu0
    %v2149 = vadd.f32 0.0, %v2148
    %v2150 = vpop.f32.mrb[0].mxu0
    %v2151 = vpop.f32.mrb[0].mxu0
    %v2152 = vadd.f32 0.0, %v2151
    %v2153 = vpop.f32.mrb[0].mxu0
    %2154 = vdwg.mxu0
    %v2155 = vadd.f32 %v2091, %v2141
    %v2156 = vadd.f32 %v2092, %v2144
    %v2157 = vadd.f32 %v2093, %v2149
    %v2158 = vadd.f32 %v2094, %v2152
    %v2159 = vld [vmem:[#allocation10 + $0x150] sm:$0xff]
    %v2160 = vld [vmem:[#allocation10 + $0x160] sm:$0x3]
    %v2161 = vpack.c.bf16 %v1832, %v1831
    %v2162 = vpack.c.bf16 %v1834, %v1833
    %v2163 = vpack.c.bf16 %v1836, %v1835
    %v2164 = vpack.c.bf16 %v1838, %v1837
    %v2165 = vpack.c.bf16 %v1840, %v1839
    %v2166 = vpack.c.bf16 %v1842, %v1841
    %v2167 = vpack.c.bf16 %v2160, %v2159
    %v2169 = vsel %vm1901, %v2161, 0
    %v2172 = vsel %vm1901, %v2162, 0
    %v2175 = vsel %vm1901, %v2163, 0
    %v2178 = vsel %vm1901, %v2164, 0
    %v2181 = vsel %vm1901, %v2165, 0
    %v2184 = vsel %vm1901, %v2166, 0
    %v2187 = vsel %vm1908, %v2167, 0
    %2189 = vmatprep.subr.bf16.mxu0 0
    %2190 = vmatpush1.bf16.msra.mxu0 %v2187
    %2191 = vmatprep.subr.bf16.mxu0 0
    %2192 = vmatpush1.bf16.msra.mxu0 0
    %2193 = vmatprep.subr.bf16.mxu0 0
    %2194 = vmatpush1.bf16.msra.mxu0 0
    %2195 = vmatprep.subr.bf16.mxu0 0
    %2196 = vmatpush1.bf16.msra.mxu0 0
    %2197 = vmatprep.subr.bf16.mxu0 0
    %2198 = vmatpush1.bf16.msra.mxu0 0
    %2199 = vmatprep.subr.bf16.mxu0 0
    %2200 = vmatpush1.bf16.msra.mxu0 0
    %2201 = vmatprep.subr.bf16.mxu0 0
    %2202 = vmatpush1.bf16.msra.mxu0 0
    %2203 = vmatprep.subr.bf16.mxu0 0
    %2204 = vmatpush1.bf16.msra.mxu0 0
    %2205 = vmatprep.subr.bf16.mxu0 0
    %2206 = vmatpush1.bf16.msra.mxu0 0
    %2207 = vmatprep.subr.bf16.mxu0 0
    %2208 = vmatpush1.bf16.msra.mxu0 0
    %2209 = vmatprep.subr.bf16.mxu0 0
    %2210 = vmatpush1.bf16.msra.mxu0 0
    %2211 = vmatprep.subr.bf16.mxu0 0
    %2212 = vmatpush1.bf16.msra.mxu0 0
    %2213 = vmatprep.subr.bf16.mxu0 0
    %2214 = vmatpush1.bf16.msra.mxu0 0
    %2215 = vmatprep.subr.bf16.mxu0 0
    %2216 = vmatpush1.bf16.msra.mxu0 0
    %2217 = vmatprep.subr.bf16.mxu0 0
    %2218 = vmatpush1.bf16.msra.mxu0 0
    %2219 = vmatprep.subr.bf16.mxu0 0
    %2220 = vmatpush1.bf16.msra.mxu0 0
    %2221 = vmatprep.mubr.bf16.mxu0 0
    %2222 = vmatmul.mubr.bf16.gmra.mrb[0].mxu0 %v2169
    %v2223 = vpop.f32.mrb[0].mxu0
    %v2224 = vadd.f32 0.0, %v2223
    %v2225 = vpop.f32.mrb[0].mxu0
    %v2226 = vpop.f32.mrb[0].mxu0
    %v2227 = vadd.f32 0.0, %v2226
    %v2228 = vpop.f32.mrb[0].mxu0
    %2229 = vmatprep.mubr.bf16.mxu0 0
    %2230 = vmatmul.mubr.bf16.gmra.mrb[0].mxu0 %v2172
    %v2231 = vpop.f32.mrb[0].mxu0
    %v2232 = vadd.f32 0.0, %v2231
    %v2233 = vpop.f32.mrb[0].mxu0
    %v2234 = vpop.f32.mrb[0].mxu0
    %v2235 = vadd.f32 0.0, %v2234
    %v2236 = vpop.f32.mrb[0].mxu0
    %2237 = vmatprep.mubr.bf16.mxu0 0
    %2238 = vmatmul.mubr.bf16.gmra.mrb[0].mxu0 %v2175
    %v2239 = vpop.f32.mrb[0].mxu0
    %v2240 = vadd.f32 0.0, %v2239
    %v2241 = vpop.f32.mrb[0].mxu0
    %v2242 = vpop.f32.mrb[0].mxu0
    %v2243 = vadd.f32 0.0, %v2242
    %v2244 = vpop.f32.mrb[0].mxu0
    %2245 = vmatprep.mubr.bf16.mxu0 0
    %2246 = vmatmul.mubr.bf16.gmra.mrb[0].mxu0 %v2178
    %v2247 = vpop.f32.mrb[0].mxu0
    %v2248 = vadd.f32 0.0, %v2247
    %v2249 = vpop.f32.mrb[0].mxu0
    %v2250 = vpop.f32.mrb[0].mxu0
    %v2251 = vadd.f32 0.0, %v2250
    %v2252 = vpop.f32.mrb[0].mxu0
    %2253 = vmatprep.mubr.bf16.mxu0 0
    %2254 = vmatmul.mubr.bf16.gmra.mrb[0].mxu0 %v2181
    %v2255 = vpop.f32.mrb[0].mxu0
    %v2256 = vadd.f32 0.0, %v2255
    %v2257 = vpop.f32.mrb[0].mxu0
    %v2258 = vpop.f32.mrb[0].mxu0
    %v2259 = vadd.f32 0.0, %v2258
    %v2260 = vpop.f32.mrb[0].mxu0
    %2261 = vmatprep.mubr.bf16.mxu0 0
    %2262 = vmatmul.mubr.bf16.gmra.mrb[0].mxu0 %v2184
    %v2263 = vpop.f32.mrb[0].mxu0
    %v2264 = vadd.f32 0.0, %v2263
    %v2265 = vpop.f32.mrb[0].mxu0
    %v2266 = vpop.f32.mrb[0].mxu0
    %v2267 = vadd.f32 0.0, %v2266
    %v2268 = vpop.f32.mrb[0].mxu0
    %2269 = vdwg.mxu0
    %v2270 = vmul.f32 %v2224, %v2224
    %v2271 = vmul.f32 %v2227, %v2227
    %v2272 = vmul.f32 %v2232, %v2232
    %v2273 = vmul.f32 %v2235, %v2235
    %v2274 = vmul.f32 %v2240, %v2240
    %v2275 = vmul.f32 %v2243, %v2243
    %v2276 = vmul.f32 %v2248, %v2248
    %v2277 = vmul.f32 %v2251, %v2251
    %v2278 = vadd.f32 %v2270, %v2274
    %v2279 = vadd.f32 %v2271, %v2275
    %v2280 = vadd.f32 %v2272, %v2276
    %v2281 = vadd.f32 %v2273, %v2277
    %v2282 = vmul.f32 %v2256, %v2256
    %v2283 = vmul.f32 %v2259, %v2259
    %v2284 = vmul.f32 %v2264, %v2264
    %v2285 = vmul.f32 %v2267, %v2267
    %v2286 = vadd.f32 %v2278, %v2282
    %v2287 = vadd.f32 %v2279, %v2283
    %v2288 = vadd.f32 %v2280, %v2284
    %v2289 = vadd.f32 %v2281, %v2285
    %v2290 = vmax.f32 %v2286, 1e-08
    %v2291 = vmax.f32 %v2287, 1e-08
    %v2292 = vmax.f32 %v2288, 1e-08
    %v2293 = vmax.f32 %v2289, 1e-08
    %v2294 = vrsqrt.pop %v2290
    %v2295 = vmul.f32 %v2290, %v2294
    %vm2296 = vcmp.eq.f32.partialorder %v2290, inf
    %v2297 = vsel %vm2296, %v2290, %v2295
    %vm2298 = vcmp.eq.f32.partialorder %v2290, 0.0
    %v2299 = vand.u32 %v2290, 2147483648
    %v2300 = vsel %vm2298, %v2299, %v2297
    %v2301 = vrsqrt.pop %v2291
    %v2302 = vmul.f32 %v2291, %v2301
    %vm2303 = vcmp.eq.f32.partialorder %v2291, inf
    %v2304 = vsel %vm2303, %v2291, %v2302
    %vm2305 = vcmp.eq.f32.partialorder %v2291, 0.0
    %v2306 = vand.u32 %v2291, 2147483648
    %v2307 = vsel %vm2305, %v2306, %v2304
    %v2308 = vrsqrt.pop %v2292
    %v2309 = vmul.f32 %v2292, %v2308
    %vm2310 = vcmp.eq.f32.partialorder %v2292, inf
    %v2311 = vsel %vm2310, %v2292, %v2309
    %vm2312 = vcmp.eq.f32.partialorder %v2292, 0.0
    %v2313 = vand.u32 %v2292, 2147483648
    %v2314 = vsel %vm2312, %v2313, %v2311
    %v2315 = vrsqrt.pop %v2293
    %v2316 = vmul.f32 %v2293, %v2315
    %vm2317 = vcmp.eq.f32.partialorder %v2293, inf
    %v2318 = vsel %vm2317, %v2293, %v2316
    %vm2319 = vcmp.eq.f32.partialorder %v2293, 0.0
    %v2320 = vand.u32 %v2293, 2147483648
    %v2321 = vsel %vm2319, %v2320, %v2318
    %v2322 = vsub.f32 0.0, %v2300
    %v2323 = vsub.f32 0.0, %v2307
    %v2324 = vsub.f32 0.0, %v2314
    %v2325 = vsub.f32 0.0, %v2321
    %v2326 = vmul.f32 %v2322, 1.442695
    %v2327 = vpow.pop %v2326
    %v2328 = vmul.f32 %v2323, 1.442695
    %v2329 = vpow.pop %v2328
    %v2330 = vmul.f32 %v2324, 1.442695
    %v2331 = vpow.pop %v2330
    %v2332 = vmul.f32 %v2325, 1.442695
    %v2333 = vpow.pop %v2332
    %v2334 = vadd.f32 %v2327, 1.0
    %v2335 = vadd.f32 %v2329, 1.0
    %v2336 = vadd.f32 %v2331, 1.0
    %v2337 = vadd.f32 %v2333, 1.0
    %v2338 = vrcp.pop %v2334
    %v2339 = vrcp.pop %v2335
    %v2340 = vrcp.pop %v2336
    %v2341 = vrcp.pop %v2337
    %v2342 = vmul.f32 %v2224, %v2338
    %v2343 = vmul.f32 %v2227, %v2339
    %v2344 = vmul.f32 %v2232, %v2340
    %v2345 = vmul.f32 %v2235, %v2341
    %v2346 = vmul.f32 %v2240, %v2338
    %v2347 = vmul.f32 %v2243, %v2339
    %v2348 = vmul.f32 %v2248, %v2340
    %v2349 = vmul.f32 %v2251, %v2341
    %v2350 = vmul.f32 %v2256, %v2338
    %v2351 = vmul.f32 %v2259, %v2339
    %v2352 = vmul.f32 %v2264, %v2340
    %v2353 = vmul.f32 %v2267, %v2341
    %v2354 = vmax.f32 %v2155, 0.0
    %v2355 = vmax.f32 %v2156, 0.0
    %v2356 = vmax.f32 %v2157, 0.0
    %v2357 = vmax.f32 %v2158, 0.0
    %v2358 = vld [vmem:[#allocation10 + $0x170] sm:$0xf]
    %v2359 = vpack.c.bf16 %v2343, %v2342
    %v2360 = vpack.c.bf16 %v2345, %v2344
    %v2361 = vpack.c.bf16 %v2347, %v2346
    %v2362 = vpack.c.bf16 %v2349, %v2348
    %v2363 = vpack.c.bf16 %v2351, %v2350
    %v2364 = vpack.c.bf16 %v2353, %v2352
    %v2365 = vpack.c.bf16 %v2358, %v2358
    %v2367 = vsel %vm397, %v2359, 0
    %v2370 = vsel %vm397, %v2360, 0
    %v2373 = vsel %vm397, %v2361, 0
    %v2376 = vsel %vm397, %v2362, 0
    %v2379 = vsel %vm397, %v2363, 0
    %v2382 = vsel %vm397, %v2364, 0
    %v2385 = vsel %vm304, %v2365, 0
    %2387 = vmatprep.subr.bf16.mxu0 0
    %2388 = vmatpush1.bf16.msra.mxu0 %v2385
    %2389 = vmatprep.subr.bf16.mxu0 0
    %2390 = vmatpush1.bf16.msra.mxu0 0
    %2391 = vmatprep.subr.bf16.mxu0 0
    %2392 = vmatpush1.bf16.msra.mxu0 0
    %2393 = vmatprep.subr.bf16.mxu0 0
    %2394 = vmatpush1.bf16.msra.mxu0 0
    %2395 = vmatprep.subr.bf16.mxu0 0
    %2396 = vmatpush1.bf16.msra.mxu0 0
    %2397 = vmatprep.subr.bf16.mxu0 0
    %2398 = vmatpush1.bf16.msra.mxu0 0
    %2399 = vmatprep.subr.bf16.mxu0 0
    %2400 = vmatpush1.bf16.msra.mxu0 0
    %2401 = vmatprep.subr.bf16.mxu0 0
    %2402 = vmatpush1.bf16.msra.mxu0 0
    %2403 = vmatprep.subr.bf16.mxu0 0
    %2404 = vmatpush1.bf16.msra.mxu0 0
    %2405 = vmatprep.subr.bf16.mxu0 0
    %2406 = vmatpush1.bf16.msra.mxu0 0
    %2407 = vmatprep.subr.bf16.mxu0 0
    %2408 = vmatpush1.bf16.msra.mxu0 0
    %2409 = vmatprep.subr.bf16.mxu0 0
    %2410 = vmatpush1.bf16.msra.mxu0 0
    %2411 = vmatprep.subr.bf16.mxu0 0
    %2412 = vmatpush1.bf16.msra.mxu0 0
    %2413 = vmatprep.subr.bf16.mxu0 0
    %2414 = vmatpush1.bf16.msra.mxu0 0
    %2415 = vmatprep.subr.bf16.mxu0 0
    %2416 = vmatpush1.bf16.msra.mxu0 0
    %2417 = vmatprep.subr.bf16.mxu0 0
    %2418 = vmatpush1.bf16.msra.mxu0 0
    %2419 = vmatprep.mubr.bf16.mxu0 0
    %2420 = vmatmul.mubr.bf16.gmra.mrb[0].mxu0 %v2367
    %v2421 = vpop.f32.mrb[0].mxu0
    %v2422 = vadd.f32 0.0, %v2421
    %v2423 = vpop.f32.mrb[0].mxu0
    %v2424 = vpop.f32.mrb[0].mxu0
    %v2425 = vadd.f32 0.0, %v2424
    %v2426 = vpop.f32.mrb[0].mxu0
    %2427 = vmatprep.mubr.bf16.mxu0 0
    %2428 = vmatmul.mubr.bf16.gmra.mrb[0].mxu0 %v2370
    %v2429 = vpop.f32.mrb[0].mxu0
    %v2430 = vadd.f32 0.0, %v2429
    %v2431 = vpop.f32.mrb[0].mxu0
    %v2432 = vpop.f32.mrb[0].mxu0
    %v2433 = vadd.f32 0.0, %v2432
    %v2434 = vpop.f32.mrb[0].mxu0
    %2435 = vmatprep.mubr.bf16.mxu0 0
    %2436 = vmatmul.mubr.bf16.gmra.mrb[0].mxu0 %v2373
    %v2437 = vpop.f32.mrb[0].mxu0
    %v2438 = vadd.f32 0.0, %v2437
    %v2439 = vpop.f32.mrb[0].mxu0
    %v2440 = vpop.f32.mrb[0].mxu0
    %v2441 = vadd.f32 0.0, %v2440
    %v2442 = vpop.f32.mrb[0].mxu0
    %2443 = vmatprep.mubr.bf16.mxu0 0
    %2444 = vmatmul.mubr.bf16.gmra.mrb[0].mxu0 %v2376
    %v2445 = vpop.f32.mrb[0].mxu0
    %v2446 = vadd.f32 0.0, %v2445
    %v2447 = vpop.f32.mrb[0].mxu0
    %v2448 = vpop.f32.mrb[0].mxu0
    %v2449 = vadd.f32 0.0, %v2448
    %v2450 = vpop.f32.mrb[0].mxu0
    %2451 = vmatprep.mubr.bf16.mxu0 0
    %2452 = vmatmul.mubr.bf16.gmra.mrb[0].mxu0 %v2379
    %v2453 = vpop.f32.mrb[0].mxu0
    %v2454 = vadd.f32 0.0, %v2453
    %v2455 = vpop.f32.mrb[0].mxu0
    %v2456 = vpop.f32.mrb[0].mxu0
    %v2457 = vadd.f32 0.0, %v2456
    %v2458 = vpop.f32.mrb[0].mxu0
    %2459 = vmatprep.mubr.bf16.mxu0 0
    %2460 = vmatmul.mubr.bf16.gmra.mrb[0].mxu0 %v2382
    %v2461 = vpop.f32.mrb[0].mxu0
    %v2462 = vadd.f32 0.0, %v2461
    %v2463 = vpop.f32.mrb[0].mxu0
    %v2464 = vpop.f32.mrb[0].mxu0
    %v2465 = vadd.f32 0.0, %v2464
    %v2466 = vpop.f32.mrb[0].mxu0
    %2467 = vdwg.mxu0
    %v2468 = vmul.f32 %v2422, %v2422
    %v2469 = vmul.f32 %v2425, %v2425
    %v2470 = vmul.f32 %v2430, %v2430
    %v2471 = vmul.f32 %v2433, %v2433
    %v2472 = vmul.f32 %v2438, %v2438
    %v2473 = vmul.f32 %v2441, %v2441
    %v2474 = vmul.f32 %v2446, %v2446
    %v2475 = vmul.f32 %v2449, %v2449
    %v2476 = vadd.f32 %v2468, %v2472
    %v2477 = vadd.f32 %v2469, %v2473
    %v2478 = vadd.f32 %v2470, %v2474
    %v2479 = vadd.f32 %v2471, %v2475
    %v2480 = vmul.f32 %v2454, %v2454
    %v2481 = vmul.f32 %v2457, %v2457
    %v2482 = vmul.f32 %v2462, %v2462
    %v2483 = vmul.f32 %v2465, %v2465
    %v2484 = vadd.f32 %v2476, %v2480
    %v2485 = vadd.f32 %v2477, %v2481
    %v2486 = vadd.f32 %v2478, %v2482
    %v2487 = vadd.f32 %v2479, %v2483
    %v2488 = vmax.f32 %v2484, 1e-08
    %v2489 = vmax.f32 %v2485, 1e-08
    %v2490 = vmax.f32 %v2486, 1e-08
    %v2491 = vmax.f32 %v2487, 1e-08
    %v2492 = vrsqrt.pop %v2488
    %v2493 = vmul.f32 %v2488, %v2492
    %vm2494 = vcmp.eq.f32.partialorder %v2488, inf
    %v2495 = vsel %vm2494, %v2488, %v2493
    %vm2496 = vcmp.eq.f32.partialorder %v2488, 0.0
    %v2497 = vand.u32 %v2488, 2147483648
    %v2498 = vsel %vm2496, %v2497, %v2495
    %v2499 = vrsqrt.pop %v2489
    %v2500 = vmul.f32 %v2489, %v2499
    %vm2501 = vcmp.eq.f32.partialorder %v2489, inf
    %v2502 = vsel %vm2501, %v2489, %v2500
    %vm2503 = vcmp.eq.f32.partialorder %v2489, 0.0
    %v2504 = vand.u32 %v2489, 2147483648
    %v2505 = vsel %vm2503, %v2504, %v2502
    %v2506 = vrsqrt.pop %v2490
    %v2507 = vmul.f32 %v2490, %v2506
    %vm2508 = vcmp.eq.f32.partialorder %v2490, inf
    %v2509 = vsel %vm2508, %v2490, %v2507
    %vm2510 = vcmp.eq.f32.partialorder %v2490, 0.0
    %v2511 = vand.u32 %v2490, 2147483648
    %v2512 = vsel %vm2510, %v2511, %v2509
    %v2513 = vrsqrt.pop %v2491
    %v2514 = vmul.f32 %v2491, %v2513
    %vm2515 = vcmp.eq.f32.partialorder %v2491, inf
    %v2516 = vsel %vm2515, %v2491, %v2514
    %vm2517 = vcmp.eq.f32.partialorder %v2491, 0.0
    %v2518 = vand.u32 %v2491, 2147483648
    %v2519 = vsel %vm2517, %v2518, %v2516
    %v2520 = vld [vmem:[#allocation10 + $0x180] ss:$0 sm:$0xff]
    %v2521 = vld [vmem:[#allocation10 + $0x190] sm:$0xf]
    %v2522 = vpack.c.bf16 %v2505, %v2498
    %v2523 = vpack.c.bf16 %v2519, %v2512
    %v2524 = vpack.c.bf16 %v2521, %v2521
    %v2526 = vsel %vm397, %v2522, 0
    %v2529 = vsel %vm397, %v2523, 0
    %v2532 = vsel %vm304, %v2524, 0
    %2534 = vmatprep.subr.bf16.mxu0 0
    %2535 = vmatpush1.bf16.msra.mxu0 %v2532
    %2536 = vmatprep.subr.bf16.mxu0 0
    %2537 = vmatpush1.bf16.msra.mxu0 0
    %2538 = vmatprep.subr.bf16.mxu0 0
    %2539 = vmatpush1.bf16.msra.mxu0 0
    %2540 = vmatprep.subr.bf16.mxu0 0
    %2541 = vmatpush1.bf16.msra.mxu0 0
    %2542 = vmatprep.subr.bf16.mxu0 0
    %2543 = vmatpush1.bf16.msra.mxu0 0
    %2544 = vmatprep.subr.bf16.mxu0 0
    %2545 = vmatpush1.bf16.msra.mxu0 0
    %2546 = vmatprep.subr.bf16.mxu0 0
    %2547 = vmatpush1.bf16.msra.mxu0 0
    %2548 = vmatprep.subr.bf16.mxu0 0
    %2549 = vmatpush1.bf16.msra.mxu0 0
    %2550 = vmatprep.subr.bf16.mxu0 0
    %2551 = vmatpush1.bf16.msra.mxu0 0
    %2552 = vmatprep.subr.bf16.mxu0 0
    %2553 = vmatpush1.bf16.msra.mxu0 0
    %2554 = vmatprep.subr.bf16.mxu0 0
    %2555 = vmatpush1.bf16.msra.mxu0 0
    %2556 = vmatprep.subr.bf16.mxu0 0
    %2557 = vmatpush1.bf16.msra.mxu0 0
    %2558 = vmatprep.subr.bf16.mxu0 0
    %2559 = vmatpush1.bf16.msra.mxu0 0
    %2560 = vmatprep.subr.bf16.mxu0 0
    %2561 = vmatpush1.bf16.msra.mxu0 0
    %2562 = vmatprep.subr.bf16.mxu0 0
    %2563 = vmatpush1.bf16.msra.mxu0 0
    %2564 = vmatprep.subr.bf16.mxu0 0
    %2565 = vmatpush1.bf16.msra.mxu0 0
    %2566 = vmatprep.mubr.bf16.mxu0 0
    %2567 = vmatmul.mubr.bf16.gmra.mrb[0].mxu0 %v2526
    %v2568 = vpop.f32.mrb[0].mxu0
    %v2569 = vadd.f32 0.0, %v2568
    %v2570 = vpop.f32.mrb[0].mxu0
    %v2571 = vpop.f32.mrb[0].mxu0
    %v2572 = vadd.f32 0.0, %v2571
    %v2573 = vpop.f32.mrb[0].mxu0
    %2574 = vmatprep.mubr.bf16.mxu0 0
    %2575 = vmatmul.mubr.bf16.gmra.mrb[0].mxu0 %v2529
    %v2576 = vpop.f32.mrb[0].mxu0
    %v2577 = vadd.f32 0.0, %v2576
    %v2578 = vpop.f32.mrb[0].mxu0
    %v2579 = vpop.f32.mrb[0].mxu0
    %v2580 = vadd.f32 0.0, %v2579
    %v2581 = vpop.f32.mrb[0].mxu0
    %2582 = vdwg.mxu0
    %v2583 = vadd.f32 %v2520, %v2569
    %v2584 = vadd.f32 %v2520, %v2572
    %v2585 = vadd.f32 %v2520, %v2577
    %v2586 = vadd.f32 %v2520, %v2580
    %v2587 = vld [vmem:[#allocation10 + $0x1a0] sm:$0xff]
    %v2588 = vld [vmem:[#allocation10 + $0x1b0] sm:$0xff]
    %v2589 = vpack.c.bf16 %v2355, %v2354
    %v2590 = vpack.c.bf16 %v2357, %v2356
    %v2591 = vpack.c.bf16 %v2588, %v2587
    %v2593 = vsel %vm1093, %v2589, 0
    %v2596 = vsel %vm1093, %v2590, 0
    %2598 = vmatprep.subr.bf16.mxu0 0
    %2599 = vmatpush1.bf16.msra.mxu0 %v2591
    %2600 = vmatprep.subr.bf16.mxu0 0
    %2601 = vmatpush1.bf16.msra.mxu0 0
    %2602 = vmatprep.subr.bf16.mxu0 0
    %2603 = vmatpush1.bf16.msra.mxu0 0
    %2604 = vmatprep.subr.bf16.mxu0 0
    %2605 = vmatpush1.bf16.msra.mxu0 0
    %2606 = vmatprep.subr.bf16.mxu0 0
    %2607 = vmatpush1.bf16.msra.mxu0 0
    %2608 = vmatprep.subr.bf16.mxu0 0
    %2609 = vmatpush1.bf16.msra.mxu0 0
    %2610 = vmatprep.subr.bf16.mxu0 0
    %2611 = vmatpush1.bf16.msra.mxu0 0
    %2612 = vmatprep.subr.bf16.mxu0 0
    %2613 = vmatpush1.bf16.msra.mxu0 0
    %2614 = vmatprep.subr.bf16.mxu0 0
    %2615 = vmatpush1.bf16.msra.mxu0 0
    %2616 = vmatprep.subr.bf16.mxu0 0
    %2617 = vmatpush1.bf16.msra.mxu0 0
    %2618 = vmatprep.subr.bf16.mxu0 0
    %2619 = vmatpush1.bf16.msra.mxu0 0
    %2620 = vmatprep.subr.bf16.mxu0 0
    %2621 = vmatpush1.bf16.msra.mxu0 0
    %2622 = vmatprep.subr.bf16.mxu0 0
    %2623 = vmatpush1.bf16.msra.mxu0 0
    %2624 = vmatprep.subr.bf16.mxu0 0
    %2625 = vmatpush1.bf16.msra.mxu0 0
    %2626 = vmatprep.subr.bf16.mxu0 0
    %2627 = vmatpush1.bf16.msra.mxu0 0
    %2628 = vmatprep.subr.bf16.mxu0 0
    %2629 = vmatpush1.bf16.msra.mxu0 0
    %2630 = vmatprep.mubr.bf16.mxu0 0
    %2631 = vmatmul.mubr.bf16.gmra.mrb[0].mxu0 %v2593
    %v2632 = vpop.f32.mrb[0].mxu0
    %v2633 = vadd.f32 0.0, %v2632
    %v2634 = vpop.f32.mrb[0].mxu0
    %v2635 = vpop.f32.mrb[0].mxu0
    %v2636 = vadd.f32 0.0, %v2635
    %v2637 = vpop.f32.mrb[0].mxu0
    %2638 = vmatprep.mubr.bf16.mxu0 0
    %2639 = vmatmul.mubr.bf16.gmra.mrb[0].mxu0 %v2596
    %v2640 = vpop.f32.mrb[0].mxu0
    %v2641 = vadd.f32 0.0, %v2640
    %v2642 = vpop.f32.mrb[0].mxu0
    %v2643 = vpop.f32.mrb[0].mxu0
    %v2644 = vadd.f32 0.0, %v2643
    %v2645 = vpop.f32.mrb[0].mxu0
    %2646 = vdwg.mxu0
    %v2647 = vadd.f32 %v2583, %v2633
    %v2648 = vadd.f32 %v2584, %v2636
    %v2649 = vadd.f32 %v2585, %v2641
    %v2650 = vadd.f32 %v2586, %v2644
    %v2651 = vld [vmem:[#allocation10 + $0x1c0] sm:$0xf]
    %v2652 = vpack.c.bf16 %v2425, %v2422
    %v2653 = vpack.c.bf16 %v2433, %v2430
    %v2654 = vpack.c.bf16 %v2441, %v2438
    %v2655 = vpack.c.bf16 %v2449, %v2446
    %v2656 = vpack.c.bf16 %v2457, %v2454
    %v2657 = vpack.c.bf16 %v2465, %v2462
    %v2658 = vpack.c.bf16 %v2651, %v2651
    %v2660 = vsel %vm397, %v2652, 0
    %v2663 = vsel %vm397, %v2653, 0
    %v2666 = vsel %vm397, %v2654, 0
    %v2669 = vsel %vm397, %v2655, 0
    %v2672 = vsel %vm397, %v2656, 0
    %v2675 = vsel %vm397, %v2657, 0
    %v2678 = vsel %vm304, %v2658, 0
    %2680 = vmatprep.subr.bf16.mxu0 0
    %2681 = vmatpush1.bf16.msra.mxu0 %v2678
    %2682 = vmatprep.subr.bf16.mxu0 0
    %2683 = vmatpush1.bf16.msra.mxu0 0
    %2684 = vmatprep.subr.bf16.mxu0 0
    %2685 = vmatpush1.bf16.msra.mxu0 0
    %2686 = vmatprep.subr.bf16.mxu0 0
    %2687 = vmatpush1.bf16.msra.mxu0 0
    %2688 = vmatprep.subr.bf16.mxu0 0
    %2689 = vmatpush1.bf16.msra.mxu0 0
    %2690 = vmatprep.subr.bf16.mxu0 0
    %2691 = vmatpush1.bf16.msra.mxu0 0
    %2692 = vmatprep.subr.bf16.mxu0 0
    %2693 = vmatpush1.bf16.msra.mxu0 0
    %2694 = vmatprep.subr.bf16.mxu0 0
    %2695 = vmatpush1.bf16.msra.mxu0 0
    %2696 = vmatprep.subr.bf16.mxu0 0
    %2697 = vmatpush1.bf16.msra.mxu0 0
    %2698 = vmatprep.subr.bf16.mxu0 0
    %2699 = vmatpush1.bf16.msra.mxu0 0
    %2700 = vmatprep.subr.bf16.mxu0 0
    %2701 = vmatpush1.bf16.msra.mxu0 0
    %2702 = vmatprep.subr.bf16.mxu0 0
    %2703 = vmatpush1.bf16.msra.mxu0 0
    %2704 = vmatprep.subr.bf16.mxu0 0
    %2705 = vmatpush1.bf16.msra.mxu0 0
    %2706 = vmatprep.subr.bf16.mxu0 0
    %2707 = vmatpush1.bf16.msra.mxu0 0
    %2708 = vmatprep.subr.bf16.mxu0 0
    %2709 = vmatpush1.bf16.msra.mxu0 0
    %2710 = vmatprep.subr.bf16.mxu0 0
    %2711 = vmatpush1.bf16.msra.mxu0 0
    %2712 = vmatprep.mubr.bf16.mxu0 0
    %2713 = vmatmul.mubr.bf16.gmra.mrb[0].mxu0 %v2660
    %v2714 = vpop.f32.mrb[0].mxu0
    %v2715 = vadd.f32 0.0, %v2714
    %v2716 = vpop.f32.mrb[0].mxu0
    %v2717 = vpop.f32.mrb[0].mxu0
    %v2718 = vadd.f32 0.0, %v2717
    %v2719 = vpop.f32.mrb[0].mxu0
    %2720 = vmatprep.mubr.bf16.mxu0 0
    %2721 = vmatmul.mubr.bf16.gmra.mrb[0].mxu0 %v2663
    %v2722 = vpop.f32.mrb[0].mxu0
    %v2723 = vadd.f32 0.0, %v2722
    %v2724 = vpop.f32.mrb[0].mxu0
    %v2725 = vpop.f32.mrb[0].mxu0
    %v2726 = vadd.f32 0.0, %v2725
    %v2727 = vpop.f32.mrb[0].mxu0
    %2728 = vmatprep.mubr.bf16.mxu0 0
    %2729 = vmatmul.mubr.bf16.gmra.mrb[0].mxu0 %v2666
    %v2730 = vpop.f32.mrb[0].mxu0
    %v2731 = vadd.f32 0.0, %v2730
    %v2732 = vpop.f32.mrb[0].mxu0
    %v2733 = vpop.f32.mrb[0].mxu0
    %v2734 = vadd.f32 0.0, %v2733
    %v2735 = vpop.f32.mrb[0].mxu0
    %2736 = vmatprep.mubr.bf16.mxu0 0
    %2737 = vmatmul.mubr.bf16.gmra.mrb[0].mxu0 %v2669
    %v2738 = vpop.f32.mrb[0].mxu0
    %v2739 = vadd.f32 0.0, %v2738
    %v2740 = vpop.f32.mrb[0].mxu0
    %v2741 = vpop.f32.mrb[0].mxu0
    %v2742 = vadd.f32 0.0, %v2741
    %v2743 = vpop.f32.mrb[0].mxu0
    %2744 = vmatprep.mubr.bf16.mxu0 0
    %2745 = vmatmul.mubr.bf16.gmra.mrb[0].mxu0 %v2672
    %v2746 = vpop.f32.mrb[0].mxu0
    %v2747 = vadd.f32 0.0, %v2746
    %v2748 = vpop.f32.mrb[0].mxu0
    %v2749 = vpop.f32.mrb[0].mxu0
    %v2750 = vadd.f32 0.0, %v2749
    %v2751 = vpop.f32.mrb[0].mxu0
    %2752 = vmatprep.mubr.bf16.mxu0 0
    %2753 = vmatmul.mubr.bf16.gmra.mrb[0].mxu0 %v2675
    %v2754 = vpop.f32.mrb[0].mxu0
    %v2755 = vadd.f32 0.0, %v2754
    %v2756 = vpop.f32.mrb[0].mxu0
    %v2757 = vpop.f32.mrb[0].mxu0
    %v2758 = vadd.f32 0.0, %v2757
    %v2759 = vpop.f32.mrb[0].mxu0
    %2760 = vdwg.mxu0
    %v2761 = vmul.f32 %v2715, %v2715
    %v2762 = vmul.f32 %v2718, %v2718
    %v2763 = vmul.f32 %v2723, %v2723
    %v2764 = vmul.f32 %v2726, %v2726
    %v2765 = vmul.f32 %v2731, %v2731
    %v2766 = vmul.f32 %v2734, %v2734
    %v2767 = vmul.f32 %v2739, %v2739
    %v2768 = vmul.f32 %v2742, %v2742
    %v2769 = vadd.f32 %v2761, %v2765
    %v2770 = vadd.f32 %v2762, %v2766
    %v2771 = vadd.f32 %v2763, %v2767
    %v2772 = vadd.f32 %v2764, %v2768
    %v2773 = vmul.f32 %v2747, %v2747
    %v2774 = vmul.f32 %v2750, %v2750
    %v2775 = vmul.f32 %v2755, %v2755
    %v2776 = vmul.f32 %v2758, %v2758
    %v2777 = vadd.f32 %v2769, %v2773
    %v2778 = vadd.f32 %v2770, %v2774
    %v2779 = vadd.f32 %v2771, %v2775
    %v2780 = vadd.f32 %v2772, %v2776
    %v2781 = vmax.f32 %v2777, 1e-08
    %v2782 = vmax.f32 %v2778, 1e-08
    %v2783 = vmax.f32 %v2779, 1e-08
    %v2784 = vmax.f32 %v2780, 1e-08
    %v2785 = vrsqrt.pop %v2781
    %v2786 = vmul.f32 %v2781, %v2785
    %vm2787 = vcmp.eq.f32.partialorder %v2781, inf
    %v2788 = vsel %vm2787, %v2781, %v2786
    %vm2789 = vcmp.eq.f32.partialorder %v2781, 0.0
    %v2790 = vand.u32 %v2781, 2147483648
    %v2791 = vsel %vm2789, %v2790, %v2788
    %v2792 = vrsqrt.pop %v2782
    %v2793 = vmul.f32 %v2782, %v2792
    %vm2794 = vcmp.eq.f32.partialorder %v2782, inf
    %v2795 = vsel %vm2794, %v2782, %v2793
    %vm2796 = vcmp.eq.f32.partialorder %v2782, 0.0
    %v2797 = vand.u32 %v2782, 2147483648
    %v2798 = vsel %vm2796, %v2797, %v2795
    %v2799 = vrsqrt.pop %v2783
    %v2800 = vmul.f32 %v2783, %v2799
    %vm2801 = vcmp.eq.f32.partialorder %v2783, inf
    %v2802 = vsel %vm2801, %v2783, %v2800
    %vm2803 = vcmp.eq.f32.partialorder %v2783, 0.0
    %v2804 = vand.u32 %v2783, 2147483648
    %v2805 = vsel %vm2803, %v2804, %v2802
    %v2806 = vrsqrt.pop %v2784
    %v2807 = vmul.f32 %v2784, %v2806
    %vm2808 = vcmp.eq.f32.partialorder %v2784, inf
    %v2809 = vsel %vm2808, %v2784, %v2807
    %vm2810 = vcmp.eq.f32.partialorder %v2784, 0.0
    %v2811 = vand.u32 %v2784, 2147483648
    %v2812 = vsel %vm2810, %v2811, %v2809
    %v2813 = vsub.f32 0.0, %v2791
    %v2814 = vsub.f32 0.0, %v2798
    %v2815 = vsub.f32 0.0, %v2805
    %v2816 = vsub.f32 0.0, %v2812
    %v2817 = vmul.f32 %v2813, 1.442695
    %v2818 = vpow.pop %v2817
    %v2819 = vmul.f32 %v2814, 1.442695
    %v2820 = vpow.pop %v2819
    %v2821 = vmul.f32 %v2815, 1.442695
    %v2822 = vpow.pop %v2821
    %v2823 = vmul.f32 %v2816, 1.442695
    %v2824 = vpow.pop %v2823
    %v2825 = vadd.f32 %v2818, 1.0
    %v2826 = vadd.f32 %v2820, 1.0
    %v2827 = vadd.f32 %v2822, 1.0
    %v2828 = vadd.f32 %v2824, 1.0
    %v2829 = vrcp.pop %v2825
    %v2830 = vrcp.pop %v2826
    %v2831 = vrcp.pop %v2827
    %v2832 = vrcp.pop %v2828
    %v2833 = vmul.f32 %v2715, %v2829
    %v2834 = vmul.f32 %v2718, %v2830
    %v2835 = vmul.f32 %v2723, %v2831
    %v2836 = vmul.f32 %v2726, %v2832
    %v2837 = vmul.f32 %v2731, %v2829
    %v2838 = vmul.f32 %v2734, %v2830
    %v2839 = vmul.f32 %v2739, %v2831
    %v2840 = vmul.f32 %v2742, %v2832
    %v2841 = vmul.f32 %v2747, %v2829
    %v2842 = vmul.f32 %v2750, %v2830
    %v2843 = vmul.f32 %v2755, %v2831
    %v2844 = vmul.f32 %v2758, %v2832
    %v2845 = vmax.f32 %v2647, 0.0
    %v2846 = vmax.f32 %v2648, 0.0
    %v2847 = vmax.f32 %v2649, 0.0
    %v2848 = vmax.f32 %v2650, 0.0
    %v2849 = vld [vmem:[#allocation10 + $0x1d0] sm:$0xf]
    %v2850 = vpack.c.bf16 %v2834, %v2833
    %v2851 = vpack.c.bf16 %v2836, %v2835
    %v2852 = vpack.c.bf16 %v2838, %v2837
    %v2853 = vpack.c.bf16 %v2840, %v2839
    %v2854 = vpack.c.bf16 %v2842, %v2841
    %v2855 = vpack.c.bf16 %v2844, %v2843
    %v2856 = vpack.c.bf16 %v2849, %v2849
    %v2858 = vsel %vm397, %v2850, 0
    %v2861 = vsel %vm397, %v2851, 0
    %v2864 = vsel %vm397, %v2852, 0
    %v2867 = vsel %vm397, %v2853, 0
    %v2870 = vsel %vm397, %v2854, 0
    %v2873 = vsel %vm397, %v2855, 0
    %v2876 = vsel %vm304, %v2856, 0
    %2878 = vmatprep.subr.bf16.mxu0 0
    %2879 = vmatpush1.bf16.msra.mxu0 %v2876
    %2880 = vmatprep.subr.bf16.mxu0 0
    %2881 = vmatpush1.bf16.msra.mxu0 0
    %2882 = vmatprep.subr.bf16.mxu0 0
    %2883 = vmatpush1.bf16.msra.mxu0 0
    %2884 = vmatprep.subr.bf16.mxu0 0
    %2885 = vmatpush1.bf16.msra.mxu0 0
    %2886 = vmatprep.subr.bf16.mxu0 0
    %2887 = vmatpush1.bf16.msra.mxu0 0
    %2888 = vmatprep.subr.bf16.mxu0 0
    %2889 = vmatpush1.bf16.msra.mxu0 0
    %2890 = vmatprep.subr.bf16.mxu0 0
    %2891 = vmatpush1.bf16.msra.mxu0 0
    %2892 = vmatprep.subr.bf16.mxu0 0
    %2893 = vmatpush1.bf16.msra.mxu0 0
    %2894 = vmatprep.subr.bf16.mxu0 0
    %2895 = vmatpush1.bf16.msra.mxu0 0
    %2896 = vmatprep.subr.bf16.mxu0 0
    %2897 = vmatpush1.bf16.msra.mxu0 0
    %2898 = vmatprep.subr.bf16.mxu0 0
    %2899 = vmatpush1.bf16.msra.mxu0 0
    %2900 = vmatprep.subr.bf16.mxu0 0
    %2901 = vmatpush1.bf16.msra.mxu0 0
    %2902 = vmatprep.subr.bf16.mxu0 0
    %2903 = vmatpush1.bf16.msra.mxu0 0
    %2904 = vmatprep.subr.bf16.mxu0 0
    %2905 = vmatpush1.bf16.msra.mxu0 0
    %2906 = vmatprep.subr.bf16.mxu0 0
    %2907 = vmatpush1.bf16.msra.mxu0 0
    %2908 = vmatprep.subr.bf16.mxu0 0
    %2909 = vmatpush1.bf16.msra.mxu0 0
    %2910 = vmatprep.mubr.bf16.mxu0 0
    %2911 = vmatmul.mubr.bf16.gmra.mrb[0].mxu0 %v2858
    %v2912 = vpop.f32.mrb[0].mxu0
    %v2913 = vadd.f32 0.0, %v2912
    %v2914 = vpop.f32.mrb[0].mxu0
    %v2915 = vpop.f32.mrb[0].mxu0
    %v2916 = vadd.f32 0.0, %v2915
    %v2917 = vpop.f32.mrb[0].mxu0
    %2918 = vmatprep.mubr.bf16.mxu0 0
    %2919 = vmatmul.mubr.bf16.gmra.mrb[0].mxu0 %v2861
    %v2920 = vpop.f32.mrb[0].mxu0
    %v2921 = vadd.f32 0.0, %v2920
    %v2922 = vpop.f32.mrb[0].mxu0
    %v2923 = vpop.f32.mrb[0].mxu0
    %v2924 = vadd.f32 0.0, %v2923
    %v2925 = vpop.f32.mrb[0].mxu0
    %2926 = vmatprep.mubr.bf16.mxu0 0
    %2927 = vmatmul.mubr.bf16.gmra.mrb[0].mxu0 %v2864
    %v2928 = vpop.f32.mrb[0].mxu0
    %v2929 = vadd.f32 0.0, %v2928
    %v2930 = vpop.f32.mrb[0].mxu0
    %v2931 = vpop.f32.mrb[0].mxu0
    %v2932 = vadd.f32 0.0, %v2931
    %v2933 = vpop.f32.mrb[0].mxu0
    %2934 = vmatprep.mubr.bf16.mxu0 0
    %2935 = vmatmul.mubr.bf16.gmra.mrb[0].mxu0 %v2867
    %v2936 = vpop.f32.mrb[0].mxu0
    %v2937 = vadd.f32 0.0, %v2936
    %v2938 = vpop.f32.mrb[0].mxu0
    %v2939 = vpop.f32.mrb[0].mxu0
    %v2940 = vadd.f32 0.0, %v2939
    %v2941 = vpop.f32.mrb[0].mxu0
    %2942 = vmatprep.mubr.bf16.mxu0 0
    %2943 = vmatmul.mubr.bf16.gmra.mrb[0].mxu0 %v2870
    %v2944 = vpop.f32.mrb[0].mxu0
    %v2945 = vadd.f32 0.0, %v2944
    %v2946 = vpop.f32.mrb[0].mxu0
    %v2947 = vpop.f32.mrb[0].mxu0
    %v2948 = vadd.f32 0.0, %v2947
    %v2949 = vpop.f32.mrb[0].mxu0
    %2950 = vmatprep.mubr.bf16.mxu0 0
    %2951 = vmatmul.mubr.bf16.gmra.mrb[0].mxu0 %v2873
    %v2952 = vpop.f32.mrb[0].mxu0
    %v2953 = vadd.f32 0.0, %v2952
    %v2954 = vpop.f32.mrb[0].mxu0
    %v2955 = vpop.f32.mrb[0].mxu0
    %v2956 = vadd.f32 0.0, %v2955
    %v2957 = vpop.f32.mrb[0].mxu0
    %2958 = vdwg.mxu0
    %v2959 = vmul.f32 %v2913, %v2913
    %v2960 = vmul.f32 %v2916, %v2916
    %v2961 = vmul.f32 %v2921, %v2921
    %v2962 = vmul.f32 %v2924, %v2924
    %v2963 = vmul.f32 %v2929, %v2929
    %v2964 = vmul.f32 %v2932, %v2932
    %v2965 = vmul.f32 %v2937, %v2937
    %v2966 = vmul.f32 %v2940, %v2940
    %v2967 = vadd.f32 %v2959, %v2963
    %v2968 = vadd.f32 %v2960, %v2964
    %v2969 = vadd.f32 %v2961, %v2965
    %v2970 = vadd.f32 %v2962, %v2966
    %v2971 = vmul.f32 %v2945, %v2945
    %v2972 = vmul.f32 %v2948, %v2948
    %v2973 = vmul.f32 %v2953, %v2953
    %v2974 = vmul.f32 %v2956, %v2956
    %v2975 = vadd.f32 %v2967, %v2971
    %v2976 = vadd.f32 %v2968, %v2972
    %v2977 = vadd.f32 %v2969, %v2973
    %v2978 = vadd.f32 %v2970, %v2974
    %v2979 = vmax.f32 %v2975, 1e-08
    %v2980 = vmax.f32 %v2976, 1e-08
    %v2981 = vmax.f32 %v2977, 1e-08
    %v2982 = vmax.f32 %v2978, 1e-08
    %v2983 = vrsqrt.pop %v2979
    %v2984 = vmul.f32 %v2979, %v2983
    %vm2985 = vcmp.eq.f32.partialorder %v2979, inf
    %v2986 = vsel %vm2985, %v2979, %v2984
    %vm2987 = vcmp.eq.f32.partialorder %v2979, 0.0
    %v2988 = vand.u32 %v2979, 2147483648
    %v2989 = vsel %vm2987, %v2988, %v2986
    %v2990 = vrsqrt.pop %v2980
    %v2991 = vmul.f32 %v2980, %v2990
    %vm2992 = vcmp.eq.f32.partialorder %v2980, inf
    %v2993 = vsel %vm2992, %v2980, %v2991
    %vm2994 = vcmp.eq.f32.partialorder %v2980, 0.0
    %v2995 = vand.u32 %v2980, 2147483648
    %v2996 = vsel %vm2994, %v2995, %v2993
    %v2997 = vrsqrt.pop %v2981
    %v2998 = vmul.f32 %v2981, %v2997
    %vm2999 = vcmp.eq.f32.partialorder %v2981, inf
    %v3000 = vsel %vm2999, %v2981, %v2998
    %vm3001 = vcmp.eq.f32.partialorder %v2981, 0.0
    %v3002 = vand.u32 %v2981, 2147483648
    %v3003 = vsel %vm3001, %v3002, %v3000
    %v3004 = vrsqrt.pop %v2982
    %v3005 = vmul.f32 %v2982, %v3004
    %vm3006 = vcmp.eq.f32.partialorder %v2982, inf
    %v3007 = vsel %vm3006, %v2982, %v3005
    %vm3008 = vcmp.eq.f32.partialorder %v2982, 0.0
    %v3009 = vand.u32 %v2982, 2147483648
    %v3010 = vsel %vm3008, %v3009, %v3007
    %v3011 = vld [vmem:[#allocation10 + $0x1e0] ss:$0 sm:$0xff]
    %v3012 = vld [vmem:[#allocation10 + $0x1f0] sm:$0xf]
    %v3013 = vpack.c.bf16 %v2996, %v2989
    %v3014 = vpack.c.bf16 %v3010, %v3003
    %v3015 = vpack.c.bf16 %v3012, %v3012
    %v3017 = vsel %vm397, %v3013, 0
    %v3020 = vsel %vm397, %v3014, 0
    %v3023 = vsel %vm304, %v3015, 0
    %3025 = vmatprep.subr.bf16.mxu0 0
    %3026 = vmatpush1.bf16.msra.mxu0 %v3023
    %3027 = vmatprep.subr.bf16.mxu0 0
    %3028 = vmatpush1.bf16.msra.mxu0 0
    %3029 = vmatprep.subr.bf16.mxu0 0
    %3030 = vmatpush1.bf16.msra.mxu0 0
    %3031 = vmatprep.subr.bf16.mxu0 0
    %3032 = vmatpush1.bf16.msra.mxu0 0
    %3033 = vmatprep.subr.bf16.mxu0 0
    %3034 = vmatpush1.bf16.msra.mxu0 0
    %3035 = vmatprep.subr.bf16.mxu0 0
    %3036 = vmatpush1.bf16.msra.mxu0 0
    %3037 = vmatprep.subr.bf16.mxu0 0
    %3038 = vmatpush1.bf16.msra.mxu0 0
    %3039 = vmatprep.subr.bf16.mxu0 0
    %3040 = vmatpush1.bf16.msra.mxu0 0
    %3041 = vmatprep.subr.bf16.mxu0 0
    %3042 = vmatpush1.bf16.msra.mxu0 0
    %3043 = vmatprep.subr.bf16.mxu0 0
    %3044 = vmatpush1.bf16.msra.mxu0 0
    %3045 = vmatprep.subr.bf16.mxu0 0
    %3046 = vmatpush1.bf16.msra.mxu0 0
    %3047 = vmatprep.subr.bf16.mxu0 0
    %3048 = vmatpush1.bf16.msra.mxu0 0
    %3049 = vmatprep.subr.bf16.mxu0 0
    %3050 = vmatpush1.bf16.msra.mxu0 0
    %3051 = vmatprep.subr.bf16.mxu0 0
    %3052 = vmatpush1.bf16.msra.mxu0 0
    %3053 = vmatprep.subr.bf16.mxu0 0
    %3054 = vmatpush1.bf16.msra.mxu0 0
    %3055 = vmatprep.subr.bf16.mxu0 0
    %3056 = vmatpush1.bf16.msra.mxu0 0
    %3057 = vmatprep.mubr.bf16.mxu0 0
    %3058 = vmatmul.mubr.bf16.gmra.mrb[0].mxu0 %v3017
    %v3059 = vpop.f32.mrb[0].mxu0
    %v3060 = vadd.f32 0.0, %v3059
    %v3061 = vpop.f32.mrb[0].mxu0
    %v3062 = vpop.f32.mrb[0].mxu0
    %v3063 = vadd.f32 0.0, %v3062
    %v3064 = vpop.f32.mrb[0].mxu0
    %3065 = vmatprep.mubr.bf16.mxu0 0
    %3066 = vmatmul.mubr.bf16.gmra.mrb[0].mxu0 %v3020
    %v3067 = vpop.f32.mrb[0].mxu0
    %v3068 = vadd.f32 0.0, %v3067
    %v3069 = vpop.f32.mrb[0].mxu0
    %v3070 = vpop.f32.mrb[0].mxu0
    %v3071 = vadd.f32 0.0, %v3070
    %v3072 = vpop.f32.mrb[0].mxu0
    %3073 = vdwg.mxu0
    %v3074 = vadd.f32 %v3011, %v3060
    %v3075 = vadd.f32 %v3011, %v3063
    %v3076 = vadd.f32 %v3011, %v3068
    %v3077 = vadd.f32 %v3011, %v3071
    %v3078 = vld [vmem:[#allocation10 + $0x200] sm:$0xff]
    %v3079 = vld [vmem:[#allocation10 + $0x210] sm:$0xff]
    %v3080 = vpack.c.bf16 %v2846, %v2845
    %v3081 = vpack.c.bf16 %v2848, %v2847
    %v3082 = vpack.c.bf16 %v3079, %v3078
    %v3084 = vsel %vm1093, %v3080, 0
    %v3087 = vsel %vm1093, %v3081, 0
    %3089 = vmatprep.subr.bf16.mxu0 0
    %3090 = vmatpush1.bf16.msra.mxu0 %v3082
    %3091 = vmatprep.subr.bf16.mxu0 0
    %3092 = vmatpush1.bf16.msra.mxu0 0
    %3093 = vmatprep.subr.bf16.mxu0 0
    %3094 = vmatpush1.bf16.msra.mxu0 0
    %3095 = vmatprep.subr.bf16.mxu0 0
    %3096 = vmatpush1.bf16.msra.mxu0 0
    %3097 = vmatprep.subr.bf16.mxu0 0
    %3098 = vmatpush1.bf16.msra.mxu0 0
    %3099 = vmatprep.subr.bf16.mxu0 0
    %3100 = vmatpush1.bf16.msra.mxu0 0
    %3101 = vmatprep.subr.bf16.mxu0 0
    %3102 = vmatpush1.bf16.msra.mxu0 0
    %3103 = vmatprep.subr.bf16.mxu0 0
    %3104 = vmatpush1.bf16.msra.mxu0 0
    %3105 = vmatprep.subr.bf16.mxu0 0
    %3106 = vmatpush1.bf16.msra.mxu0 0
    %3107 = vmatprep.subr.bf16.mxu0 0
    %3108 = vmatpush1.bf16.msra.mxu0 0
    %3109 = vmatprep.subr.bf16.mxu0 0
    %3110 = vmatpush1.bf16.msra.mxu0 0
    %3111 = vmatprep.subr.bf16.mxu0 0
    %3112 = vmatpush1.bf16.msra.mxu0 0
    %3113 = vmatprep.subr.bf16.mxu0 0
    %3114 = vmatpush1.bf16.msra.mxu0 0
    %3115 = vmatprep.subr.bf16.mxu0 0
    %3116 = vmatpush1.bf16.msra.mxu0 0
    %3117 = vmatprep.subr.bf16.mxu0 0
    %3118 = vmatpush1.bf16.msra.mxu0 0
    %3119 = vmatprep.subr.bf16.mxu0 0
    %3120 = vmatpush1.bf16.msra.mxu0 0
    %3121 = vmatprep.mubr.bf16.mxu0 0
    %3122 = vmatmul.mubr.bf16.gmra.mrb[0].mxu0 %v3084
    %v3123 = vpop.f32.mrb[0].mxu0
    %v3124 = vadd.f32 0.0, %v3123
    %v3125 = vpop.f32.mrb[0].mxu0
    %v3126 = vpop.f32.mrb[0].mxu0
    %v3127 = vadd.f32 0.0, %v3126
    %v3128 = vpop.f32.mrb[0].mxu0
    %3129 = vmatprep.mubr.bf16.mxu0 0
    %3130 = vmatmul.mubr.bf16.gmra.mrb[0].mxu0 %v3087
    %v3131 = vpop.f32.mrb[0].mxu0
    %v3132 = vadd.f32 0.0, %v3131
    %v3133 = vpop.f32.mrb[0].mxu0
    %v3134 = vpop.f32.mrb[0].mxu0
    %v3135 = vadd.f32 0.0, %v3134
    %v3136 = vpop.f32.mrb[0].mxu0
    %3137 = vdwg.mxu0
    %v3138 = vadd.f32 %v3074, %v3124
    %v3139 = vadd.f32 %v3075, %v3127
    %v3140 = vadd.f32 %v3076, %v3132
    %v3141 = vadd.f32 %v3077, %v3135
    %v3142 = vld [vmem:[#allocation10 + $0x220] sm:$0xf]
    %v3143 = vpack.c.bf16 %v2916, %v2913
    %v3144 = vpack.c.bf16 %v2924, %v2921
    %v3145 = vpack.c.bf16 %v2932, %v2929
    %v3146 = vpack.c.bf16 %v2940, %v2937
    %v3147 = vpack.c.bf16 %v2948, %v2945
    %v3148 = vpack.c.bf16 %v2956, %v2953
    %v3149 = vpack.c.bf16 %v3142, %v3142
    %v3151 = vsel %vm397, %v3143, 0
    %v3154 = vsel %vm397, %v3144, 0
    %v3157 = vsel %vm397, %v3145, 0
    %v3160 = vsel %vm397, %v3146, 0
    %v3163 = vsel %vm397, %v3147, 0
    %v3166 = vsel %vm397, %v3148, 0
    %v3169 = vsel %vm304, %v3149, 0
    %3171 = vmatprep.subr.bf16.mxu0 0
    %3172 = vmatpush1.bf16.msra.mxu0 %v3169
    %3173 = vmatprep.subr.bf16.mxu0 0
    %3174 = vmatpush1.bf16.msra.mxu0 0
    %3175 = vmatprep.subr.bf16.mxu0 0
    %3176 = vmatpush1.bf16.msra.mxu0 0
    %3177 = vmatprep.subr.bf16.mxu0 0
    %3178 = vmatpush1.bf16.msra.mxu0 0
    %3179 = vmatprep.subr.bf16.mxu0 0
    %3180 = vmatpush1.bf16.msra.mxu0 0
    %3181 = vmatprep.subr.bf16.mxu0 0
    %3182 = vmatpush1.bf16.msra.mxu0 0
    %3183 = vmatprep.subr.bf16.mxu0 0
    %3184 = vmatpush1.bf16.msra.mxu0 0
    %3185 = vmatprep.subr.bf16.mxu0 0
    %3186 = vmatpush1.bf16.msra.mxu0 0
    %3187 = vmatprep.subr.bf16.mxu0 0
    %3188 = vmatpush1.bf16.msra.mxu0 0
    %3189 = vmatprep.subr.bf16.mxu0 0
    %3190 = vmatpush1.bf16.msra.mxu0 0
    %3191 = vmatprep.subr.bf16.mxu0 0
    %3192 = vmatpush1.bf16.msra.mxu0 0
    %3193 = vmatprep.subr.bf16.mxu0 0
    %3194 = vmatpush1.bf16.msra.mxu0 0
    %3195 = vmatprep.subr.bf16.mxu0 0
    %3196 = vmatpush1.bf16.msra.mxu0 0
    %3197 = vmatprep.subr.bf16.mxu0 0
    %3198 = vmatpush1.bf16.msra.mxu0 0
    %3199 = vmatprep.subr.bf16.mxu0 0
    %3200 = vmatpush1.bf16.msra.mxu0 0
    %3201 = vmatprep.subr.bf16.mxu0 0
    %3202 = vmatpush1.bf16.msra.mxu0 0
    %3203 = vmatprep.mubr.bf16.mxu0 0
    %3204 = vmatmul.mubr.bf16.gmra.mrb[0].mxu0 %v3151
    %v3205 = vpop.f32.mrb[0].mxu0
    %v3206 = vadd.f32 0.0, %v3205
    %v3207 = vpop.f32.mrb[0].mxu0
    %v3208 = vpop.f32.mrb[0].mxu0
    %v3209 = vadd.f32 0.0, %v3208
    %v3210 = vpop.f32.mrb[0].mxu0
    %3211 = vmatprep.mubr.bf16.mxu0 0
    %3212 = vmatmul.mubr.bf16.gmra.mrb[0].mxu0 %v3154
    %v3213 = vpop.f32.mrb[0].mxu0
    %v3214 = vadd.f32 0.0, %v3213
    %v3215 = vpop.f32.mrb[0].mxu0
    %v3216 = vpop.f32.mrb[0].mxu0
    %v3217 = vadd.f32 0.0, %v3216
    %v3218 = vpop.f32.mrb[0].mxu0
    %3219 = vmatprep.mubr.bf16.mxu0 0
    %3220 = vmatmul.mubr.bf16.gmra.mrb[0].mxu0 %v3157
    %v3221 = vpop.f32.mrb[0].mxu0
    %v3222 = vadd.f32 0.0, %v3221
    %v3223 = vpop.f32.mrb[0].mxu0
    %v3224 = vpop.f32.mrb[0].mxu0
    %v3225 = vadd.f32 0.0, %v3224
    %v3226 = vpop.f32.mrb[0].mxu0
    %3227 = vmatprep.mubr.bf16.mxu0 0
    %3228 = vmatmul.mubr.bf16.gmra.mrb[0].mxu0 %v3160
    %v3229 = vpop.f32.mrb[0].mxu0
    %v3230 = vadd.f32 0.0, %v3229
    %v3231 = vpop.f32.mrb[0].mxu0
    %v3232 = vpop.f32.mrb[0].mxu0
    %v3233 = vadd.f32 0.0, %v3232
    %v3234 = vpop.f32.mrb[0].mxu0
    %3235 = vmatprep.mubr.bf16.mxu0 0
    %3236 = vmatmul.mubr.bf16.gmra.mrb[0].mxu0 %v3163
    %v3237 = vpop.f32.mrb[0].mxu0
    %v3238 = vadd.f32 0.0, %v3237
    %v3239 = vpop.f32.mrb[0].mxu0
    %v3240 = vpop.f32.mrb[0].mxu0
    %v3241 = vadd.f32 0.0, %v3240
    %v3242 = vpop.f32.mrb[0].mxu0
    %3243 = vmatprep.mubr.bf16.mxu0 0
    %3244 = vmatmul.mubr.bf16.gmra.mrb[0].mxu0 %v3166
    %v3245 = vpop.f32.mrb[0].mxu0
    %v3246 = vadd.f32 0.0, %v3245
    %v3247 = vpop.f32.mrb[0].mxu0
    %v3248 = vpop.f32.mrb[0].mxu0
    %v3249 = vadd.f32 0.0, %v3248
    %v3250 = vpop.f32.mrb[0].mxu0
    %3251 = vdwg.mxu0
    %v3252 = vpack.c.bf16 %v3139, %v3138
    %v3253 = vpack.c.bf16 %v3141, %v3140
    %v3255 = vsel %vm172, %v171, 0
    %3257 = vmatprep.subr.bf16.mxu0 0
    %3258 = vmatpush1.bf16.msra.mxu0 %v3252
    %3259 = vmatprep.subr.bf16.mxu0 0
    %3260 = vmatpush1.bf16.msra.mxu0 %v3253
    %3261 = vmatprep.subr.bf16.mxu0 0
    %3262 = vmatpush1.bf16.msra.mxu0 0
    %3263 = vmatprep.subr.bf16.mxu0 0
    %3264 = vmatpush1.bf16.msra.mxu0 0
    %3265 = vmatprep.subr.bf16.mxu0 0
    %3266 = vmatpush1.bf16.msra.mxu0 0
    %3267 = vmatprep.subr.bf16.mxu0 0
    %3268 = vmatpush1.bf16.msra.mxu0 0
    %3269 = vmatprep.subr.bf16.mxu0 0
    %3270 = vmatpush1.bf16.msra.mxu0 0
    %3271 = vmatprep.subr.bf16.mxu0 0
    %3272 = vmatpush1.bf16.msra.mxu0 0
    %3273 = vmatprep.subr.bf16.mxu0 0
    %3274 = vmatpush1.bf16.msra.mxu0 0
    %3275 = vmatprep.subr.bf16.mxu0 0
    %3276 = vmatpush1.bf16.msra.mxu0 0
    %3277 = vmatprep.subr.bf16.mxu0 0
    %3278 = vmatpush1.bf16.msra.mxu0 0
    %3279 = vmatprep.subr.bf16.mxu0 0
    %3280 = vmatpush1.bf16.msra.mxu0 0
    %3281 = vmatprep.subr.bf16.mxu0 0
    %3282 = vmatpush1.bf16.msra.mxu0 0
    %3283 = vmatprep.subr.bf16.mxu0 0
    %3284 = vmatpush1.bf16.msra.mxu0 0
    %3285 = vmatprep.subr.bf16.mxu0 0
    %3286 = vmatpush1.bf16.msra.mxu0 0
    %3287 = vmatprep.subr.bf16.mxu0 0
    %3288 = vmatpush1.bf16.msra.mxu0 0
    %3289 = vmatprep.mubr.bf16.mxu0 0
    %3290 = vmatmul.mubr.bf16.gmra.mrb[0].mxu0 %v3255
    %v3291 = vpop.f32.mrb[0].mxu0
    %v3292 = vadd.f32 0.0, %v3291
    %v3293 = vpop.f32.mrb[0].mxu0
    %v3294 = vpop.f32.mrb[0].mxu0
    %v3295 = vadd.f32 0.0, %v3294
    %v3296 = vpop.f32.mrb[0].mxu0
    %3297 = vdwg.mxu0
    %v3298 = vmul.f32 %v3292, %v181
    %v3299 = vmul.f32 %v3295, %v182
    %v3300 = vadd.f32 %v498, %v3298
    %v3301 = vadd.f32 %v499, %v3299
    %v3302 = vpack.c.bf16 %v3209, %v3206
    %v3303 = vpack.c.bf16 %v3217, %v3214
    %3304 = vmatprep.subr.bf16.mxu0 0
    %3305 = vmatpush1.bf16.msra.mxu0 %v3302
    %3306 = vmatprep.subr.bf16.mxu0 0
    %3307 = vmatpush1.bf16.msra.mxu0 %v3303
    %3308 = vmatprep.subr.bf16.mxu0 0
    %3309 = vmatpush1.bf16.msra.mxu0 0
    %3310 = vmatprep.subr.bf16.mxu0 0
    %3311 = vmatpush1.bf16.msra.mxu0 0
    %3312 = vmatprep.subr.bf16.mxu0 0
    %3313 = vmatpush1.bf16.msra.mxu0 0
    %3314 = vmatprep.subr.bf16.mxu0 0
    %3315 = vmatpush1.bf16.msra.mxu0 0
    %3316 = vmatprep.subr.bf16.mxu0 0
    %3317 = vmatpush1.bf16.msra.mxu0 0
    %3318 = vmatprep.subr.bf16.mxu0 0
    %3319 = vmatpush1.bf16.msra.mxu0 0
    %3320 = vmatprep.subr.bf16.mxu0 0
    %3321 = vmatpush1.bf16.msra.mxu0 0
    %3322 = vmatprep.subr.bf16.mxu0 0
    %3323 = vmatpush1.bf16.msra.mxu0 0
    %3324 = vmatprep.subr.bf16.mxu0 0
    %3325 = vmatpush1.bf16.msra.mxu0 0
    %3326 = vmatprep.subr.bf16.mxu0 0
    %3327 = vmatpush1.bf16.msra.mxu0 0
    %3328 = vmatprep.subr.bf16.mxu0 0
    %3329 = vmatpush1.bf16.msra.mxu0 0
    %3330 = vmatprep.subr.bf16.mxu0 0
    %3331 = vmatpush1.bf16.msra.mxu0 0
    %3332 = vmatprep.subr.bf16.mxu0 0
    %3333 = vmatpush1.bf16.msra.mxu0 0
    %3334 = vmatprep.subr.bf16.mxu0 0
    %3335 = vmatpush1.bf16.msra.mxu0 0
    %3336 = vmatprep.mubr.bf16.mxu0 0
    %3337 = vmatmul.mubr.bf16.gmra.mrb[0].mxu0 %v3255
    %v3338 = vpop.f32.mrb[0].mxu0
    %v3339 = vadd.f32 0.0, %v3338
    %v3340 = vpop.f32.mrb[0].mxu0
    %v3341 = vpop.f32.mrb[0].mxu0
    %v3342 = vadd.f32 0.0, %v3341
    %v3343 = vpop.f32.mrb[0].mxu0
    %3344 = vdwg.mxu0
    %v3345 = vmul.f32 %v3339, %v181
    %v3346 = vmul.f32 %v3342, %v182
    %v3347 = vpack.c.bf16 %v3225, %v3222
    %v3348 = vpack.c.bf16 %v3233, %v3230
    %3349 = vmatprep.subr.bf16.mxu0 0
    %3350 = vmatpush1.bf16.msra.mxu0 %v3347
    %3351 = vmatprep.subr.bf16.mxu0 0
    %3352 = vmatpush1.bf16.msra.mxu0 %v3348
    %3353 = vmatprep.subr.bf16.mxu0 0
    %3354 = vmatpush1.bf16.msra.mxu0 0
    %3355 = vmatprep.subr.bf16.mxu0 0
    %3356 = vmatpush1.bf16.msra.mxu0 0
    %3357 = vmatprep.subr.bf16.mxu0 0
    %3358 = vmatpush1.bf16.msra.mxu0 0
    %3359 = vmatprep.subr.bf16.mxu0 0
    %3360 = vmatpush1.bf16.msra.mxu0 0
    %3361 = vmatprep.subr.bf16.mxu0 0
    %3362 = vmatpush1.bf16.msra.mxu0 0
    %3363 = vmatprep.subr.bf16.mxu0 0
    %3364 = vmatpush1.bf16.msra.mxu0 0
    %3365 = vmatprep.subr.bf16.mxu0 0
    %3366 = vmatpush1.bf16.msra.mxu0 0
    %3367 = vmatprep.subr.bf16.mxu0 0
    %3368 = vmatpush1.bf16.msra.mxu0 0
    %3369 = vmatprep.subr.bf16.mxu0 0
    %3370 = vmatpush1.bf16.msra.mxu0 0
    %3371 = vmatprep.subr.bf16.mxu0 0
    %3372 = vmatpush1.bf16.msra.mxu0 0
    %3373 = vmatprep.subr.bf16.mxu0 0
    %3374 = vmatpush1.bf16.msra.mxu0 0
    %3375 = vmatprep.subr.bf16.mxu0 0
    %3376 = vmatpush1.bf16.msra.mxu0 0
    %3377 = vmatprep.subr.bf16.mxu0 0
    %3378 = vmatpush1.bf16.msra.mxu0 0
    %3379 = vmatprep.subr.bf16.mxu0 0
    %3380 = vmatpush1.bf16.msra.mxu0 0
    %3381 = vmatprep.mubr.bf16.mxu0 0
    %3382 = vmatmul.mubr.bf16.gmra.mrb[0].mxu0 %v3255
    %v3383 = vpop.f32.mrb[0].mxu0
    %v3384 = vadd.f32 0.0, %v3383
    %v3385 = vpop.f32.mrb[0].mxu0
    %v3386 = vpop.f32.mrb[0].mxu0
    %v3387 = vadd.f32 0.0, %v3386
    %v3388 = vpop.f32.mrb[0].mxu0
    %3389 = vdwg.mxu0
    %v3390 = vmul.f32 %v3384, %v181
    %v3391 = vmul.f32 %v3387, %v182
    %v3392 = vpack.c.bf16 %v3241, %v3238
    %v3393 = vpack.c.bf16 %v3249, %v3246
    %3394 = vmatprep.subr.bf16.mxu0 0
    %3395 = vmatpush1.bf16.msra.mxu0 %v3392
    %3396 = vmatprep.subr.bf16.mxu0 0
    %3397 = vmatpush1.bf16.msra.mxu0 %v3393
    %3398 = vmatprep.subr.bf16.mxu0 0
    %3399 = vmatpush1.bf16.msra.mxu0 0
    %3400 = vmatprep.subr.bf16.mxu0 0
    %3401 = vmatpush1.bf16.msra.mxu0 0
    %3402 = vmatprep.subr.bf16.mxu0 0
    %3403 = vmatpush1.bf16.msra.mxu0 0
    %3404 = vmatprep.subr.bf16.mxu0 0
    %3405 = vmatpush1.bf16.msra.mxu0 0
    %3406 = vmatprep.subr.bf16.mxu0 0
    %3407 = vmatpush1.bf16.msra.mxu0 0
    %3408 = vmatprep.subr.bf16.mxu0 0
    %3409 = vmatpush1.bf16.msra.mxu0 0
    %3410 = vmatprep.subr.bf16.mxu0 0
    %3411 = vmatpush1.bf16.msra.mxu0 0
    %3412 = vmatprep.subr.bf16.mxu0 0
    %3413 = vmatpush1.bf16.msra.mxu0 0
    %3414 = vmatprep.subr.bf16.mxu0 0
    %3415 = vmatpush1.bf16.msra.mxu0 0
    %3416 = vmatprep.subr.bf16.mxu0 0
    %3417 = vmatpush1.bf16.msra.mxu0 0
    %3418 = vmatprep.subr.bf16.mxu0 0
    %3419 = vmatpush1.bf16.msra.mxu0 0
    %3420 = vmatprep.subr.bf16.mxu0 0
    %3421 = vmatpush1.bf16.msra.mxu0 0
    %3422 = vmatprep.subr.bf16.mxu0 0
    %3423 = vmatpush1.bf16.msra.mxu0 0
    %3424 = vmatprep.subr.bf16.mxu0 0
    %3425 = vmatpush1.bf16.msra.mxu0 0
    %3426 = vmatprep.mubr.bf16.mxu0 0
    %3427 = vmatmul.mubr.bf16.gmra.mrb[0].mxu0 %v3255
    %v3428 = vpop.f32.mrb[0].mxu0
    %v3429 = vadd.f32 0.0, %v3428
    %v3430 = vpop.f32.mrb[0].mxu0
    %v3431 = vpop.f32.mrb[0].mxu0
    %v3432 = vadd.f32 0.0, %v3431
    %v3433 = vpop.f32.mrb[0].mxu0
    %3434 = vdwg.mxu0
    %v3435 = vmul.f32 %v3429, %v181
    %v3436 = vmul.f32 %v3432, %v182
    %v3437 = vadd.f32 %v552, %v3345
    %v3438 = vadd.f32 %v555, %v3346
    %v3439 = vadd.f32 %v560, %v3390
    %v3440 = vadd.f32 %v563, %v3391
    %v3441 = vadd.f32 %v568, %v3435
    %v3442 = vadd.f32 %v571, %v3436
    %v3443 = vsel %vm1093, %v3300, 0.0
    %3444 = vadd.xlane.f32.xlu0 %v3443
    %v3445 = vpop.xlane.xlu0 %3444
    %v3446 = vsel %vm1093, %v3301, 0.0
    %3447 = vadd.xlane.f32.xlu0 %v3446
    %v3448 = vpop.xlane.xlu0 %3447
    %v3449 = vrcp.pop 16.0
    %v3450 = vmul.f32 %v3445, %v3449
    %v3451 = vmul.f32 %v3448, %v3449
    %v3452 = vsub.f32 %v3300, %v3450
    %v3453 = vsub.f32 %v3301, %v3451
    %v3454 = vmul.f32 %v3452, %v3452
    %v3455 = vmul.f32 %v3453, %v3453
    %v3456 = vsel %vm1093, %v3454, 0.0
    %3457 = vadd.xlane.f32.xlu0 %v3456
    %v3458 = vpop.xlane.xlu0 %3457
    %v3459 = vsel %vm1093, %v3455, 0.0
    %3460 = vadd.xlane.f32.xlu0 %v3459
    %v3461 = vpop.xlane.xlu0 %3460
    %v3462 = vmul.f32 %v3458, %v3449
    %v3463 = vmul.f32 %v3461, %v3449
    %v3464 = vadd.f32 %v3462, 1e-05
    %v3465 = vadd.f32 %v3463, 1e-05
    %v3466 = vrsqrt.pop %v3464
    %v3467 = vrsqrt.pop %v3465
    %v3468 = vmul.f32 %v3452, %v3466
    %v3469 = vmul.f32 %v3453, %v3467
    %v3470 = vld [vmem:[#allocation10 + $0x360] ss:$0 sm:$0xff]
    %v3471 = vmul.f32 %v3468, %v3470
    %v3472 = vmul.f32 %v3469, %v3470
    %v3473 = vld [vmem:[#allocation10 + $0x350] ss:$0 sm:$0xff]
    %v3474 = vadd.f32 %v3471, %v3473
    %v3475 = vadd.f32 %v3472, %v3473
    %v3476 = vmul.f32 %v3437, %v3437
    %v3477 = vmul.f32 %v3438, %v3438
    %v3478 = vmul.f32 %v3439, %v3439
    %v3479 = vmul.f32 %v3440, %v3440
    %v3480 = vadd.f32 %v3476, %v3478
    %v3481 = vadd.f32 %v3477, %v3479
    %v3482 = vmul.f32 %v3441, %v3441
    %v3483 = vmul.f32 %v3442, %v3442
    %v3484 = vadd.f32 %v3480, %v3482
    %v3485 = vadd.f32 %v3481, %v3483
    %v3486 = vmax.f32 %v3484, 1e-08
    %v3487 = vmax.f32 %v3485, 1e-08
    %v3488 = vsel %vm397, %v3486, 0.0
    %3489 = vadd.xlane.f32.xlu0 %v3488
    %v3490 = vpop.xlane.xlu0 %3489
    %v3491 = vsel %vm397, %v3487, 0.0
    %3492 = vadd.xlane.f32.xlu0 %v3491
    %v3493 = vpop.xlane.xlu0 %3492
    %v3494 = vrcp.pop 4.0
    %v3495 = vmul.f32 %v3490, %v3494
    %v3496 = vmul.f32 %v3493, %v3494
    %v3497 = vrsqrt.pop %v3495
    %v3498 = vrsqrt.pop %v3496
    %3500 = vset.pattern.permute.xlu0 0
    %3501 = vperm.xlu0 %3500, %v3497
    %v3502 = vpop.permute.xlu0 %3501
    %3505 = vset.pattern.permute.xlu0 0
    %3506 = vperm.xlu0 %3505, %v3498
    %v3507 = vpop.permute.xlu0 %3506
    %v3509 = vmul.f32 %v3437, %v3502
    %v3510 = vmul.f32 %v3438, %v3507
    %v3511 = vmul.f32 %v3439, %v3502
    %v3512 = vmul.f32 %v3440, %v3507
    %v3513 = vmul.f32 %v3441, %v3502
    %v3514 = vmul.f32 %v3442, %v3507
    %v3515 = vld [vmem:[#allocation10 + $0x230] sm:$0xf]
    %v3516 = vpack.c.bf16 %v3510, %v3509
    %v3517 = vpack.c.bf16 %v3512, %v3511
    %v3518 = vpack.c.bf16 %v3514, %v3513
    %v3519 = vpack.c.bf16 %v3515, %v3515
    %v3521 = vsel %vm397, %v3516, 0
    %v3524 = vsel %vm397, %v3517, 0
    %v3527 = vsel %vm397, %v3518, 0
    %v3530 = vsel %vm304, %v3519, 0
    %3532 = vmatprep.subr.bf16.mxu0 0
    %3533 = vmatpush1.bf16.msra.mxu0 %v3530
    %3534 = vmatprep.subr.bf16.mxu0 0
    %3535 = vmatpush1.bf16.msra.mxu0 0
    %3536 = vmatprep.subr.bf16.mxu0 0
    %3537 = vmatpush1.bf16.msra.mxu0 0
    %3538 = vmatprep.subr.bf16.mxu0 0
    %3539 = vmatpush1.bf16.msra.mxu0 0
    %3540 = vmatprep.subr.bf16.mxu0 0
    %3541 = vmatpush1.bf16.msra.mxu0 0
    %3542 = vmatprep.subr.bf16.mxu0 0
    %3543 = vmatpush1.bf16.msra.mxu0 0
    %3544 = vmatprep.subr.bf16.mxu0 0
    %3545 = vmatpush1.bf16.msra.mxu0 0
    %3546 = vmatprep.subr.bf16.mxu0 0
    %3547 = vmatpush1.bf16.msra.mxu0 0
    %3548 = vmatprep.subr.bf16.mxu0 0
    %3549 = vmatpush1.bf16.msra.mxu0 0
    %3550 = vmatprep.subr.bf16.mxu0 0
    %3551 = vmatpush1.bf16.msra.mxu0 0
    %3552 = vmatprep.subr.bf16.mxu0 0
    %3553 = vmatpush1.bf16.msra.mxu0 0
    %3554 = vmatprep.subr.bf16.mxu0 0
    %3555 = vmatpush1.bf16.msra.mxu0 0
    %3556 = vmatprep.subr.bf16.mxu0 0
    %3557 = vmatpush1.bf16.msra.mxu0 0
    %3558 = vmatprep.subr.bf16.mxu0 0
    %3559 = vmatpush1.bf16.msra.mxu0 0
    %3560 = vmatprep.subr.bf16.mxu0 0
    %3561 = vmatpush1.bf16.msra.mxu0 0
    %3562 = vmatprep.subr.bf16.mxu0 0
    %3563 = vmatpush1.bf16.msra.mxu0 0
    %3564 = vmatprep.mubr.bf16.mxu0 0
    %3565 = vmatmul.mubr.bf16.gmra.mrb[0].mxu0 %v3521
    %v3566 = vpop.f32.mrb[0].mxu0
    %v3567 = vadd.f32 0.0, %v3566
    %v3568 = vpop.f32.mrb[0].mxu0
    %v3569 = vpop.f32.mrb[0].mxu0
    %v3570 = vadd.f32 0.0, %v3569
    %v3571 = vpop.f32.mrb[0].mxu0
    %3572 = vmatprep.mubr.bf16.mxu0 0
    %3573 = vmatmul.mubr.bf16.gmra.mrb[0].mxu0 %v3524
    %v3574 = vpop.f32.mrb[0].mxu0
    %v3575 = vadd.f32 0.0, %v3574
    %v3576 = vpop.f32.mrb[0].mxu0
    %v3577 = vpop.f32.mrb[0].mxu0
    %v3578 = vadd.f32 0.0, %v3577
    %v3579 = vpop.f32.mrb[0].mxu0
    %3580 = vmatprep.mubr.bf16.mxu0 0
    %3581 = vmatmul.mubr.bf16.gmra.mrb[0].mxu0 %v3527
    %v3582 = vpop.f32.mrb[0].mxu0
    %v3583 = vadd.f32 0.0, %v3582
    %v3584 = vpop.f32.mrb[0].mxu0
    %v3585 = vpop.f32.mrb[0].mxu0
    %v3586 = vadd.f32 0.0, %v3585
    %v3587 = vpop.f32.mrb[0].mxu0
    %3588 = vdwg.mxu0
    %v3589 = vmul.f32 %v3567, %v3567
    %v3590 = vmul.f32 %v3570, %v3570
    %v3591 = vmul.f32 %v3575, %v3575
    %v3592 = vmul.f32 %v3578, %v3578
    %v3593 = vadd.f32 %v3589, %v3591
    %v3594 = vadd.f32 %v3590, %v3592
    %v3595 = vmul.f32 %v3583, %v3583
    %v3596 = vmul.f32 %v3586, %v3586
    %v3597 = vadd.f32 %v3593, %v3595
    %v3598 = vadd.f32 %v3594, %v3596
    %v3599 = vmax.f32 %v3597, 1e-08
    %v3600 = vmax.f32 %v3598, 1e-08
    %v3601 = vrsqrt.pop %v3599
    %v3602 = vmul.f32 %v3599, %v3601
    %vm3603 = vcmp.eq.f32.partialorder %v3599, inf
    %v3604 = vsel %vm3603, %v3599, %v3602
    %vm3605 = vcmp.eq.f32.partialorder %v3599, 0.0
    %v3606 = vand.u32 %v3599, 2147483648
    %v3607 = vsel %vm3605, %v3606, %v3604
    %v3608 = vrsqrt.pop %v3600
    %v3609 = vmul.f32 %v3600, %v3608
    %vm3610 = vcmp.eq.f32.partialorder %v3600, inf
    %v3611 = vsel %vm3610, %v3600, %v3609
    %vm3612 = vcmp.eq.f32.partialorder %v3600, 0.0
    %v3613 = vand.u32 %v3600, 2147483648
    %v3614 = vsel %vm3612, %v3613, %v3611
    %v3615 = vld [vmem:[#allocation10 + $0x240] ss:$0 sm:$0xff]
    %v3616 = vld [vmem:[#allocation10 + $0x250] sm:$0xff]
    %v3617 = vpack.c.bf16 %v3614, %v3607
    %v3618 = vpack.c.bf16 %v3616, %v3616
    %v3620 = vsel %vm574, %v3617, 0
    %v3623 = vsel %vm925, %v3618, 0
    %3625 = vmatprep.subr.bf16.mxu0 0
    %3626 = vmatpush1.bf16.msra.mxu0 %v3623
    %3627 = vmatprep.subr.bf16.mxu0 0
    %3628 = vmatpush1.bf16.msra.mxu0 0
    %3629 = vmatprep.subr.bf16.mxu0 0
    %3630 = vmatpush1.bf16.msra.mxu0 0
    %3631 = vmatprep.subr.bf16.mxu0 0
    %3632 = vmatpush1.bf16.msra.mxu0 0
    %3633 = vmatprep.subr.bf16.mxu0 0
    %3634 = vmatpush1.bf16.msra.mxu0 0
    %3635 = vmatprep.subr.bf16.mxu0 0
    %3636 = vmatpush1.bf16.msra.mxu0 0
    %3637 = vmatprep.subr.bf16.mxu0 0
    %3638 = vmatpush1.bf16.msra.mxu0 0
    %3639 = vmatprep.subr.bf16.mxu0 0
    %3640 = vmatpush1.bf16.msra.mxu0 0
    %3641 = vmatprep.subr.bf16.mxu0 0
    %3642 = vmatpush1.bf16.msra.mxu0 0
    %3643 = vmatprep.subr.bf16.mxu0 0
    %3644 = vmatpush1.bf16.msra.mxu0 0
    %3645 = vmatprep.subr.bf16.mxu0 0
    %3646 = vmatpush1.bf16.msra.mxu0 0
    %3647 = vmatprep.subr.bf16.mxu0 0
    %3648 = vmatpush1.bf16.msra.mxu0 0
    %3649 = vmatprep.subr.bf16.mxu0 0
    %3650 = vmatpush1.bf16.msra.mxu0 0
    %3651 = vmatprep.subr.bf16.mxu0 0
    %3652 = vmatpush1.bf16.msra.mxu0 0
    %3653 = vmatprep.subr.bf16.mxu0 0
    %3654 = vmatpush1.bf16.msra.mxu0 0
    %3655 = vmatprep.subr.bf16.mxu0 0
    %3656 = vmatpush1.bf16.msra.mxu0 0
    %3657 = vmatprep.mubr.bf16.mxu0 0
    %3658 = vmatmul.mubr.bf16.gmra.mrb[0].mxu0 %v3620
    %v3659 = vpop.f32.mrb[0].mxu0
    %v3660 = vadd.f32 0.0, %v3659
    %v3661 = vpop.f32.mrb[0].mxu0
    %v3662 = vpop.f32.mrb[0].mxu0
    %v3663 = vadd.f32 0.0, %v3662
    %v3664 = vpop.f32.mrb[0].mxu0
    %3665 = vdwg.mxu0
    %v3666 = vadd.f32 %v3615, %v3660
    %v3667 = vadd.f32 %v3615, %v3663
    %v3668 = vld [vmem:[#allocation10 + $0x260] sm:$0xff]
    %v3669 = vld [vmem:[#allocation10 + $0x270] sm:$0xff]
    %v3670 = vpack.c.bf16 %v3475, %v3474
    %v3671 = vpack.c.bf16 %v3669, %v3668
    %v3673 = vsel %vm1093, %v3670, 0
    %3675 = vmatprep.subr.bf16.mxu0 0
    %3676 = vmatpush1.bf16.msra.mxu0 %v3671
    %3677 = vmatprep.subr.bf16.mxu0 0
    %3678 = vmatpush1.bf16.msra.mxu0 0
    %3679 = vmatprep.subr.bf16.mxu0 0
    %3680 = vmatpush1.bf16.msra.mxu0 0
    %3681 = vmatprep.subr.bf16.mxu0 0
    %3682 = vmatpush1.bf16.msra.mxu0 0
    %3683 = vmatprep.subr.bf16.mxu0 0
    %3684 = vmatpush1.bf16.msra.mxu0 0
    %3685 = vmatprep.subr.bf16.mxu0 0
    %3686 = vmatpush1.bf16.msra.mxu0 0
    %3687 = vmatprep.subr.bf16.mxu0 0
    %3688 = vmatpush1.bf16.msra.mxu0 0
    %3689 = vmatprep.subr.bf16.mxu0 0
    %3690 = vmatpush1.bf16.msra.mxu0 0
    %3691 = vmatprep.subr.bf16.mxu0 0
    %3692 = vmatpush1.bf16.msra.mxu0 0
    %3693 = vmatprep.subr.bf16.mxu0 0
    %3694 = vmatpush1.bf16.msra.mxu0 0
    %3695 = vmatprep.subr.bf16.mxu0 0
    %3696 = vmatpush1.bf16.msra.mxu0 0
    %3697 = vmatprep.subr.bf16.mxu0 0
    %3698 = vmatpush1.bf16.msra.mxu0 0
    %3699 = vmatprep.subr.bf16.mxu0 0
    %3700 = vmatpush1.bf16.msra.mxu0 0
    %3701 = vmatprep.subr.bf16.mxu0 0
    %3702 = vmatpush1.bf16.msra.mxu0 0
    %3703 = vmatprep.subr.bf16.mxu0 0
    %3704 = vmatpush1.bf16.msra.mxu0 0
    %3705 = vmatprep.subr.bf16.mxu0 0
    %3706 = vmatpush1.bf16.msra.mxu0 0
    %3707 = vmatprep.mubr.bf16.mxu0 0
    %3708 = vmatmul.mubr.bf16.gmra.mrb[0].mxu0 %v3673
    %v3709 = vpop.f32.mrb[0].mxu0
    %v3710 = vadd.f32 0.0, %v3709
    %v3711 = vpop.f32.mrb[0].mxu0
    %v3712 = vpop.f32.mrb[0].mxu0
    %v3713 = vadd.f32 0.0, %v3712
    %v3714 = vpop.f32.mrb[0].mxu0
    %3715 = vdwg.mxu0
    %v3716 = vadd.f32 %v3666, %v3710
    %v3717 = vadd.f32 %v3667, %v3713
    %v3718 = vld [vmem:[#allocation10 + $0x280] sm:$0xff]
    %v3719 = vpack.c.bf16 %v3570, %v3567
    %v3720 = vpack.c.bf16 %v3578, %v3575
    %v3721 = vpack.c.bf16 %v3586, %v3583
    %v3722 = vpack.c.bf16 %v3718, %v3718
    %v3724 = vsel %vm574, %v3719, 0
    %v3727 = vsel %vm574, %v3720, 0
    %v3730 = vsel %vm574, %v3721, 0
    %v3733 = vsel %vm925, %v3722, 0
    %3735 = vmatprep.subr.bf16.mxu0 0
    %3736 = vmatpush1.bf16.msra.mxu0 %v3733
    %3737 = vmatprep.subr.bf16.mxu0 0
    %3738 = vmatpush1.bf16.msra.mxu0 0
    %3739 = vmatprep.subr.bf16.mxu0 0
    %3740 = vmatpush1.bf16.msra.mxu0 0
    %3741 = vmatprep.subr.bf16.mxu0 0
    %3742 = vmatpush1.bf16.msra.mxu0 0
    %3743 = vmatprep.subr.bf16.mxu0 0
    %3744 = vmatpush1.bf16.msra.mxu0 0
    %3745 = vmatprep.subr.bf16.mxu0 0
    %3746 = vmatpush1.bf16.msra.mxu0 0
    %3747 = vmatprep.subr.bf16.mxu0 0
    %3748 = vmatpush1.bf16.msra.mxu0 0
    %3749 = vmatprep.subr.bf16.mxu0 0
    %3750 = vmatpush1.bf16.msra.mxu0 0
    %3751 = vmatprep.subr.bf16.mxu0 0
    %3752 = vmatpush1.bf16.msra.mxu0 0
    %3753 = vmatprep.subr.bf16.mxu0 0
    %3754 = vmatpush1.bf16.msra.mxu0 0
    %3755 = vmatprep.subr.bf16.mxu0 0
    %3756 = vmatpush1.bf16.msra.mxu0 0
    %3757 = vmatprep.subr.bf16.mxu0 0
    %3758 = vmatpush1.bf16.msra.mxu0 0
    %3759 = vmatprep.subr.bf16.mxu0 0
    %3760 = vmatpush1.bf16.msra.mxu0 0
    %3761 = vmatprep.subr.bf16.mxu0 0
    %3762 = vmatpush1.bf16.msra.mxu0 0
    %3763 = vmatprep.subr.bf16.mxu0 0
    %3764 = vmatpush1.bf16.msra.mxu0 0
    %3765 = vmatprep.subr.bf16.mxu0 0
    %3766 = vmatpush1.bf16.msra.mxu0 0
    %3767 = vmatprep.mubr.bf16.mxu0 0
    %3768 = vmatmul.mubr.bf16.gmra.mrb[0].mxu0 %v3724
    %v3769 = vpop.f32.mrb[0].mxu0
    %v3770 = vadd.f32 0.0, %v3769
    %v3771 = vpop.f32.mrb[0].mxu0
    %v3772 = vpop.f32.mrb[0].mxu0
    %v3773 = vadd.f32 0.0, %v3772
    %v3774 = vpop.f32.mrb[0].mxu0
    %3775 = vmatprep.mubr.bf16.mxu0 0
    %3776 = vmatmul.mubr.bf16.gmra.mrb[0].mxu0 %v3727
    %v3777 = vpop.f32.mrb[0].mxu0
    %v3778 = vadd.f32 0.0, %v3777
    %v3779 = vpop.f32.mrb[0].mxu0
    %v3780 = vpop.f32.mrb[0].mxu0
    %v3781 = vadd.f32 0.0, %v3780
    %v3782 = vpop.f32.mrb[0].mxu0
    %3783 = vmatprep.mubr.bf16.mxu0 0
    %3784 = vmatmul.mubr.bf16.gmra.mrb[0].mxu0 %v3730
    %v3785 = vpop.f32.mrb[0].mxu0
    %v3786 = vadd.f32 0.0, %v3785
    %v3787 = vpop.f32.mrb[0].mxu0
    %v3788 = vpop.f32.mrb[0].mxu0
    %v3789 = vadd.f32 0.0, %v3788
    %v3790 = vpop.f32.mrb[0].mxu0
    %3791 = vdwg.mxu0
    %v3792 = vmul.f32 %v3770, %v3770
    %v3793 = vmul.f32 %v3773, %v3773
    %v3794 = vmul.f32 %v3778, %v3778
    %v3795 = vmul.f32 %v3781, %v3781
    %v3796 = vadd.f32 %v3792, %v3794
    %v3797 = vadd.f32 %v3793, %v3795
    %v3798 = vmul.f32 %v3786, %v3786
    %v3799 = vmul.f32 %v3789, %v3789
    %v3800 = vadd.f32 %v3796, %v3798
    %v3801 = vadd.f32 %v3797, %v3799
    %v3802 = vmax.f32 %v3800, 1e-08
    %v3803 = vmax.f32 %v3801, 1e-08
    %v3804 = vrsqrt.pop %v3802
    %v3805 = vmul.f32 %v3802, %v3804
    %vm3806 = vcmp.eq.f32.partialorder %v3802, inf
    %v3807 = vsel %vm3806, %v3802, %v3805
    %vm3808 = vcmp.eq.f32.partialorder %v3802, 0.0
    %v3809 = vand.u32 %v3802, 2147483648
    %v3810 = vsel %vm3808, %v3809, %v3807
    %v3811 = vrsqrt.pop %v3803
    %v3812 = vmul.f32 %v3803, %v3811
    %vm3813 = vcmp.eq.f32.partialorder %v3803, inf
    %v3814 = vsel %vm3813, %v3803, %v3812
    %vm3815 = vcmp.eq.f32.partialorder %v3803, 0.0
    %v3816 = vand.u32 %v3803, 2147483648
    %v3817 = vsel %vm3815, %v3816, %v3814
    %v3818 = vsub.f32 0.0, %v3810
    %v3819 = vsub.f32 0.0, %v3817
    %v3820 = vmul.f32 %v3818, 1.442695
    %v3821 = vpow.pop %v3820
    %v3822 = vmul.f32 %v3819, 1.442695
    %v3823 = vpow.pop %v3822
    %v3824 = vadd.f32 %v3821, 1.0
    %v3825 = vadd.f32 %v3823, 1.0
    %v3826 = vrcp.pop %v3824
    %v3827 = vrcp.pop %v3825
    %v3828 = vmul.f32 %v3770, %v3826
    %v3829 = vmul.f32 %v3773, %v3827
    %v3830 = vmul.f32 %v3778, %v3826
    %v3831 = vmul.f32 %v3781, %v3827
    %v3832 = vmul.f32 %v3786, %v3826
    %v3833 = vmul.f32 %v3789, %v3827
    %v3834 = vmax.f32 %v3716, 0.0
    %v3835 = vmax.f32 %v3717, 0.0
    %v3836 = vld [vmem:[#allocation10 + $0x290] sm:$0xff]
    %v3837 = vpack.c.bf16 %v3829, %v3828
    %v3838 = vpack.c.bf16 %v3831, %v3830
    %v3839 = vpack.c.bf16 %v3833, %v3832
    %v3840 = vpack.c.bf16 %v3836, %v3836
    %v3842 = vsel %vm574, %v3837, 0
    %v3845 = vsel %vm574, %v3838, 0
    %v3848 = vsel %vm574, %v3839, 0
    %v3851 = vsel %vm925, %v3840, 0
    %3853 = vmatprep.subr.bf16.mxu0 0
    %3854 = vmatpush1.bf16.msra.mxu0 %v3851
    %3855 = vmatprep.subr.bf16.mxu0 0
    %3856 = vmatpush1.bf16.msra.mxu0 0
    %3857 = vmatprep.subr.bf16.mxu0 0
    %3858 = vmatpush1.bf16.msra.mxu0 0
    %3859 = vmatprep.subr.bf16.mxu0 0
    %3860 = vmatpush1.bf16.msra.mxu0 0
    %3861 = vmatprep.subr.bf16.mxu0 0
    %3862 = vmatpush1.bf16.msra.mxu0 0
    %3863 = vmatprep.subr.bf16.mxu0 0
    %3864 = vmatpush1.bf16.msra.mxu0 0
    %3865 = vmatprep.subr.bf16.mxu0 0
    %3866 = vmatpush1.bf16.msra.mxu0 0
    %3867 = vmatprep.subr.bf16.mxu0 0
    %3868 = vmatpush1.bf16.msra.mxu0 0
    %3869 = vmatprep.subr.bf16.mxu0 0
    %3870 = vmatpush1.bf16.msra.mxu0 0
    %3871 = vmatprep.subr.bf16.mxu0 0
    %3872 = vmatpush1.bf16.msra.mxu0 0
    %3873 = vmatprep.subr.bf16.mxu0 0
    %3874 = vmatpush1.bf16.msra.mxu0 0
    %3875 = vmatprep.subr.bf16.mxu0 0
    %3876 = vmatpush1.bf16.msra.mxu0 0
    %3877 = vmatprep.subr.bf16.mxu0 0
    %3878 = vmatpush1.bf16.msra.mxu0 0
    %3879 = vmatprep.subr.bf16.mxu0 0
    %3880 = vmatpush1.bf16.msra.mxu0 0
    %3881 = vmatprep.subr.bf16.mxu0 0
    %3882 = vmatpush1.bf16.msra.mxu0 0
    %3883 = vmatprep.subr.bf16.mxu0 0
    %3884 = vmatpush1.bf16.msra.mxu0 0
    %3885 = vmatprep.mubr.bf16.mxu0 0
    %3886 = vmatmul.mubr.bf16.gmra.mrb[0].mxu0 %v3842
    %v3887 = vpop.f32.mrb[0].mxu0
    %v3888 = vadd.f32 0.0, %v3887
    %v3889 = vpop.f32.mrb[0].mxu0
    %v3890 = vpop.f32.mrb[0].mxu0
    %v3891 = vadd.f32 0.0, %v3890
    %v3892 = vpop.f32.mrb[0].mxu0
    %3893 = vmatprep.mubr.bf16.mxu0 0
    %3894 = vmatmul.mubr.bf16.gmra.mrb[0].mxu0 %v3845
    %v3895 = vpop.f32.mrb[0].mxu0
    %v3896 = vadd.f32 0.0, %v3895
    %v3897 = vpop.f32.mrb[0].mxu0
    %v3898 = vpop.f32.mrb[0].mxu0
    %v3899 = vadd.f32 0.0, %v3898
    %v3900 = vpop.f32.mrb[0].mxu0
    %3901 = vmatprep.mubr.bf16.mxu0 0
    %3902 = vmatmul.mubr.bf16.gmra.mrb[0].mxu0 %v3848
    %v3903 = vpop.f32.mrb[0].mxu0
    %v3904 = vadd.f32 0.0, %v3903
    %v3905 = vpop.f32.mrb[0].mxu0
    %v3906 = vpop.f32.mrb[0].mxu0
    %v3907 = vadd.f32 0.0, %v3906
    %v3908 = vpop.f32.mrb[0].mxu0
    %3909 = vdwg.mxu0
    %v3910 = vmul.f32 %v3888, %v3888
    %v3911 = vmul.f32 %v3891, %v3891
    %v3912 = vmul.f32 %v3896, %v3896
    %v3913 = vmul.f32 %v3899, %v3899
    %v3914 = vadd.f32 %v3910, %v3912
    %v3915 = vadd.f32 %v3911, %v3913
    %v3916 = vmul.f32 %v3904, %v3904
    %v3917 = vmul.f32 %v3907, %v3907
    %v3918 = vadd.f32 %v3914, %v3916
    %v3919 = vadd.f32 %v3915, %v3917
    %v3920 = vmax.f32 %v3918, 1e-08
    %v3921 = vmax.f32 %v3919, 1e-08
    %v3922 = vrsqrt.pop %v3920
    %v3923 = vmul.f32 %v3920, %v3922
    %vm3924 = vcmp.eq.f32.partialorder %v3920, inf
    %v3925 = vsel %vm3924, %v3920, %v3923
    %vm3926 = vcmp.eq.f32.partialorder %v3920, 0.0
    %v3927 = vand.u32 %v3920, 2147483648
    %v3928 = vsel %vm3926, %v3927, %v3925
    %v3929 = vrsqrt.pop %v3921
    %v3930 = vmul.f32 %v3921, %v3929
    %vm3931 = vcmp.eq.f32.partialorder %v3921, inf
    %v3932 = vsel %vm3931, %v3921, %v3930
    %vm3933 = vcmp.eq.f32.partialorder %v3921, 0.0
    %v3934 = vand.u32 %v3921, 2147483648
    %v3935 = vsel %vm3933, %v3934, %v3932
    %v3936 = vld [vmem:[#allocation10 + $0x2a0] ss:$0 sm:$0xff]
    %v3937 = vld [vmem:[#allocation10 + $0x2b0] sm:$0xff]
    %v3938 = vpack.c.bf16 %v3935, %v3928
    %v3939 = vpack.c.bf16 %v3937, %v3937
    %v3941 = vsel %vm574, %v3938, 0
    %v3944 = vsel %vm925, %v3939, 0
    %3946 = vmatprep.subr.bf16.mxu0 0
    %3947 = vmatpush1.bf16.msra.mxu0 %v3944
    %3948 = vmatprep.subr.bf16.mxu0 0
    %3949 = vmatpush1.bf16.msra.mxu0 0
    %3950 = vmatprep.subr.bf16.mxu0 0
    %3951 = vmatpush1.bf16.msra.mxu0 0
    %3952 = vmatprep.subr.bf16.mxu0 0
    %3953 = vmatpush1.bf16.msra.mxu0 0
    %3954 = vmatprep.subr.bf16.mxu0 0
    %3955 = vmatpush1.bf16.msra.mxu0 0
    %3956 = vmatprep.subr.bf16.mxu0 0
    %3957 = vmatpush1.bf16.msra.mxu0 0
    %3958 = vmatprep.subr.bf16.mxu0 0
    %3959 = vmatpush1.bf16.msra.mxu0 0
    %3960 = vmatprep.subr.bf16.mxu0 0
    %3961 = vmatpush1.bf16.msra.mxu0 0
    %3962 = vmatprep.subr.bf16.mxu0 0
    %3963 = vmatpush1.bf16.msra.mxu0 0
    %3964 = vmatprep.subr.bf16.mxu0 0
    %3965 = vmatpush1.bf16.msra.mxu0 0
    %3966 = vmatprep.subr.bf16.mxu0 0
    %3967 = vmatpush1.bf16.msra.mxu0 0
    %3968 = vmatprep.subr.bf16.mxu0 0
    %3969 = vmatpush1.bf16.msra.mxu0 0
    %3970 = vmatprep.subr.bf16.mxu0 0
    %3971 = vmatpush1.bf16.msra.mxu0 0
    %3972 = vmatprep.subr.bf16.mxu0 0
    %3973 = vmatpush1.bf16.msra.mxu0 0
    %3974 = vmatprep.subr.bf16.mxu0 0
    %3975 = vmatpush1.bf16.msra.mxu0 0
    %3976 = vmatprep.subr.bf16.mxu0 0
    %3977 = vmatpush1.bf16.msra.mxu0 0
    %3978 = vmatprep.mubr.bf16.mxu0 0
    %3979 = vmatmul.mubr.bf16.gmra.mrb[0].mxu0 %v3941
    %v3980 = vpop.f32.mrb[0].mxu0
    %v3981 = vadd.f32 0.0, %v3980
    %v3982 = vpop.f32.mrb[0].mxu0
    %v3983 = vpop.f32.mrb[0].mxu0
    %v3984 = vadd.f32 0.0, %v3983
    %v3985 = vpop.f32.mrb[0].mxu0
    %3986 = vdwg.mxu0
    %v3987 = vadd.f32 %v3936, %v3981
    %v3988 = vadd.f32 %v3936, %v3984
    %v3989 = vld [vmem:[#allocation10 + $0x2c0] sm:$0xff]
    %v3990 = vld [vmem:[#allocation10 + $0x2d0] sm:$0xff]
    %v3991 = vld [vmem:[#allocation10 + $0x2e0] sm:$0xff]
    %v3992 = vld [vmem:[#allocation10 + $0x2f0] sm:$0xff]
    %v3993 = vld [vmem:[#allocation10 + $0x300] sm:$0xff]
    %v3994 = vld [vmem:[#allocation10 + $0x310] sm:$0xff]
    %v3995 = vld [vmem:[#allocation10 + $0x320] sm:$0xff]
    %v3996 = vld [vmem:[#allocation10 + $0x330] sm:$0xff]
    %v3997 = vpack.c.bf16 %v3835, %v3834
    %v3998 = vpack.c.bf16 %v3990, %v3989
    %v3999 = vpack.c.bf16 %v3992, %v3991
    %v4000 = vpack.c.bf16 %v3994, %v3993
    %v4001 = vpack.c.bf16 %v3996, %v3995
    %vm4002 = vcmask 523264
    %v4004 = vsel %vm4002, %v3997, 0
    %4006 = vmatprep.subr.bf16.mxu0 0
    %4007 = vmatpush1.bf16.msra.mxu0 %v3998
    %4008 = vmatprep.subr.bf16.mxu0 0
    %4009 = vmatpush1.bf16.msra.mxu0 %v3999
    %4010 = vmatprep.subr.bf16.mxu0 0
    %4011 = vmatpush1.bf16.msra.mxu0 %v4000
    %4012 = vmatprep.subr.bf16.mxu0 0
    %4013 = vmatpush1.bf16.msra.mxu0 %v4001
    %4014 = vmatprep.subr.bf16.mxu0 0
    %4015 = vmatpush1.bf16.msra.mxu0 0
    %4016 = vmatprep.subr.bf16.mxu0 0
    %4017 = vmatpush1.bf16.msra.mxu0 0
    %4018 = vmatprep.subr.bf16.mxu0 0
    %4019 = vmatpush1.bf16.msra.mxu0 0
    %4020 = vmatprep.subr.bf16.mxu0 0
    %4021 = vmatpush1.bf16.msra.mxu0 0
    %4022 = vmatprep.subr.bf16.mxu0 0
    %4023 = vmatpush1.bf16.msra.mxu0 0
    %4024 = vmatprep.subr.bf16.mxu0 0
    %4025 = vmatpush1.bf16.msra.mxu0 0
    %4026 = vmatprep.subr.bf16.mxu0 0
    %4027 = vmatpush1.bf16.msra.mxu0 0
    %4028 = vmatprep.subr.bf16.mxu0 0
    %4029 = vmatpush1.bf16.msra.mxu0 0
    %4030 = vmatprep.subr.bf16.mxu0 0
    %4031 = vmatpush1.bf16.msra.mxu0 0
    %4032 = vmatprep.subr.bf16.mxu0 0
    %4033 = vmatpush1.bf16.msra.mxu0 0
    %4034 = vmatprep.subr.bf16.mxu0 0
    %4035 = vmatpush1.bf16.msra.mxu0 0
    %4036 = vmatprep.subr.bf16.mxu0 0
    %4037 = vmatpush1.bf16.msra.mxu0 0
    %4038 = vmatprep.mubr.bf16.mxu0 0
    %4039 = vmatmul.mubr.bf16.gmra.mrb[0].mxu0 %v4004
    %v4040 = vpop.f32.mrb[0].mxu0
    %v4041 = vadd.f32 0.0, %v4040
    %v4042 = vpop.f32.mrb[0].mxu0
    %v4043 = vpop.f32.mrb[0].mxu0
    %v4044 = vadd.f32 0.0, %v4043
    %v4045 = vpop.f32.mrb[0].mxu0
    %4046 = vdwg.mxu0
    %v4047 = vadd.f32 %v3987, %v4041
    %v4048 = vadd.f32 %v3988, %v4044
    %v4049 = vld [vmem:[#allocation10 + $0x340] sm:$0xff]
    %v4050 = vpack.c.bf16 %v3891, %v3888
    %v4051 = vpack.c.bf16 %v3899, %v3896
    %v4052 = vpack.c.bf16 %v3907, %v3904
    %v4053 = vpack.c.bf16 %v4049, %v4049
    %v4055 = vsel %vm574, %v4050, 0
    %v4058 = vsel %vm574, %v4051, 0
    %v4061 = vsel %vm574, %v4052, 0
    %v4064 = vsel %vm925, %v4053, 0
    %4066 = vmatprep.subr.bf16.mxu0 0
    %4067 = vmatpush1.bf16.msra.mxu0 %v4064
    %4068 = vmatprep.subr.bf16.mxu0 0
    %4069 = vmatpush1.bf16.msra.mxu0 0
    %4070 = vmatprep.subr.bf16.mxu0 0
    %4071 = vmatpush1.bf16.msra.mxu0 0
    %4072 = vmatprep.subr.bf16.mxu0 0
    %4073 = vmatpush1.bf16.msra.mxu0 0
    %4074 = vmatprep.subr.bf16.mxu0 0
    %4075 = vmatpush1.bf16.msra.mxu0 0
    %4076 = vmatprep.subr.bf16.mxu0 0
    %4077 = vmatpush1.bf16.msra.mxu0 0
    %4078 = vmatprep.subr.bf16.mxu0 0
    %4079 = vmatpush1.bf16.msra.mxu0 0
    %4080 = vmatprep.subr.bf16.mxu0 0
    %4081 = vmatpush1.bf16.msra.mxu0 0
    %4082 = vmatprep.subr.bf16.mxu0 0
    %4083 = vmatpush1.bf16.msra.mxu0 0
    %4084 = vmatprep.subr.bf16.mxu0 0
    %4085 = vmatpush1.bf16.msra.mxu0 0
    %4086 = vmatprep.subr.bf16.mxu0 0
    %4087 = vmatpush1.bf16.msra.mxu0 0
    %4088 = vmatprep.subr.bf16.mxu0 0
    %4089 = vmatpush1.bf16.msra.mxu0 0
    %4090 = vmatprep.subr.bf16.mxu0 0
    %4091 = vmatpush1.bf16.msra.mxu0 0
    %4092 = vmatprep.subr.bf16.mxu0 0
    %4093 = vmatpush1.bf16.msra.mxu0 0
    %4094 = vmatprep.subr.bf16.mxu0 0
    %4095 = vmatpush1.bf16.msra.mxu0 0
    %4096 = vmatprep.subr.bf16.mxu0 0
    %4097 = vmatpush1.bf16.msra.mxu0 0
    %4098 = vmatprep.mubr.bf16.mxu0 0
    %4099 = vmatmul.mubr.bf16.gmra.mrb[0].mxu0 %v4055
    %v4100 = vpop.f32.mrb[0].mxu0
    %v4101 = vadd.f32 0.0, %v4100
    %v4102 = vpop.f32.mrb[0].mxu0
    %v4103 = vpop.f32.mrb[0].mxu0
    %v4104 = vadd.f32 0.0, %v4103
    %v4105 = vpop.f32.mrb[0].mxu0
    %4106 = vmatprep.mubr.bf16.mxu0 0
    %4107 = vmatmul.mubr.bf16.gmra.mrb[0].mxu0 %v4058
    %v4108 = vpop.f32.mrb[0].mxu0
    %v4109 = vadd.f32 0.0, %v4108
    %v4110 = vpop.f32.mrb[0].mxu0
    %v4111 = vpop.f32.mrb[0].mxu0
    %v4112 = vadd.f32 0.0, %v4111
    %v4113 = vpop.f32.mrb[0].mxu0
    %4114 = vmatprep.mubr.bf16.mxu0 0
    %4115 = vmatmul.mubr.bf16.gmra.mrb[0].mxu0 %v4061
    %v4116 = vpop.f32.mrb[0].mxu0
    %v4117 = vadd.f32 0.0, %v4116
    %v4118 = vpop.f32.mrb[0].mxu0
    %v4119 = vpop.f32.mrb[0].mxu0
    %v4120 = vadd.f32 0.0, %v4119
    %v4121 = vpop.f32.mrb[0].mxu0
    %4122 = vdwg.mxu0
    %v4123 = vadd.f32 %v3474, %v4047
    %v4124 = vadd.f32 %v3475, %v4048
    %v4125 = vadd.f32 %v3509, %v4101
    %v4126 = vadd.f32 %v3510, %v4104
    %v4127 = vadd.f32 %v3511, %v4109
    %v4128 = vadd.f32 %v3512, %v4112
    %v4129 = vadd.f32 %v3513, %v4117
    %v4130 = vadd.f32 %v3514, %v4120
    %v4131 = vsel %vm1093, %v4123, 0.0
    %4132 = vadd.xlane.f32.xlu0 %v4131
    %v4133 = vpop.xlane.xlu0 %4132
    %v4134 = vsel %vm1093, %v4124, 0.0
    %4135 = vadd.xlane.f32.xlu0 %v4134
    %v4136 = vpop.xlane.xlu0 %4135
    %v4137 = vmul.f32 %v4133, %v3449
    %v4138 = vmul.f32 %v4136, %v3449
    %v4139 = vsub.f32 %v4123, %v4137
    %v4140 = vsub.f32 %v4124, %v4138
    %v4141 = vmul.f32 %v4139, %v4139
    %v4142 = vmul.f32 %v4140, %v4140
    %v4143 = vsel %vm1093, %v4141, 0.0
    %4144 = vadd.xlane.f32.xlu0 %v4143
    %v4145 = vpop.xlane.xlu0 %4144
    %v4146 = vsel %vm1093, %v4142, 0.0
    %4147 = vadd.xlane.f32.xlu0 %v4146
    %v4148 = vpop.xlane.xlu0 %4147
    %v4149 = vmul.f32 %v4145, %v3449
    %v4150 = vmul.f32 %v4148, %v3449
    %v4151 = vadd.f32 %v4149, 1e-05
    %v4152 = vadd.f32 %v4150, 1e-05
    %v4153 = vrsqrt.pop %v4151
    %v4154 = vrsqrt.pop %v4152
    %v4155 = vmul.f32 %v4139, %v4153
    %v4156 = vmul.f32 %v4140, %v4154
    %v4157 = vld [vmem:[#allocation10 + $0x380] ss:$0 sm:$0xff]
    %v4158 = vmul.f32 %v4155, %v4157
    %v4159 = vmul.f32 %v4156, %v4157
    %v4160 = vld [vmem:[#allocation10 + $0x370] ss:$0 sm:$0xff]
    %v4161 = vadd.f32 %v4158, %v4160
    %v4162 = vadd.f32 %v4159, %v4160
    %v4163 = vmul.f32 %v4125, %v4125
    %v4164 = vmul.f32 %v4126, %v4126
    %v4165 = vmul.f32 %v4127, %v4127
    %v4166 = vmul.f32 %v4128, %v4128
    %v4167 = vadd.f32 %v4163, %v4165
    %v4168 = vadd.f32 %v4164, %v4166
    %v4169 = vmul.f32 %v4129, %v4129
    %v4170 = vmul.f32 %v4130, %v4130
    %v4171 = vadd.f32 %v4167, %v4169
    %v4172 = vadd.f32 %v4168, %v4170
    %v4173 = vmax.f32 %v4171, 1e-08
    %v4174 = vmax.f32 %v4172, 1e-08
    %v4175 = vsel %vm397, %v4173, 0.0
    %4176 = vadd.xlane.f32.xlu0 %v4175
    %v4177 = vpop.xlane.xlu0 %4176
    %v4178 = vsel %vm397, %v4174, 0.0
    %4179 = vadd.xlane.f32.xlu0 %v4178
    %v4180 = vpop.xlane.xlu0 %4179
    %v4181 = vmul.f32 %v4177, %v3494
    %v4182 = vmul.f32 %v4180, %v3494
    %v4183 = vrsqrt.pop %v4181
    %v4184 = vrsqrt.pop %v4182
    %4186 = vset.pattern.permute.xlu0 0
    %4187 = vperm.xlu0 %4186, %v4183
    %v4188 = vpop.permute.xlu0 %4187
    %4191 = vset.pattern.permute.xlu0 0
    %4192 = vperm.xlu0 %4191, %v4184
    %v4193 = vpop.permute.xlu0 %4192
    %v4195 = vmul.f32 %v4125, %v4188
    %v4196 = vmul.f32 %v4126, %v4193
    %v4197 = vmul.f32 %v4127, %v4188
    %v4198 = vmul.f32 %v4128, %v4193
    %v4199 = vmul.f32 %v4129, %v4188
    %v4200 = vmul.f32 %v4130, %v4193
    %v4201 = vpack.c.bf16 %v4162, %v4161
    %4202 = vmatprep.subr.bf16.mxu0 0
    %4203 = vmatpush1.bf16.msra.mxu0 %v4201
    %4204 = vmatprep.subr.bf16.mxu0 0
    %4205 = vmatpush1.bf16.msra.mxu0 0
    %4206 = vmatprep.subr.bf16.mxu0 0
    %4207 = vmatpush1.bf16.msra.mxu0 0
    %4208 = vmatprep.subr.bf16.mxu0 0
    %4209 = vmatpush1.bf16.msra.mxu0 0
    %4210 = vmatprep.subr.bf16.mxu0 0
    %4211 = vmatpush1.bf16.msra.mxu0 0
    %4212 = vmatprep.subr.bf16.mxu0 0
    %4213 = vmatpush1.bf16.msra.mxu0 0
    %4214 = vmatprep.subr.bf16.mxu0 0
    %4215 = vmatpush1.bf16.msra.mxu0 0
    %4216 = vmatprep.subr.bf16.mxu0 0
    %4217 = vmatpush1.bf16.msra.mxu0 0
    %4218 = vmatprep.subr.bf16.mxu0 0
    %4219 = vmatpush1.bf16.msra.mxu0 0
    %4220 = vmatprep.subr.bf16.mxu0 0
    %4221 = vmatpush1.bf16.msra.mxu0 0
    %4222 = vmatprep.subr.bf16.mxu0 0
    %4223 = vmatpush1.bf16.msra.mxu0 0
    %4224 = vmatprep.subr.bf16.mxu0 0
    %4225 = vmatpush1.bf16.msra.mxu0 0
    %4226 = vmatprep.subr.bf16.mxu0 0
    %4227 = vmatpush1.bf16.msra.mxu0 0
    %4228 = vmatprep.subr.bf16.mxu0 0
    %4229 = vmatpush1.bf16.msra.mxu0 0
    %4230 = vmatprep.subr.bf16.mxu0 0
    %4231 = vmatpush1.bf16.msra.mxu0 0
    %4232 = vmatprep.subr.bf16.mxu0 0
    %4233 = vmatpush1.bf16.msra.mxu0 0
    %4234 = vmatprep.mubr.bf16.mxu0 0
    %4235 = vmatmul.mubr.bf16.gmra.mrb[0].mxu0 %v1095
    %v4236 = vpop.f32.mrb[0].mxu0
    %v4237 = vadd.f32 0.0, %v4236
    %v4238 = vpop.f32.mrb[0].mxu0
    %v4239 = vpop.f32.mrb[0].mxu0
    %v4240 = vadd.f32 0.0, %v4239
    %v4241 = vpop.f32.mrb[0].mxu0
    %4242 = vmatprep.mubr.bf16.mxu0 0
    %4243 = vmatmul.mubr.bf16.gmra.mrb[0].mxu0 %v1098
    %v4244 = vpop.f32.mrb[0].mxu0
    %v4245 = vadd.f32 0.0, %v4244
    %v4246 = vpop.f32.mrb[0].mxu0
    %v4247 = vpop.f32.mrb[0].mxu0
    %v4248 = vadd.f32 0.0, %v4247
    %v4249 = vpop.f32.mrb[0].mxu0
    %4250 = vdwg.mxu0
    %4251 = vmatprep.subr.bf16.mxu0 0
    %4252 = vmatpush1.bf16.msra.mxu0 %v4201
    %4253 = vmatprep.subr.bf16.mxu0 0
    %4254 = vmatpush1.bf16.msra.mxu0 0
    %4255 = vmatprep.subr.bf16.mxu0 0
    %4256 = vmatpush1.bf16.msra.mxu0 0
    %4257 = vmatprep.subr.bf16.mxu0 0
    %4258 = vmatpush1.bf16.msra.mxu0 0
    %4259 = vmatprep.subr.bf16.mxu0 0
    %4260 = vmatpush1.bf16.msra.mxu0 0
    %4261 = vmatprep.subr.bf16.mxu0 0
    %4262 = vmatpush1.bf16.msra.mxu0 0
    %4263 = vmatprep.subr.bf16.mxu0 0
    %4264 = vmatpush1.bf16.msra.mxu0 0
    %4265 = vmatprep.subr.bf16.mxu0 0
    %4266 = vmatpush1.bf16.msra.mxu0 0
    %4267 = vmatprep.subr.bf16.mxu0 0
    %4268 = vmatpush1.bf16.msra.mxu0 0
    %4269 = vmatprep.subr.bf16.mxu0 0
    %4270 = vmatpush1.bf16.msra.mxu0 0
    %4271 = vmatprep.subr.bf16.mxu0 0
    %4272 = vmatpush1.bf16.msra.mxu0 0
    %4273 = vmatprep.subr.bf16.mxu0 0
    %4274 = vmatpush1.bf16.msra.mxu0 0
    %4275 = vmatprep.subr.bf16.mxu0 0
    %4276 = vmatpush1.bf16.msra.mxu0 0
    %4277 = vmatprep.subr.bf16.mxu0 0
    %4278 = vmatpush1.bf16.msra.mxu0 0
    %4279 = vmatprep.subr.bf16.mxu0 0
    %4280 = vmatpush1.bf16.msra.mxu0 0
    %4281 = vmatprep.subr.bf16.mxu0 0
    %4282 = vmatpush1.bf16.msra.mxu0 0
    %4283 = vmatprep.mubr.bf16.mxu0 0
    %4284 = vmatmul.mubr.bf16.gmra.mrb[0].mxu0 %v1150
    %v4285 = vpop.f32.mrb[0].mxu0
    %v4286 = vadd.f32 0.0, %v4285
    %v4287 = vpop.f32.mrb[0].mxu0
    %v4288 = vpop.f32.mrb[0].mxu0
    %v4289 = vadd.f32 0.0, %v4288
    %v4290 = vpop.f32.mrb[0].mxu0
    %4291 = vmatprep.mubr.bf16.mxu0 0
    %4292 = vmatmul.mubr.bf16.gmra.mrb[0].mxu0 %v1153
    %v4293 = vpop.f32.mrb[0].mxu0
    %v4294 = vadd.f32 0.0, %v4293
    %v4295 = vpop.f32.mrb[0].mxu0
    %v4296 = vpop.f32.mrb[0].mxu0
    %v4297 = vadd.f32 0.0, %v4296
    %v4298 = vpop.f32.mrb[0].mxu0
    %4299 = vdwg.mxu0
    %v4300 = vpack.c.bf16 %v4196, %v4195
    %4301 = vmatprep.subr.bf16.mxu0 0
    %4302 = vmatpush1.bf16.msra.mxu0 %v4300
    %4303 = vmatprep.subr.bf16.mxu0 0
    %4304 = vmatpush1.bf16.msra.mxu0 0
    %4305 = vmatprep.subr.bf16.mxu0 0
    %4306 = vmatpush1.bf16.msra.mxu0 0
    %4307 = vmatprep.subr.bf16.mxu0 0
    %4308 = vmatpush1.bf16.msra.mxu0 0
    %4309 = vmatprep.subr.bf16.mxu0 0
    %4310 = vmatpush1.bf16.msra.mxu0 0
    %4311 = vmatprep.subr.bf16.mxu0 0
    %4312 = vmatpush1.bf16.msra.mxu0 0
    %4313 = vmatprep.subr.bf16.mxu0 0
    %4314 = vmatpush1.bf16.msra.mxu0 0
    %4315 = vmatprep.subr.bf16.mxu0 0
    %4316 = vmatpush1.bf16.msra.mxu0 0
    %4317 = vmatprep.subr.bf16.mxu0 0
    %4318 = vmatpush1.bf16.msra.mxu0 0
    %4319 = vmatprep.subr.bf16.mxu0 0
    %4320 = vmatpush1.bf16.msra.mxu0 0
    %4321 = vmatprep.subr.bf16.mxu0 0
    %4322 = vmatpush1.bf16.msra.mxu0 0
    %4323 = vmatprep.subr.bf16.mxu0 0
    %4324 = vmatpush1.bf16.msra.mxu0 0
    %4325 = vmatprep.subr.bf16.mxu0 0
    %4326 = vmatpush1.bf16.msra.mxu0 0
    %4327 = vmatprep.subr.bf16.mxu0 0
    %4328 = vmatpush1.bf16.msra.mxu0 0
    %4329 = vmatprep.subr.bf16.mxu0 0
    %4330 = vmatpush1.bf16.msra.mxu0 0
    %4331 = vmatprep.subr.bf16.mxu0 0
    %4332 = vmatpush1.bf16.msra.mxu0 0
    %4333 = vmatprep.mubr.bf16.mxu0 0
    %4334 = vmatmul.mubr.bf16.gmra.mrb[0].mxu0 %v1095
    %v4335 = vpop.f32.mrb[0].mxu0
    %v4336 = vadd.f32 0.0, %v4335
    %v4337 = vpop.f32.mrb[0].mxu0
    %v4338 = vpop.f32.mrb[0].mxu0
    %v4339 = vadd.f32 0.0, %v4338
    %v4340 = vpop.f32.mrb[0].mxu0
    %4341 = vmatprep.mubr.bf16.mxu0 0
    %4342 = vmatmul.mubr.bf16.gmra.mrb[0].mxu0 %v1098
    %v4343 = vpop.f32.mrb[0].mxu0
    %v4344 = vadd.f32 0.0, %v4343
    %v4345 = vpop.f32.mrb[0].mxu0
    %v4346 = vpop.f32.mrb[0].mxu0
    %v4347 = vadd.f32 0.0, %v4346
    %v4348 = vpop.f32.mrb[0].mxu0
    %4349 = vdwg.mxu0
    %v4350 = vpack.c.bf16 %v4198, %v4197
    %4351 = vmatprep.subr.bf16.mxu0 0
    %4352 = vmatpush1.bf16.msra.mxu0 %v4350
    %4353 = vmatprep.subr.bf16.mxu0 0
    %4354 = vmatpush1.bf16.msra.mxu0 0
    %4355 = vmatprep.subr.bf16.mxu0 0
    %4356 = vmatpush1.bf16.msra.mxu0 0
    %4357 = vmatprep.subr.bf16.mxu0 0
    %4358 = vmatpush1.bf16.msra.mxu0 0
    %4359 = vmatprep.subr.bf16.mxu0 0
    %4360 = vmatpush1.bf16.msra.mxu0 0
    %4361 = vmatprep.subr.bf16.mxu0 0
    %4362 = vmatpush1.bf16.msra.mxu0 0
    %4363 = vmatprep.subr.bf16.mxu0 0
    %4364 = vmatpush1.bf16.msra.mxu0 0
    %4365 = vmatprep.subr.bf16.mxu0 0
    %4366 = vmatpush1.bf16.msra.mxu0 0
    %4367 = vmatprep.subr.bf16.mxu0 0
    %4368 = vmatpush1.bf16.msra.mxu0 0
    %4369 = vmatprep.subr.bf16.mxu0 0
    %4370 = vmatpush1.bf16.msra.mxu0 0
    %4371 = vmatprep.subr.bf16.mxu0 0
    %4372 = vmatpush1.bf16.msra.mxu0 0
    %4373 = vmatprep.subr.bf16.mxu0 0
    %4374 = vmatpush1.bf16.msra.mxu0 0
    %4375 = vmatprep.subr.bf16.mxu0 0
    %4376 = vmatpush1.bf16.msra.mxu0 0
    %4377 = vmatprep.subr.bf16.mxu0 0
    %4378 = vmatpush1.bf16.msra.mxu0 0
    %4379 = vmatprep.subr.bf16.mxu0 0
    %4380 = vmatpush1.bf16.msra.mxu0 0
    %4381 = vmatprep.subr.bf16.mxu0 0
    %4382 = vmatpush1.bf16.msra.mxu0 0
    %4383 = vmatprep.mubr.bf16.mxu0 0
    %4384 = vmatmul.mubr.bf16.gmra.mrb[0].mxu0 %v1095
    %v4385 = vpop.f32.mrb[0].mxu0
    %v4386 = vadd.f32 0.0, %v4385
    %v4387 = vpop.f32.mrb[0].mxu0
    %v4388 = vpop.f32.mrb[0].mxu0
    %v4389 = vadd.f32 0.0, %v4388
    %v4390 = vpop.f32.mrb[0].mxu0
    %4391 = vmatprep.mubr.bf16.mxu0 0
    %4392 = vmatmul.mubr.bf16.gmra.mrb[0].mxu0 %v1098
    %v4393 = vpop.f32.mrb[0].mxu0
    %v4394 = vadd.f32 0.0, %v4393
    %v4395 = vpop.f32.mrb[0].mxu0
    %v4396 = vpop.f32.mrb[0].mxu0
    %v4397 = vadd.f32 0.0, %v4396
    %v4398 = vpop.f32.mrb[0].mxu0
    %4399 = vdwg.mxu0
    %v4400 = vpack.c.bf16 %v4200, %v4199
    %4401 = vmatprep.subr.bf16.mxu0 0
    %4402 = vmatpush1.bf16.msra.mxu0 %v4400
    %4403 = vmatprep.subr.bf16.mxu0 0
    %4404 = vmatpush1.bf16.msra.mxu0 0
    %4405 = vmatprep.subr.bf16.mxu0 0
    %4406 = vmatpush1.bf16.msra.mxu0 0
    %4407 = vmatprep.subr.bf16.mxu0 0
    %4408 = vmatpush1.bf16.msra.mxu0 0
    %4409 = vmatprep.subr.bf16.mxu0 0
    %4410 = vmatpush1.bf16.msra.mxu0 0
    %4411 = vmatprep.subr.bf16.mxu0 0
    %4412 = vmatpush1.bf16.msra.mxu0 0
    %4413 = vmatprep.subr.bf16.mxu0 0
    %4414 = vmatpush1.bf16.msra.mxu0 0
    %4415 = vmatprep.subr.bf16.mxu0 0
    %4416 = vmatpush1.bf16.msra.mxu0 0
    %4417 = vmatprep.subr.bf16.mxu0 0
    %4418 = vmatpush1.bf16.msra.mxu0 0
    %4419 = vmatprep.subr.bf16.mxu0 0
    %4420 = vmatpush1.bf16.msra.mxu0 0
    %4421 = vmatprep.subr.bf16.mxu0 0
    %4422 = vmatpush1.bf16.msra.mxu0 0
    %4423 = vmatprep.subr.bf16.mxu0 0
    %4424 = vmatpush1.bf16.msra.mxu0 0
    %4425 = vmatprep.subr.bf16.mxu0 0
    %4426 = vmatpush1.bf16.msra.mxu0 0
    %4427 = vmatprep.subr.bf16.mxu0 0
    %4428 = vmatpush1.bf16.msra.mxu0 0
    %4429 = vmatprep.subr.bf16.mxu0 0
    %4430 = vmatpush1.bf16.msra.mxu0 0
    %4431 = vmatprep.subr.bf16.mxu0 0
    %4432 = vmatpush1.bf16.msra.mxu0 0
    %4433 = vmatprep.mubr.bf16.mxu0 0
    %4434 = vmatmul.mubr.bf16.gmra.mrb[0].mxu0 %v1095
    %v4435 = vpop.f32.mrb[0].mxu0
    %v4436 = vadd.f32 0.0, %v4435
    %v4437 = vpop.f32.mrb[0].mxu0
    %v4438 = vpop.f32.mrb[0].mxu0
    %v4439 = vadd.f32 0.0, %v4438
    %v4440 = vpop.f32.mrb[0].mxu0
    %4441 = vmatprep.mubr.bf16.mxu0 0
    %4442 = vmatmul.mubr.bf16.gmra.mrb[0].mxu0 %v1098
    %v4443 = vpop.f32.mrb[0].mxu0
    %v4444 = vadd.f32 0.0, %v4443
    %v4445 = vpop.f32.mrb[0].mxu0
    %v4446 = vpop.f32.mrb[0].mxu0
    %v4447 = vadd.f32 0.0, %v4446
    %v4448 = vpop.f32.mrb[0].mxu0
    %4449 = vdwg.mxu0
    %4450 = vmatprep.subr.bf16.mxu0 0
    %4451 = vmatpush1.bf16.msra.mxu0 %v4300
    %4452 = vmatprep.subr.bf16.mxu0 0
    %4453 = vmatpush1.bf16.msra.mxu0 0
    %4454 = vmatprep.subr.bf16.mxu0 0
    %4455 = vmatpush1.bf16.msra.mxu0 0
    %4456 = vmatprep.subr.bf16.mxu0 0
    %4457 = vmatpush1.bf16.msra.mxu0 0
    %4458 = vmatprep.subr.bf16.mxu0 0
    %4459 = vmatpush1.bf16.msra.mxu0 0
    %4460 = vmatprep.subr.bf16.mxu0 0
    %4461 = vmatpush1.bf16.msra.mxu0 0
    %4462 = vmatprep.subr.bf16.mxu0 0
    %4463 = vmatpush1.bf16.msra.mxu0 0
    %4464 = vmatprep.subr.bf16.mxu0 0
    %4465 = vmatpush1.bf16.msra.mxu0 0
    %4466 = vmatprep.subr.bf16.mxu0 0
    %4467 = vmatpush1.bf16.msra.mxu0 0
    %4468 = vmatprep.subr.bf16.mxu0 0
    %4469 = vmatpush1.bf16.msra.mxu0 0
    %4470 = vmatprep.subr.bf16.mxu0 0
    %4471 = vmatpush1.bf16.msra.mxu0 0
    %4472 = vmatprep.subr.bf16.mxu0 0
    %4473 = vmatpush1.bf16.msra.mxu0 0
    %4474 = vmatprep.subr.bf16.mxu0 0
    %4475 = vmatpush1.bf16.msra.mxu0 0
    %4476 = vmatprep.subr.bf16.mxu0 0
    %4477 = vmatpush1.bf16.msra.mxu0 0
    %4478 = vmatprep.subr.bf16.mxu0 0
    %4479 = vmatpush1.bf16.msra.mxu0 0
    %4480 = vmatprep.subr.bf16.mxu0 0
    %4481 = vmatpush1.bf16.msra.mxu0 0
    %4482 = vmatprep.mubr.bf16.mxu0 0
    %4483 = vmatmul.mubr.bf16.gmra.mrb[0].mxu0 %v1150
    %v4484 = vpop.f32.mrb[0].mxu0
    %v4485 = vadd.f32 0.0, %v4484
    %v4486 = vpop.f32.mrb[0].mxu0
    %v4487 = vpop.f32.mrb[0].mxu0
    %v4488 = vadd.f32 0.0, %v4487
    %v4489 = vpop.f32.mrb[0].mxu0
    %4490 = vmatprep.mubr.bf16.mxu0 0
    %4491 = vmatmul.mubr.bf16.gmra.mrb[0].mxu0 %v1153
    %v4492 = vpop.f32.mrb[0].mxu0
    %v4493 = vadd.f32 0.0, %v4492
    %v4494 = vpop.f32.mrb[0].mxu0
    %v4495 = vpop.f32.mrb[0].mxu0
    %v4496 = vadd.f32 0.0, %v4495
    %v4497 = vpop.f32.mrb[0].mxu0
    %4498 = vdwg.mxu0
    %4499 = vmatprep.subr.bf16.mxu0 0
    %4500 = vmatpush1.bf16.msra.mxu0 %v4350
    %4501 = vmatprep.subr.bf16.mxu0 0
    %4502 = vmatpush1.bf16.msra.mxu0 0
    %4503 = vmatprep.subr.bf16.mxu0 0
    %4504 = vmatpush1.bf16.msra.mxu0 0
    %4505 = vmatprep.subr.bf16.mxu0 0
    %4506 = vmatpush1.bf16.msra.mxu0 0
    %4507 = vmatprep.subr.bf16.mxu0 0
    %4508 = vmatpush1.bf16.msra.mxu0 0
    %4509 = vmatprep.subr.bf16.mxu0 0
    %4510 = vmatpush1.bf16.msra.mxu0 0
    %4511 = vmatprep.subr.bf16.mxu0 0
    %4512 = vmatpush1.bf16.msra.mxu0 0
    %4513 = vmatprep.subr.bf16.mxu0 0
    %4514 = vmatpush1.bf16.msra.mxu0 0
    %4515 = vmatprep.subr.bf16.mxu0 0
    %4516 = vmatpush1.bf16.msra.mxu0 0
    %4517 = vmatprep.subr.bf16.mxu0 0
    %4518 = vmatpush1.bf16.msra.mxu0 0
    %4519 = vmatprep.subr.bf16.mxu0 0
    %4520 = vmatpush1.bf16.msra.mxu0 0
    %4521 = vmatprep.subr.bf16.mxu0 0
    %4522 = vmatpush1.bf16.msra.mxu0 0
    %4523 = vmatprep.subr.bf16.mxu0 0
    %4524 = vmatpush1.bf16.msra.mxu0 0
    %4525 = vmatprep.subr.bf16.mxu0 0
    %4526 = vmatpush1.bf16.msra.mxu0 0
    %4527 = vmatprep.subr.bf16.mxu0 0
    %4528 = vmatpush1.bf16.msra.mxu0 0
    %4529 = vmatprep.subr.bf16.mxu0 0
    %4530 = vmatpush1.bf16.msra.mxu0 0
    %4531 = vmatprep.mubr.bf16.mxu0 0
    %4532 = vmatmul.mubr.bf16.gmra.mrb[0].mxu0 %v1150
    %v4533 = vpop.f32.mrb[0].mxu0
    %v4534 = vadd.f32 0.0, %v4533
    %v4535 = vpop.f32.mrb[0].mxu0
    %v4536 = vpop.f32.mrb[0].mxu0
    %v4537 = vadd.f32 0.0, %v4536
    %v4538 = vpop.f32.mrb[0].mxu0
    %4539 = vmatprep.mubr.bf16.mxu0 0
    %4540 = vmatmul.mubr.bf16.gmra.mrb[0].mxu0 %v1153
    %v4541 = vpop.f32.mrb[0].mxu0
    %v4542 = vadd.f32 0.0, %v4541
    %v4543 = vpop.f32.mrb[0].mxu0
    %v4544 = vpop.f32.mrb[0].mxu0
    %v4545 = vadd.f32 0.0, %v4544
    %v4546 = vpop.f32.mrb[0].mxu0
    %4547 = vdwg.mxu0
    %4548 = vmatprep.subr.bf16.mxu0 0
    %4549 = vmatpush1.bf16.msra.mxu0 %v4400
    %4550 = vmatprep.subr.bf16.mxu0 0
    %4551 = vmatpush1.bf16.msra.mxu0 0
    %4552 = vmatprep.subr.bf16.mxu0 0
    %4553 = vmatpush1.bf16.msra.mxu0 0
    %4554 = vmatprep.subr.bf16.mxu0 0
    %4555 = vmatpush1.bf16.msra.mxu0 0
    %4556 = vmatprep.subr.bf16.mxu0 0
    %4557 = vmatpush1.bf16.msra.mxu0 0
    %4558 = vmatprep.subr.bf16.mxu0 0
    %4559 = vmatpush1.bf16.msra.mxu0 0
    %4560 = vmatprep.subr.bf16.mxu0 0
    %4561 = vmatpush1.bf16.msra.mxu0 0
    %4562 = vmatprep.subr.bf16.mxu0 0
    %4563 = vmatpush1.bf16.msra.mxu0 0
    %4564 = vmatprep.subr.bf16.mxu0 0
    %4565 = vmatpush1.bf16.msra.mxu0 0
    %4566 = vmatprep.subr.bf16.mxu0 0
    %4567 = vmatpush1.bf16.msra.mxu0 0
    %4568 = vmatprep.subr.bf16.mxu0 0
    %4569 = vmatpush1.bf16.msra.mxu0 0
    %4570 = vmatprep.subr.bf16.mxu0 0
    %4571 = vmatpush1.bf16.msra.mxu0 0
    %4572 = vmatprep.subr.bf16.mxu0 0
    %4573 = vmatpush1.bf16.msra.mxu0 0
    %4574 = vmatprep.subr.bf16.mxu0 0
    %4575 = vmatpush1.bf16.msra.mxu0 0
    %4576 = vmatprep.subr.bf16.mxu0 0
    %4577 = vmatpush1.bf16.msra.mxu0 0
    %4578 = vmatprep.subr.bf16.mxu0 0
    %4579 = vmatpush1.bf16.msra.mxu0 0
    %4580 = vmatprep.mubr.bf16.mxu0 0
    %4581 = vmatmul.mubr.bf16.gmra.mrb[0].mxu0 %v1150
    %v4582 = vpop.f32.mrb[0].mxu0
    %v4583 = vadd.f32 0.0, %v4582
    %v4584 = vpop.f32.mrb[0].mxu0
    %v4585 = vpop.f32.mrb[0].mxu0
    %v4586 = vadd.f32 0.0, %v4585
    %v4587 = vpop.f32.mrb[0].mxu0
    %4588 = vmatprep.mubr.bf16.mxu0 0
    %4589 = vmatmul.mubr.bf16.gmra.mrb[0].mxu0 %v1153
    %v4590 = vpop.f32.mrb[0].mxu0
    %v4591 = vadd.f32 0.0, %v4590
    %v4592 = vpop.f32.mrb[0].mxu0
    %v4593 = vpop.f32.mrb[0].mxu0
    %v4594 = vadd.f32 0.0, %v4593
    %v4595 = vpop.f32.mrb[0].mxu0
    %4596 = vdwg.mxu0
    %v4597 = vld [vmem:[#allocation10 + $0x390] sm:$0xf]
    %v4598 = vpack.c.bf16 %v4339, %v4336
    %v4599 = vpack.c.bf16 %v4347, %v4344
    %v4600 = vpack.c.bf16 %v4389, %v4386
    %v4601 = vpack.c.bf16 %v4397, %v4394
    %v4602 = vpack.c.bf16 %v4439, %v4436
    %v4603 = vpack.c.bf16 %v4447, %v4444
    %v4604 = vpack.c.bf16 %v4597, %v4597
    %v4605 = vld [vmem:[#allocation10 + $0x3a0] sm:$0x3]
    %v4606 = vpack.c.bf16 %v4605, %v4605
    %v4608 = vsel %vm303, %v4606, 0
    %4610 = vmatprep.subr.bf16.mxu0 0
    %4611 = vmatpush1.bf16.msra.mxu0 %v4608
    %4612 = vmatprep.subr.bf16.mxu0 0
    %4613 = vmatpush1.bf16.msra.mxu0 0
    %4614 = vmatprep.subr.bf16.mxu0 0
    %4615 = vmatpush1.bf16.msra.mxu0 0
    %4616 = vmatprep.subr.bf16.mxu0 0
    %4617 = vmatpush1.bf16.msra.mxu0 0
    %4618 = vmatprep.subr.bf16.mxu0 0
    %4619 = vmatpush1.bf16.msra.mxu0 0
    %4620 = vmatprep.subr.bf16.mxu0 0
    %4621 = vmatpush1.bf16.msra.mxu0 0
    %4622 = vmatprep.subr.bf16.mxu0 0
    %4623 = vmatpush1.bf16.msra.mxu0 0
    %4624 = vmatprep.subr.bf16.mxu0 0
    %4625 = vmatpush1.bf16.msra.mxu0 0
    %4626 = vmatprep.subr.bf16.mxu0 0
    %4627 = vmatpush1.bf16.msra.mxu0 0
    %4628 = vmatprep.subr.bf16.mxu0 0
    %4629 = vmatpush1.bf16.msra.mxu0 0
    %4630 = vmatprep.subr.bf16.mxu0 0
    %4631 = vmatpush1.bf16.msra.mxu0 0
    %4632 = vmatprep.subr.bf16.mxu0 0
    %4633 = vmatpush1.bf16.msra.mxu0 0
    %4634 = vmatprep.subr.bf16.mxu0 0
    %4635 = vmatpush1.bf16.msra.mxu0 0
    %4636 = vmatprep.subr.bf16.mxu0 0
    %4637 = vmatpush1.bf16.msra.mxu0 0
    %4638 = vmatprep.subr.bf16.mxu0 0
    %4639 = vmatpush1.bf16.msra.mxu0 0
    %4640 = vmatprep.subr.bf16.mxu0 0
    %4641 = vmatpush1.bf16.msra.mxu0 0
    %4642 = vmatprep.mubr.bf16.mxu0 0
    %4643 = vmatmul.mubr.bf16.gmra.mrb[0].mxu0 %v1518
    %v4644 = vpop.f32.mrb[0].mxu0
    %v4645 = vadd.f32 0.0, %v4644
    %v4646 = vpop.f32.mrb[0].mxu0
    %v4647 = vpop.f32.mrb[0].mxu0
    %v4648 = vadd.f32 0.0, %v4647
    %v4649 = vpop.f32.mrb[0].mxu0
    %4650 = vmatprep.mubr.bf16.mxu0 0
    %4651 = vmatmul.mubr.bf16.gmra.mrb[0].mxu0 %v1521
    %v4652 = vpop.f32.mrb[0].mxu0
    %v4653 = vadd.f32 0.0, %v4652
    %v4654 = vpop.f32.mrb[0].mxu0
    %v4655 = vpop.f32.mrb[0].mxu0
    %v4656 = vadd.f32 0.0, %v4655
    %v4657 = vpop.f32.mrb[0].mxu0
    %4658 = vmatprep.mubr.bf16.mxu0 0
    %4659 = vmatmul.mubr.bf16.gmra.mrb[0].mxu0 %v1524
    %v4660 = vpop.f32.mrb[0].mxu0
    %v4661 = vadd.f32 0.0, %v4660
    %v4662 = vpop.f32.mrb[0].mxu0
    %v4663 = vpop.f32.mrb[0].mxu0
    %v4664 = vadd.f32 0.0, %v4663
    %v4665 = vpop.f32.mrb[0].mxu0
    %4666 = vmatprep.mubr.bf16.mxu0 0
    %4667 = vmatmul.mubr.bf16.gmra.mrb[0].mxu0 %v1527
    %v4668 = vpop.f32.mrb[0].mxu0
    %v4669 = vadd.f32 0.0, %v4668
    %v4670 = vpop.f32.mrb[0].mxu0
    %v4671 = vpop.f32.mrb[0].mxu0
    %v4672 = vadd.f32 0.0, %v4671
    %v4673 = vpop.f32.mrb[0].mxu0
    %4674 = vmatprep.mubr.bf16.mxu0 0
    %4675 = vmatmul.mubr.bf16.gmra.mrb[0].mxu0 %v1530
    %v4676 = vpop.f32.mrb[0].mxu0
    %v4677 = vadd.f32 0.0, %v4676
    %v4678 = vpop.f32.mrb[0].mxu0
    %v4679 = vpop.f32.mrb[0].mxu0
    %v4680 = vadd.f32 0.0, %v4679
    %v4681 = vpop.f32.mrb[0].mxu0
    %4682 = vmatprep.mubr.bf16.mxu0 0
    %4683 = vmatmul.mubr.bf16.gmra.mrb[0].mxu0 %v1533
    %v4684 = vpop.f32.mrb[0].mxu0
    %v4685 = vadd.f32 0.0, %v4684
    %v4686 = vpop.f32.mrb[0].mxu0
    %v4687 = vpop.f32.mrb[0].mxu0
    %v4688 = vadd.f32 0.0, %v4687
    %v4689 = vpop.f32.mrb[0].mxu0
    %4690 = vdwg.mxu0
    %v4692 = vsel %vm397, %v4598, 0
    %v4695 = vsel %vm397, %v4599, 0
    %v4698 = vsel %vm397, %v4600, 0
    %v4701 = vsel %vm397, %v4601, 0
    %v4704 = vsel %vm397, %v4602, 0
    %v4707 = vsel %vm397, %v4603, 0
    %v4710 = vsel %vm304, %v4604, 0
    %4712 = vmatprep.subr.bf16.mxu0 0
    %4713 = vmatpush1.bf16.msra.mxu0 %v4710
    %4714 = vmatprep.subr.bf16.mxu0 0
    %4715 = vmatpush1.bf16.msra.mxu0 0
    %4716 = vmatprep.subr.bf16.mxu0 0
    %4717 = vmatpush1.bf16.msra.mxu0 0
    %4718 = vmatprep.subr.bf16.mxu0 0
    %4719 = vmatpush1.bf16.msra.mxu0 0
    %4720 = vmatprep.subr.bf16.mxu0 0
    %4721 = vmatpush1.bf16.msra.mxu0 0
    %4722 = vmatprep.subr.bf16.mxu0 0
    %4723 = vmatpush1.bf16.msra.mxu0 0
    %4724 = vmatprep.subr.bf16.mxu0 0
    %4725 = vmatpush1.bf16.msra.mxu0 0
    %4726 = vmatprep.subr.bf16.mxu0 0
    %4727 = vmatpush1.bf16.msra.mxu0 0
    %4728 = vmatprep.subr.bf16.mxu0 0
    %4729 = vmatpush1.bf16.msra.mxu0 0
    %4730 = vmatprep.subr.bf16.mxu0 0
    %4731 = vmatpush1.bf16.msra.mxu0 0
    %4732 = vmatprep.subr.bf16.mxu0 0
    %4733 = vmatpush1.bf16.msra.mxu0 0
    %4734 = vmatprep.subr.bf16.mxu0 0
    %4735 = vmatpush1.bf16.msra.mxu0 0
    %4736 = vmatprep.subr.bf16.mxu0 0
    %4737 = vmatpush1.bf16.msra.mxu0 0
    %4738 = vmatprep.subr.bf16.mxu0 0
    %4739 = vmatpush1.bf16.msra.mxu0 0
    %4740 = vmatprep.subr.bf16.mxu0 0
    %4741 = vmatpush1.bf16.msra.mxu0 0
    %4742 = vmatprep.subr.bf16.mxu0 0
    %4743 = vmatpush1.bf16.msra.mxu0 0
    %4744 = vmatprep.mubr.bf16.mxu0 0
    %4745 = vmatmul.mubr.bf16.gmra.mrb[0].mxu0 %v4692
    %v4746 = vpop.f32.mrb[0].mxu0
    %v4747 = vadd.f32 %v4645, %v4746
    %v4748 = vpop.f32.mrb[0].mxu0
    %v4749 = vpop.f32.mrb[0].mxu0
    %v4750 = vadd.f32 %v4648, %v4749
    %v4751 = vpop.f32.mrb[0].mxu0
    %4752 = vmatprep.mubr.bf16.mxu0 0
    %4753 = vmatmul.mubr.bf16.gmra.mrb[0].mxu0 %v4695
    %v4754 = vpop.f32.mrb[0].mxu0
    %v4755 = vadd.f32 %v4653, %v4754
    %v4756 = vpop.f32.mrb[0].mxu0
    %v4757 = vpop.f32.mrb[0].mxu0
    %v4758 = vadd.f32 %v4656, %v4757
    %v4759 = vpop.f32.mrb[0].mxu0
    %4760 = vmatprep.mubr.bf16.mxu0 0
    %4761 = vmatmul.mubr.bf16.gmra.mrb[0].mxu0 %v4698
    %v4762 = vpop.f32.mrb[0].mxu0
    %v4763 = vadd.f32 %v4661, %v4762
    %v4764 = vpop.f32.mrb[0].mxu0
    %v4765 = vpop.f32.mrb[0].mxu0
    %v4766 = vadd.f32 %v4664, %v4765
    %v4767 = vpop.f32.mrb[0].mxu0
    %4768 = vmatprep.mubr.bf16.mxu0 0
    %4769 = vmatmul.mubr.bf16.gmra.mrb[0].mxu0 %v4701
    %v4770 = vpop.f32.mrb[0].mxu0
    %v4771 = vadd.f32 %v4669, %v4770
    %v4772 = vpop.f32.mrb[0].mxu0
    %v4773 = vpop.f32.mrb[0].mxu0
    %v4774 = vadd.f32 %v4672, %v4773
    %v4775 = vpop.f32.mrb[0].mxu0
    %4776 = vmatprep.mubr.bf16.mxu0 0
    %4777 = vmatmul.mubr.bf16.gmra.mrb[0].mxu0 %v4704
    %v4778 = vpop.f32.mrb[0].mxu0
    %v4779 = vadd.f32 %v4677, %v4778
    %v4780 = vpop.f32.mrb[0].mxu0
    %v4781 = vpop.f32.mrb[0].mxu0
    %v4782 = vadd.f32 %v4680, %v4781
    %v4783 = vpop.f32.mrb[0].mxu0
    %4784 = vmatprep.mubr.bf16.mxu0 0
    %4785 = vmatmul.mubr.bf16.gmra.mrb[0].mxu0 %v4707
    %v4786 = vpop.f32.mrb[0].mxu0
    %v4787 = vadd.f32 %v4685, %v4786
    %v4788 = vpop.f32.mrb[0].mxu0
    %v4789 = vpop.f32.mrb[0].mxu0
    %v4790 = vadd.f32 %v4688, %v4789
    %v4791 = vpop.f32.mrb[0].mxu0
    %4792 = vdwg.mxu0
    %v4793 = vld [vmem:[#allocation10 + $0x3b0] sm:$0xf]
    %v4794 = vpack.c.bf16 %v4488, %v4485
    %v4795 = vpack.c.bf16 %v4496, %v4493
    %v4796 = vpack.c.bf16 %v4537, %v4534
    %v4797 = vpack.c.bf16 %v4545, %v4542
    %v4798 = vpack.c.bf16 %v4586, %v4583
    %v4799 = vpack.c.bf16 %v4594, %v4591
    %v4800 = vpack.c.bf16 %v4793, %v4793
    %v4802 = vsel %vm397, %v4794, 0
    %v4805 = vsel %vm397, %v4795, 0
    %v4808 = vsel %vm397, %v4796, 0
    %v4811 = vsel %vm397, %v4797, 0
    %v4814 = vsel %vm397, %v4798, 0
    %v4817 = vsel %vm397, %v4799, 0
    %v4820 = vsel %vm304, %v4800, 0
    %4822 = vmatprep.subr.bf16.mxu0 0
    %4823 = vmatpush1.bf16.msra.mxu0 %v4820
    %4824 = vmatprep.subr.bf16.mxu0 0
    %4825 = vmatpush1.bf16.msra.mxu0 0
    %4826 = vmatprep.subr.bf16.mxu0 0
    %4827 = vmatpush1.bf16.msra.mxu0 0
    %4828 = vmatprep.subr.bf16.mxu0 0
    %4829 = vmatpush1.bf16.msra.mxu0 0
    %4830 = vmatprep.subr.bf16.mxu0 0
    %4831 = vmatpush1.bf16.msra.mxu0 0
    %4832 = vmatprep.subr.bf16.mxu0 0
    %4833 = vmatpush1.bf16.msra.mxu0 0
    %4834 = vmatprep.subr.bf16.mxu0 0
    %4835 = vmatpush1.bf16.msra.mxu0 0
    %4836 = vmatprep.subr.bf16.mxu0 0
    %4837 = vmatpush1.bf16.msra.mxu0 0
    %4838 = vmatprep.subr.bf16.mxu0 0
    %4839 = vmatpush1.bf16.msra.mxu0 0
    %4840 = vmatprep.subr.bf16.mxu0 0
    %4841 = vmatpush1.bf16.msra.mxu0 0
    %4842 = vmatprep.subr.bf16.mxu0 0
    %4843 = vmatpush1.bf16.msra.mxu0 0
    %4844 = vmatprep.subr.bf16.mxu0 0
    %4845 = vmatpush1.bf16.msra.mxu0 0
    %4846 = vmatprep.subr.bf16.mxu0 0
    %4847 = vmatpush1.bf16.msra.mxu0 0
    %4848 = vmatprep.subr.bf16.mxu0 0
    %4849 = vmatpush1.bf16.msra.mxu0 0
    %4850 = vmatprep.subr.bf16.mxu0 0
    %4851 = vmatpush1.bf16.msra.mxu0 0
    %4852 = vmatprep.subr.bf16.mxu0 0
    %4853 = vmatpush1.bf16.msra.mxu0 0
    %4854 = vmatprep.mubr.bf16.mxu0 0
    %4855 = vmatmul.mubr.bf16.gmra.mrb[0].mxu0 %v4802
    %v4856 = vpop.f32.mrb[0].mxu0
    %v4857 = vadd.f32 0.0, %v4856
    %v4858 = vpop.f32.mrb[0].mxu0
    %v4859 = vpop.f32.mrb[0].mxu0
    %v4860 = vadd.f32 0.0, %v4859
    %v4861 = vpop.f32.mrb[0].mxu0
    %4862 = vmatprep.mubr.bf16.mxu0 0
    %4863 = vmatmul.mubr.bf16.gmra.mrb[0].mxu0 %v4805
    %v4864 = vpop.f32.mrb[0].mxu0
    %v4865 = vadd.f32 0.0, %v4864
    %v4866 = vpop.f32.mrb[0].mxu0
    %v4867 = vpop.f32.mrb[0].mxu0
    %v4868 = vadd.f32 0.0, %v4867
    %v4869 = vpop.f32.mrb[0].mxu0
    %4870 = vmatprep.mubr.bf16.mxu0 0
    %4871 = vmatmul.mubr.bf16.gmra.mrb[0].mxu0 %v4808
    %v4872 = vpop.f32.mrb[0].mxu0
    %v4873 = vadd.f32 0.0, %v4872
    %v4874 = vpop.f32.mrb[0].mxu0
    %v4875 = vpop.f32.mrb[0].mxu0
    %v4876 = vadd.f32 0.0, %v4875
    %v4877 = vpop.f32.mrb[0].mxu0
    %4878 = vmatprep.mubr.bf16.mxu0 0
    %4879 = vmatmul.mubr.bf16.gmra.mrb[0].mxu0 %v4811
    %v4880 = vpop.f32.mrb[0].mxu0
    %v4881 = vadd.f32 0.0, %v4880
    %v4882 = vpop.f32.mrb[0].mxu0
    %v4883 = vpop.f32.mrb[0].mxu0
    %v4884 = vadd.f32 0.0, %v4883
    %v4885 = vpop.f32.mrb[0].mxu0
    %4886 = vmatprep.mubr.bf16.mxu0 0
    %4887 = vmatmul.mubr.bf16.gmra.mrb[0].mxu0 %v4814
    %v4888 = vpop.f32.mrb[0].mxu0
    %v4889 = vadd.f32 0.0, %v4888
    %v4890 = vpop.f32.mrb[0].mxu0
    %v4891 = vpop.f32.mrb[0].mxu0
    %v4892 = vadd.f32 0.0, %v4891
    %v4893 = vpop.f32.mrb[0].mxu0
    %4894 = vmatprep.mubr.bf16.mxu0 0
    %4895 = vmatmul.mubr.bf16.gmra.mrb[0].mxu0 %v4817
    %v4896 = vpop.f32.mrb[0].mxu0
    %v4897 = vadd.f32 0.0, %v4896
    %v4898 = vpop.f32.mrb[0].mxu0
    %v4899 = vpop.f32.mrb[0].mxu0
    %v4900 = vadd.f32 0.0, %v4899
    %v4901 = vpop.f32.mrb[0].mxu0
    %4902 = vdwg.mxu0
    %v4903 = vadd.f32 %v4747, %v4857
    %v4904 = vadd.f32 %v4750, %v4860
    %v4905 = vadd.f32 %v4755, %v4865
    %v4906 = vadd.f32 %v4758, %v4868
    %v4907 = vadd.f32 %v4763, %v4873
    %v4908 = vadd.f32 %v4766, %v4876
    %v4909 = vadd.f32 %v4771, %v4881
    %v4910 = vadd.f32 %v4774, %v4884
    %v4911 = vadd.f32 %v4779, %v4889
    %v4912 = vadd.f32 %v4782, %v4892
    %v4913 = vadd.f32 %v4787, %v4897
    %v4914 = vadd.f32 %v4790, %v4900
    %v4915 = vmul.f32 %v4903, %v4903
    %v4916 = vmul.f32 %v4904, %v4904
    %v4917 = vmul.f32 %v4905, %v4905
    %v4918 = vmul.f32 %v4906, %v4906
    %v4919 = vmul.f32 %v4907, %v4907
    %v4920 = vmul.f32 %v4908, %v4908
    %v4921 = vmul.f32 %v4909, %v4909
    %v4922 = vmul.f32 %v4910, %v4910
    %v4923 = vadd.f32 %v4915, %v4919
    %v4924 = vadd.f32 %v4916, %v4920
    %v4925 = vadd.f32 %v4917, %v4921
    %v4926 = vadd.f32 %v4918, %v4922
    %v4927 = vmul.f32 %v4911, %v4911
    %v4928 = vmul.f32 %v4912, %v4912
    %v4929 = vmul.f32 %v4913, %v4913
    %v4930 = vmul.f32 %v4914, %v4914
    %v4931 = vadd.f32 %v4923, %v4927
    %v4932 = vadd.f32 %v4924, %v4928
    %v4933 = vadd.f32 %v4925, %v4929
    %v4934 = vadd.f32 %v4926, %v4930
    %v4935 = vmax.f32 %v4931, 1e-08
    %v4936 = vmax.f32 %v4932, 1e-08
    %v4937 = vmax.f32 %v4933, 1e-08
    %v4938 = vmax.f32 %v4934, 1e-08
    %v4939 = vrsqrt.pop %v4935
    %v4940 = vmul.f32 %v4935, %v4939
    %vm4941 = vcmp.eq.f32.partialorder %v4935, inf
    %v4942 = vsel %vm4941, %v4935, %v4940
    %vm4943 = vcmp.eq.f32.partialorder %v4935, 0.0
    %v4944 = vand.u32 %v4935, 2147483648
    %v4945 = vsel %vm4943, %v4944, %v4942
    %v4946 = vrsqrt.pop %v4936
    %v4947 = vmul.f32 %v4936, %v4946
    %vm4948 = vcmp.eq.f32.partialorder %v4936, inf
    %v4949 = vsel %vm4948, %v4936, %v4947
    %vm4950 = vcmp.eq.f32.partialorder %v4936, 0.0
    %v4951 = vand.u32 %v4936, 2147483648
    %v4952 = vsel %vm4950, %v4951, %v4949
    %v4953 = vrsqrt.pop %v4937
    %v4954 = vmul.f32 %v4937, %v4953
    %vm4955 = vcmp.eq.f32.partialorder %v4937, inf
    %v4956 = vsel %vm4955, %v4937, %v4954
    %vm4957 = vcmp.eq.f32.partialorder %v4937, 0.0
    %v4958 = vand.u32 %v4937, 2147483648
    %v4959 = vsel %vm4957, %v4958, %v4956
    %v4960 = vrsqrt.pop %v4938
    %v4961 = vmul.f32 %v4938, %v4960
    %vm4962 = vcmp.eq.f32.partialorder %v4938, inf
    %v4963 = vsel %vm4962, %v4938, %v4961
    %vm4964 = vcmp.eq.f32.partialorder %v4938, 0.0
    %v4965 = vand.u32 %v4938, 2147483648
    %v4966 = vsel %vm4964, %v4965, %v4963
    %v4967 = vld [vmem:[#allocation10 + $0x3c0] ss:$0 sm:$0xff]
    %v4968 = vld [vmem:[#allocation10 + $0x3d0] sm:$0xff]
    %v4969 = vld [vmem:[#allocation10 + $0x3e0] sm:$0x3]
    %v4970 = vpack.c.bf16 %v4952, %v4945
    %v4971 = vpack.c.bf16 %v4966, %v4959
    %v4972 = vpack.c.bf16 %v4969, %v4968
    %v4974 = vsel %vm1901, %v4970, 0
    %v4977 = vsel %vm1901, %v4971, 0
    %v4980 = vsel %vm1908, %v4972, 0
    %4982 = vmatprep.subr.bf16.mxu0 0
    %4983 = vmatpush1.bf16.msra.mxu0 %v4980
    %4984 = vmatprep.subr.bf16.mxu0 0
    %4985 = vmatpush1.bf16.msra.mxu0 0
    %4986 = vmatprep.subr.bf16.mxu0 0
    %4987 = vmatpush1.bf16.msra.mxu0 0
    %4988 = vmatprep.subr.bf16.mxu0 0
    %4989 = vmatpush1.bf16.msra.mxu0 0
    %4990 = vmatprep.subr.bf16.mxu0 0
    %4991 = vmatpush1.bf16.msra.mxu0 0
    %4992 = vmatprep.subr.bf16.mxu0 0
    %4993 = vmatpush1.bf16.msra.mxu0 0
    %4994 = vmatprep.subr.bf16.mxu0 0
    %4995 = vmatpush1.bf16.msra.mxu0 0
    %4996 = vmatprep.subr.bf16.mxu0 0
    %4997 = vmatpush1.bf16.msra.mxu0 0
    %4998 = vmatprep.subr.bf16.mxu0 0
    %4999 = vmatpush1.bf16.msra.mxu0 0
    %5000 = vmatprep.subr.bf16.mxu0 0
    %5001 = vmatpush1.bf16.msra.mxu0 0
    %5002 = vmatprep.subr.bf16.mxu0 0
    %5003 = vmatpush1.bf16.msra.mxu0 0
    %5004 = vmatprep.subr.bf16.mxu0 0
    %5005 = vmatpush1.bf16.msra.mxu0 0
    %5006 = vmatprep.subr.bf16.mxu0 0
    %5007 = vmatpush1.bf16.msra.mxu0 0
    %5008 = vmatprep.subr.bf16.mxu0 0
    %5009 = vmatpush1.bf16.msra.mxu0 0
    %5010 = vmatprep.subr.bf16.mxu0 0
    %5011 = vmatpush1.bf16.msra.mxu0 0
    %5012 = vmatprep.subr.bf16.mxu0 0
    %5013 = vmatpush1.bf16.msra.mxu0 0
    %5014 = vmatprep.mubr.bf16.mxu0 0
    %5015 = vmatmul.mubr.bf16.gmra.mrb[0].mxu0 %v4974
    %v5016 = vpop.f32.mrb[0].mxu0
    %v5017 = vadd.f32 0.0, %v5016
    %v5018 = vpop.f32.mrb[0].mxu0
    %v5019 = vpop.f32.mrb[0].mxu0
    %v5020 = vadd.f32 0.0, %v5019
    %v5021 = vpop.f32.mrb[0].mxu0
    %5022 = vmatprep.mubr.bf16.mxu0 0
    %5023 = vmatmul.mubr.bf16.gmra.mrb[0].mxu0 %v4977
    %v5024 = vpop.f32.mrb[0].mxu0
    %v5025 = vadd.f32 0.0, %v5024
    %v5026 = vpop.f32.mrb[0].mxu0
    %v5027 = vpop.f32.mrb[0].mxu0
    %v5028 = vadd.f32 0.0, %v5027
    %v5029 = vpop.f32.mrb[0].mxu0
    %5030 = vdwg.mxu0
    %v5031 = vadd.f32 %v4967, %v5017
    %v5032 = vadd.f32 %v4967, %v5020
    %v5033 = vadd.f32 %v4967, %v5025
    %v5034 = vadd.f32 %v4967, %v5028
    %v5035 = vld [vmem:[#allocation10 + $0x3f0] sm:$0xff]
    %v5036 = vld [vmem:[#allocation10 + $0x400] sm:$0xff]
    %v5037 = vpack.c.bf16 %v4240, %v4237
    %v5038 = vpack.c.bf16 %v4248, %v4245
    %v5039 = vpack.c.bf16 %v5036, %v5035
    %v5041 = vsel %vm1093, %v5037, 0
    %v5044 = vsel %vm1093, %v5038, 0
    %5046 = vmatprep.subr.bf16.mxu0 0
    %5047 = vmatpush1.bf16.msra.mxu0 %v5039
    %5048 = vmatprep.subr.bf16.mxu0 0
    %5049 = vmatpush1.bf16.msra.mxu0 0
    %5050 = vmatprep.subr.bf16.mxu0 0
    %5051 = vmatpush1.bf16.msra.mxu0 0
    %5052 = vmatprep.subr.bf16.mxu0 0
    %5053 = vmatpush1.bf16.msra.mxu0 0
    %5054 = vmatprep.subr.bf16.mxu0 0
    %5055 = vmatpush1.bf16.msra.mxu0 0
    %5056 = vmatprep.subr.bf16.mxu0 0
    %5057 = vmatpush1.bf16.msra.mxu0 0
    %5058 = vmatprep.subr.bf16.mxu0 0
    %5059 = vmatpush1.bf16.msra.mxu0 0
    %5060 = vmatprep.subr.bf16.mxu0 0
    %5061 = vmatpush1.bf16.msra.mxu0 0
    %5062 = vmatprep.subr.bf16.mxu0 0
    %5063 = vmatpush1.bf16.msra.mxu0 0
    %5064 = vmatprep.subr.bf16.mxu0 0
    %5065 = vmatpush1.bf16.msra.mxu0 0
    %5066 = vmatprep.subr.bf16.mxu0 0
    %5067 = vmatpush1.bf16.msra.mxu0 0
    %5068 = vmatprep.subr.bf16.mxu0 0
    %5069 = vmatpush1.bf16.msra.mxu0 0
    %5070 = vmatprep.subr.bf16.mxu0 0
    %5071 = vmatpush1.bf16.msra.mxu0 0
    %5072 = vmatprep.subr.bf16.mxu0 0
    %5073 = vmatpush1.bf16.msra.mxu0 0
    %5074 = vmatprep.subr.bf16.mxu0 0
    %5075 = vmatpush1.bf16.msra.mxu0 0
    %5076 = vmatprep.subr.bf16.mxu0 0
    %5077 = vmatpush1.bf16.msra.mxu0 0
    %5078 = vmatprep.mubr.bf16.mxu0 0
    %5079 = vmatmul.mubr.bf16.gmra.mrb[0].mxu0 %v5041
    %v5080 = vpop.f32.mrb[0].mxu0
    %v5081 = vadd.f32 0.0, %v5080
    %v5082 = vpop.f32.mrb[0].mxu0
    %v5083 = vpop.f32.mrb[0].mxu0
    %v5084 = vadd.f32 0.0, %v5083
    %v5085 = vpop.f32.mrb[0].mxu0
    %5086 = vmatprep.mubr.bf16.mxu0 0
    %5087 = vmatmul.mubr.bf16.gmra.mrb[0].mxu0 %v5044
    %v5088 = vpop.f32.mrb[0].mxu0
    %v5089 = vadd.f32 0.0, %v5088
    %v5090 = vpop.f32.mrb[0].mxu0
    %v5091 = vpop.f32.mrb[0].mxu0
    %v5092 = vadd.f32 0.0, %v5091
    %v5093 = vpop.f32.mrb[0].mxu0
    %5094 = vdwg.mxu0
    %v5095 = vadd.f32 %v5031, %v5081
    %v5096 = vadd.f32 %v5032, %v5084
    %v5097 = vadd.f32 %v5033, %v5089
    %v5098 = vadd.f32 %v5034, %v5092
    %v5099 = vld [vmem:[#allocation10 + $0x410] sm:$0xff]
    %v5100 = vpack.c.bf16 %v5099, %v5099
    %v5102 = vsel %vm925, %v5100, 0
    %5104 = vmatprep.subr.bf16.mxu0 0
    %5105 = vmatpush1.bf16.msra.mxu0 %v5102
    %5106 = vmatprep.subr.bf16.mxu0 0
    %5107 = vmatpush1.bf16.msra.mxu0 0
    %5108 = vmatprep.subr.bf16.mxu0 0
    %5109 = vmatpush1.bf16.msra.mxu0 0
    %5110 = vmatprep.subr.bf16.mxu0 0
    %5111 = vmatpush1.bf16.msra.mxu0 0
    %5112 = vmatprep.subr.bf16.mxu0 0
    %5113 = vmatpush1.bf16.msra.mxu0 0
    %5114 = vmatprep.subr.bf16.mxu0 0
    %5115 = vmatpush1.bf16.msra.mxu0 0
    %5116 = vmatprep.subr.bf16.mxu0 0
    %5117 = vmatpush1.bf16.msra.mxu0 0
    %5118 = vmatprep.subr.bf16.mxu0 0
    %5119 = vmatpush1.bf16.msra.mxu0 0
    %5120 = vmatprep.subr.bf16.mxu0 0
    %5121 = vmatpush1.bf16.msra.mxu0 0
    %5122 = vmatprep.subr.bf16.mxu0 0
    %5123 = vmatpush1.bf16.msra.mxu0 0
    %5124 = vmatprep.subr.bf16.mxu0 0
    %5125 = vmatpush1.bf16.msra.mxu0 0
    %5126 = vmatprep.subr.bf16.mxu0 0
    %5127 = vmatpush1.bf16.msra.mxu0 0
    %5128 = vmatprep.subr.bf16.mxu0 0
    %5129 = vmatpush1.bf16.msra.mxu0 0
    %5130 = vmatprep.subr.bf16.mxu0 0
    %5131 = vmatpush1.bf16.msra.mxu0 0
    %5132 = vmatprep.subr.bf16.mxu0 0
    %5133 = vmatpush1.bf16.msra.mxu0 0
    %5134 = vmatprep.subr.bf16.mxu0 0
    %5135 = vmatpush1.bf16.msra.mxu0 0
    %5136 = vmatprep.mubr.bf16.mxu0 0
    %5137 = vmatmul.mubr.bf16.gmra.mrb[0].mxu0 %v2034
    %v5138 = vpop.f32.mrb[0].mxu0
    %v5139 = vadd.f32 0.0, %v5138
    %v5140 = vpop.f32.mrb[0].mxu0
    %v5141 = vpop.f32.mrb[0].mxu0
    %v5142 = vadd.f32 0.0, %v5141
    %v5143 = vpop.f32.mrb[0].mxu0
    %5144 = vmatprep.mubr.bf16.mxu0 0
    %5145 = vmatmul.mubr.bf16.gmra.mrb[0].mxu0 %v2037
    %v5146 = vpop.f32.mrb[0].mxu0
    %v5147 = vadd.f32 0.0, %v5146
    %v5148 = vpop.f32.mrb[0].mxu0
    %v5149 = vpop.f32.mrb[0].mxu0
    %v5150 = vadd.f32 0.0, %v5149
    %v5151 = vpop.f32.mrb[0].mxu0
    %5152 = vdwg.mxu0
    %v5153 = vadd.f32 %v5095, %v5139
    %v5154 = vadd.f32 %v5096, %v5142
    %v5155 = vadd.f32 %v5097, %v5147
    %v5156 = vadd.f32 %v5098, %v5150
    %v5157 = vld [vmem:[#allocation10 + $0x420] sm:$0xff]
    %v5158 = vld [vmem:[#allocation10 + $0x430] sm:$0xff]
    %v5159 = vpack.c.bf16 %v4289, %v4286
    %v5160 = vpack.c.bf16 %v4297, %v4294
    %v5161 = vpack.c.bf16 %v5158, %v5157
    %v5163 = vsel %vm1093, %v5159, 0
    %v5166 = vsel %vm1093, %v5160, 0
    %5168 = vmatprep.subr.bf16.mxu0 0
    %5169 = vmatpush1.bf16.msra.mxu0 %v5161
    %5170 = vmatprep.subr.bf16.mxu0 0
    %5171 = vmatpush1.bf16.msra.mxu0 0
    %5172 = vmatprep.subr.bf16.mxu0 0
    %5173 = vmatpush1.bf16.msra.mxu0 0
    %5174 = vmatprep.subr.bf16.mxu0 0
    %5175 = vmatpush1.bf16.msra.mxu0 0
    %5176 = vmatprep.subr.bf16.mxu0 0
    %5177 = vmatpush1.bf16.msra.mxu0 0
    %5178 = vmatprep.subr.bf16.mxu0 0
    %5179 = vmatpush1.bf16.msra.mxu0 0
    %5180 = vmatprep.subr.bf16.mxu0 0
    %5181 = vmatpush1.bf16.msra.mxu0 0
    %5182 = vmatprep.subr.bf16.mxu0 0
    %5183 = vmatpush1.bf16.msra.mxu0 0
    %5184 = vmatprep.subr.bf16.mxu0 0
    %5185 = vmatpush1.bf16.msra.mxu0 0
    %5186 = vmatprep.subr.bf16.mxu0 0
    %5187 = vmatpush1.bf16.msra.mxu0 0
    %5188 = vmatprep.subr.bf16.mxu0 0
    %5189 = vmatpush1.bf16.msra.mxu0 0
    %5190 = vmatprep.subr.bf16.mxu0 0
    %5191 = vmatpush1.bf16.msra.mxu0 0
    %5192 = vmatprep.subr.bf16.mxu0 0
    %5193 = vmatpush1.bf16.msra.mxu0 0
    %5194 = vmatprep.subr.bf16.mxu0 0
    %5195 = vmatpush1.bf16.msra.mxu0 0
    %5196 = vmatprep.subr.bf16.mxu0 0
    %5197 = vmatpush1.bf16.msra.mxu0 0
    %5198 = vmatprep.subr.bf16.mxu0 0
    %5199 = vmatpush1.bf16.msra.mxu0 0
    %5200 = vmatprep.mubr.bf16.mxu0 0
    %5201 = vmatmul.mubr.bf16.gmra.mrb[0].mxu0 %v5163
    %v5202 = vpop.f32.mrb[0].mxu0
    %v5203 = vadd.f32 0.0, %v5202
    %v5204 = vpop.f32.mrb[0].mxu0
    %v5205 = vpop.f32.mrb[0].mxu0
    %v5206 = vadd.f32 0.0, %v5205
    %v5207 = vpop.f32.mrb[0].mxu0
    %5208 = vmatprep.mubr.bf16.mxu0 0
    %5209 = vmatmul.mubr.bf16.gmra.mrb[0].mxu0 %v5166
    %v5210 = vpop.f32.mrb[0].mxu0
    %v5211 = vadd.f32 0.0, %v5210
    %v5212 = vpop.f32.mrb[0].mxu0
    %v5213 = vpop.f32.mrb[0].mxu0
    %v5214 = vadd.f32 0.0, %v5213
    %v5215 = vpop.f32.mrb[0].mxu0
    %5216 = vdwg.mxu0
    %v5217 = vadd.f32 %v5153, %v5203
    %v5218 = vadd.f32 %v5154, %v5206
    %v5219 = vadd.f32 %v5155, %v5211
    %v5220 = vadd.f32 %v5156, %v5214
    %v5221 = vld [vmem:[#allocation10 + $0x440] sm:$0xff]
    %v5222 = vld [vmem:[#allocation10 + $0x450] sm:$0x3]
    %v5223 = vpack.c.bf16 %v4904, %v4903
    %v5224 = vpack.c.bf16 %v4906, %v4905
    %v5225 = vpack.c.bf16 %v4908, %v4907
    %v5226 = vpack.c.bf16 %v4910, %v4909
    %v5227 = vpack.c.bf16 %v4912, %v4911
    %v5228 = vpack.c.bf16 %v4914, %v4913
    %v5229 = vpack.c.bf16 %v5222, %v5221
    %v5231 = vsel %vm1901, %v5223, 0
    %v5234 = vsel %vm1901, %v5224, 0
    %v5237 = vsel %vm1901, %v5225, 0
    %v5240 = vsel %vm1901, %v5226, 0
    %v5243 = vsel %vm1901, %v5227, 0
    %v5246 = vsel %vm1901, %v5228, 0
    %v5249 = vsel %vm1908, %v5229, 0
    %5251 = vmatprep.subr.bf16.mxu0 0
    %5252 = vmatpush1.bf16.msra.mxu0 %v5249
    %5253 = vmatprep.subr.bf16.mxu0 0
    %5254 = vmatpush1.bf16.msra.mxu0 0
    %5255 = vmatprep.subr.bf16.mxu0 0
    %5256 = vmatpush1.bf16.msra.mxu0 0
    %5257 = vmatprep.subr.bf16.mxu0 0
    %5258 = vmatpush1.bf16.msra.mxu0 0
    %5259 = vmatprep.subr.bf16.mxu0 0
    %5260 = vmatpush1.bf16.msra.mxu0 0
    %5261 = vmatprep.subr.bf16.mxu0 0
    %5262 = vmatpush1.bf16.msra.mxu0 0
    %5263 = vmatprep.subr.bf16.mxu0 0
    %5264 = vmatpush1.bf16.msra.mxu0 0
    %5265 = vmatprep.subr.bf16.mxu0 0
    %5266 = vmatpush1.bf16.msra.mxu0 0
    %5267 = vmatprep.subr.bf16.mxu0 0
    %5268 = vmatpush1.bf16.msra.mxu0 0
    %5269 = vmatprep.subr.bf16.mxu0 0
    %5270 = vmatpush1.bf16.msra.mxu0 0
    %5271 = vmatprep.subr.bf16.mxu0 0
    %5272 = vmatpush1.bf16.msra.mxu0 0
    %5273 = vmatprep.subr.bf16.mxu0 0
    %5274 = vmatpush1.bf16.msra.mxu0 0
    %5275 = vmatprep.subr.bf16.mxu0 0
    %5276 = vmatpush1.bf16.msra.mxu0 0
    %5277 = vmatprep.subr.bf16.mxu0 0
    %5278 = vmatpush1.bf16.msra.mxu0 0
    %5279 = vmatprep.subr.bf16.mxu0 0
    %5280 = vmatpush1.bf16.msra.mxu0 0
    %5281 = vmatprep.subr.bf16.mxu0 0
    %5282 = vmatpush1.bf16.msra.mxu0 0
    %5283 = vmatprep.mubr.bf16.mxu0 0
    %5284 = vmatmul.mubr.bf16.gmra.mrb[0].mxu0 %v5231
    %v5285 = vpop.f32.mrb[0].mxu0
    %v5286 = vadd.f32 0.0, %v5285
    %v5287 = vpop.f32.mrb[0].mxu0
    %v5288 = vpop.f32.mrb[0].mxu0
    %v5289 = vadd.f32 0.0, %v5288
    %v5290 = vpop.f32.mrb[0].mxu0
    %5291 = vmatprep.mubr.bf16.mxu0 0
    %5292 = vmatmul.mubr.bf16.gmra.mrb[0].mxu0 %v5234
    %v5293 = vpop.f32.mrb[0].mxu0
    %v5294 = vadd.f32 0.0, %v5293
    %v5295 = vpop.f32.mrb[0].mxu0
    %v5296 = vpop.f32.mrb[0].mxu0
    %v5297 = vadd.f32 0.0, %v5296
    %v5298 = vpop.f32.mrb[0].mxu0
    %5299 = vmatprep.mubr.bf16.mxu0 0
    %5300 = vmatmul.mubr.bf16.gmra.mrb[0].mxu0 %v5237
    %v5301 = vpop.f32.mrb[0].mxu0
    %v5302 = vadd.f32 0.0, %v5301
    %v5303 = vpop.f32.mrb[0].mxu0
    %v5304 = vpop.f32.mrb[0].mxu0
    %v5305 = vadd.f32 0.0, %v5304
    %v5306 = vpop.f32.mrb[0].mxu0
    %5307 = vmatprep.mubr.bf16.mxu0 0
    %5308 = vmatmul.mubr.bf16.gmra.mrb[0].mxu0 %v5240
    %v5309 = vpop.f32.mrb[0].mxu0
    %v5310 = vadd.f32 0.0, %v5309
    %v5311 = vpop.f32.mrb[0].mxu0
    %v5312 = vpop.f32.mrb[0].mxu0
    %v5313 = vadd.f32 0.0, %v5312
    %v5314 = vpop.f32.mrb[0].mxu0
    %5315 = vmatprep.mubr.bf16.mxu0 0
    %5316 = vmatmul.mubr.bf16.gmra.mrb[0].mxu0 %v5243
    %v5317 = vpop.f32.mrb[0].mxu0
    %v5318 = vadd.f32 0.0, %v5317
    %v5319 = vpop.f32.mrb[0].mxu0
    %v5320 = vpop.f32.mrb[0].mxu0
    %v5321 = vadd.f32 0.0, %v5320
    %v5322 = vpop.f32.mrb[0].mxu0
    %5323 = vmatprep.mubr.bf16.mxu0 0
    %5324 = vmatmul.mubr.bf16.gmra.mrb[0].mxu0 %v5246
    %v5325 = vpop.f32.mrb[0].mxu0
    %v5326 = vadd.f32 0.0, %v5325
    %v5327 = vpop.f32.mrb[0].mxu0
    %v5328 = vpop.f32.mrb[0].mxu0
    %v5329 = vadd.f32 0.0, %v5328
    %v5330 = vpop.f32.mrb[0].mxu0
    %5331 = vdwg.mxu0
    %v5332 = vmul.f32 %v5286, %v5286
    %v5333 = vmul.f32 %v5289, %v5289
    %v5334 = vmul.f32 %v5294, %v5294
    %v5335 = vmul.f32 %v5297, %v5297
    %v5336 = vmul.f32 %v5302, %v5302
    %v5337 = vmul.f32 %v5305, %v5305
    %v5338 = vmul.f32 %v5310, %v5310
    %v5339 = vmul.f32 %v5313, %v5313
    %v5340 = vadd.f32 %v5332, %v5336
    %v5341 = vadd.f32 %v5333, %v5337
    %v5342 = vadd.f32 %v5334, %v5338
    %v5343 = vadd.f32 %v5335, %v5339
    %v5344 = vmul.f32 %v5318, %v5318
    %v5345 = vmul.f32 %v5321, %v5321
    %v5346 = vmul.f32 %v5326, %v5326
    %v5347 = vmul.f32 %v5329, %v5329
    %v5348 = vadd.f32 %v5340, %v5344
    %v5349 = vadd.f32 %v5341, %v5345
    %v5350 = vadd.f32 %v5342, %v5346
    %v5351 = vadd.f32 %v5343, %v5347
    %v5352 = vmax.f32 %v5348, 1e-08
    %v5353 = vmax.f32 %v5349, 1e-08
    %v5354 = vmax.f32 %v5350, 1e-08
    %v5355 = vmax.f32 %v5351, 1e-08
    %v5356 = vrsqrt.pop %v5352
    %v5357 = vmul.f32 %v5352, %v5356
    %vm5358 = vcmp.eq.f32.partialorder %v5352, inf
    %v5359 = vsel %vm5358, %v5352, %v5357
    %vm5360 = vcmp.eq.f32.partialorder %v5352, 0.0
    %v5361 = vand.u32 %v5352, 2147483648
    %v5362 = vsel %vm5360, %v5361, %v5359
    %v5363 = vrsqrt.pop %v5353
    %v5364 = vmul.f32 %v5353, %v5363
    %vm5365 = vcmp.eq.f32.partialorder %v5353, inf
    %v5366 = vsel %vm5365, %v5353, %v5364
    %vm5367 = vcmp.eq.f32.partialorder %v5353, 0.0
    %v5368 = vand.u32 %v5353, 2147483648
    %v5369 = vsel %vm5367, %v5368, %v5366
    %v5370 = vrsqrt.pop %v5354
    %v5371 = vmul.f32 %v5354, %v5370
    %vm5372 = vcmp.eq.f32.partialorder %v5354, inf
    %v5373 = vsel %vm5372, %v5354, %v5371
    %vm5374 = vcmp.eq.f32.partialorder %v5354, 0.0
    %v5375 = vand.u32 %v5354, 2147483648
    %v5376 = vsel %vm5374, %v5375, %v5373
    %v5377 = vrsqrt.pop %v5355
    %v5378 = vmul.f32 %v5355, %v5377
    %vm5379 = vcmp.eq.f32.partialorder %v5355, inf
    %v5380 = vsel %vm5379, %v5355, %v5378
    %vm5381 = vcmp.eq.f32.partialorder %v5355, 0.0
    %v5382 = vand.u32 %v5355, 2147483648
    %v5383 = vsel %vm5381, %v5382, %v5380
    %v5384 = vsub.f32 0.0, %v5362
    %v5385 = vsub.f32 0.0, %v5369
    %v5386 = vsub.f32 0.0, %v5376
    %v5387 = vsub.f32 0.0, %v5383
    %v5388 = vmul.f32 %v5384, 1.442695
    %v5389 = vpow.pop %v5388
    %v5390 = vmul.f32 %v5385, 1.442695
    %v5391 = vpow.pop %v5390
    %v5392 = vmul.f32 %v5386, 1.442695
    %v5393 = vpow.pop %v5392
    %v5394 = vmul.f32 %v5387, 1.442695
    %v5395 = vpow.pop %v5394
    %v5396 = vadd.f32 %v5389, 1.0
    %v5397 = vadd.f32 %v5391, 1.0
    %v5398 = vadd.f32 %v5393, 1.0
    %v5399 = vadd.f32 %v5395, 1.0
    %v5400 = vrcp.pop %v5396
    %v5401 = vrcp.pop %v5397
    %v5402 = vrcp.pop %v5398
    %v5403 = vrcp.pop %v5399
    %v5404 = vmul.f32 %v5286, %v5400
    %v5405 = vmul.f32 %v5289, %v5401
    %v5406 = vmul.f32 %v5294, %v5402
    %v5407 = vmul.f32 %v5297, %v5403
    %v5408 = vmul.f32 %v5302, %v5400
    %v5409 = vmul.f32 %v5305, %v5401
    %v5410 = vmul.f32 %v5310, %v5402
    %v5411 = vmul.f32 %v5313, %v5403
    %v5412 = vmul.f32 %v5318, %v5400
    %v5413 = vmul.f32 %v5321, %v5401
    %v5414 = vmul.f32 %v5326, %v5402
    %v5415 = vmul.f32 %v5329, %v5403
    %v5416 = vmax.f32 %v5217, 0.0
    %v5417 = vmax.f32 %v5218, 0.0
    %v5418 = vmax.f32 %v5219, 0.0
    %v5419 = vmax.f32 %v5220, 0.0
    %v5420 = vld [vmem:[#allocation10 + $0x460] sm:$0xf]
    %v5421 = vpack.c.bf16 %v5405, %v5404
    %v5422 = vpack.c.bf16 %v5407, %v5406
    %v5423 = vpack.c.bf16 %v5409, %v5408
    %v5424 = vpack.c.bf16 %v5411, %v5410
    %v5425 = vpack.c.bf16 %v5413, %v5412
    %v5426 = vpack.c.bf16 %v5415, %v5414
    %v5427 = vpack.c.bf16 %v5420, %v5420
    %v5429 = vsel %vm397, %v5421, 0
    %v5432 = vsel %vm397, %v5422, 0
    %v5435 = vsel %vm397, %v5423, 0
    %v5438 = vsel %vm397, %v5424, 0
    %v5441 = vsel %vm397, %v5425, 0
    %v5444 = vsel %vm397, %v5426, 0
    %v5447 = vsel %vm304, %v5427, 0
    %5449 = vmatprep.subr.bf16.mxu0 0
    %5450 = vmatpush1.bf16.msra.mxu0 %v5447
    %5451 = vmatprep.subr.bf16.mxu0 0
    %5452 = vmatpush1.bf16.msra.mxu0 0
    %5453 = vmatprep.subr.bf16.mxu0 0
    %5454 = vmatpush1.bf16.msra.mxu0 0
    %5455 = vmatprep.subr.bf16.mxu0 0
    %5456 = vmatpush1.bf16.msra.mxu0 0
    %5457 = vmatprep.subr.bf16.mxu0 0
    %5458 = vmatpush1.bf16.msra.mxu0 0
    %5459 = vmatprep.subr.bf16.mxu0 0
    %5460 = vmatpush1.bf16.msra.mxu0 0
    %5461 = vmatprep.subr.bf16.mxu0 0
    %5462 = vmatpush1.bf16.msra.mxu0 0
    %5463 = vmatprep.subr.bf16.mxu0 0
    %5464 = vmatpush1.bf16.msra.mxu0 0
    %5465 = vmatprep.subr.bf16.mxu0 0
    %5466 = vmatpush1.bf16.msra.mxu0 0
    %5467 = vmatprep.subr.bf16.mxu0 0
    %5468 = vmatpush1.bf16.msra.mxu0 0
    %5469 = vmatprep.subr.bf16.mxu0 0
    %5470 = vmatpush1.bf16.msra.mxu0 0
    %5471 = vmatprep.subr.bf16.mxu0 0
    %5472 = vmatpush1.bf16.msra.mxu0 0
    %5473 = vmatprep.subr.bf16.mxu0 0
    %5474 = vmatpush1.bf16.msra.mxu0 0
    %5475 = vmatprep.subr.bf16.mxu0 0
    %5476 = vmatpush1.bf16.msra.mxu0 0
    %5477 = vmatprep.subr.bf16.mxu0 0
    %5478 = vmatpush1.bf16.msra.mxu0 0
    %5479 = vmatprep.subr.bf16.mxu0 0
    %5480 = vmatpush1.bf16.msra.mxu0 0
    %5481 = vmatprep.mubr.bf16.mxu0 0
    %5482 = vmatmul.mubr.bf16.gmra.mrb[0].mxu0 %v5429
    %v5483 = vpop.f32.mrb[0].mxu0
    %v5484 = vadd.f32 0.0, %v5483
    %v5485 = vpop.f32.mrb[0].mxu0
    %v5486 = vpop.f32.mrb[0].mxu0
    %v5487 = vadd.f32 0.0, %v5486
    %v5488 = vpop.f32.mrb[0].mxu0
    %5489 = vmatprep.mubr.bf16.mxu0 0
    %5490 = vmatmul.mubr.bf16.gmra.mrb[0].mxu0 %v5432
    %v5491 = vpop.f32.mrb[0].mxu0
    %v5492 = vadd.f32 0.0, %v5491
    %v5493 = vpop.f32.mrb[0].mxu0
    %v5494 = vpop.f32.mrb[0].mxu0
    %v5495 = vadd.f32 0.0, %v5494
    %v5496 = vpop.f32.mrb[0].mxu0
    %5497 = vmatprep.mubr.bf16.mxu0 0
    %5498 = vmatmul.mubr.bf16.gmra.mrb[0].mxu0 %v5435
    %v5499 = vpop.f32.mrb[0].mxu0
    %v5500 = vadd.f32 0.0, %v5499
    %v5501 = vpop.f32.mrb[0].mxu0
    %v5502 = vpop.f32.mrb[0].mxu0
    %v5503 = vadd.f32 0.0, %v5502
    %v5504 = vpop.f32.mrb[0].mxu0
    %5505 = vmatprep.mubr.bf16.mxu0 0
    %5506 = vmatmul.mubr.bf16.gmra.mrb[0].mxu0 %v5438
    %v5507 = vpop.f32.mrb[0].mxu0
    %v5508 = vadd.f32 0.0, %v5507
    %v5509 = vpop.f32.mrb[0].mxu0
    %v5510 = vpop.f32.mrb[0].mxu0
    %v5511 = vadd.f32 0.0, %v5510
    %v5512 = vpop.f32.mrb[0].mxu0
    %5513 = vmatprep.mubr.bf16.mxu0 0
    %5514 = vmatmul.mubr.bf16.gmra.mrb[0].mxu0 %v5441
    %v5515 = vpop.f32.mrb[0].mxu0
    %v5516 = vadd.f32 0.0, %v5515
    %v5517 = vpop.f32.mrb[0].mxu0
    %v5518 = vpop.f32.mrb[0].mxu0
    %v5519 = vadd.f32 0.0, %v5518
    %v5520 = vpop.f32.mrb[0].mxu0
    %5521 = vmatprep.mubr.bf16.mxu0 0
    %5522 = vmatmul.mubr.bf16.gmra.mrb[0].mxu0 %v5444
    %v5523 = vpop.f32.mrb[0].mxu0
    %v5524 = vadd.f32 0.0, %v5523
    %v5525 = vpop.f32.mrb[0].mxu0
    %v5526 = vpop.f32.mrb[0].mxu0
    %v5527 = vadd.f32 0.0, %v5526
    %v5528 = vpop.f32.mrb[0].mxu0
    %5529 = vdwg.mxu0
    %v5530 = vmul.f32 %v5484, %v5484
    %v5531 = vmul.f32 %v5487, %v5487
    %v5532 = vmul.f32 %v5492, %v5492
    %v5533 = vmul.f32 %v5495, %v5495
    %v5534 = vmul.f32 %v5500, %v5500
    %v5535 = vmul.f32 %v5503, %v5503
    %v5536 = vmul.f32 %v5508, %v5508
    %v5537 = vmul.f32 %v5511, %v5511
    %v5538 = vadd.f32 %v5530, %v5534
    %v5539 = vadd.f32 %v5531, %v5535
    %v5540 = vadd.f32 %v5532, %v5536
    %v5541 = vadd.f32 %v5533, %v5537
    %v5542 = vmul.f32 %v5516, %v5516
    %v5543 = vmul.f32 %v5519, %v5519
    %v5544 = vmul.f32 %v5524, %v5524
    %v5545 = vmul.f32 %v5527, %v5527
    %v5546 = vadd.f32 %v5538, %v5542
    %v5547 = vadd.f32 %v5539, %v5543
    %v5548 = vadd.f32 %v5540, %v5544
    %v5549 = vadd.f32 %v5541, %v5545
    %v5550 = vmax.f32 %v5546, 1e-08
    %v5551 = vmax.f32 %v5547, 1e-08
    %v5552 = vmax.f32 %v5548, 1e-08
    %v5553 = vmax.f32 %v5549, 1e-08
    %v5554 = vrsqrt.pop %v5550
    %v5555 = vmul.f32 %v5550, %v5554
    %vm5556 = vcmp.eq.f32.partialorder %v5550, inf
    %v5557 = vsel %vm5556, %v5550, %v5555
    %vm5558 = vcmp.eq.f32.partialorder %v5550, 0.0
    %v5559 = vand.u32 %v5550, 2147483648
    %v5560 = vsel %vm5558, %v5559, %v5557
    %v5561 = vrsqrt.pop %v5551
    %v5562 = vmul.f32 %v5551, %v5561
    %vm5563 = vcmp.eq.f32.partialorder %v5551, inf
    %v5564 = vsel %vm5563, %v5551, %v5562
    %vm5565 = vcmp.eq.f32.partialorder %v5551, 0.0
    %v5566 = vand.u32 %v5551, 2147483648
    %v5567 = vsel %vm5565, %v5566, %v5564
    %v5568 = vrsqrt.pop %v5552
    %v5569 = vmul.f32 %v5552, %v5568
    %vm5570 = vcmp.eq.f32.partialorder %v5552, inf
    %v5571 = vsel %vm5570, %v5552, %v5569
    %vm5572 = vcmp.eq.f32.partialorder %v5552, 0.0
    %v5573 = vand.u32 %v5552, 2147483648
    %v5574 = vsel %vm5572, %v5573, %v5571
    %v5575 = vrsqrt.pop %v5553
    %v5576 = vmul.f32 %v5553, %v5575
    %vm5577 = vcmp.eq.f32.partialorder %v5553, inf
    %v5578 = vsel %vm5577, %v5553, %v5576
    %vm5579 = vcmp.eq.f32.partialorder %v5553, 0.0
    %v5580 = vand.u32 %v5553, 2147483648
    %v5581 = vsel %vm5579, %v5580, %v5578
    %v5582 = vld [vmem:[#allocation10 + $0x470] ss:$0 sm:$0xff]
    %v5583 = vld [vmem:[#allocation10 + $0x480] sm:$0xf]
    %v5584 = vpack.c.bf16 %v5567, %v5560
    %v5585 = vpack.c.bf16 %v5581, %v5574
    %v5586 = vpack.c.bf16 %v5583, %v5583
    %v5588 = vsel %vm397, %v5584, 0
    %v5591 = vsel %vm397, %v5585, 0
    %v5594 = vsel %vm304, %v5586, 0
    %5596 = vmatprep.subr.bf16.mxu0 0
    %5597 = vmatpush1.bf16.msra.mxu0 %v5594
    %5598 = vmatprep.subr.bf16.mxu0 0
    %5599 = vmatpush1.bf16.msra.mxu0 0
    %5600 = vmatprep.subr.bf16.mxu0 0
    %5601 = vmatpush1.bf16.msra.mxu0 0
    %5602 = vmatprep.subr.bf16.mxu0 0
    %5603 = vmatpush1.bf16.msra.mxu0 0
    %5604 = vmatprep.subr.bf16.mxu0 0
    %5605 = vmatpush1.bf16.msra.mxu0 0
    %5606 = vmatprep.subr.bf16.mxu0 0
    %5607 = vmatpush1.bf16.msra.mxu0 0
    %5608 = vmatprep.subr.bf16.mxu0 0
    %5609 = vmatpush1.bf16.msra.mxu0 0
    %5610 = vmatprep.subr.bf16.mxu0 0
    %5611 = vmatpush1.bf16.msra.mxu0 0
    %5612 = vmatprep.subr.bf16.mxu0 0
    %5613 = vmatpush1.bf16.msra.mxu0 0
    %5614 = vmatprep.subr.bf16.mxu0 0
    %5615 = vmatpush1.bf16.msra.mxu0 0
    %5616 = vmatprep.subr.bf16.mxu0 0
    %5617 = vmatpush1.bf16.msra.mxu0 0
    %5618 = vmatprep.subr.bf16.mxu0 0
    %5619 = vmatpush1.bf16.msra.mxu0 0
    %5620 = vmatprep.subr.bf16.mxu0 0
    %5621 = vmatpush1.bf16.msra.mxu0 0
    %5622 = vmatprep.subr.bf16.mxu0 0
    %5623 = vmatpush1.bf16.msra.mxu0 0
    %5624 = vmatprep.subr.bf16.mxu0 0
    %5625 = vmatpush1.bf16.msra.mxu0 0
    %5626 = vmatprep.subr.bf16.mxu0 0
    %5627 = vmatpush1.bf16.msra.mxu0 0
    %5628 = vmatprep.mubr.bf16.mxu0 0
    %5629 = vmatmul.mubr.bf16.gmra.mrb[0].mxu0 %v5588
    %v5630 = vpop.f32.mrb[0].mxu0
    %v5631 = vadd.f32 0.0, %v5630
    %v5632 = vpop.f32.mrb[0].mxu0
    %v5633 = vpop.f32.mrb[0].mxu0
    %v5634 = vadd.f32 0.0, %v5633
    %v5635 = vpop.f32.mrb[0].mxu0
    %5636 = vmatprep.mubr.bf16.mxu0 0
    %5637 = vmatmul.mubr.bf16.gmra.mrb[0].mxu0 %v5591
    %v5638 = vpop.f32.mrb[0].mxu0
    %v5639 = vadd.f32 0.0, %v5638
    %v5640 = vpop.f32.mrb[0].mxu0
    %v5641 = vpop.f32.mrb[0].mxu0
    %v5642 = vadd.f32 0.0, %v5641
    %v5643 = vpop.f32.mrb[0].mxu0
    %5644 = vdwg.mxu0
    %v5645 = vadd.f32 %v5582, %v5631
    %v5646 = vadd.f32 %v5582, %v5634
    %v5647 = vadd.f32 %v5582, %v5639
    %v5648 = vadd.f32 %v5582, %v5642
    %v5649 = vld [vmem:[#allocation10 + $0x490] sm:$0xff]
    %v5650 = vld [vmem:[#allocation10 + $0x4a0] sm:$0xff]
    %v5651 = vpack.c.bf16 %v5417, %v5416
    %v5652 = vpack.c.bf16 %v5419, %v5418
    %v5653 = vpack.c.bf16 %v5650, %v5649
    %v5655 = vsel %vm1093, %v5651, 0
    %v5658 = vsel %vm1093, %v5652, 0
    %5660 = vmatprep.subr.bf16.mxu0 0
    %5661 = vmatpush1.bf16.msra.mxu0 %v5653
    %5662 = vmatprep.subr.bf16.mxu0 0
    %5663 = vmatpush1.bf16.msra.mxu0 0
    %5664 = vmatprep.subr.bf16.mxu0 0
    %5665 = vmatpush1.bf16.msra.mxu0 0
    %5666 = vmatprep.subr.bf16.mxu0 0
    %5667 = vmatpush1.bf16.msra.mxu0 0
    %5668 = vmatprep.subr.bf16.mxu0 0
    %5669 = vmatpush1.bf16.msra.mxu0 0
    %5670 = vmatprep.subr.bf16.mxu0 0
    %5671 = vmatpush1.bf16.msra.mxu0 0
    %5672 = vmatprep.subr.bf16.mxu0 0
    %5673 = vmatpush1.bf16.msra.mxu0 0
    %5674 = vmatprep.subr.bf16.mxu0 0
    %5675 = vmatpush1.bf16.msra.mxu0 0
    %5676 = vmatprep.subr.bf16.mxu0 0
    %5677 = vmatpush1.bf16.msra.mxu0 0
    %5678 = vmatprep.subr.bf16.mxu0 0
    %5679 = vmatpush1.bf16.msra.mxu0 0
    %5680 = vmatprep.subr.bf16.mxu0 0
    %5681 = vmatpush1.bf16.msra.mxu0 0
    %5682 = vmatprep.subr.bf16.mxu0 0
    %5683 = vmatpush1.bf16.msra.mxu0 0
    %5684 = vmatprep.subr.bf16.mxu0 0
    %5685 = vmatpush1.bf16.msra.mxu0 0
    %5686 = vmatprep.subr.bf16.mxu0 0
    %5687 = vmatpush1.bf16.msra.mxu0 0
    %5688 = vmatprep.subr.bf16.mxu0 0
    %5689 = vmatpush1.bf16.msra.mxu0 0
    %5690 = vmatprep.subr.bf16.mxu0 0
    %5691 = vmatpush1.bf16.msra.mxu0 0
    %5692 = vmatprep.mubr.bf16.mxu0 0
    %5693 = vmatmul.mubr.bf16.gmra.mrb[0].mxu0 %v5655
    %v5694 = vpop.f32.mrb[0].mxu0
    %v5695 = vadd.f32 0.0, %v5694
    %v5696 = vpop.f32.mrb[0].mxu0
    %v5697 = vpop.f32.mrb[0].mxu0
    %v5698 = vadd.f32 0.0, %v5697
    %v5699 = vpop.f32.mrb[0].mxu0
    %5700 = vmatprep.mubr.bf16.mxu0 0
    %5701 = vmatmul.mubr.bf16.gmra.mrb[0].mxu0 %v5658
    %v5702 = vpop.f32.mrb[0].mxu0
    %v5703 = vadd.f32 0.0, %v5702
    %v5704 = vpop.f32.mrb[0].mxu0
    %v5705 = vpop.f32.mrb[0].mxu0
    %v5706 = vadd.f32 0.0, %v5705
    %v5707 = vpop.f32.mrb[0].mxu0
    %5708 = vdwg.mxu0
    %v5709 = vadd.f32 %v5645, %v5695
    %v5710 = vadd.f32 %v5646, %v5698
    %v5711 = vadd.f32 %v5647, %v5703
    %v5712 = vadd.f32 %v5648, %v5706
    %v5713 = vld [vmem:[#allocation10 + $0x4b0] sm:$0xf]
    %v5714 = vpack.c.bf16 %v5487, %v5484
    %v5715 = vpack.c.bf16 %v5495, %v5492
    %v5716 = vpack.c.bf16 %v5503, %v5500
    %v5717 = vpack.c.bf16 %v5511, %v5508
    %v5718 = vpack.c.bf16 %v5519, %v5516
    %v5719 = vpack.c.bf16 %v5527, %v5524
    %v5720 = vpack.c.bf16 %v5713, %v5713
    %v5722 = vsel %vm397, %v5714, 0
    %v5725 = vsel %vm397, %v5715, 0
    %v5728 = vsel %vm397, %v5716, 0
    %v5731 = vsel %vm397, %v5717, 0
    %v5734 = vsel %vm397, %v5718, 0
    %v5737 = vsel %vm397, %v5719, 0
    %v5740 = vsel %vm304, %v5720, 0
    %5742 = vmatprep.subr.bf16.mxu0 0
    %5743 = vmatpush1.bf16.msra.mxu0 %v5740
    %5744 = vmatprep.subr.bf16.mxu0 0
    %5745 = vmatpush1.bf16.msra.mxu0 0
    %5746 = vmatprep.subr.bf16.mxu0 0
    %5747 = vmatpush1.bf16.msra.mxu0 0
    %5748 = vmatprep.subr.bf16.mxu0 0
    %5749 = vmatpush1.bf16.msra.mxu0 0
    %5750 = vmatprep.subr.bf16.mxu0 0
    %5751 = vmatpush1.bf16.msra.mxu0 0
    %5752 = vmatprep.subr.bf16.mxu0 0
    %5753 = vmatpush1.bf16.msra.mxu0 0
    %5754 = vmatprep.subr.bf16.mxu0 0
    %5755 = vmatpush1.bf16.msra.mxu0 0
    %5756 = vmatprep.subr.bf16.mxu0 0
    %5757 = vmatpush1.bf16.msra.mxu0 0
    %5758 = vmatprep.subr.bf16.mxu0 0
    %5759 = vmatpush1.bf16.msra.mxu0 0
    %5760 = vmatprep.subr.bf16.mxu0 0
    %5761 = vmatpush1.bf16.msra.mxu0 0
    %5762 = vmatprep.subr.bf16.mxu0 0
    %5763 = vmatpush1.bf16.msra.mxu0 0
    %5764 = vmatprep.subr.bf16.mxu0 0
    %5765 = vmatpush1.bf16.msra.mxu0 0
    %5766 = vmatprep.subr.bf16.mxu0 0
    %5767 = vmatpush1.bf16.msra.mxu0 0
    %5768 = vmatprep.subr.bf16.mxu0 0
    %5769 = vmatpush1.bf16.msra.mxu0 0
    %5770 = vmatprep.subr.bf16.mxu0 0
    %5771 = vmatpush1.bf16.msra.mxu0 0
    %5772 = vmatprep.subr.bf16.mxu0 0
    %5773 = vmatpush1.bf16.msra.mxu0 0
    %5774 = vmatprep.mubr.bf16.mxu0 0
    %5775 = vmatmul.mubr.bf16.gmra.mrb[0].mxu0 %v5722
    %v5776 = vpop.f32.mrb[0].mxu0
    %v5777 = vadd.f32 0.0, %v5776
    %v5778 = vpop.f32.mrb[0].mxu0
    %v5779 = vpop.f32.mrb[0].mxu0
    %v5780 = vadd.f32 0.0, %v5779
    %v5781 = vpop.f32.mrb[0].mxu0
    %5782 = vmatprep.mubr.bf16.mxu0 0
    %5783 = vmatmul.mubr.bf16.gmra.mrb[0].mxu0 %v5725
    %v5784 = vpop.f32.mrb[0].mxu0
    %v5785 = vadd.f32 0.0, %v5784
    %v5786 = vpop.f32.mrb[0].mxu0
    %v5787 = vpop.f32.mrb[0].mxu0
    %v5788 = vadd.f32 0.0, %v5787
    %v5789 = vpop.f32.mrb[0].mxu0
    %5790 = vmatprep.mubr.bf16.mxu0 0
    %5791 = vmatmul.mubr.bf16.gmra.mrb[0].mxu0 %v5728
    %v5792 = vpop.f32.mrb[0].mxu0
    %v5793 = vadd.f32 0.0, %v5792
    %v5794 = vpop.f32.mrb[0].mxu0
    %v5795 = vpop.f32.mrb[0].mxu0
    %v5796 = vadd.f32 0.0, %v5795
    %v5797 = vpop.f32.mrb[0].mxu0
    %5798 = vmatprep.mubr.bf16.mxu0 0
    %5799 = vmatmul.mubr.bf16.gmra.mrb[0].mxu0 %v5731
    %v5800 = vpop.f32.mrb[0].mxu0
    %v5801 = vadd.f32 0.0, %v5800
    %v5802 = vpop.f32.mrb[0].mxu0
    %v5803 = vpop.f32.mrb[0].mxu0
    %v5804 = vadd.f32 0.0, %v5803
    %v5805 = vpop.f32.mrb[0].mxu0
    %5806 = vmatprep.mubr.bf16.mxu0 0
    %5807 = vmatmul.mubr.bf16.gmra.mrb[0].mxu0 %v5734
    %v5808 = vpop.f32.mrb[0].mxu0
    %v5809 = vadd.f32 0.0, %v5808
    %v5810 = vpop.f32.mrb[0].mxu0
    %v5811 = vpop.f32.mrb[0].mxu0
    %v5812 = vadd.f32 0.0, %v5811
    %v5813 = vpop.f32.mrb[0].mxu0
    %5814 = vmatprep.mubr.bf16.mxu0 0
    %5815 = vmatmul.mubr.bf16.gmra.mrb[0].mxu0 %v5737
    %v5816 = vpop.f32.mrb[0].mxu0
    %v5817 = vadd.f32 0.0, %v5816
    %v5818 = vpop.f32.mrb[0].mxu0
    %v5819 = vpop.f32.mrb[0].mxu0
    %v5820 = vadd.f32 0.0, %v5819
    %v5821 = vpop.f32.mrb[0].mxu0
    %5822 = vdwg.mxu0
    %v5823 = vmul.f32 %v5777, %v5777
    %v5824 = vmul.f32 %v5780, %v5780
    %v5825 = vmul.f32 %v5785, %v5785
    %v5826 = vmul.f32 %v5788, %v5788
    %v5827 = vmul.f32 %v5793, %v5793
    %v5828 = vmul.f32 %v5796, %v5796
    %v5829 = vmul.f32 %v5801, %v5801
    %v5830 = vmul.f32 %v5804, %v5804
    %v5831 = vadd.f32 %v5823, %v5827
    %v5832 = vadd.f32 %v5824, %v5828
    %v5833 = vadd.f32 %v5825, %v5829
    %v5834 = vadd.f32 %v5826, %v5830
    %v5835 = vmul.f32 %v5809, %v5809
    %v5836 = vmul.f32 %v5812, %v5812
    %v5837 = vmul.f32 %v5817, %v5817
    %v5838 = vmul.f32 %v5820, %v5820
    %v5839 = vadd.f32 %v5831, %v5835
    %v5840 = vadd.f32 %v5832, %v5836
    %v5841 = vadd.f32 %v5833, %v5837
    %v5842 = vadd.f32 %v5834, %v5838
    %v5843 = vmax.f32 %v5839, 1e-08
    %v5844 = vmax.f32 %v5840, 1e-08
    %v5845 = vmax.f32 %v5841, 1e-08
    %v5846 = vmax.f32 %v5842, 1e-08
    %v5847 = vrsqrt.pop %v5843
    %v5848 = vmul.f32 %v5843, %v5847
    %vm5849 = vcmp.eq.f32.partialorder %v5843, inf
    %v5850 = vsel %vm5849, %v5843, %v5848
    %vm5851 = vcmp.eq.f32.partialorder %v5843, 0.0
    %v5852 = vand.u32 %v5843, 2147483648
    %v5853 = vsel %vm5851, %v5852, %v5850
    %v5854 = vrsqrt.pop %v5844
    %v5855 = vmul.f32 %v5844, %v5854
    %vm5856 = vcmp.eq.f32.partialorder %v5844, inf
    %v5857 = vsel %vm5856, %v5844, %v5855
    %vm5858 = vcmp.eq.f32.partialorder %v5844, 0.0
    %v5859 = vand.u32 %v5844, 2147483648
    %v5860 = vsel %vm5858, %v5859, %v5857
    %v5861 = vrsqrt.pop %v5845
    %v5862 = vmul.f32 %v5845, %v5861
    %vm5863 = vcmp.eq.f32.partialorder %v5845, inf
    %v5864 = vsel %vm5863, %v5845, %v5862
    %vm5865 = vcmp.eq.f32.partialorder %v5845, 0.0
    %v5866 = vand.u32 %v5845, 2147483648
    %v5867 = vsel %vm5865, %v5866, %v5864
    %v5868 = vrsqrt.pop %v5846
    %v5869 = vmul.f32 %v5846, %v5868
    %vm5870 = vcmp.eq.f32.partialorder %v5846, inf
    %v5871 = vsel %vm5870, %v5846, %v5869
    %vm5872 = vcmp.eq.f32.partialorder %v5846, 0.0
    %v5873 = vand.u32 %v5846, 2147483648
    %v5874 = vsel %vm5872, %v5873, %v5871
    %v5875 = vsub.f32 0.0, %v5853
    %v5876 = vsub.f32 0.0, %v5860
    %v5877 = vsub.f32 0.0, %v5867
    %v5878 = vsub.f32 0.0, %v5874
    %v5879 = vmul.f32 %v5875, 1.442695
    %v5880 = vpow.pop %v5879
    %v5881 = vmul.f32 %v5876, 1.442695
    %v5882 = vpow.pop %v5881
    %v5883 = vmul.f32 %v5877, 1.442695
    %v5884 = vpow.pop %v5883
    %v5885 = vmul.f32 %v5878, 1.442695
    %v5886 = vpow.pop %v5885
    %v5887 = vadd.f32 %v5880, 1.0
    %v5888 = vadd.f32 %v5882, 1.0
    %v5889 = vadd.f32 %v5884, 1.0
    %v5890 = vadd.f32 %v5886, 1.0
    %v5891 = vrcp.pop %v5887
    %v5892 = vrcp.pop %v5888
    %v5893 = vrcp.pop %v5889
    %v5894 = vrcp.pop %v5890
    %v5895 = vmul.f32 %v5777, %v5891
    %v5896 = vmul.f32 %v5780, %v5892
    %v5897 = vmul.f32 %v5785, %v5893
    %v5898 = vmul.f32 %v5788, %v5894
    %v5899 = vmul.f32 %v5793, %v5891
    %v5900 = vmul.f32 %v5796, %v5892
    %v5901 = vmul.f32 %v5801, %v5893
    %v5902 = vmul.f32 %v5804, %v5894
    %v5903 = vmul.f32 %v5809, %v5891
    %v5904 = vmul.f32 %v5812, %v5892
    %v5905 = vmul.f32 %v5817, %v5893
    %v5906 = vmul.f32 %v5820, %v5894
    %v5907 = vmax.f32 %v5709, 0.0
    %v5908 = vmax.f32 %v5710, 0.0
    %v5909 = vmax.f32 %v5711, 0.0
    %v5910 = vmax.f32 %v5712, 0.0
    %v5911 = vld [vmem:[#allocation10 + $0x4c0] sm:$0xf]
    %v5912 = vpack.c.bf16 %v5896, %v5895
    %v5913 = vpack.c.bf16 %v5898, %v5897
    %v5914 = vpack.c.bf16 %v5900, %v5899
    %v5915 = vpack.c.bf16 %v5902, %v5901
    %v5916 = vpack.c.bf16 %v5904, %v5903
    %v5917 = vpack.c.bf16 %v5906, %v5905
    %v5918 = vpack.c.bf16 %v5911, %v5911
    %v5920 = vsel %vm397, %v5912, 0
    %v5923 = vsel %vm397, %v5913, 0
    %v5926 = vsel %vm397, %v5914, 0
    %v5929 = vsel %vm397, %v5915, 0
    %v5932 = vsel %vm397, %v5916, 0
    %v5935 = vsel %vm397, %v5917, 0
    %v5938 = vsel %vm304, %v5918, 0
    %5940 = vmatprep.subr.bf16.mxu0 0
    %5941 = vmatpush1.bf16.msra.mxu0 %v5938
    %5942 = vmatprep.subr.bf16.mxu0 0
    %5943 = vmatpush1.bf16.msra.mxu0 0
    %5944 = vmatprep.subr.bf16.mxu0 0
    %5945 = vmatpush1.bf16.msra.mxu0 0
    %5946 = vmatprep.subr.bf16.mxu0 0
    %5947 = vmatpush1.bf16.msra.mxu0 0
    %5948 = vmatprep.subr.bf16.mxu0 0
    %5949 = vmatpush1.bf16.msra.mxu0 0
    %5950 = vmatprep.subr.bf16.mxu0 0
    %5951 = vmatpush1.bf16.msra.mxu0 0
    %5952 = vmatprep.subr.bf16.mxu0 0
    %5953 = vmatpush1.bf16.msra.mxu0 0
    %5954 = vmatprep.subr.bf16.mxu0 0
    %5955 = vmatpush1.bf16.msra.mxu0 0
    %5956 = vmatprep.subr.bf16.mxu0 0
    %5957 = vmatpush1.bf16.msra.mxu0 0
    %5958 = vmatprep.subr.bf16.mxu0 0
    %5959 = vmatpush1.bf16.msra.mxu0 0
    %5960 = vmatprep.subr.bf16.mxu0 0
    %5961 = vmatpush1.bf16.msra.mxu0 0
    %5962 = vmatprep.subr.bf16.mxu0 0
    %5963 = vmatpush1.bf16.msra.mxu0 0
    %5964 = vmatprep.subr.bf16.mxu0 0
    %5965 = vmatpush1.bf16.msra.mxu0 0
    %5966 = vmatprep.subr.bf16.mxu0 0
    %5967 = vmatpush1.bf16.msra.mxu0 0
    %5968 = vmatprep.subr.bf16.mxu0 0
    %5969 = vmatpush1.bf16.msra.mxu0 0
    %5970 = vmatprep.subr.bf16.mxu0 0
    %5971 = vmatpush1.bf16.msra.mxu0 0
    %5972 = vmatprep.mubr.bf16.mxu0 0
    %5973 = vmatmul.mubr.bf16.gmra.mrb[0].mxu0 %v5920
    %v5974 = vpop.f32.mrb[0].mxu0
    %v5975 = vadd.f32 0.0, %v5974
    %v5976 = vpop.f32.mrb[0].mxu0
    %v5977 = vpop.f32.mrb[0].mxu0
    %v5978 = vadd.f32 0.0, %v5977
    %v5979 = vpop.f32.mrb[0].mxu0
    %5980 = vmatprep.mubr.bf16.mxu0 0
    %5981 = vmatmul.mubr.bf16.gmra.mrb[0].mxu0 %v5923
    %v5982 = vpop.f32.mrb[0].mxu0
    %v5983 = vadd.f32 0.0, %v5982
    %v5984 = vpop.f32.mrb[0].mxu0
    %v5985 = vpop.f32.mrb[0].mxu0
    %v5986 = vadd.f32 0.0, %v5985
    %v5987 = vpop.f32.mrb[0].mxu0
    %5988 = vmatprep.mubr.bf16.mxu0 0
    %5989 = vmatmul.mubr.bf16.gmra.mrb[0].mxu0 %v5926
    %v5990 = vpop.f32.mrb[0].mxu0
    %v5991 = vadd.f32 0.0, %v5990
    %v5992 = vpop.f32.mrb[0].mxu0
    %v5993 = vpop.f32.mrb[0].mxu0
    %v5994 = vadd.f32 0.0, %v5993
    %v5995 = vpop.f32.mrb[0].mxu0
    %5996 = vmatprep.mubr.bf16.mxu0 0
    %5997 = vmatmul.mubr.bf16.gmra.mrb[0].mxu0 %v5929
    %v5998 = vpop.f32.mrb[0].mxu0
    %v5999 = vadd.f32 0.0, %v5998
    %v6000 = vpop.f32.mrb[0].mxu0
    %v6001 = vpop.f32.mrb[0].mxu0
    %v6002 = vadd.f32 0.0, %v6001
    %v6003 = vpop.f32.mrb[0].mxu0
    %6004 = vmatprep.mubr.bf16.mxu0 0
    %6005 = vmatmul.mubr.bf16.gmra.mrb[0].mxu0 %v5932
    %v6006 = vpop.f32.mrb[0].mxu0
    %v6007 = vadd.f32 0.0, %v6006
    %v6008 = vpop.f32.mrb[0].mxu0
    %v6009 = vpop.f32.mrb[0].mxu0
    %v6010 = vadd.f32 0.0, %v6009
    %v6011 = vpop.f32.mrb[0].mxu0
    %6012 = vmatprep.mubr.bf16.mxu0 0
    %6013 = vmatmul.mubr.bf16.gmra.mrb[0].mxu0 %v5935
    %v6014 = vpop.f32.mrb[0].mxu0
    %v6015 = vadd.f32 0.0, %v6014
    %v6016 = vpop.f32.mrb[0].mxu0
    %v6017 = vpop.f32.mrb[0].mxu0
    %v6018 = vadd.f32 0.0, %v6017
    %v6019 = vpop.f32.mrb[0].mxu0
    %6020 = vdwg.mxu0
    %v6021 = vmul.f32 %v5975, %v5975
    %v6022 = vmul.f32 %v5978, %v5978
    %v6023 = vmul.f32 %v5983, %v5983
    %v6024 = vmul.f32 %v5986, %v5986
    %v6025 = vmul.f32 %v5991, %v5991
    %v6026 = vmul.f32 %v5994, %v5994
    %v6027 = vmul.f32 %v5999, %v5999
    %v6028 = vmul.f32 %v6002, %v6002
    %v6029 = vadd.f32 %v6021, %v6025
    %v6030 = vadd.f32 %v6022, %v6026
    %v6031 = vadd.f32 %v6023, %v6027
    %v6032 = vadd.f32 %v6024, %v6028
    %v6033 = vmul.f32 %v6007, %v6007
    %v6034 = vmul.f32 %v6010, %v6010
    %v6035 = vmul.f32 %v6015, %v6015
    %v6036 = vmul.f32 %v6018, %v6018
    %v6037 = vadd.f32 %v6029, %v6033
    %v6038 = vadd.f32 %v6030, %v6034
    %v6039 = vadd.f32 %v6031, %v6035
    %v6040 = vadd.f32 %v6032, %v6036
    %v6041 = vmax.f32 %v6037, 1e-08
    %v6042 = vmax.f32 %v6038, 1e-08
    %v6043 = vmax.f32 %v6039, 1e-08
    %v6044 = vmax.f32 %v6040, 1e-08
    %v6045 = vrsqrt.pop %v6041
    %v6046 = vmul.f32 %v6041, %v6045
    %vm6047 = vcmp.eq.f32.partialorder %v6041, inf
    %v6048 = vsel %vm6047, %v6041, %v6046
    %vm6049 = vcmp.eq.f32.partialorder %v6041, 0.0
    %v6050 = vand.u32 %v6041, 2147483648
    %v6051 = vsel %vm6049, %v6050, %v6048
    %v6052 = vrsqrt.pop %v6042
    %v6053 = vmul.f32 %v6042, %v6052
    %vm6054 = vcmp.eq.f32.partialorder %v6042, inf
    %v6055 = vsel %vm6054, %v6042, %v6053
    %vm6056 = vcmp.eq.f32.partialorder %v6042, 0.0
    %v6057 = vand.u32 %v6042, 2147483648
    %v6058 = vsel %vm6056, %v6057, %v6055
    %v6059 = vrsqrt.pop %v6043
    %v6060 = vmul.f32 %v6043, %v6059
    %vm6061 = vcmp.eq.f32.partialorder %v6043, inf
    %v6062 = vsel %vm6061, %v6043, %v6060
    %vm6063 = vcmp.eq.f32.partialorder %v6043, 0.0
    %v6064 = vand.u32 %v6043, 2147483648
    %v6065 = vsel %vm6063, %v6064, %v6062
    %v6066 = vrsqrt.pop %v6044
    %v6067 = vmul.f32 %v6044, %v6066
    %vm6068 = vcmp.eq.f32.partialorder %v6044, inf
    %v6069 = vsel %vm6068, %v6044, %v6067
    %vm6070 = vcmp.eq.f32.partialorder %v6044, 0.0
    %v6071 = vand.u32 %v6044, 2147483648
    %v6072 = vsel %vm6070, %v6071, %v6069
    %v6073 = vld [vmem:[#allocation10 + $0x4d0] ss:$0 sm:$0xff]
    %v6074 = vld [vmem:[#allocation10 + $0x4e0] sm:$0xf]
    %v6075 = vpack.c.bf16 %v6058, %v6051
    %v6076 = vpack.c.bf16 %v6072, %v6065
    %v6077 = vpack.c.bf16 %v6074, %v6074
    %v6079 = vsel %vm397, %v6075, 0
    %v6082 = vsel %vm397, %v6076, 0
    %v6085 = vsel %vm304, %v6077, 0
    %6087 = vmatprep.subr.bf16.mxu0 0
    %6088 = vmatpush1.bf16.msra.mxu0 %v6085
    %6089 = vmatprep.subr.bf16.mxu0 0
    %6090 = vmatpush1.bf16.msra.mxu0 0
    %6091 = vmatprep.subr.bf16.mxu0 0
    %6092 = vmatpush1.bf16.msra.mxu0 0
    %6093 = vmatprep.subr.bf16.mxu0 0
    %6094 = vmatpush1.bf16.msra.mxu0 0
    %6095 = vmatprep.subr.bf16.mxu0 0
    %6096 = vmatpush1.bf16.msra.mxu0 0
    %6097 = vmatprep.subr.bf16.mxu0 0
    %6098 = vmatpush1.bf16.msra.mxu0 0
    %6099 = vmatprep.subr.bf16.mxu0 0
    %6100 = vmatpush1.bf16.msra.mxu0 0
    %6101 = vmatprep.subr.bf16.mxu0 0
    %6102 = vmatpush1.bf16.msra.mxu0 0
    %6103 = vmatprep.subr.bf16.mxu0 0
    %6104 = vmatpush1.bf16.msra.mxu0 0
    %6105 = vmatprep.subr.bf16.mxu0 0
    %6106 = vmatpush1.bf16.msra.mxu0 0
    %6107 = vmatprep.subr.bf16.mxu0 0
    %6108 = vmatpush1.bf16.msra.mxu0 0
    %6109 = vmatprep.subr.bf16.mxu0 0
    %6110 = vmatpush1.bf16.msra.mxu0 0
    %6111 = vmatprep.subr.bf16.mxu0 0
    %6112 = vmatpush1.bf16.msra.mxu0 0
    %6113 = vmatprep.subr.bf16.mxu0 0
    %6114 = vmatpush1.bf16.msra.mxu0 0
    %6115 = vmatprep.subr.bf16.mxu0 0
    %6116 = vmatpush1.bf16.msra.mxu0 0
    %6117 = vmatprep.subr.bf16.mxu0 0
    %6118 = vmatpush1.bf16.msra.mxu0 0
    %6119 = vmatprep.mubr.bf16.mxu0 0
    %6120 = vmatmul.mubr.bf16.gmra.mrb[0].mxu0 %v6079
    %v6121 = vpop.f32.mrb[0].mxu0
    %v6122 = vadd.f32 0.0, %v6121
    %v6123 = vpop.f32.mrb[0].mxu0
    %v6124 = vpop.f32.mrb[0].mxu0
    %v6125 = vadd.f32 0.0, %v6124
    %v6126 = vpop.f32.mrb[0].mxu0
    %6127 = vmatprep.mubr.bf16.mxu0 0
    %6128 = vmatmul.mubr.bf16.gmra.mrb[0].mxu0 %v6082
    %v6129 = vpop.f32.mrb[0].mxu0
    %v6130 = vadd.f32 0.0, %v6129
    %v6131 = vpop.f32.mrb[0].mxu0
    %v6132 = vpop.f32.mrb[0].mxu0
    %v6133 = vadd.f32 0.0, %v6132
    %v6134 = vpop.f32.mrb[0].mxu0
    %6135 = vdwg.mxu0
    %v6136 = vadd.f32 %v6073, %v6122
    %v6137 = vadd.f32 %v6073, %v6125
    %v6138 = vadd.f32 %v6073, %v6130
    %v6139 = vadd.f32 %v6073, %v6133
    %v6140 = vld [vmem:[#allocation10 + $0x4f0] sm:$0xff]
    %v6141 = vld [vmem:[#allocation10 + $0x500] sm:$0xff]
    %v6142 = vpack.c.bf16 %v5908, %v5907
    %v6143 = vpack.c.bf16 %v5910, %v5909
    %v6144 = vpack.c.bf16 %v6141, %v6140
    %v6146 = vsel %vm1093, %v6142, 0
    %v6149 = vsel %vm1093, %v6143, 0
    %6151 = vmatprep.subr.bf16.mxu0 0
    %6152 = vmatpush1.bf16.msra.mxu0 %v6144
    %6153 = vmatprep.subr.bf16.mxu0 0
    %6154 = vmatpush1.bf16.msra.mxu0 0
    %6155 = vmatprep.subr.bf16.mxu0 0
    %6156 = vmatpush1.bf16.msra.mxu0 0
    %6157 = vmatprep.subr.bf16.mxu0 0
    %6158 = vmatpush1.bf16.msra.mxu0 0
    %6159 = vmatprep.subr.bf16.mxu0 0
    %6160 = vmatpush1.bf16.msra.mxu0 0
    %6161 = vmatprep.subr.bf16.mxu0 0
    %6162 = vmatpush1.bf16.msra.mxu0 0
    %6163 = vmatprep.subr.bf16.mxu0 0
    %6164 = vmatpush1.bf16.msra.mxu0 0
    %6165 = vmatprep.subr.bf16.mxu0 0
    %6166 = vmatpush1.bf16.msra.mxu0 0
    %6167 = vmatprep.subr.bf16.mxu0 0
    %6168 = vmatpush1.bf16.msra.mxu0 0
    %6169 = vmatprep.subr.bf16.mxu0 0
    %6170 = vmatpush1.bf16.msra.mxu0 0
    %6171 = vmatprep.subr.bf16.mxu0 0
    %6172 = vmatpush1.bf16.msra.mxu0 0
    %6173 = vmatprep.subr.bf16.mxu0 0
    %6174 = vmatpush1.bf16.msra.mxu0 0
    %6175 = vmatprep.subr.bf16.mxu0 0
    %6176 = vmatpush1.bf16.msra.mxu0 0
    %6177 = vmatprep.subr.bf16.mxu0 0
    %6178 = vmatpush1.bf16.msra.mxu0 0
    %6179 = vmatprep.subr.bf16.mxu0 0
    %6180 = vmatpush1.bf16.msra.mxu0 0
    %6181 = vmatprep.subr.bf16.mxu0 0
    %6182 = vmatpush1.bf16.msra.mxu0 0
    %6183 = vmatprep.mubr.bf16.mxu0 0
    %6184 = vmatmul.mubr.bf16.gmra.mrb[0].mxu0 %v6146
    %v6185 = vpop.f32.mrb[0].mxu0
    %v6186 = vadd.f32 0.0, %v6185
    %v6187 = vpop.f32.mrb[0].mxu0
    %v6188 = vpop.f32.mrb[0].mxu0
    %v6189 = vadd.f32 0.0, %v6188
    %v6190 = vpop.f32.mrb[0].mxu0
    %6191 = vmatprep.mubr.bf16.mxu0 0
    %6192 = vmatmul.mubr.bf16.gmra.mrb[0].mxu0 %v6149
    %v6193 = vpop.f32.mrb[0].mxu0
    %v6194 = vadd.f32 0.0, %v6193
    %v6195 = vpop.f32.mrb[0].mxu0
    %v6196 = vpop.f32.mrb[0].mxu0
    %v6197 = vadd.f32 0.0, %v6196
    %v6198 = vpop.f32.mrb[0].mxu0
    %6199 = vdwg.mxu0
    %v6200 = vadd.f32 %v6136, %v6186
    %v6201 = vadd.f32 %v6137, %v6189
    %v6202 = vadd.f32 %v6138, %v6194
    %v6203 = vadd.f32 %v6139, %v6197
    %v6204 = vld [vmem:[#allocation10 + $0x510] sm:$0xf]
    %v6205 = vpack.c.bf16 %v5978, %v5975
    %v6206 = vpack.c.bf16 %v5986, %v5983
    %v6207 = vpack.c.bf16 %v5994, %v5991
    %v6208 = vpack.c.bf16 %v6002, %v5999
    %v6209 = vpack.c.bf16 %v6010, %v6007
    %v6210 = vpack.c.bf16 %v6018, %v6015
    %v6211 = vpack.c.bf16 %v6204, %v6204
    %v6213 = vsel %vm397, %v6205, 0
    %v6216 = vsel %vm397, %v6206, 0
    %v6219 = vsel %vm397, %v6207, 0
    %v6222 = vsel %vm397, %v6208, 0
    %v6225 = vsel %vm397, %v6209, 0
    %v6228 = vsel %vm397, %v6210, 0
    %v6231 = vsel %vm304, %v6211, 0
    %6233 = vmatprep.subr.bf16.mxu0 0
    %6234 = vmatpush1.bf16.msra.mxu0 %v6231
    %6235 = vmatprep.subr.bf16.mxu0 0
    %6236 = vmatpush1.bf16.msra.mxu0 0
    %6237 = vmatprep.subr.bf16.mxu0 0
    %6238 = vmatpush1.bf16.msra.mxu0 0
    %6239 = vmatprep.subr.bf16.mxu0 0
    %6240 = vmatpush1.bf16.msra.mxu0 0
    %6241 = vmatprep.subr.bf16.mxu0 0
    %6242 = vmatpush1.bf16.msra.mxu0 0
    %6243 = vmatprep.subr.bf16.mxu0 0
    %6244 = vmatpush1.bf16.msra.mxu0 0
    %6245 = vmatprep.subr.bf16.mxu0 0
    %6246 = vmatpush1.bf16.msra.mxu0 0
    %6247 = vmatprep.subr.bf16.mxu0 0
    %6248 = vmatpush1.bf16.msra.mxu0 0
    %6249 = vmatprep.subr.bf16.mxu0 0
    %6250 = vmatpush1.bf16.msra.mxu0 0
    %6251 = vmatprep.subr.bf16.mxu0 0
    %6252 = vmatpush1.bf16.msra.mxu0 0
    %6253 = vmatprep.subr.bf16.mxu0 0
    %6254 = vmatpush1.bf16.msra.mxu0 0
    %6255 = vmatprep.subr.bf16.mxu0 0
    %6256 = vmatpush1.bf16.msra.mxu0 0
    %6257 = vmatprep.subr.bf16.mxu0 0
    %6258 = vmatpush1.bf16.msra.mxu0 0
    %6259 = vmatprep.subr.bf16.mxu0 0
    %6260 = vmatpush1.bf16.msra.mxu0 0
    %6261 = vmatprep.subr.bf16.mxu0 0
    %6262 = vmatpush1.bf16.msra.mxu0 0
    %6263 = vmatprep.subr.bf16.mxu0 0
    %6264 = vmatpush1.bf16.msra.mxu0 0
    %6265 = vmatprep.mubr.bf16.mxu0 0
    %6266 = vmatmul.mubr.bf16.gmra.mrb[0].mxu0 %v6213
    %v6267 = vpop.f32.mrb[0].mxu0
    %v6268 = vadd.f32 0.0, %v6267
    %v6269 = vpop.f32.mrb[0].mxu0
    %v6270 = vpop.f32.mrb[0].mxu0
    %v6271 = vadd.f32 0.0, %v6270
    %v6272 = vpop.f32.mrb[0].mxu0
    %6273 = vmatprep.mubr.bf16.mxu0 0
    %6274 = vmatmul.mubr.bf16.gmra.mrb[0].mxu0 %v6216
    %v6275 = vpop.f32.mrb[0].mxu0
    %v6276 = vadd.f32 0.0, %v6275
    %v6277 = vpop.f32.mrb[0].mxu0
    %v6278 = vpop.f32.mrb[0].mxu0
    %v6279 = vadd.f32 0.0, %v6278
    %v6280 = vpop.f32.mrb[0].mxu0
    %6281 = vmatprep.mubr.bf16.mxu0 0
    %6282 = vmatmul.mubr.bf16.gmra.mrb[0].mxu0 %v6219
    %v6283 = vpop.f32.mrb[0].mxu0
    %v6284 = vadd.f32 0.0, %v6283
    %v6285 = vpop.f32.mrb[0].mxu0
    %v6286 = vpop.f32.mrb[0].mxu0
    %v6287 = vadd.f32 0.0, %v6286
    %v6288 = vpop.f32.mrb[0].mxu0
    %6289 = vmatprep.mubr.bf16.mxu0 0
    %6290 = vmatmul.mubr.bf16.gmra.mrb[0].mxu0 %v6222
    %v6291 = vpop.f32.mrb[0].mxu0
    %v6292 = vadd.f32 0.0, %v6291
    %v6293 = vpop.f32.mrb[0].mxu0
    %v6294 = vpop.f32.mrb[0].mxu0
    %v6295 = vadd.f32 0.0, %v6294
    %v6296 = vpop.f32.mrb[0].mxu0
    %6297 = vmatprep.mubr.bf16.mxu0 0
    %6298 = vmatmul.mubr.bf16.gmra.mrb[0].mxu0 %v6225
    %v6299 = vpop.f32.mrb[0].mxu0
    %v6300 = vadd.f32 0.0, %v6299
    %v6301 = vpop.f32.mrb[0].mxu0
    %v6302 = vpop.f32.mrb[0].mxu0
    %v6303 = vadd.f32 0.0, %v6302
    %v6304 = vpop.f32.mrb[0].mxu0
    %6305 = vmatprep.mubr.bf16.mxu0 0
    %6306 = vmatmul.mubr.bf16.gmra.mrb[0].mxu0 %v6228
    %v6307 = vpop.f32.mrb[0].mxu0
    %v6308 = vadd.f32 0.0, %v6307
    %v6309 = vpop.f32.mrb[0].mxu0
    %v6310 = vpop.f32.mrb[0].mxu0
    %v6311 = vadd.f32 0.0, %v6310
    %v6312 = vpop.f32.mrb[0].mxu0
    %6313 = vdwg.mxu0
    %v6314 = vpack.c.bf16 %v6201, %v6200
    %v6315 = vpack.c.bf16 %v6203, %v6202
    %6316 = vmatprep.subr.bf16.mxu0 0
    %6317 = vmatpush1.bf16.msra.mxu0 %v6314
    %6318 = vmatprep.subr.bf16.mxu0 0
    %6319 = vmatpush1.bf16.msra.mxu0 %v6315
    %6320 = vmatprep.subr.bf16.mxu0 0
    %6321 = vmatpush1.bf16.msra.mxu0 0
    %6322 = vmatprep.subr.bf16.mxu0 0
    %6323 = vmatpush1.bf16.msra.mxu0 0
    %6324 = vmatprep.subr.bf16.mxu0 0
    %6325 = vmatpush1.bf16.msra.mxu0 0
    %6326 = vmatprep.subr.bf16.mxu0 0
    %6327 = vmatpush1.bf16.msra.mxu0 0
    %6328 = vmatprep.subr.bf16.mxu0 0
    %6329 = vmatpush1.bf16.msra.mxu0 0
    %6330 = vmatprep.subr.bf16.mxu0 0
    %6331 = vmatpush1.bf16.msra.mxu0 0
    %6332 = vmatprep.subr.bf16.mxu0 0
    %6333 = vmatpush1.bf16.msra.mxu0 0
    %6334 = vmatprep.subr.bf16.mxu0 0
    %6335 = vmatpush1.bf16.msra.mxu0 0
    %6336 = vmatprep.subr.bf16.mxu0 0
    %6337 = vmatpush1.bf16.msra.mxu0 0
    %6338 = vmatprep.subr.bf16.mxu0 0
    %6339 = vmatpush1.bf16.msra.mxu0 0
    %6340 = vmatprep.subr.bf16.mxu0 0
    %6341 = vmatpush1.bf16.msra.mxu0 0
    %6342 = vmatprep.subr.bf16.mxu0 0
    %6343 = vmatpush1.bf16.msra.mxu0 0
    %6344 = vmatprep.subr.bf16.mxu0 0
    %6345 = vmatpush1.bf16.msra.mxu0 0
    %6346 = vmatprep.subr.bf16.mxu0 0
    %6347 = vmatpush1.bf16.msra.mxu0 0
    %6348 = vmatprep.mubr.bf16.mxu0 0
    %6349 = vmatmul.mubr.bf16.gmra.mrb[0].mxu0 %v3255
    %v6350 = vpop.f32.mrb[0].mxu0
    %v6351 = vadd.f32 0.0, %v6350
    %v6352 = vpop.f32.mrb[0].mxu0
    %v6353 = vpop.f32.mrb[0].mxu0
    %v6354 = vadd.f32 0.0, %v6353
    %v6355 = vpop.f32.mrb[0].mxu0
    %6356 = vdwg.mxu0
    %v6357 = vmul.f32 %v6351, %v181
    %v6358 = vmul.f32 %v6354, %v182
    %v6359 = vadd.f32 %v4161, %v6357
    %v6360 = vadd.f32 %v4162, %v6358
    %v6361 = vpack.c.bf16 %v6271, %v6268
    %v6362 = vpack.c.bf16 %v6279, %v6276
    %6363 = vmatprep.subr.bf16.mxu0 0
    %6364 = vmatpush1.bf16.msra.mxu0 %v6361
    %6365 = vmatprep.subr.bf16.mxu0 0
    %6366 = vmatpush1.bf16.msra.mxu0 %v6362
    %6367 = vmatprep.subr.bf16.mxu0 0
    %6368 = vmatpush1.bf16.msra.mxu0 0
    %6369 = vmatprep.subr.bf16.mxu0 0
    %6370 = vmatpush1.bf16.msra.mxu0 0
    %6371 = vmatprep.subr.bf16.mxu0 0
    %6372 = vmatpush1.bf16.msra.mxu0 0
    %6373 = vmatprep.subr.bf16.mxu0 0
    %6374 = vmatpush1.bf16.msra.mxu0 0
    %6375 = vmatprep.subr.bf16.mxu0 0
    %6376 = vmatpush1.bf16.msra.mxu0 0
    %6377 = vmatprep.subr.bf16.mxu0 0
    %6378 = vmatpush1.bf16.msra.mxu0 0
    %6379 = vmatprep.subr.bf16.mxu0 0
    %6380 = vmatpush1.bf16.msra.mxu0 0
    %6381 = vmatprep.subr.bf16.mxu0 0
    %6382 = vmatpush1.bf16.msra.mxu0 0
    %6383 = vmatprep.subr.bf16.mxu0 0
    %6384 = vmatpush1.bf16.msra.mxu0 0
    %6385 = vmatprep.subr.bf16.mxu0 0
    %6386 = vmatpush1.bf16.msra.mxu0 0
    %6387 = vmatprep.subr.bf16.mxu0 0
    %6388 = vmatpush1.bf16.msra.mxu0 0
    %6389 = vmatprep.subr.bf16.mxu0 0
    %6390 = vmatpush1.bf16.msra.mxu0 0
    %6391 = vmatprep.subr.bf16.mxu0 0
    %6392 = vmatpush1.bf16.msra.mxu0 0
    %6393 = vmatprep.subr.bf16.mxu0 0
    %6394 = vmatpush1.bf16.msra.mxu0 0
    %6395 = vmatprep.mubr.bf16.mxu0 0
    %6396 = vmatmul.mubr.bf16.gmra.mrb[0].mxu0 %v3255
    %v6397 = vpop.f32.mrb[0].mxu0
    %v6398 = vadd.f32 0.0, %v6397
    %v6399 = vpop.f32.mrb[0].mxu0
    %v6400 = vpop.f32.mrb[0].mxu0
    %v6401 = vadd.f32 0.0, %v6400
    %v6402 = vpop.f32.mrb[0].mxu0
    %6403 = vdwg.mxu0
    %v6404 = vmul.f32 %v6398, %v181
    %v6405 = vmul.f32 %v6401, %v182
    %v6406 = vpack.c.bf16 %v6287, %v6284
    %v6407 = vpack.c.bf16 %v6295, %v6292
    %6408 = vmatprep.subr.bf16.mxu0 0
    %6409 = vmatpush1.bf16.msra.mxu0 %v6406
    %6410 = vmatprep.subr.bf16.mxu0 0
    %6411 = vmatpush1.bf16.msra.mxu0 %v6407
    %6412 = vmatprep.subr.bf16.mxu0 0
    %6413 = vmatpush1.bf16.msra.mxu0 0
    %6414 = vmatprep.subr.bf16.mxu0 0
    %6415 = vmatpush1.bf16.msra.mxu0 0
    %6416 = vmatprep.subr.bf16.mxu0 0
    %6417 = vmatpush1.bf16.msra.mxu0 0
    %6418 = vmatprep.subr.bf16.mxu0 0
    %6419 = vmatpush1.bf16.msra.mxu0 0
    %6420 = vmatprep.subr.bf16.mxu0 0
    %6421 = vmatpush1.bf16.msra.mxu0 0
    %6422 = vmatprep.subr.bf16.mxu0 0
    %6423 = vmatpush1.bf16.msra.mxu0 0
    %6424 = vmatprep.subr.bf16.mxu0 0
    %6425 = vmatpush1.bf16.msra.mxu0 0
    %6426 = vmatprep.subr.bf16.mxu0 0
    %6427 = vmatpush1.bf16.msra.mxu0 0
    %6428 = vmatprep.subr.bf16.mxu0 0
    %6429 = vmatpush1.bf16.msra.mxu0 0
    %6430 = vmatprep.subr.bf16.mxu0 0
    %6431 = vmatpush1.bf16.msra.mxu0 0
    %6432 = vmatprep.subr.bf16.mxu0 0
    %6433 = vmatpush1.bf16.msra.mxu0 0
    %6434 = vmatprep.subr.bf16.mxu0 0
    %6435 = vmatpush1.bf16.msra.mxu0 0
    %6436 = vmatprep.subr.bf16.mxu0 0
    %6437 = vmatpush1.bf16.msra.mxu0 0
    %6438 = vmatprep.subr.bf16.mxu0 0
    %6439 = vmatpush1.bf16.msra.mxu0 0
    %6440 = vmatprep.mubr.bf16.mxu0 0
    %6441 = vmatmul.mubr.bf16.gmra.mrb[0].mxu0 %v3255
    %v6442 = vpop.f32.mrb[0].mxu0
    %v6443 = vadd.f32 0.0, %v6442
    %v6444 = vpop.f32.mrb[0].mxu0
    %v6445 = vpop.f32.mrb[0].mxu0
    %v6446 = vadd.f32 0.0, %v6445
    %v6447 = vpop.f32.mrb[0].mxu0
    %6448 = vdwg.mxu0
    %v6449 = vmul.f32 %v6443, %v181
    %v6450 = vmul.f32 %v6446, %v182
    %v6451 = vpack.c.bf16 %v6303, %v6300
    %v6452 = vpack.c.bf16 %v6311, %v6308
    %6453 = vmatprep.subr.bf16.mxu0 0
    %6454 = vmatpush1.bf16.msra.mxu0 %v6451
    %6455 = vmatprep.subr.bf16.mxu0 0
    %6456 = vmatpush1.bf16.msra.mxu0 %v6452
    %6457 = vmatprep.subr.bf16.mxu0 0
    %6458 = vmatpush1.bf16.msra.mxu0 0
    %6459 = vmatprep.subr.bf16.mxu0 0
    %6460 = vmatpush1.bf16.msra.mxu0 0
    %6461 = vmatprep.subr.bf16.mxu0 0
    %6462 = vmatpush1.bf16.msra.mxu0 0
    %6463 = vmatprep.subr.bf16.mxu0 0
    %6464 = vmatpush1.bf16.msra.mxu0 0
    %6465 = vmatprep.subr.bf16.mxu0 0
    %6466 = vmatpush1.bf16.msra.mxu0 0
    %6467 = vmatprep.subr.bf16.mxu0 0
    %6468 = vmatpush1.bf16.msra.mxu0 0
    %6469 = vmatprep.subr.bf16.mxu0 0
    %6470 = vmatpush1.bf16.msra.mxu0 0
    %6471 = vmatprep.subr.bf16.mxu0 0
    %6472 = vmatpush1.bf16.msra.mxu0 0
    %6473 = vmatprep.subr.bf16.mxu0 0
    %6474 = vmatpush1.bf16.msra.mxu0 0
    %6475 = vmatprep.subr.bf16.mxu0 0
    %6476 = vmatpush1.bf16.msra.mxu0 0
    %6477 = vmatprep.subr.bf16.mxu0 0
    %6478 = vmatpush1.bf16.msra.mxu0 0
    %6479 = vmatprep.subr.bf16.mxu0 0
    %6480 = vmatpush1.bf16.msra.mxu0 0
    %6481 = vmatprep.subr.bf16.mxu0 0
    %6482 = vmatpush1.bf16.msra.mxu0 0
    %6483 = vmatprep.subr.bf16.mxu0 0
    %6484 = vmatpush1.bf16.msra.mxu0 0
    %6485 = vmatprep.mubr.bf16.mxu0 0
    %6486 = vmatmul.mubr.bf16.gmra.mrb[0].mxu0 %v3255
    %v6487 = vpop.f32.mrb[0].mxu0
    %v6488 = vadd.f32 0.0, %v6487
    %v6489 = vpop.f32.mrb[0].mxu0
    %v6490 = vpop.f32.mrb[0].mxu0
    %v6491 = vadd.f32 0.0, %v6490
    %v6492 = vpop.f32.mrb[0].mxu0
    %6493 = vdwg.mxu0
    %v6494 = vmul.f32 %v6488, %v181
    %v6495 = vmul.f32 %v6491, %v182
    %v6496 = vadd.f32 %v4195, %v6404
    %v6497 = vadd.f32 %v4196, %v6405
    %v6498 = vadd.f32 %v4197, %v6449
    %v6499 = vadd.f32 %v4198, %v6450
    %v6500 = vadd.f32 %v4199, %v6494
    %v6501 = vadd.f32 %v4200, %v6495
    %v6502 = vsel %vm1093, %v6359, 0.0
    %6503 = vadd.xlane.f32.xlu0 %v6502
    %v6504 = vpop.xlane.xlu0 %6503
    %v6505 = vsel %vm1093, %v6360, 0.0
    %6506 = vadd.xlane.f32.xlu0 %v6505
    %v6507 = vpop.xlane.xlu0 %6506
    %v6508 = vmul.f32 %v6504, %v3449
    %v6509 = vmul.f32 %v6507, %v3449
    %v6510 = vsub.f32 %v6359, %v6508
    %v6511 = vsub.f32 %v6360, %v6509
    %v6512 = vmul.f32 %v6510, %v6510
    %v6513 = vmul.f32 %v6511, %v6511
    %v6514 = vsel %vm1093, %v6512, 0.0
    %6515 = vadd.xlane.f32.xlu0 %v6514
    %v6516 = vpop.xlane.xlu0 %6515
    %v6517 = vsel %vm1093, %v6513, 0.0
    %6518 = vadd.xlane.f32.xlu0 %v6517
    %v6519 = vpop.xlane.xlu0 %6518
    %v6520 = vmul.f32 %v6516, %v3449
    %v6521 = vmul.f32 %v6519, %v3449
    %v6522 = vadd.f32 %v6520, 1e-05
    %v6523 = vadd.f32 %v6521, 1e-05
    %v6524 = vrsqrt.pop %v6522
    %v6525 = vrsqrt.pop %v6523
    %v6526 = vmul.f32 %v6510, %v6524
    %v6527 = vmul.f32 %v6511, %v6525
    %v6528 = vld [vmem:[#allocation10 + $0x650] ss:$0 sm:$0xff]
    %v6529 = vmul.f32 %v6526, %v6528
    %v6530 = vmul.f32 %v6527, %v6528
    %v6531 = vld [vmem:[#allocation10 + $0x640] ss:$0 sm:$0xff]
    %v6532 = vadd.f32 %v6529, %v6531
    %v6533 = vadd.f32 %v6530, %v6531
    %v6534 = vmul.f32 %v6496, %v6496
    %v6535 = vmul.f32 %v6497, %v6497
    %v6536 = vmul.f32 %v6498, %v6498
    %v6537 = vmul.f32 %v6499, %v6499
    %v6538 = vadd.f32 %v6534, %v6536
    %v6539 = vadd.f32 %v6535, %v6537
    %v6540 = vmul.f32 %v6500, %v6500
    %v6541 = vmul.f32 %v6501, %v6501
    %v6542 = vadd.f32 %v6538, %v6540
    %v6543 = vadd.f32 %v6539, %v6541
    %v6544 = vmax.f32 %v6542, 1e-08
    %v6545 = vmax.f32 %v6543, 1e-08
    %v6546 = vsel %vm397, %v6544, 0.0
    %6547 = vadd.xlane.f32.xlu0 %v6546
    %v6548 = vpop.xlane.xlu0 %6547
    %v6549 = vsel %vm397, %v6545, 0.0
    %6550 = vadd.xlane.f32.xlu0 %v6549
    %v6551 = vpop.xlane.xlu0 %6550
    %v6552 = vmul.f32 %v6548, %v3494
    %v6553 = vmul.f32 %v6551, %v3494
    %v6554 = vrsqrt.pop %v6552
    %v6555 = vrsqrt.pop %v6553
    %6557 = vset.pattern.permute.xlu0 0
    %6558 = vperm.xlu0 %6557, %v6554
    %v6559 = vpop.permute.xlu0 %6558
    %6562 = vset.pattern.permute.xlu0 0
    %6563 = vperm.xlu0 %6562, %v6555
    %v6564 = vpop.permute.xlu0 %6563
    %v6566 = vmul.f32 %v6496, %v6559
    %v6567 = vmul.f32 %v6497, %v6564
    %v6568 = vmul.f32 %v6498, %v6559
    %v6569 = vmul.f32 %v6499, %v6564
    %v6570 = vmul.f32 %v6500, %v6559
    %v6571 = vmul.f32 %v6501, %v6564
    %v6572 = vld [vmem:[#allocation10 + $0x520] sm:$0xf]
    %v6573 = vpack.c.bf16 %v6567, %v6566
    %v6574 = vpack.c.bf16 %v6569, %v6568
    %v6575 = vpack.c.bf16 %v6571, %v6570
    %v6576 = vpack.c.bf16 %v6572, %v6572
    %v6578 = vsel %vm397, %v6573, 0
    %v6581 = vsel %vm397, %v6574, 0
    %v6584 = vsel %vm397, %v6575, 0
    %v6587 = vsel %vm304, %v6576, 0
    %6589 = vmatprep.subr.bf16.mxu0 0
    %6590 = vmatpush1.bf16.msra.mxu0 %v6587
    %6591 = vmatprep.subr.bf16.mxu0 0
    %6592 = vmatpush1.bf16.msra.mxu0 0
    %6593 = vmatprep.subr.bf16.mxu0 0
    %6594 = vmatpush1.bf16.msra.mxu0 0
    %6595 = vmatprep.subr.bf16.mxu0 0
    %6596 = vmatpush1.bf16.msra.mxu0 0
    %6597 = vmatprep.subr.bf16.mxu0 0
    %6598 = vmatpush1.bf16.msra.mxu0 0
    %6599 = vmatprep.subr.bf16.mxu0 0
    %6600 = vmatpush1.bf16.msra.mxu0 0
    %6601 = vmatprep.subr.bf16.mxu0 0
    %6602 = vmatpush1.bf16.msra.mxu0 0
    %6603 = vmatprep.subr.bf16.mxu0 0
    %6604 = vmatpush1.bf16.msra.mxu0 0
    %6605 = vmatprep.subr.bf16.mxu0 0
    %6606 = vmatpush1.bf16.msra.mxu0 0
    %6607 = vmatprep.subr.bf16.mxu0 0
    %6608 = vmatpush1.bf16.msra.mxu0 0
    %6609 = vmatprep.subr.bf16.mxu0 0
    %6610 = vmatpush1.bf16.msra.mxu0 0
    %6611 = vmatprep.subr.bf16.mxu0 0
    %6612 = vmatpush1.bf16.msra.mxu0 0
    %6613 = vmatprep.subr.bf16.mxu0 0
    %6614 = vmatpush1.bf16.msra.mxu0 0
    %6615 = vmatprep.subr.bf16.mxu0 0
    %6616 = vmatpush1.bf16.msra.mxu0 0
    %6617 = vmatprep.subr.bf16.mxu0 0
    %6618 = vmatpush1.bf16.msra.mxu0 0
    %6619 = vmatprep.subr.bf16.mxu0 0
    %6620 = vmatpush1.bf16.msra.mxu0 0
    %6621 = vmatprep.mubr.bf16.mxu0 0
    %6622 = vmatmul.mubr.bf16.gmra.mrb[0].mxu0 %v6578
    %v6623 = vpop.f32.mrb[0].mxu0
    %v6624 = vadd.f32 0.0, %v6623
    %v6625 = vpop.f32.mrb[0].mxu0
    %v6626 = vpop.f32.mrb[0].mxu0
    %v6627 = vadd.f32 0.0, %v6626
    %v6628 = vpop.f32.mrb[0].mxu0
    %6629 = vmatprep.mubr.bf16.mxu0 0
    %6630 = vmatmul.mubr.bf16.gmra.mrb[0].mxu0 %v6581
    %v6631 = vpop.f32.mrb[0].mxu0
    %v6632 = vadd.f32 0.0, %v6631
    %v6633 = vpop.f32.mrb[0].mxu0
    %v6634 = vpop.f32.mrb[0].mxu0
    %v6635 = vadd.f32 0.0, %v6634
    %v6636 = vpop.f32.mrb[0].mxu0
    %6637 = vmatprep.mubr.bf16.mxu0 0
    %6638 = vmatmul.mubr.bf16.gmra.mrb[0].mxu0 %v6584
    %v6639 = vpop.f32.mrb[0].mxu0
    %v6640 = vadd.f32 0.0, %v6639
    %v6641 = vpop.f32.mrb[0].mxu0
    %v6642 = vpop.f32.mrb[0].mxu0
    %v6643 = vadd.f32 0.0, %v6642
    %v6644 = vpop.f32.mrb[0].mxu0
    %6645 = vdwg.mxu0
    %v6646 = vmul.f32 %v6624, %v6624
    %v6647 = vmul.f32 %v6627, %v6627
    %v6648 = vmul.f32 %v6632, %v6632
    %v6649 = vmul.f32 %v6635, %v6635
    %v6650 = vadd.f32 %v6646, %v6648
    %v6651 = vadd.f32 %v6647, %v6649
    %v6652 = vmul.f32 %v6640, %v6640
    %v6653 = vmul.f32 %v6643, %v6643
    %v6654 = vadd.f32 %v6650, %v6652
    %v6655 = vadd.f32 %v6651, %v6653
    %v6656 = vmax.f32 %v6654, 1e-08
    %v6657 = vmax.f32 %v6655, 1e-08
    %v6658 = vrsqrt.pop %v6656
    %v6659 = vmul.f32 %v6656, %v6658
    %vm6660 = vcmp.eq.f32.partialorder %v6656, inf
    %v6661 = vsel %vm6660, %v6656, %v6659
    %vm6662 = vcmp.eq.f32.partialorder %v6656, 0.0
    %v6663 = vand.u32 %v6656, 2147483648
    %v6664 = vsel %vm6662, %v6663, %v6661
    %v6665 = vrsqrt.pop %v6657
    %v6666 = vmul.f32 %v6657, %v6665
    %vm6667 = vcmp.eq.f32.partialorder %v6657, inf
    %v6668 = vsel %vm6667, %v6657, %v6666
    %vm6669 = vcmp.eq.f32.partialorder %v6657, 0.0
    %v6670 = vand.u32 %v6657, 2147483648
    %v6671 = vsel %vm6669, %v6670, %v6668
    %v6672 = vld [vmem:[#allocation10 + $0x530] ss:$0 sm:$0xff]
    %v6673 = vld [vmem:[#allocation10 + $0x540] sm:$0xff]
    %v6674 = vpack.c.bf16 %v6671, %v6664
    %v6675 = vpack.c.bf16 %v6673, %v6673
    %v6677 = vsel %vm574, %v6674, 0
    %v6680 = vsel %vm925, %v6675, 0
    %6682 = vmatprep.subr.bf16.mxu0 0
    %6683 = vmatpush1.bf16.msra.mxu0 %v6680
    %6684 = vmatprep.subr.bf16.mxu0 0
    %6685 = vmatpush1.bf16.msra.mxu0 0
    %6686 = vmatprep.subr.bf16.mxu0 0
    %6687 = vmatpush1.bf16.msra.mxu0 0
    %6688 = vmatprep.subr.bf16.mxu0 0
    %6689 = vmatpush1.bf16.msra.mxu0 0
    %6690 = vmatprep.subr.bf16.mxu0 0
    %6691 = vmatpush1.bf16.msra.mxu0 0
    %6692 = vmatprep.subr.bf16.mxu0 0
    %6693 = vmatpush1.bf16.msra.mxu0 0
    %6694 = vmatprep.subr.bf16.mxu0 0
    %6695 = vmatpush1.bf16.msra.mxu0 0
    %6696 = vmatprep.subr.bf16.mxu0 0
    %6697 = vmatpush1.bf16.msra.mxu0 0
    %6698 = vmatprep.subr.bf16.mxu0 0
    %6699 = vmatpush1.bf16.msra.mxu0 0
    %6700 = vmatprep.subr.bf16.mxu0 0
    %6701 = vmatpush1.bf16.msra.mxu0 0
    %6702 = vmatprep.subr.bf16.mxu0 0
    %6703 = vmatpush1.bf16.msra.mxu0 0
    %6704 = vmatprep.subr.bf16.mxu0 0
    %6705 = vmatpush1.bf16.msra.mxu0 0
    %6706 = vmatprep.subr.bf16.mxu0 0
    %6707 = vmatpush1.bf16.msra.mxu0 0
    %6708 = vmatprep.subr.bf16.mxu0 0
    %6709 = vmatpush1.bf16.msra.mxu0 0
    %6710 = vmatprep.subr.bf16.mxu0 0
    %6711 = vmatpush1.bf16.msra.mxu0 0
    %6712 = vmatprep.subr.bf16.mxu0 0
    %6713 = vmatpush1.bf16.msra.mxu0 0
    %6714 = vmatprep.mubr.bf16.mxu0 0
    %6715 = vmatmul.mubr.bf16.gmra.mrb[0].mxu0 %v6677
    %v6716 = vpop.f32.mrb[0].mxu0
    %v6717 = vadd.f32 0.0, %v6716
    %v6718 = vpop.f32.mrb[0].mxu0
    %v6719 = vpop.f32.mrb[0].mxu0
    %v6720 = vadd.f32 0.0, %v6719
    %v6721 = vpop.f32.mrb[0].mxu0
    %6722 = vdwg.mxu0
    %v6723 = vadd.f32 %v6672, %v6717
    %v6724 = vadd.f32 %v6672, %v6720
    %v6725 = vld [vmem:[#allocation10 + $0x550] sm:$0xff]
    %v6726 = vld [vmem:[#allocation10 + $0x560] sm:$0xff]
    %v6727 = vpack.c.bf16 %v6533, %v6532
    %v6728 = vpack.c.bf16 %v6726, %v6725
    %v6730 = vsel %vm1093, %v6727, 0
    %6732 = vmatprep.subr.bf16.mxu0 0
    %6733 = vmatpush1.bf16.msra.mxu0 %v6728
    %6734 = vmatprep.subr.bf16.mxu0 0
    %6735 = vmatpush1.bf16.msra.mxu0 0
    %6736 = vmatprep.subr.bf16.mxu0 0
    %6737 = vmatpush1.bf16.msra.mxu0 0
    %6738 = vmatprep.subr.bf16.mxu0 0
    %6739 = vmatpush1.bf16.msra.mxu0 0
    %6740 = vmatprep.subr.bf16.mxu0 0
    %6741 = vmatpush1.bf16.msra.mxu0 0
    %6742 = vmatprep.subr.bf16.mxu0 0
    %6743 = vmatpush1.bf16.msra.mxu0 0
    %6744 = vmatprep.subr.bf16.mxu0 0
    %6745 = vmatpush1.bf16.msra.mxu0 0
    %6746 = vmatprep.subr.bf16.mxu0 0
    %6747 = vmatpush1.bf16.msra.mxu0 0
    %6748 = vmatprep.subr.bf16.mxu0 0
    %6749 = vmatpush1.bf16.msra.mxu0 0
    %6750 = vmatprep.subr.bf16.mxu0 0
    %6751 = vmatpush1.bf16.msra.mxu0 0
    %6752 = vmatprep.subr.bf16.mxu0 0
    %6753 = vmatpush1.bf16.msra.mxu0 0
    %6754 = vmatprep.subr.bf16.mxu0 0
    %6755 = vmatpush1.bf16.msra.mxu0 0
    %6756 = vmatprep.subr.bf16.mxu0 0
    %6757 = vmatpush1.bf16.msra.mxu0 0
    %6758 = vmatprep.subr.bf16.mxu0 0
    %6759 = vmatpush1.bf16.msra.mxu0 0
    %6760 = vmatprep.subr.bf16.mxu0 0
    %6761 = vmatpush1.bf16.msra.mxu0 0
    %6762 = vmatprep.subr.bf16.mxu0 0
    %6763 = vmatpush1.bf16.msra.mxu0 0
    %6764 = vmatprep.mubr.bf16.mxu0 0
    %6765 = vmatmul.mubr.bf16.gmra.mrb[0].mxu0 %v6730
    %v6766 = vpop.f32.mrb[0].mxu0
    %v6767 = vadd.f32 0.0, %v6766
    %v6768 = vpop.f32.mrb[0].mxu0
    %v6769 = vpop.f32.mrb[0].mxu0
    %v6770 = vadd.f32 0.0, %v6769
    %v6771 = vpop.f32.mrb[0].mxu0
    %6772 = vdwg.mxu0
    %v6773 = vadd.f32 %v6723, %v6767
    %v6774 = vadd.f32 %v6724, %v6770
    %v6775 = vld [vmem:[#allocation10 + $0x570] sm:$0xff]
    %v6776 = vpack.c.bf16 %v6627, %v6624
    %v6777 = vpack.c.bf16 %v6635, %v6632
    %v6778 = vpack.c.bf16 %v6643, %v6640
    %v6779 = vpack.c.bf16 %v6775, %v6775
    %v6781 = vsel %vm574, %v6776, 0
    %v6784 = vsel %vm574, %v6777, 0
    %v6787 = vsel %vm574, %v6778, 0
    %v6790 = vsel %vm925, %v6779, 0
    %6792 = vmatprep.subr.bf16.mxu0 0
    %6793 = vmatpush1.bf16.msra.mxu0 %v6790
    %6794 = vmatprep.subr.bf16.mxu0 0
    %6795 = vmatpush1.bf16.msra.mxu0 0
    %6796 = vmatprep.subr.bf16.mxu0 0
    %6797 = vmatpush1.bf16.msra.mxu0 0
    %6798 = vmatprep.subr.bf16.mxu0 0
    %6799 = vmatpush1.bf16.msra.mxu0 0
    %6800 = vmatprep.subr.bf16.mxu0 0
    %6801 = vmatpush1.bf16.msra.mxu0 0
    %6802 = vmatprep.subr.bf16.mxu0 0
    %6803 = vmatpush1.bf16.msra.mxu0 0
    %6804 = vmatprep.subr.bf16.mxu0 0
    %6805 = vmatpush1.bf16.msra.mxu0 0
    %6806 = vmatprep.subr.bf16.mxu0 0
    %6807 = vmatpush1.bf16.msra.mxu0 0
    %6808 = vmatprep.subr.bf16.mxu0 0
    %6809 = vmatpush1.bf16.msra.mxu0 0
    %6810 = vmatprep.subr.bf16.mxu0 0
    %6811 = vmatpush1.bf16.msra.mxu0 0
    %6812 = vmatprep.subr.bf16.mxu0 0
    %6813 = vmatpush1.bf16.msra.mxu0 0
    %6814 = vmatprep.subr.bf16.mxu0 0
    %6815 = vmatpush1.bf16.msra.mxu0 0
    %6816 = vmatprep.subr.bf16.mxu0 0
    %6817 = vmatpush1.bf16.msra.mxu0 0
    %6818 = vmatprep.subr.bf16.mxu0 0
    %6819 = vmatpush1.bf16.msra.mxu0 0
    %6820 = vmatprep.subr.bf16.mxu0 0
    %6821 = vmatpush1.bf16.msra.mxu0 0
    %6822 = vmatprep.subr.bf16.mxu0 0
    %6823 = vmatpush1.bf16.msra.mxu0 0
    %6824 = vmatprep.mubr.bf16.mxu0 0
    %6825 = vmatmul.mubr.bf16.gmra.mrb[0].mxu0 %v6781
    %v6826 = vpop.f32.mrb[0].mxu0
    %v6827 = vadd.f32 0.0, %v6826
    %v6828 = vpop.f32.mrb[0].mxu0
    %v6829 = vpop.f32.mrb[0].mxu0
    %v6830 = vadd.f32 0.0, %v6829
    %v6831 = vpop.f32.mrb[0].mxu0
    %6832 = vmatprep.mubr.bf16.mxu0 0
    %6833 = vmatmul.mubr.bf16.gmra.mrb[0].mxu0 %v6784
    %v6834 = vpop.f32.mrb[0].mxu0
    %v6835 = vadd.f32 0.0, %v6834
    %v6836 = vpop.f32.mrb[0].mxu0
    %v6837 = vpop.f32.mrb[0].mxu0
    %v6838 = vadd.f32 0.0, %v6837
    %v6839 = vpop.f32.mrb[0].mxu0
    %6840 = vmatprep.mubr.bf16.mxu0 0
    %6841 = vmatmul.mubr.bf16.gmra.mrb[0].mxu0 %v6787
    %v6842 = vpop.f32.mrb[0].mxu0
    %v6843 = vadd.f32 0.0, %v6842
    %v6844 = vpop.f32.mrb[0].mxu0
    %v6845 = vpop.f32.mrb[0].mxu0
    %v6846 = vadd.f32 0.0, %v6845
    %v6847 = vpop.f32.mrb[0].mxu0
    %6848 = vdwg.mxu0
    %v6849 = vmul.f32 %v6827, %v6827
    %v6850 = vmul.f32 %v6830, %v6830
    %v6851 = vmul.f32 %v6835, %v6835
    %v6852 = vmul.f32 %v6838, %v6838
    %v6853 = vadd.f32 %v6849, %v6851
    %v6854 = vadd.f32 %v6850, %v6852
    %v6855 = vmul.f32 %v6843, %v6843
    %v6856 = vmul.f32 %v6846, %v6846
    %v6857 = vadd.f32 %v6853, %v6855
    %v6858 = vadd.f32 %v6854, %v6856
    %v6859 = vmax.f32 %v6857, 1e-08
    %v6860 = vmax.f32 %v6858, 1e-08
    %v6861 = vrsqrt.pop %v6859
    %v6862 = vmul.f32 %v6859, %v6861
    %vm6863 = vcmp.eq.f32.partialorder %v6859, inf
    %v6864 = vsel %vm6863, %v6859, %v6862
    %vm6865 = vcmp.eq.f32.partialorder %v6859, 0.0
    %v6866 = vand.u32 %v6859, 2147483648
    %v6867 = vsel %vm6865, %v6866, %v6864
    %v6868 = vrsqrt.pop %v6860
    %v6869 = vmul.f32 %v6860, %v6868
    %vm6870 = vcmp.eq.f32.partialorder %v6860, inf
    %v6871 = vsel %vm6870, %v6860, %v6869
    %vm6872 = vcmp.eq.f32.partialorder %v6860, 0.0
    %v6873 = vand.u32 %v6860, 2147483648
    %v6874 = vsel %vm6872, %v6873, %v6871
    %v6875 = vsub.f32 0.0, %v6867
    %v6876 = vsub.f32 0.0, %v6874
    %v6877 = vmul.f32 %v6875, 1.442695
    %v6878 = vpow.pop %v6877
    %v6879 = vmul.f32 %v6876, 1.442695
    %v6880 = vpow.pop %v6879
    %v6881 = vadd.f32 %v6878, 1.0
    %v6882 = vadd.f32 %v6880, 1.0
    %v6883 = vrcp.pop %v6881
    %v6884 = vrcp.pop %v6882
    %v6885 = vmul.f32 %v6827, %v6883
    %v6886 = vmul.f32 %v6830, %v6884
    %v6887 = vmul.f32 %v6835, %v6883
    %v6888 = vmul.f32 %v6838, %v6884
    %v6889 = vmul.f32 %v6843, %v6883
    %v6890 = vmul.f32 %v6846, %v6884
    %v6891 = vmax.f32 %v6773, 0.0
    %v6892 = vmax.f32 %v6774, 0.0
    %v6893 = vld [vmem:[#allocation10 + $0x580] sm:$0xff]
    %v6894 = vpack.c.bf16 %v6886, %v6885
    %v6895 = vpack.c.bf16 %v6888, %v6887
    %v6896 = vpack.c.bf16 %v6890, %v6889
    %v6897 = vpack.c.bf16 %v6893, %v6893
    %v6899 = vsel %vm574, %v6894, 0
    %v6902 = vsel %vm574, %v6895, 0
    %v6905 = vsel %vm574, %v6896, 0
    %v6908 = vsel %vm925, %v6897, 0
    %6910 = vmatprep.subr.bf16.mxu0 0
    %6911 = vmatpush1.bf16.msra.mxu0 %v6908
    %6912 = vmatprep.subr.bf16.mxu0 0
    %6913 = vmatpush1.bf16.msra.mxu0 0
    %6914 = vmatprep.subr.bf16.mxu0 0
    %6915 = vmatpush1.bf16.msra.mxu0 0
    %6916 = vmatprep.subr.bf16.mxu0 0
    %6917 = vmatpush1.bf16.msra.mxu0 0
    %6918 = vmatprep.subr.bf16.mxu0 0
    %6919 = vmatpush1.bf16.msra.mxu0 0
    %6920 = vmatprep.subr.bf16.mxu0 0
    %6921 = vmatpush1.bf16.msra.mxu0 0
    %6922 = vmatprep.subr.bf16.mxu0 0
    %6923 = vmatpush1.bf16.msra.mxu0 0
    %6924 = vmatprep.subr.bf16.mxu0 0
    %6925 = vmatpush1.bf16.msra.mxu0 0
    %6926 = vmatprep.subr.bf16.mxu0 0
    %6927 = vmatpush1.bf16.msra.mxu0 0
    %6928 = vmatprep.subr.bf16.mxu0 0
    %6929 = vmatpush1.bf16.msra.mxu0 0
    %6930 = vmatprep.subr.bf16.mxu0 0
    %6931 = vmatpush1.bf16.msra.mxu0 0
    %6932 = vmatprep.subr.bf16.mxu0 0
    %6933 = vmatpush1.bf16.msra.mxu0 0
    %6934 = vmatprep.subr.bf16.mxu0 0
    %6935 = vmatpush1.bf16.msra.mxu0 0
    %6936 = vmatprep.subr.bf16.mxu0 0
    %6937 = vmatpush1.bf16.msra.mxu0 0
    %6938 = vmatprep.subr.bf16.mxu0 0
    %6939 = vmatpush1.bf16.msra.mxu0 0
    %6940 = vmatprep.subr.bf16.mxu0 0
    %6941 = vmatpush1.bf16.msra.mxu0 0
    %6942 = vmatprep.mubr.bf16.mxu0 0
    %6943 = vmatmul.mubr.bf16.gmra.mrb[0].mxu0 %v6899
    %v6944 = vpop.f32.mrb[0].mxu0
    %v6945 = vadd.f32 0.0, %v6944
    %v6946 = vpop.f32.mrb[0].mxu0
    %v6947 = vpop.f32.mrb[0].mxu0
    %v6948 = vadd.f32 0.0, %v6947
    %v6949 = vpop.f32.mrb[0].mxu0
    %6950 = vmatprep.mubr.bf16.mxu0 0
    %6951 = vmatmul.mubr.bf16.gmra.mrb[0].mxu0 %v6902
    %v6952 = vpop.f32.mrb[0].mxu0
    %v6953 = vadd.f32 0.0, %v6952
    %v6954 = vpop.f32.mrb[0].mxu0
    %v6955 = vpop.f32.mrb[0].mxu0
    %v6956 = vadd.f32 0.0, %v6955
    %v6957 = vpop.f32.mrb[0].mxu0
    %6958 = vmatprep.mubr.bf16.mxu0 0
    %6959 = vmatmul.mubr.bf16.gmra.mrb[0].mxu0 %v6905
    %v6960 = vpop.f32.mrb[0].mxu0
    %v6961 = vadd.f32 0.0, %v6960
    %v6962 = vpop.f32.mrb[0].mxu0
    %v6963 = vpop.f32.mrb[0].mxu0
    %v6964 = vadd.f32 0.0, %v6963
    %v6965 = vpop.f32.mrb[0].mxu0
    %6966 = vdwg.mxu0
    %v6967 = vmul.f32 %v6945, %v6945
    %v6968 = vmul.f32 %v6948, %v6948
    %v6969 = vmul.f32 %v6953, %v6953
    %v6970 = vmul.f32 %v6956, %v6956
    %v6971 = vadd.f32 %v6967, %v6969
    %v6972 = vadd.f32 %v6968, %v6970
    %v6973 = vmul.f32 %v6961, %v6961
    %v6974 = vmul.f32 %v6964, %v6964
    %v6975 = vadd.f32 %v6971, %v6973
    %v6976 = vadd.f32 %v6972, %v6974
    %v6977 = vmax.f32 %v6975, 1e-08
    %v6978 = vmax.f32 %v6976, 1e-08
    %v6979 = vrsqrt.pop %v6977
    %v6980 = vmul.f32 %v6977, %v6979
    %vm6981 = vcmp.eq.f32.partialorder %v6977, inf
    %v6982 = vsel %vm6981, %v6977, %v6980
    %vm6983 = vcmp.eq.f32.partialorder %v6977, 0.0
    %v6984 = vand.u32 %v6977, 2147483648
    %v6985 = vsel %vm6983, %v6984, %v6982
    %v6986 = vrsqrt.pop %v6978
    %v6987 = vmul.f32 %v6978, %v6986
    %vm6988 = vcmp.eq.f32.partialorder %v6978, inf
    %v6989 = vsel %vm6988, %v6978, %v6987
    %vm6990 = vcmp.eq.f32.partialorder %v6978, 0.0
    %v6991 = vand.u32 %v6978, 2147483648
    %v6992 = vsel %vm6990, %v6991, %v6989
    %v6993 = vld [vmem:[#allocation10 + $0x590] ss:$0 sm:$0xff]
    %v6994 = vld [vmem:[#allocation10 + $0x5a0] sm:$0xff]
    %v6995 = vpack.c.bf16 %v6992, %v6985
    %v6996 = vpack.c.bf16 %v6994, %v6994
    %v6998 = vsel %vm574, %v6995, 0
    %v7001 = vsel %vm925, %v6996, 0
    %7003 = vmatprep.subr.bf16.mxu0 0
    %7004 = vmatpush1.bf16.msra.mxu0 %v7001
    %7005 = vmatprep.subr.bf16.mxu0 0
    %7006 = vmatpush1.bf16.msra.mxu0 0
    %7007 = vmatprep.subr.bf16.mxu0 0
    %7008 = vmatpush1.bf16.msra.mxu0 0
    %7009 = vmatprep.subr.bf16.mxu0 0
    %7010 = vmatpush1.bf16.msra.mxu0 0
    %7011 = vmatprep.subr.bf16.mxu0 0
    %7012 = vmatpush1.bf16.msra.mxu0 0
    %7013 = vmatprep.subr.bf16.mxu0 0
    %7014 = vmatpush1.bf16.msra.mxu0 0
    %7015 = vmatprep.subr.bf16.mxu0 0
    %7016 = vmatpush1.bf16.msra.mxu0 0
    %7017 = vmatprep.subr.bf16.mxu0 0
    %7018 = vmatpush1.bf16.msra.mxu0 0
    %7019 = vmatprep.subr.bf16.mxu0 0
    %7020 = vmatpush1.bf16.msra.mxu0 0
    %7021 = vmatprep.subr.bf16.mxu0 0
    %7022 = vmatpush1.bf16.msra.mxu0 0
    %7023 = vmatprep.subr.bf16.mxu0 0
    %7024 = vmatpush1.bf16.msra.mxu0 0
    %7025 = vmatprep.subr.bf16.mxu0 0
    %7026 = vmatpush1.bf16.msra.mxu0 0
    %7027 = vmatprep.subr.bf16.mxu0 0
    %7028 = vmatpush1.bf16.msra.mxu0 0
    %7029 = vmatprep.subr.bf16.mxu0 0
    %7030 = vmatpush1.bf16.msra.mxu0 0
    %7031 = vmatprep.subr.bf16.mxu0 0
    %7032 = vmatpush1.bf16.msra.mxu0 0
    %7033 = vmatprep.subr.bf16.mxu0 0
    %7034 = vmatpush1.bf16.msra.mxu0 0
    %7035 = vmatprep.mubr.bf16.mxu0 0
    %7036 = vmatmul.mubr.bf16.gmra.mrb[0].mxu0 %v6998
    %v7037 = vpop.f32.mrb[0].mxu0
    %v7038 = vadd.f32 0.0, %v7037
    %v7039 = vpop.f32.mrb[0].mxu0
    %v7040 = vpop.f32.mrb[0].mxu0
    %v7041 = vadd.f32 0.0, %v7040
    %v7042 = vpop.f32.mrb[0].mxu0
    %7043 = vdwg.mxu0
    %v7044 = vadd.f32 %v6993, %v7038
    %v7045 = vadd.f32 %v6993, %v7041
    %v7046 = vld [vmem:[#allocation10 + $0x5b0] sm:$0xff]
    %v7047 = vld [vmem:[#allocation10 + $0x5c0] sm:$0xff]
    %v7048 = vld [vmem:[#allocation10 + $0x5d0] sm:$0xff]
    %v7049 = vld [vmem:[#allocation10 + $0x5e0] sm:$0xff]
    %v7050 = vld [vmem:[#allocation10 + $0x5f0] sm:$0xff]
    %v7051 = vld [vmem:[#allocation10 + $0x600] sm:$0xff]
    %v7052 = vld [vmem:[#allocation10 + $0x610] sm:$0xff]
    %v7053 = vld [vmem:[#allocation10 + $0x620] sm:$0xff]
    %v7054 = vpack.c.bf16 %v6892, %v6891
    %v7055 = vpack.c.bf16 %v7047, %v7046
    %v7056 = vpack.c.bf16 %v7049, %v7048
    %v7057 = vpack.c.bf16 %v7051, %v7050
    %v7058 = vpack.c.bf16 %v7053, %v7052
    %v7060 = vsel %vm4002, %v7054, 0
    %7062 = vmatprep.subr.bf16.mxu0 0
    %7063 = vmatpush1.bf16.msra.mxu0 %v7055
    %7064 = vmatprep.subr.bf16.mxu0 0
    %7065 = vmatpush1.bf16.msra.mxu0 %v7056
    %7066 = vmatprep.subr.bf16.mxu0 0
    %7067 = vmatpush1.bf16.msra.mxu0 %v7057
    %7068 = vmatprep.subr.bf16.mxu0 0
    %7069 = vmatpush1.bf16.msra.mxu0 %v7058
    %7070 = vmatprep.subr.bf16.mxu0 0
    %7071 = vmatpush1.bf16.msra.mxu0 0
    %7072 = vmatprep.subr.bf16.mxu0 0
    %7073 = vmatpush1.bf16.msra.mxu0 0
    %7074 = vmatprep.subr.bf16.mxu0 0
    %7075 = vmatpush1.bf16.msra.mxu0 0
    %7076 = vmatprep.subr.bf16.mxu0 0
    %7077 = vmatpush1.bf16.msra.mxu0 0
    %7078 = vmatprep.subr.bf16.mxu0 0
    %7079 = vmatpush1.bf16.msra.mxu0 0
    %7080 = vmatprep.subr.bf16.mxu0 0
    %7081 = vmatpush1.bf16.msra.mxu0 0
    %7082 = vmatprep.subr.bf16.mxu0 0
    %7083 = vmatpush1.bf16.msra.mxu0 0
    %7084 = vmatprep.subr.bf16.mxu0 0
    %7085 = vmatpush1.bf16.msra.mxu0 0
    %7086 = vmatprep.subr.bf16.mxu0 0
    %7087 = vmatpush1.bf16.msra.mxu0 0
    %7088 = vmatprep.subr.bf16.mxu0 0
    %7089 = vmatpush1.bf16.msra.mxu0 0
    %7090 = vmatprep.subr.bf16.mxu0 0
    %7091 = vmatpush1.bf16.msra.mxu0 0
    %7092 = vmatprep.subr.bf16.mxu0 0
    %7093 = vmatpush1.bf16.msra.mxu0 0
    %7094 = vmatprep.mubr.bf16.mxu0 0
    %7095 = vmatmul.mubr.bf16.gmra.mrb[0].mxu0 %v7060
    %v7096 = vpop.f32.mrb[0].mxu0
    %v7097 = vadd.f32 0.0, %v7096
    %v7098 = vpop.f32.mrb[0].mxu0
    %v7099 = vpop.f32.mrb[0].mxu0
    %v7100 = vadd.f32 0.0, %v7099
    %v7101 = vpop.f32.mrb[0].mxu0
    %7102 = vdwg.mxu0
    %v7103 = vadd.f32 %v7044, %v7097
    %v7104 = vadd.f32 %v7045, %v7100
    %v7105 = vld [vmem:[#allocation10 + $0x630] sm:$0xff]
    %v7106 = vpack.c.bf16 %v6948, %v6945
    %v7107 = vpack.c.bf16 %v6956, %v6953
    %v7108 = vpack.c.bf16 %v6964, %v6961
    %v7109 = vpack.c.bf16 %v7105, %v7105
    %v7111 = vsel %vm574, %v7106, 0
    %v7114 = vsel %vm574, %v7107, 0
    %v7117 = vsel %vm574, %v7108, 0
    %v7120 = vsel %vm925, %v7109, 0
    %7122 = vmatprep.subr.bf16.mxu0 0
    %7123 = vmatpush1.bf16.msra.mxu0 %v7120
    %7124 = vmatprep.subr.bf16.mxu0 0
    %7125 = vmatpush1.bf16.msra.mxu0 0
    %7126 = vmatprep.subr.bf16.mxu0 0
    %7127 = vmatpush1.bf16.msra.mxu0 0
    %7128 = vmatprep.subr.bf16.mxu0 0
    %7129 = vmatpush1.bf16.msra.mxu0 0
    %7130 = vmatprep.subr.bf16.mxu0 0
    %7131 = vmatpush1.bf16.msra.mxu0 0
    %7132 = vmatprep.subr.bf16.mxu0 0
    %7133 = vmatpush1.bf16.msra.mxu0 0
    %7134 = vmatprep.subr.bf16.mxu0 0
    %7135 = vmatpush1.bf16.msra.mxu0 0
    %7136 = vmatprep.subr.bf16.mxu0 0
    %7137 = vmatpush1.bf16.msra.mxu0 0
    %7138 = vmatprep.subr.bf16.mxu0 0
    %7139 = vmatpush1.bf16.msra.mxu0 0
    %7140 = vmatprep.subr.bf16.mxu0 0
    %7141 = vmatpush1.bf16.msra.mxu0 0
    %7142 = vmatprep.subr.bf16.mxu0 0
    %7143 = vmatpush1.bf16.msra.mxu0 0
    %7144 = vmatprep.subr.bf16.mxu0 0
    %7145 = vmatpush1.bf16.msra.mxu0 0
    %7146 = vmatprep.subr.bf16.mxu0 0
    %7147 = vmatpush1.bf16.msra.mxu0 0
    %7148 = vmatprep.subr.bf16.mxu0 0
    %7149 = vmatpush1.bf16.msra.mxu0 0
    %7150 = vmatprep.subr.bf16.mxu0 0
    %7151 = vmatpush1.bf16.msra.mxu0 0
    %7152 = vmatprep.subr.bf16.mxu0 0
    %7153 = vmatpush1.bf16.msra.mxu0 0
    %7154 = vmatprep.mubr.bf16.mxu0 0
    %7155 = vmatmul.mubr.bf16.gmra.mrb[0].mxu0 %v7111
    %v7156 = vpop.f32.mrb[0].mxu0
    %v7157 = vadd.f32 0.0, %v7156
    %v7158 = vpop.f32.mrb[0].mxu0
    %v7159 = vpop.f32.mrb[0].mxu0
    %v7160 = vadd.f32 0.0, %v7159
    %v7161 = vpop.f32.mrb[0].mxu0
    %7162 = vmatprep.mubr.bf16.mxu0 0
    %7163 = vmatmul.mubr.bf16.gmra.mrb[0].mxu0 %v7114
    %v7164 = vpop.f32.mrb[0].mxu0
    %v7165 = vadd.f32 0.0, %v7164
    %v7166 = vpop.f32.mrb[0].mxu0
    %v7167 = vpop.f32.mrb[0].mxu0
    %v7168 = vadd.f32 0.0, %v7167
    %v7169 = vpop.f32.mrb[0].mxu0
    %7170 = vmatprep.mubr.bf16.mxu0 0
    %7171 = vmatmul.mubr.bf16.gmra.mrb[0].mxu0 %v7117
    %v7172 = vpop.f32.mrb[0].mxu0
    %v7173 = vadd.f32 0.0, %v7172
    %v7174 = vpop.f32.mrb[0].mxu0
    %v7175 = vpop.f32.mrb[0].mxu0
    %v7176 = vadd.f32 0.0, %v7175
    %v7177 = vpop.f32.mrb[0].mxu0
    %7178 = vdwg.mxu0
    %v7179 = vadd.f32 %v6532, %v7103
    %v7180 = vadd.f32 %v6533, %v7104
    %v7181 = vadd.f32 %v6566, %v7157
    %v7182 = vadd.f32 %v6567, %v7160
    %v7183 = vadd.f32 %v6568, %v7165
    %v7184 = vadd.f32 %v6569, %v7168
    %v7185 = vadd.f32 %v6570, %v7173
    %v7186 = vadd.f32 %v6571, %v7176
    %v7187 = vsel %vm1093, %v7179, 0.0
    %7188 = vadd.xlane.f32.xlu0 %v7187
    %v7189 = vpop.xlane.xlu0 %7188
    %v7190 = vsel %vm1093, %v7180, 0.0
    %7191 = vadd.xlane.f32.xlu0 %v7190
    %v7192 = vpop.xlane.xlu0 %7191
    %v7193 = vmul.f32 %v7189, %v3449
    %v7194 = vmul.f32 %v7192, %v3449
    %v7195 = vsub.f32 %v7179, %v7193
    %v7196 = vsub.f32 %v7180, %v7194
    %v7197 = vmul.f32 %v7195, %v7195
    %v7198 = vmul.f32 %v7196, %v7196
    %v7199 = vsel %vm1093, %v7197, 0.0
    %7200 = vadd.xlane.f32.xlu0 %v7199
    %v7201 = vpop.xlane.xlu0 %7200
    %v7202 = vsel %vm1093, %v7198, 0.0
    %7203 = vadd.xlane.f32.xlu0 %v7202
    %v7204 = vpop.xlane.xlu0 %7203
    %v7205 = vmul.f32 %v7201, %v3449
    %v7206 = vmul.f32 %v7204, %v3449
    %v7207 = vadd.f32 %v7205, 1e-05
    %v7208 = vadd.f32 %v7206, 1e-05
    %v7209 = vrsqrt.pop %v7207
    %v7210 = vrsqrt.pop %v7208
    %v7211 = vmul.f32 %v7195, %v7209
    %v7212 = vmul.f32 %v7196, %v7210
    %v7213 = vld [vmem:[#allocation10 + $0x670] ss:$0 sm:$0xff]
    %v7214 = vmul.f32 %v7211, %v7213
    %v7215 = vmul.f32 %v7212, %v7213
    %v7216 = vld [vmem:[#allocation10 + $0x660] ss:$0 sm:$0xff]
    %v7217 = vadd.f32 %v7214, %v7216
    %v7218 = vadd.f32 %v7215, %v7216
    %v7219 = vmul.f32 %v7181, %v7181
    %v7220 = vmul.f32 %v7182, %v7182
    %v7221 = vmul.f32 %v7183, %v7183
    %v7222 = vmul.f32 %v7184, %v7184
    %v7223 = vadd.f32 %v7219, %v7221
    %v7224 = vadd.f32 %v7220, %v7222
    %v7225 = vmul.f32 %v7185, %v7185
    %v7226 = vmul.f32 %v7186, %v7186
    %v7227 = vadd.f32 %v7223, %v7225
    %v7228 = vadd.f32 %v7224, %v7226
    %v7229 = vmax.f32 %v7227, 1e-08
    %v7230 = vmax.f32 %v7228, 1e-08
    %v7231 = vsel %vm397, %v7229, 0.0
    %7232 = vadd.xlane.f32.xlu0 %v7231
    %v7233 = vpop.xlane.xlu0 %7232
    %v7234 = vsel %vm397, %v7230, 0.0
    %7235 = vadd.xlane.f32.xlu0 %v7234
    %v7236 = vpop.xlane.xlu0 %7235
    %v7237 = vmul.f32 %v7233, %v3494
    %v7238 = vmul.f32 %v7236, %v3494
    %v7239 = vrsqrt.pop %v7237
    %v7240 = vrsqrt.pop %v7238
    %7242 = vset.pattern.permute.xlu0 0
    %7243 = vperm.xlu0 %7242, %v7239
    %v7244 = vpop.permute.xlu0 %7243
    %7247 = vset.pattern.permute.xlu0 0
    %7248 = vperm.xlu0 %7247, %v7240
    %v7249 = vpop.permute.xlu0 %7248
    %v7251 = vmul.f32 %v7181, %v7244
    %v7252 = vmul.f32 %v7182, %v7249
    %v7253 = vmul.f32 %v7183, %v7244
    %v7254 = vmul.f32 %v7184, %v7249
    %v7255 = vmul.f32 %v7185, %v7244
    %v7256 = vmul.f32 %v7186, %v7249
    %v7257 = vsel %vm1093, %v7217, 0.0
    %7258 = vadd.xlane.f32.xlu0 %v7257
    %v7259 = vpop.xlane.xlu0 %7258
    %v7260 = vsel %vm1093, %v7218, 0.0
    %7261 = vadd.xlane.f32.xlu0 %v7260
    %v7262 = vpop.xlane.xlu0 %7261
    %v7263 = vmul.f32 %v7259, %v3449
    %v7264 = vmul.f32 %v7262, %v3449
    %v7265 = vsub.f32 %v7217, %v7263
    %v7266 = vsub.f32 %v7218, %v7264
    %v7267 = vmul.f32 %v7265, %v7265
    %v7268 = vmul.f32 %v7266, %v7266
    %v7269 = vsel %vm1093, %v7267, 0.0
    %7270 = vadd.xlane.f32.xlu0 %v7269
    %v7271 = vpop.xlane.xlu0 %7270
    %v7272 = vsel %vm1093, %v7268, 0.0
    %7273 = vadd.xlane.f32.xlu0 %v7272
    %v7274 = vpop.xlane.xlu0 %7273
    %v7275 = vmul.f32 %v7271, %v3449
    %v7276 = vmul.f32 %v7274, %v3449
    %v7277 = vadd.f32 %v7275, 1e-05
    %v7278 = vadd.f32 %v7276, 1e-05
    %v7279 = vrsqrt.pop %v7277
    %v7280 = vrsqrt.pop %v7278
    %v7281 = vmul.f32 %v7265, %v7279
    %v7282 = vmul.f32 %v7266, %v7280
    %v7283 = vld [vmem:[#allocation10 + $0x8c0] ss:$0 sm:$0xff]
    %v7284 = vmul.f32 %v7281, %v7283
    %v7285 = vmul.f32 %v7282, %v7283
    %v7286 = vld [vmem:[#allocation10 + $0x8b0] ss:$0 sm:$0xff]
    %v7287 = vadd.f32 %v7284, %v7286
    %v7288 = vadd.f32 %v7285, %v7286
    %v7289 = vmul.f32 %v7251, %v7251
    %v7290 = vmul.f32 %v7252, %v7252
    %v7291 = vmul.f32 %v7253, %v7253
    %v7292 = vmul.f32 %v7254, %v7254
    %v7293 = vadd.f32 %v7289, %v7291
    %v7294 = vadd.f32 %v7290, %v7292
    %v7295 = vmul.f32 %v7255, %v7255
    %v7296 = vmul.f32 %v7256, %v7256
    %v7297 = vadd.f32 %v7293, %v7295
    %v7298 = vadd.f32 %v7294, %v7296
    %v7299 = vmax.f32 %v7297, 1e-08
    %v7300 = vmax.f32 %v7298, 1e-08
    %v7301 = vsel %vm397, %v7299, 0.0
    %7302 = vadd.xlane.f32.xlu0 %v7301
    %v7303 = vpop.xlane.xlu0 %7302
    %v7304 = vsel %vm397, %v7300, 0.0
    %7305 = vadd.xlane.f32.xlu0 %v7304
    %v7306 = vpop.xlane.xlu0 %7305
    %v7307 = vmul.f32 %v7303, %v3494
    %v7308 = vmul.f32 %v7306, %v3494
    %v7309 = vrsqrt.pop %v7307
    %v7310 = vrsqrt.pop %v7308
    %7312 = vset.pattern.permute.xlu0 0
    %7313 = vperm.xlu0 %7312, %v7309
    %v7314 = vpop.permute.xlu0 %7313
    %7317 = vset.pattern.permute.xlu0 0
    %7318 = vperm.xlu0 %7317, %v7310
    %v7319 = vpop.permute.xlu0 %7318
    %v7321 = vmul.f32 %v7251, %v7314
    %v7322 = vmul.f32 %v7252, %v7319
    %v7323 = vmul.f32 %v7253, %v7314
    %v7324 = vmul.f32 %v7254, %v7319
    %v7325 = vmul.f32 %v7255, %v7314
    %v7326 = vmul.f32 %v7256, %v7319
    %v7327 = vld [vmem:[#allocation10 + $0x6c0] sm:$0xf]
    %v7328 = vpack.c.bf16 %v7322, %v7321
    %v7329 = vpack.c.bf16 %v7324, %v7323
    %v7330 = vpack.c.bf16 %v7326, %v7325
    %v7331 = vpack.c.bf16 %v7327, %v7327
    %v7333 = vsel %vm397, %v7328, 0
    %v7336 = vsel %vm397, %v7329, 0
    %v7339 = vsel %vm397, %v7330, 0
    %v7342 = vsel %vm304, %v7331, 0
    %7344 = vmatprep.subr.bf16.mxu0 0
    %7345 = vmatpush1.bf16.msra.mxu0 %v7342
    %7346 = vmatprep.subr.bf16.mxu0 0
    %7347 = vmatpush1.bf16.msra.mxu0 0
    %7348 = vmatprep.subr.bf16.mxu0 0
    %7349 = vmatpush1.bf16.msra.mxu0 0
    %7350 = vmatprep.subr.bf16.mxu0 0
    %7351 = vmatpush1.bf16.msra.mxu0 0
    %7352 = vmatprep.subr.bf16.mxu0 0
    %7353 = vmatpush1.bf16.msra.mxu0 0
    %7354 = vmatprep.subr.bf16.mxu0 0
    %7355 = vmatpush1.bf16.msra.mxu0 0
    %7356 = vmatprep.subr.bf16.mxu0 0
    %7357 = vmatpush1.bf16.msra.mxu0 0
    %7358 = vmatprep.subr.bf16.mxu0 0
    %7359 = vmatpush1.bf16.msra.mxu0 0
    %7360 = vmatprep.subr.bf16.mxu0 0
    %7361 = vmatpush1.bf16.msra.mxu0 0
    %7362 = vmatprep.subr.bf16.mxu0 0
    %7363 = vmatpush1.bf16.msra.mxu0 0
    %7364 = vmatprep.subr.bf16.mxu0 0
    %7365 = vmatpush1.bf16.msra.mxu0 0
    %7366 = vmatprep.subr.bf16.mxu0 0
    %7367 = vmatpush1.bf16.msra.mxu0 0
    %7368 = vmatprep.subr.bf16.mxu0 0
    %7369 = vmatpush1.bf16.msra.mxu0 0
    %7370 = vmatprep.subr.bf16.mxu0 0
    %7371 = vmatpush1.bf16.msra.mxu0 0
    %7372 = vmatprep.subr.bf16.mxu0 0
    %7373 = vmatpush1.bf16.msra.mxu0 0
    %7374 = vmatprep.subr.bf16.mxu0 0
    %7375 = vmatpush1.bf16.msra.mxu0 0
    %7376 = vmatprep.mubr.bf16.mxu0 0
    %7377 = vmatmul.mubr.bf16.gmra.mrb[0].mxu0 %v7333
    %v7378 = vpop.f32.mrb[0].mxu0
    %v7379 = vadd.f32 0.0, %v7378
    %v7380 = vpop.f32.mrb[0].mxu0
    %v7381 = vpop.f32.mrb[0].mxu0
    %v7382 = vadd.f32 0.0, %v7381
    %v7383 = vpop.f32.mrb[0].mxu0
    %7384 = vmatprep.mubr.bf16.mxu0 0
    %7385 = vmatmul.mubr.bf16.gmra.mrb[0].mxu0 %v7336
    %v7386 = vpop.f32.mrb[0].mxu0
    %v7387 = vadd.f32 0.0, %v7386
    %v7388 = vpop.f32.mrb[0].mxu0
    %v7389 = vpop.f32.mrb[0].mxu0
    %v7390 = vadd.f32 0.0, %v7389
    %v7391 = vpop.f32.mrb[0].mxu0
    %7392 = vmatprep.mubr.bf16.mxu0 0
    %7393 = vmatmul.mubr.bf16.gmra.mrb[0].mxu0 %v7339
    %v7394 = vpop.f32.mrb[0].mxu0
    %v7395 = vadd.f32 0.0, %v7394
    %v7396 = vpop.f32.mrb[0].mxu0
    %v7397 = vpop.f32.mrb[0].mxu0
    %v7398 = vadd.f32 0.0, %v7397
    %v7399 = vpop.f32.mrb[0].mxu0
    %7400 = vdwg.mxu0
    %v7401 = vmul.f32 %v7379, %v7379
    %v7402 = vmul.f32 %v7382, %v7382
    %v7403 = vmul.f32 %v7387, %v7387
    %v7404 = vmul.f32 %v7390, %v7390
    %v7405 = vadd.f32 %v7401, %v7403
    %v7406 = vadd.f32 %v7402, %v7404
    %v7407 = vmul.f32 %v7395, %v7395
    %v7408 = vmul.f32 %v7398, %v7398
    %v7409 = vadd.f32 %v7405, %v7407
    %v7410 = vadd.f32 %v7406, %v7408
    %v7411 = vmax.f32 %v7409, 1e-08
    %v7412 = vmax.f32 %v7410, 1e-08
    %v7413 = vrsqrt.pop %v7411
    %v7414 = vmul.f32 %v7411, %v7413
    %vm7415 = vcmp.eq.f32.partialorder %v7411, inf
    %v7416 = vsel %vm7415, %v7411, %v7414
    %vm7417 = vcmp.eq.f32.partialorder %v7411, 0.0
    %v7418 = vand.u32 %v7411, 2147483648
    %v7419 = vsel %vm7417, %v7418, %v7416
    %v7420 = vrsqrt.pop %v7412
    %v7421 = vmul.f32 %v7412, %v7420
    %vm7422 = vcmp.eq.f32.partialorder %v7412, inf
    %v7423 = vsel %vm7422, %v7412, %v7421
    %vm7424 = vcmp.eq.f32.partialorder %v7412, 0.0
    %v7425 = vand.u32 %v7412, 2147483648
    %v7426 = vsel %vm7424, %v7425, %v7423
    %v7427 = vld [vmem:[#allocation10 + $0x6d0] ss:$0 sm:$0xff]
    %v7428 = vld [vmem:[#allocation10 + $0x6e0] sm:$0xf]
    %v7429 = vpack.c.bf16 %v7426, %v7419
    %v7430 = vpack.c.bf16 %v7428, %v7428
    %v7432 = vsel %vm397, %v7429, 0
    %v7435 = vsel %vm304, %v7430, 0
    %7437 = vmatprep.subr.bf16.mxu0 0
    %7438 = vmatpush1.bf16.msra.mxu0 %v7435
    %7439 = vmatprep.subr.bf16.mxu0 0
    %7440 = vmatpush1.bf16.msra.mxu0 0
    %7441 = vmatprep.subr.bf16.mxu0 0
    %7442 = vmatpush1.bf16.msra.mxu0 0
    %7443 = vmatprep.subr.bf16.mxu0 0
    %7444 = vmatpush1.bf16.msra.mxu0 0
    %7445 = vmatprep.subr.bf16.mxu0 0
    %7446 = vmatpush1.bf16.msra.mxu0 0
    %7447 = vmatprep.subr.bf16.mxu0 0
    %7448 = vmatpush1.bf16.msra.mxu0 0
    %7449 = vmatprep.subr.bf16.mxu0 0
    %7450 = vmatpush1.bf16.msra.mxu0 0
    %7451 = vmatprep.subr.bf16.mxu0 0
    %7452 = vmatpush1.bf16.msra.mxu0 0
    %7453 = vmatprep.subr.bf16.mxu0 0
    %7454 = vmatpush1.bf16.msra.mxu0 0
    %7455 = vmatprep.subr.bf16.mxu0 0
    %7456 = vmatpush1.bf16.msra.mxu0 0
    %7457 = vmatprep.subr.bf16.mxu0 0
    %7458 = vmatpush1.bf16.msra.mxu0 0
    %7459 = vmatprep.subr.bf16.mxu0 0
    %7460 = vmatpush1.bf16.msra.mxu0 0
    %7461 = vmatprep.subr.bf16.mxu0 0
    %7462 = vmatpush1.bf16.msra.mxu0 0
    %7463 = vmatprep.subr.bf16.mxu0 0
    %7464 = vmatpush1.bf16.msra.mxu0 0
    %7465 = vmatprep.subr.bf16.mxu0 0
    %7466 = vmatpush1.bf16.msra.mxu0 0
    %7467 = vmatprep.subr.bf16.mxu0 0
    %7468 = vmatpush1.bf16.msra.mxu0 0
    %7469 = vmatprep.mubr.bf16.mxu0 0
    %7470 = vmatmul.mubr.bf16.gmra.mrb[0].mxu0 %v7432
    %v7471 = vpop.f32.mrb[0].mxu0
    %v7472 = vadd.f32 0.0, %v7471
    %v7473 = vpop.f32.mrb[0].mxu0
    %v7474 = vpop.f32.mrb[0].mxu0
    %v7475 = vadd.f32 0.0, %v7474
    %v7476 = vpop.f32.mrb[0].mxu0
    %7477 = vdwg.mxu0
    %v7478 = vadd.f32 %v7427, %v7472
    %v7479 = vadd.f32 %v7427, %v7475
    %v7480 = vld [vmem:[#allocation10 + $0x6f0] sm:$0xff]
    %v7481 = vld [vmem:[#allocation10 + $0x700] sm:$0xff]
    %v7482 = vpack.c.bf16 %v7288, %v7287
    %v7483 = vpack.c.bf16 %v7481, %v7480
    %v7485 = vsel %vm1093, %v7482, 0
    %7487 = vmatprep.subr.bf16.mxu0 0
    %7488 = vmatpush1.bf16.msra.mxu0 %v7483
    %7489 = vmatprep.subr.bf16.mxu0 0
    %7490 = vmatpush1.bf16.msra.mxu0 0
    %7491 = vmatprep.subr.bf16.mxu0 0
    %7492 = vmatpush1.bf16.msra.mxu0 0
    %7493 = vmatprep.subr.bf16.mxu0 0
    %7494 = vmatpush1.bf16.msra.mxu0 0
    %7495 = vmatprep.subr.bf16.mxu0 0
    %7496 = vmatpush1.bf16.msra.mxu0 0
    %7497 = vmatprep.subr.bf16.mxu0 0
    %7498 = vmatpush1.bf16.msra.mxu0 0
    %7499 = vmatprep.subr.bf16.mxu0 0
    %7500 = vmatpush1.bf16.msra.mxu0 0
    %7501 = vmatprep.subr.bf16.mxu0 0
    %7502 = vmatpush1.bf16.msra.mxu0 0
    %7503 = vmatprep.subr.bf16.mxu0 0
    %7504 = vmatpush1.bf16.msra.mxu0 0
    %7505 = vmatprep.subr.bf16.mxu0 0
    %7506 = vmatpush1.bf16.msra.mxu0 0
    %7507 = vmatprep.subr.bf16.mxu0 0
    %7508 = vmatpush1.bf16.msra.mxu0 0
    %7509 = vmatprep.subr.bf16.mxu0 0
    %7510 = vmatpush1.bf16.msra.mxu0 0
    %7511 = vmatprep.subr.bf16.mxu0 0
    %7512 = vmatpush1.bf16.msra.mxu0 0
    %7513 = vmatprep.subr.bf16.mxu0 0
    %7514 = vmatpush1.bf16.msra.mxu0 0
    %7515 = vmatprep.subr.bf16.mxu0 0
    %7516 = vmatpush1.bf16.msra.mxu0 0
    %7517 = vmatprep.subr.bf16.mxu0 0
    %7518 = vmatpush1.bf16.msra.mxu0 0
    %7519 = vmatprep.mubr.bf16.mxu0 0
    %7520 = vmatmul.mubr.bf16.gmra.mrb[0].mxu0 %v7485
    %v7521 = vpop.f32.mrb[0].mxu0
    %v7522 = vadd.f32 0.0, %v7521
    %v7523 = vpop.f32.mrb[0].mxu0
    %v7524 = vpop.f32.mrb[0].mxu0
    %v7525 = vadd.f32 0.0, %v7524
    %v7526 = vpop.f32.mrb[0].mxu0
    %7527 = vdwg.mxu0
    %v7528 = vadd.f32 %v7478, %v7522
    %v7529 = vadd.f32 %v7479, %v7525
    %v7530 = vld [vmem:[#allocation8] sm:$0xf]
    %v7531 = vpack.c.bf16 %v7529, %v7528
    %v7532 = vpack.c.bf16 %v7530, %v7530
    %v7534 = vsel %vm397, %v7531, 0
    %v7537 = vsel %vm304, %v7532, 0
    %7539 = vmatprep.subr.bf16.mxu0 0
    %7540 = vmatpush1.bf16.msra.mxu0 %v7537
    %7541 = vmatprep.subr.bf16.mxu0 0
    %7542 = vmatpush1.bf16.msra.mxu0 0
    %7543 = vmatprep.subr.bf16.mxu0 0
    %7544 = vmatpush1.bf16.msra.mxu0 0
    %7545 = vmatprep.subr.bf16.mxu0 0
    %7546 = vmatpush1.bf16.msra.mxu0 0
    %7547 = vmatprep.subr.bf16.mxu0 0
    %7548 = vmatpush1.bf16.msra.mxu0 0
    %7549 = vmatprep.subr.bf16.mxu0 0
    %7550 = vmatpush1.bf16.msra.mxu0 0
    %7551 = vmatprep.subr.bf16.mxu0 0
    %7552 = vmatpush1.bf16.msra.mxu0 0
    %7553 = vmatprep.subr.bf16.mxu0 0
    %7554 = vmatpush1.bf16.msra.mxu0 0
    %7555 = vmatprep.subr.bf16.mxu0 0
    %7556 = vmatpush1.bf16.msra.mxu0 0
    %7557 = vmatprep.subr.bf16.mxu0 0
    %7558 = vmatpush1.bf16.msra.mxu0 0
    %7559 = vmatprep.subr.bf16.mxu0 0
    %7560 = vmatpush1.bf16.msra.mxu0 0
    %7561 = vmatprep.subr.bf16.mxu0 0
    %7562 = vmatpush1.bf16.msra.mxu0 0
    %7563 = vmatprep.subr.bf16.mxu0 0
    %7564 = vmatpush1.bf16.msra.mxu0 0
    %7565 = vmatprep.subr.bf16.mxu0 0
    %7566 = vmatpush1.bf16.msra.mxu0 0
    %7567 = vmatprep.subr.bf16.mxu0 0
    %7568 = vmatpush1.bf16.msra.mxu0 0
    %7569 = vmatprep.subr.bf16.mxu0 0
    %7570 = vmatpush1.bf16.msra.mxu0 0
    %7571 = vmatprep.mubr.bf16.mxu0 0
    %7572 = vmatmul.mubr.bf16.gmra.mrb[0].mxu0 %v7534
    %v7573 = vpop.f32.mrb[0].mxu0
    %v7574 = vadd.f32 0.0, %v7573
    %v7575 = vpop.f32.mrb[0].mxu0
    %v7576 = vpop.f32.mrb[0].mxu0
    %v7577 = vadd.f32 0.0, %v7576
    %v7578 = vpop.f32.mrb[0].mxu0
    %7579 = vdwg.mxu0
    %v7580 = vld [vmem:[#allocation7] sm:$0xff]
    %v7581 = vld [vmem:[#allocation7 + $0x8] sm:$0xff]
    %v7582 = vmul.f32 %v7574, %v7580
    %v7583 = vmul.f32 %v7577, %v7581
    %v7584 = vpack.c.bf16 %v7583, %v7582
    %v7586 = vsel %vm1093, %v190, 0
    %7588 = vmatprep.subr.bf16.mxu0 0
    %7589 = vmatpush1.bf16.msra.mxu0 %v7584
    %7590 = vmatprep.subr.bf16.mxu0 0
    %7591 = vmatpush1.bf16.msra.mxu0 0
    %7592 = vmatprep.subr.bf16.mxu0 0
    %7593 = vmatpush1.bf16.msra.mxu0 0
    %7594 = vmatprep.subr.bf16.mxu0 0
    %7595 = vmatpush1.bf16.msra.mxu0 0
    %7596 = vmatprep.subr.bf16.mxu0 0
    %7597 = vmatpush1.bf16.msra.mxu0 0
    %7598 = vmatprep.subr.bf16.mxu0 0
    %7599 = vmatpush1.bf16.msra.mxu0 0
    %7600 = vmatprep.subr.bf16.mxu0 0
    %7601 = vmatpush1.bf16.msra.mxu0 0
    %7602 = vmatprep.subr.bf16.mxu0 0
    %7603 = vmatpush1.bf16.msra.mxu0 0
    %7604 = vmatprep.subr.bf16.mxu0 0
    %7605 = vmatpush1.bf16.msra.mxu0 0
    %7606 = vmatprep.subr.bf16.mxu0 0
    %7607 = vmatpush1.bf16.msra.mxu0 0
    %7608 = vmatprep.subr.bf16.mxu0 0
    %7609 = vmatpush1.bf16.msra.mxu0 0
    %7610 = vmatprep.subr.bf16.mxu0 0
    %7611 = vmatpush1.bf16.msra.mxu0 0
    %7612 = vmatprep.subr.bf16.mxu0 0
    %7613 = vmatpush1.bf16.msra.mxu0 0
    %7614 = vmatprep.subr.bf16.mxu0 0
    %7615 = vmatpush1.bf16.msra.mxu0 0
    %7616 = vmatprep.subr.bf16.mxu0 0
    %7617 = vmatpush1.bf16.msra.mxu0 0
    %7618 = vmatprep.subr.bf16.mxu0 0
    %7619 = vmatpush1.bf16.msra.mxu0 0
    %7620 = vmatprep.mubr.bf16.mxu0 0
    %7621 = vmatmul.mubr.bf16.gmra.mrb[0].mxu0 %v7586
    %v7622 = vpop.f32.mrb[0].mxu0
    %v7623 = vadd.f32 0.0, %v7622
    %v7624 = vpop.f32.mrb[0].mxu0
    %v7625 = vpop.f32.mrb[0].mxu0
    %v7626 = vpop.f32.mrb[0].mxu0
    %7627 = vdwg.mxu0
    %v7628 = vld [vmem:[#allocation10 + $0x720] sm:$0xff]
    %v7629 = vld [vmem:[#allocation10 + $0x728] sm:$0xff]
    %v7630 = vld [vmem:[#allocation10 + $0x730] sm:$0xff]
    %v7631 = vld [vmem:[#allocation10 + $0x738] sm:$0xff]
    %v7632 = vld [vmem:[#allocation10 + $0x740] sm:$0xff]
    %v7633 = vld [vmem:[#allocation10 + $0x748] sm:$0xff]
    %v7634 = vld [vmem:[#allocation10 + $0x750] sm:$0xff]
    %v7635 = vld [vmem:[#allocation10 + $0x758] sm:$0xff]
    %v7636 = vpack.c.bf16 %v7623, %v7623
    %v7637 = vpack.c.bf16 %v7630, %v7628
    %v7638 = vpack.c.bf16 %v7631, %v7629
    %v7639 = vpack.c.bf16 %v7634, %v7632
    %v7640 = vpack.c.bf16 %v7635, %v7633
    %s7641 = scalar_lea.vmem [#allocation10], 1808
    %v7642 = vld [vmem:[%s7641] ss:$8 sm:$0x3]
    %v7644 = vlaneseq
    %v7645 = vshrl.u32 %v7644, 7
    %v7646 = vsub.s32 0, %v7645
    %v7647 = vrot.slane %v7642, %v7646
    %v7648 = vlaneseq
    %v7649 = vshrl.u32 %v7648, 7
    %v7650 = vsub.s32 1, %v7649
    %v7651 = vrot.slane %v7642, %v7650
    %v7655 = vsel %vm172, %v7636, 0
    %7657 = vmatprep.subr.bf16.mxu0 %v7638
    %7658 = vmatpush1.bf16.msra.mxu0 %v7637
    %7659 = vmatprep.subr.bf16.mxu0 %v7640
    %7660 = vmatpush1.bf16.msra.mxu0 %v7639
    %7661 = vmatprep.subr.bf16.mxu0 0
    %7662 = vmatpush1.bf16.msra.mxu0 0
    %7663 = vmatprep.subr.bf16.mxu0 0
    %7664 = vmatpush1.bf16.msra.mxu0 0
    %7665 = vmatprep.subr.bf16.mxu0 0
    %7666 = vmatpush1.bf16.msra.mxu0 0
    %7667 = vmatprep.subr.bf16.mxu0 0
    %7668 = vmatpush1.bf16.msra.mxu0 0
    %7669 = vmatprep.subr.bf16.mxu0 0
    %7670 = vmatpush1.bf16.msra.mxu0 0
    %7671 = vmatprep.subr.bf16.mxu0 0
    %7672 = vmatpush1.bf16.msra.mxu0 0
    %7673 = vmatprep.subr.bf16.mxu0 0
    %7674 = vmatpush1.bf16.msra.mxu0 0
    %7675 = vmatprep.subr.bf16.mxu0 0
    %7676 = vmatpush1.bf16.msra.mxu0 0
    %7677 = vmatprep.subr.bf16.mxu0 0
    %7678 = vmatpush1.bf16.msra.mxu0 0
    %7679 = vmatprep.subr.bf16.mxu0 0
    %7680 = vmatpush1.bf16.msra.mxu0 0
    %7681 = vmatprep.subr.bf16.mxu0 0
    %7682 = vmatpush1.bf16.msra.mxu0 0
    %7683 = vmatprep.subr.bf16.mxu0 0
    %7684 = vmatpush1.bf16.msra.mxu0 0
    %7685 = vmatprep.subr.bf16.mxu0 0
    %7686 = vmatpush1.bf16.msra.mxu0 0
    %7687 = vmatprep.subr.bf16.mxu0 0
    %7688 = vmatpush1.bf16.msra.mxu0 0
    %7689 = vmatprep.mubr.bf16.mxu0 0
    %7690 = vmatmul.mubr.bf16.gmra.mrb[0].mxu0 %v7655
    %v7691 = vpop.f32.mrb[0].mxu0
    %v7692 = vadd.f32 %v7647, %v7691
    %v7693 = vpop.f32.mrb[0].mxu0
    %v7694 = vadd.f32 %v7651, %v7693
    %v7695 = vpop.f32.mrb[0].mxu0
    %v7696 = vpop.f32.mrb[0].mxu0
    %7697 = vdwg.mxu0
    %v7698 = vmax.f32 %v7692, 0.0
    %v7699 = vmax.f32 %v7694, 0.0
    %v7700 = vld [vmem:[#allocation10 + $0x770] sm:$0xff]
    %v7701 = vld [vmem:[#allocation10 + $0x778] sm:$0xff]
    %v7702 = vld [vmem:[#allocation10 + $0x780] sm:$0xff]
    %v7703 = vld [vmem:[#allocation10 + $0x788] sm:$0xff]
    %v7704 = vld [vmem:[#allocation10 + $0x790] sm:$0xff]
    %v7705 = vld [vmem:[#allocation10 + $0x798] sm:$0xff]
    %v7706 = vld [vmem:[#allocation10 + $0x7a0] sm:$0xff]
    %v7707 = vld [vmem:[#allocation10 + $0x7a8] sm:$0xff]
    %v7708 = vld [vmem:[#allocation10 + $0x7b0] sm:$0xff]
    %v7709 = vld [vmem:[#allocation10 + $0x7b8] sm:$0xff]
    %v7710 = vld [vmem:[#allocation10 + $0x7c0] sm:$0xff]
    %v7711 = vld [vmem:[#allocation10 + $0x7c8] sm:$0xff]
    %v7712 = vld [vmem:[#allocation10 + $0x7d0] sm:$0xff]
    %v7713 = vld [vmem:[#allocation10 + $0x7d8] sm:$0xff]
    %v7714 = vld [vmem:[#allocation10 + $0x7e0] sm:$0xff]
    %v7715 = vld [vmem:[#allocation10 + $0x7e8] sm:$0xff]
    %v7716 = vld [vmem:[#allocation10 + $0x7f0] sm:$0xff]
    %v7717 = vld [vmem:[#allocation10 + $0x7f8] sm:$0xff]
    %v7718 = vld [vmem:[#allocation10 + $0x800] sm:$0xff]
    %v7719 = vld [vmem:[#allocation10 + $0x808] sm:$0xff]
    %v7720 = vld [vmem:[#allocation10 + $0x810] sm:$0xff]
    %v7721 = vld [vmem:[#allocation10 + $0x818] sm:$0xff]
    %v7722 = vld [vmem:[#allocation10 + $0x820] sm:$0xff]
    %v7723 = vld [vmem:[#allocation10 + $0x828] sm:$0xff]
    %v7724 = vld [vmem:[#allocation10 + $0x830] sm:$0xff]
    %v7725 = vld [vmem:[#allocation10 + $0x838] sm:$0xff]
    %v7726 = vld [vmem:[#allocation10 + $0x840] sm:$0xff]
    %v7727 = vld [vmem:[#allocation10 + $0x848] sm:$0xff]
    %v7728 = vld [vmem:[#allocation10 + $0x850] sm:$0xff]
    %v7729 = vld [vmem:[#allocation10 + $0x858] sm:$0xff]
    %v7730 = vld [vmem:[#allocation10 + $0x860] sm:$0xff]
    %v7731 = vld [vmem:[#allocation10 + $0x868] sm:$0xff]
    %v7732 = vld [vmem:[#allocation10 + $0x870] sm:$0xff]
    %v7733 = vld [vmem:[#allocation10 + $0x878] sm:$0xff]
    %v7734 = vld [vmem:[#allocation10 + $0x880] sm:$0xff]
    %v7735 = vld [vmem:[#allocation10 + $0x888] sm:$0xff]
    %v7736 = vld [vmem:[#allocation10 + $0x890] sm:$0xff]
    %v7737 = vld [vmem:[#allocation10 + $0x898] sm:$0xff]
    %v7738 = vld [vmem:[#allocation10 + $0x8a0] sm:$0xff]
    %v7739 = vld [vmem:[#allocation10 + $0x8a8] sm:$0xff]
    %v7740 = vpack.c.bf16 %v7698, %v7698
    %v7741 = vpack.c.bf16 %v7699, %v7699
    %v7742 = vpack.c.bf16 %v7702, %v7700
    %v7743 = vpack.c.bf16 %v7703, %v7701
    %v7744 = vpack.c.bf16 %v7706, %v7704
    %v7745 = vpack.c.bf16 %v7707, %v7705
    %v7746 = vpack.c.bf16 %v7710, %v7708
    %v7747 = vpack.c.bf16 %v7711, %v7709
    %v7748 = vpack.c.bf16 %v7714, %v7712
    %v7749 = vpack.c.bf16 %v7715, %v7713
    %v7750 = vpack.c.bf16 %v7718, %v7716
    %v7751 = vpack.c.bf16 %v7719, %v7717
    %v7752 = vpack.c.bf16 %v7722, %v7720
    %v7753 = vpack.c.bf16 %v7723, %v7721
    %v7754 = vpack.c.bf16 %v7726, %v7724
    %v7755 = vpack.c.bf16 %v7727, %v7725
    %v7756 = vpack.c.bf16 %v7730, %v7728
    %v7757 = vpack.c.bf16 %v7731, %v7729
    %v7758 = vpack.c.bf16 %v7734, %v7732
    %v7759 = vpack.c.bf16 %v7735, %v7733
    %v7760 = vpack.c.bf16 %v7738, %v7736
    %v7761 = vpack.c.bf16 %v7739, %v7737
    %s7762 = scalar_lea.vmem [#allocation10], 1888
    %v7763 = vld [vmem:[%s7762] ss:$8 sm:$0x3]
    %v7765 = vlaneseq
    %v7766 = vshrl.u32 %v7765, 7
    %v7767 = vsub.s32 0, %v7766
    %v7768 = vrot.slane %v7763, %v7767
    %v7769 = vlaneseq
    %v7770 = vshrl.u32 %v7769, 7
    %v7771 = vsub.s32 1, %v7770
    %v7772 = vrot.slane %v7763, %v7771
    %v7776 = vsel %vm172, %v7741, 0
    %7778 = vmatprep.subr.bf16.mxu0 %v7743
    %7779 = vmatpush1.bf16.msra.mxu0 %v7742
    %7780 = vmatprep.subr.bf16.mxu0 %v7745
    %7781 = vmatpush1.bf16.msra.mxu0 %v7744
    %7782 = vmatprep.subr.bf16.mxu0 %v7747
    %7783 = vmatpush1.bf16.msra.mxu0 %v7746
    %7784 = vmatprep.subr.bf16.mxu0 %v7749
    %7785 = vmatpush1.bf16.msra.mxu0 %v7748
    %7786 = vmatprep.subr.bf16.mxu0 %v7751
    %7787 = vmatpush1.bf16.msra.mxu0 %v7750
    %7788 = vmatprep.subr.bf16.mxu0 %v7753
    %7789 = vmatpush1.bf16.msra.mxu0 %v7752
    %7790 = vmatprep.subr.bf16.mxu0 %v7755
    %7791 = vmatpush1.bf16.msra.mxu0 %v7754
    %7792 = vmatprep.subr.bf16.mxu0 %v7757
    %7793 = vmatpush1.bf16.msra.mxu0 %v7756
    %7794 = vmatprep.subr.bf16.mxu0 %v7759
    %7795 = vmatpush1.bf16.msra.mxu0 %v7758
    %7796 = vmatprep.subr.bf16.mxu0 %v7761
    %7797 = vmatpush1.bf16.msra.mxu0 %v7760
    %7798 = vmatprep.subr.bf16.mxu0 0
    %7799 = vmatpush1.bf16.msra.mxu0 0
    %7800 = vmatprep.subr.bf16.mxu0 0
    %7801 = vmatpush1.bf16.msra.mxu0 0
    %7802 = vmatprep.subr.bf16.mxu0 0
    %7803 = vmatpush1.bf16.msra.mxu0 0
    %7804 = vmatprep.subr.bf16.mxu0 0
    %7805 = vmatpush1.bf16.msra.mxu0 0
    %7806 = vmatprep.subr.bf16.mxu0 0
    %7807 = vmatpush1.bf16.msra.mxu0 0
    %7808 = vmatprep.subr.bf16.mxu0 0
    %7809 = vmatpush1.bf16.msra.mxu0 0
    %7810 = vmatprep.mubr.bf16.mxu0 %v7776
    %7811 = vmatmul.mubr.bf16.gmra.mrb[0].mxu0 %v7740
    %v7812 = vpop.f32.mrb[0].mxu0
    %v7813 = vadd.f32 %v7768, %v7812
    %v7814 = vpop.f32.mrb[0].mxu0
    %v7815 = vadd.f32 %v7772, %v7814
    %v7816 = vpop.f32.mrb[0].mxu0
    %v7817 = vpop.f32.mrb[0].mxu0
    %7818 = vdwg.mxu0
    %v7821 = vcombine.low %v7813, %v7815
    %v7823 = vunpack.c.l.s4 1983009808
    %v7824 = vunpack.c.0.s8 %v7823
    %v7825 = vlaneseq
    %v7826 = vshrl.u32 %v7825, 7
    %v7827 = vsub.s32 %v7824, %v7826
    %v7828 = vrot.slane %v7821, %v7827
    %vm7830 = vcmask 257026
    %vm7831 = vmor %vm7830, %vm304
    %7832 = vst.msk [vmem:[#allocation11] sm:$0xf] %vm7831, %v7828
    %v7833 = vld [vmem:[#allocation10 + $0x970] ss:$0 sm:$0xff]
    %v7834 = vmul.f32 %v7281, %v7833
    %v7835 = vmul.f32 %v7282, %v7833
    %v7836 = vld [vmem:[#allocation10 + $0x960] ss:$0 sm:$0xff]
    %v7837 = vadd.f32 %v7834, %v7836
    %v7838 = vadd.f32 %v7835, %v7836
    %v7839 = vld [vmem:[#allocation10 + $0x8d0] sm:$0xf]
    %v7840 = vpack.c.bf16 %v7839, %v7839
    %v7842 = vsel %vm304, %v7840, 0
    %7844 = vmatprep.subr.bf16.mxu0 0
    %7845 = vmatpush1.bf16.msra.mxu0 %v7842
    %7846 = vmatprep.subr.bf16.mxu0 0
    %7847 = vmatpush1.bf16.msra.mxu0 0
    %7848 = vmatprep.subr.bf16.mxu0 0
    %7849 = vmatpush1.bf16.msra.mxu0 0
    %7850 = vmatprep.subr.bf16.mxu0 0
    %7851 = vmatpush1.bf16.msra.mxu0 0
    %7852 = vmatprep.subr.bf16.mxu0 0
    %7853 = vmatpush1.bf16.msra.mxu0 0
    %7854 = vmatprep.subr.bf16.mxu0 0
    %7855 = vmatpush1.bf16.msra.mxu0 0
    %7856 = vmatprep.subr.bf16.mxu0 0
    %7857 = vmatpush1.bf16.msra.mxu0 0
    %7858 = vmatprep.subr.bf16.mxu0 0
    %7859 = vmatpush1.bf16.msra.mxu0 0
    %7860 = vmatprep.subr.bf16.mxu0 0
    %7861 = vmatpush1.bf16.msra.mxu0 0
    %7862 = vmatprep.subr.bf16.mxu0 0
    %7863 = vmatpush1.bf16.msra.mxu0 0
    %7864 = vmatprep.subr.bf16.mxu0 0
    %7865 = vmatpush1.bf16.msra.mxu0 0
    %7866 = vmatprep.subr.bf16.mxu0 0
    %7867 = vmatpush1.bf16.msra.mxu0 0
    %7868 = vmatprep.subr.bf16.mxu0 0
    %7869 = vmatpush1.bf16.msra.mxu0 0
    %7870 = vmatprep.subr.bf16.mxu0 0
    %7871 = vmatpush1.bf16.msra.mxu0 0
    %7872 = vmatprep.subr.bf16.mxu0 0
    %7873 = vmatpush1.bf16.msra.mxu0 0
    %7874 = vmatprep.subr.bf16.mxu0 0
    %7875 = vmatpush1.bf16.msra.mxu0 0
    %7876 = vmatprep.mubr.bf16.mxu0 0
    %7877 = vmatmul.mubr.bf16.gmra.mrb[0].mxu0 %v7333
    %v7878 = vpop.f32.mrb[0].mxu0
    %v7879 = vadd.f32 0.0, %v7878
    %v7880 = vpop.f32.mrb[0].mxu0
    %v7881 = vpop.f32.mrb[0].mxu0
    %v7882 = vadd.f32 0.0, %v7881
    %v7883 = vpop.f32.mrb[0].mxu0
    %7884 = vmatprep.mubr.bf16.mxu0 0
    %7885 = vmatmul.mubr.bf16.gmra.mrb[0].mxu0 %v7336
    %v7886 = vpop.f32.mrb[0].mxu0
    %v7887 = vadd.f32 0.0, %v7886
    %v7888 = vpop.f32.mrb[0].mxu0
    %v7889 = vpop.f32.mrb[0].mxu0
    %v7890 = vadd.f32 0.0, %v7889
    %v7891 = vpop.f32.mrb[0].mxu0
    %7892 = vmatprep.mubr.bf16.mxu0 0
    %7893 = vmatmul.mubr.bf16.gmra.mrb[0].mxu0 %v7339
    %v7894 = vpop.f32.mrb[0].mxu0
    %v7895 = vadd.f32 0.0, %v7894
    %v7896 = vpop.f32.mrb[0].mxu0
    %v7897 = vpop.f32.mrb[0].mxu0
    %v7898 = vadd.f32 0.0, %v7897
    %v7899 = vpop.f32.mrb[0].mxu0
    %7900 = vdwg.mxu0
    %v7901 = vmul.f32 %v7879, %v7879
    %v7902 = vmul.f32 %v7882, %v7882
    %v7903 = vmul.f32 %v7887, %v7887
    %v7904 = vmul.f32 %v7890, %v7890
    %v7905 = vadd.f32 %v7901, %v7903
    %v7906 = vadd.f32 %v7902, %v7904
    %v7907 = vmul.f32 %v7895, %v7895
    %v7908 = vmul.f32 %v7898, %v7898
    %v7909 = vadd.f32 %v7905, %v7907
    %v7910 = vadd.f32 %v7906, %v7908
    %v7911 = vmax.f32 %v7909, 1e-08
    %v7912 = vmax.f32 %v7910, 1e-08
    %v7913 = vrsqrt.pop %v7911
    %v7914 = vmul.f32 %v7911, %v7913
    %vm7915 = vcmp.eq.f32.partialorder %v7911, inf
    %v7916 = vsel %vm7915, %v7911, %v7914
    %vm7917 = vcmp.eq.f32.partialorder %v7911, 0.0
    %v7918 = vand.u32 %v7911, 2147483648
    %v7919 = vsel %vm7917, %v7918, %v7916
    %v7920 = vrsqrt.pop %v7912
    %v7921 = vmul.f32 %v7912, %v7920
    %vm7922 = vcmp.eq.f32.partialorder %v7912, inf
    %v7923 = vsel %vm7922, %v7912, %v7921
    %vm7924 = vcmp.eq.f32.partialorder %v7912, 0.0
    %v7925 = vand.u32 %v7912, 2147483648
    %v7926 = vsel %vm7924, %v7925, %v7923
    %v7927 = vld [vmem:[#allocation10 + $0x8e0] ss:$0 sm:$0xff]
    %v7928 = vld [vmem:[#allocation10 + $0x8f0] sm:$0xf]
    %v7929 = vpack.c.bf16 %v7926, %v7919
    %v7930 = vpack.c.bf16 %v7928, %v7928
    %v7932 = vsel %vm397, %v7929, 0
    %v7935 = vsel %vm304, %v7930, 0
    %7937 = vmatprep.subr.bf16.mxu0 0
    %7938 = vmatpush1.bf16.msra.mxu0 %v7935
    %7939 = vmatprep.subr.bf16.mxu0 0
    %7940 = vmatpush1.bf16.msra.mxu0 0
    %7941 = vmatprep.subr.bf16.mxu0 0
    %7942 = vmatpush1.bf16.msra.mxu0 0
    %7943 = vmatprep.subr.bf16.mxu0 0
    %7944 = vmatpush1.bf16.msra.mxu0 0
    %7945 = vmatprep.subr.bf16.mxu0 0
    %7946 = vmatpush1.bf16.msra.mxu0 0
    %7947 = vmatprep.subr.bf16.mxu0 0
    %7948 = vmatpush1.bf16.msra.mxu0 0
    %7949 = vmatprep.subr.bf16.mxu0 0
    %7950 = vmatpush1.bf16.msra.mxu0 0
    %7951 = vmatprep.subr.bf16.mxu0 0
    %7952 = vmatpush1.bf16.msra.mxu0 0
    %7953 = vmatprep.subr.bf16.mxu0 0
    %7954 = vmatpush1.bf16.msra.mxu0 0
    %7955 = vmatprep.subr.bf16.mxu0 0
    %7956 = vmatpush1.bf16.msra.mxu0 0
    %7957 = vmatprep.subr.bf16.mxu0 0
    %7958 = vmatpush1.bf16.msra.mxu0 0
    %7959 = vmatprep.subr.bf16.mxu0 0
    %7960 = vmatpush1.bf16.msra.mxu0 0
    %7961 = vmatprep.subr.bf16.mxu0 0
    %7962 = vmatpush1.bf16.msra.mxu0 0
    %7963 = vmatprep.subr.bf16.mxu0 0
    %7964 = vmatpush1.bf16.msra.mxu0 0
    %7965 = vmatprep.subr.bf16.mxu0 0
    %7966 = vmatpush1.bf16.msra.mxu0 0
    %7967 = vmatprep.subr.bf16.mxu0 0
    %7968 = vmatpush1.bf16.msra.mxu0 0
    %7969 = vmatprep.mubr.bf16.mxu0 0
    %7970 = vmatmul.mubr.bf16.gmra.mrb[0].mxu0 %v7932
    %v7971 = vpop.f32.mrb[0].mxu0
    %v7972 = vadd.f32 0.0, %v7971
    %v7973 = vpop.f32.mrb[0].mxu0
    %v7974 = vpop.f32.mrb[0].mxu0
    %v7975 = vadd.f32 0.0, %v7974
    %v7976 = vpop.f32.mrb[0].mxu0
    %7977 = vdwg.mxu0
    %v7978 = vadd.f32 %v7927, %v7972
    %v7979 = vadd.f32 %v7927, %v7975
    %v7980 = vld [vmem:[#allocation10 + $0x900] sm:$0xff]
    %v7981 = vld [vmem:[#allocation10 + $0x910] sm:$0xff]
    %v7982 = vpack.c.bf16 %v7838, %v7837
    %v7983 = vpack.c.bf16 %v7981, %v7980
    %v7985 = vsel %vm1093, %v7982, 0
    %7987 = vmatprep.subr.bf16.mxu0 0
    %7988 = vmatpush1.bf16.msra.mxu0 %v7983
    %7989 = vmatprep.subr.bf16.mxu0 0
    %7990 = vmatpush1.bf16.msra.mxu0 0
    %7991 = vmatprep.subr.bf16.mxu0 0
    %7992 = vmatpush1.bf16.msra.mxu0 0
    %7993 = vmatprep.subr.bf16.mxu0 0
    %7994 = vmatpush1.bf16.msra.mxu0 0
    %7995 = vmatprep.subr.bf16.mxu0 0
    %7996 = vmatpush1.bf16.msra.mxu0 0
    %7997 = vmatprep.subr.bf16.mxu0 0
    %7998 = vmatpush1.bf16.msra.mxu0 0
    %7999 = vmatprep.subr.bf16.mxu0 0
    %8000 = vmatpush1.bf16.msra.mxu0 0
    %8001 = vmatprep.subr.bf16.mxu0 0
    %8002 = vmatpush1.bf16.msra.mxu0 0
    %8003 = vmatprep.subr.bf16.mxu0 0
    %8004 = vmatpush1.bf16.msra.mxu0 0
    %8005 = vmatprep.subr.bf16.mxu0 0
    %8006 = vmatpush1.bf16.msra.mxu0 0
    %8007 = vmatprep.subr.bf16.mxu0 0
    %8008 = vmatpush1.bf16.msra.mxu0 0
    %8009 = vmatprep.subr.bf16.mxu0 0
    %8010 = vmatpush1.bf16.msra.mxu0 0
    %8011 = vmatprep.subr.bf16.mxu0 0
    %8012 = vmatpush1.bf16.msra.mxu0 0
    %8013 = vmatprep.subr.bf16.mxu0 0
    %8014 = vmatpush1.bf16.msra.mxu0 0
    %8015 = vmatprep.subr.bf16.mxu0 0
    %8016 = vmatpush1.bf16.msra.mxu0 0
    %8017 = vmatprep.subr.bf16.mxu0 0
    %8018 = vmatpush1.bf16.msra.mxu0 0
    %8019 = vmatprep.mubr.bf16.mxu0 0
    %8020 = vmatmul.mubr.bf16.gmra.mrb[0].mxu0 %v7985
    %v8021 = vpop.f32.mrb[0].mxu0
    %v8022 = vadd.f32 0.0, %v8021
    %v8023 = vpop.f32.mrb[0].mxu0
    %v8024 = vpop.f32.mrb[0].mxu0
    %v8025 = vadd.f32 0.0, %v8024
    %v8026 = vpop.f32.mrb[0].mxu0
    %8027 = vdwg.mxu0
    %v8028 = vadd.f32 %v7978, %v8022
    %v8029 = vadd.f32 %v7979, %v8025
    %v8030 = vpack.c.bf16 %v8029, %v8028
    %8031 = vmatprep.subr.bf16.mxu0 0
    %8032 = vmatpush1.bf16.msra.mxu0 %v8030
    %8033 = vmatprep.subr.bf16.mxu0 0
    %8034 = vmatpush1.bf16.msra.mxu0 0
    %8035 = vmatprep.subr.bf16.mxu0 0
    %8036 = vmatpush1.bf16.msra.mxu0 0
    %8037 = vmatprep.subr.bf16.mxu0 0
    %8038 = vmatpush1.bf16.msra.mxu0 0
    %8039 = vmatprep.subr.bf16.mxu0 0
    %8040 = vmatpush1.bf16.msra.mxu0 0
    %8041 = vmatprep.subr.bf16.mxu0 0
    %8042 = vmatpush1.bf16.msra.mxu0 0
    %8043 = vmatprep.subr.bf16.mxu0 0
    %8044 = vmatpush1.bf16.msra.mxu0 0
    %8045 = vmatprep.subr.bf16.mxu0 0
    %8046 = vmatpush1.bf16.msra.mxu0 0
    %8047 = vmatprep.subr.bf16.mxu0 0
    %8048 = vmatpush1.bf16.msra.mxu0 0
    %8049 = vmatprep.subr.bf16.mxu0 0
    %8050 = vmatpush1.bf16.msra.mxu0 0
    %8051 = vmatprep.subr.bf16.mxu0 0
    %8052 = vmatpush1.bf16.msra.mxu0 0
    %8053 = vmatprep.subr.bf16.mxu0 0
    %8054 = vmatpush1.bf16.msra.mxu0 0
    %8055 = vmatprep.subr.bf16.mxu0 0
    %8056 = vmatpush1.bf16.msra.mxu0 0
    %8057 = vmatprep.subr.bf16.mxu0 0
    %8058 = vmatpush1.bf16.msra.mxu0 0
    %8059 = vmatprep.subr.bf16.mxu0 0
    %8060 = vmatpush1.bf16.msra.mxu0 0
    %8061 = vmatprep.subr.bf16.mxu0 0
    %8062 = vmatpush1.bf16.msra.mxu0 0
    %8063 = vmatprep.mubr.bf16.mxu0 0
    %8064 = vmatmul.mubr.bf16.gmra.mrb[0].mxu0 %v7586
    %v8065 = vpop.f32.mrb[0].mxu0
    %v8066 = vadd.f32 0.0, %v8065
    %v8067 = vpop.f32.mrb[0].mxu0
    %v8068 = vpop.f32.mrb[0].mxu0
    %v8069 = vpop.f32.mrb[0].mxu0
    %8070 = vdwg.mxu0
    %v8071 = vld [vmem:[#allocation10 + $0x930] sm:$0xf]
    %v8072 = vpack.c.bf16 %v8066, %v8066
    %v8073 = vpack.c.bf16 %v8071, %v8071
    %v8074 = vld [vmem:[#allocation10 + $0x920] ss:$0 sm:$0xff]
    %v8076 = vsel %vm397, %v8072, 0
    %v8079 = vsel %vm304, %v8073, 0
    %8081 = vmatprep.subr.bf16.mxu0 0
    %8082 = vmatpush1.bf16.msra.mxu0 %v8079
    %8083 = vmatprep.subr.bf16.mxu0 0
    %8084 = vmatpush1.bf16.msra.mxu0 0
    %8085 = vmatprep.subr.bf16.mxu0 0
    %8086 = vmatpush1.bf16.msra.mxu0 0
    %8087 = vmatprep.subr.bf16.mxu0 0
    %8088 = vmatpush1.bf16.msra.mxu0 0
    %8089 = vmatprep.subr.bf16.mxu0 0
    %8090 = vmatpush1.bf16.msra.mxu0 0
    %8091 = vmatprep.subr.bf16.mxu0 0
    %8092 = vmatpush1.bf16.msra.mxu0 0
    %8093 = vmatprep.subr.bf16.mxu0 0
    %8094 = vmatpush1.bf16.msra.mxu0 0
    %8095 = vmatprep.subr.bf16.mxu0 0
    %8096 = vmatpush1.bf16.msra.mxu0 0
    %8097 = vmatprep.subr.bf16.mxu0 0
    %8098 = vmatpush1.bf16.msra.mxu0 0
    %8099 = vmatprep.subr.bf16.mxu0 0
    %8100 = vmatpush1.bf16.msra.mxu0 0
    %8101 = vmatprep.subr.bf16.mxu0 0
    %8102 = vmatpush1.bf16.msra.mxu0 0
    %8103 = vmatprep.subr.bf16.mxu0 0
    %8104 = vmatpush1.bf16.msra.mxu0 0
    %8105 = vmatprep.subr.bf16.mxu0 0
    %8106 = vmatpush1.bf16.msra.mxu0 0
    %8107 = vmatprep.subr.bf16.mxu0 0
    %8108 = vmatpush1.bf16.msra.mxu0 0
    %8109 = vmatprep.subr.bf16.mxu0 0
    %8110 = vmatpush1.bf16.msra.mxu0 0
    %8111 = vmatprep.subr.bf16.mxu0 0
    %8112 = vmatpush1.bf16.msra.mxu0 0
    %8113 = vmatprep.mubr.bf16.mxu0 0
    %8114 = vmatmul.mubr.bf16.gmra.mrb[0].mxu0 %v8076
    %v8115 = vpop.f32.mrb[0].mxu0
    %v8116 = vadd.f32 %v8074, %v8115
    %v8117 = vpop.f32.mrb[0].mxu0
    %v8118 = vpop.f32.mrb[0].mxu0
    %v8119 = vpop.f32.mrb[0].mxu0
    %8120 = vdwg.mxu0
    %vm8121 = vcmp.ge.f32.partialorder %v8116, 0.0
    %v8122 = vmul.f32 %v8116, 0.01
    %v8123 = vsel %vm8121, %v8116, %v8122
    %v8124 = vld [vmem:[#allocation10 + $0x950] sm:$0x3]
    %v8125 = vpack.c.bf16 %v8123, %v8123
    %v8126 = vpack.c.bf16 %v8124, %v8124
    %v8127 = vld [vmem:[#allocation10 + $0x940] ss:$0 sm:$0xff]
    %v8129 = vsel %vm852, %v8125, 0
    %v8132 = vsel %vm303, %v8126, 0
    %8134 = vmatprep.subr.bf16.mxu0 0
    %8135 = vmatpush1.bf16.msra.mxu0 %v8132
    %8136 = vmatprep.subr.bf16.mxu0 0
    %8137 = vmatpush1.bf16.msra.mxu0 0
    %8138 = vmatprep.subr.bf16.mxu0 0
    %8139 = vmatpush1.bf16.msra.mxu0 0
    %8140 = vmatprep.subr.bf16.mxu0 0
    %8141 = vmatpush1.bf16.msra.mxu0 0
    %8142 = vmatprep.subr.bf16.mxu0 0
    %8143 = vmatpush1.bf16.msra.mxu0 0
    %8144 = vmatprep.subr.bf16.mxu0 0
    %8145 = vmatpush1.bf16.msra.mxu0 0
    %8146 = vmatprep.subr.bf16.mxu0 0
    %8147 = vmatpush1.bf16.msra.mxu0 0
    %8148 = vmatprep.subr.bf16.mxu0 0
    %8149 = vmatpush1.bf16.msra.mxu0 0
    %8150 = vmatprep.subr.bf16.mxu0 0
    %8151 = vmatpush1.bf16.msra.mxu0 0
    %8152 = vmatprep.subr.bf16.mxu0 0
    %8153 = vmatpush1.bf16.msra.mxu0 0
    %8154 = vmatprep.subr.bf16.mxu0 0
    %8155 = vmatpush1.bf16.msra.mxu0 0
    %8156 = vmatprep.subr.bf16.mxu0 0
    %8157 = vmatpush1.bf16.msra.mxu0 0
    %8158 = vmatprep.subr.bf16.mxu0 0
    %8159 = vmatpush1.bf16.msra.mxu0 0
    %8160 = vmatprep.subr.bf16.mxu0 0
    %8161 = vmatpush1.bf16.msra.mxu0 0
    %8162 = vmatprep.subr.bf16.mxu0 0
    %8163 = vmatpush1.bf16.msra.mxu0 0
    %8164 = vmatprep.subr.bf16.mxu0 0
    %8165 = vmatpush1.bf16.msra.mxu0 0
    %8166 = vmatprep.mubr.bf16.mxu0 0
    %8167 = vmatmul.mubr.bf16.gmra.mrb[0].mxu0 %v8129
    %v8168 = vpop.f32.mrb[0].mxu0
    %v8169 = vadd.f32 %v8127, %v8168
    %v8170 = vpop.f32.mrb[0].mxu0
    %v8171 = vpop.f32.mrb[0].mxu0
    %v8172 = vpop.f32.mrb[0].mxu0
    %8173 = vdwg.mxu0
    %vm8174 = vcmask 82944
    %8175 = vst.msk [vmem:[#allocation12] sm:$0x3] %vm8174, %v8169
    // Predicated region
    $region66: #{tpu_custom_call.1} parent=1 // pred_check
      _
    $region67: #{tpu_custom_call.1} parent=1 // pred_check_branch
      %8177 = sbr.rel (0) target = $region69
    $region68: #{tpu_custom_call.1} parent=1 // pred_region
      %s8179 = ssub.s32 64, 64
      %8180 = vsyncadd [#allocation4], %s8179
      %s8182 = sshll.u32 [#allocation11], 4
      %s8183 = int_to_ptr.vmem [resolvable:$true] %s8182
      %8185 = dma.vmem_to_hbm [thread:$0]  %s8183, 64, %s11, [#allocation4]
    $region69: #{tpu_custom_call.1} parent=1 // pred_fallthru
      _
    // Predicated region
    $region70: #{tpu_custom_call.1} parent=1 // pred_check
      _
    $region71: #{tpu_custom_call.1} parent=1 // pred_check_branch
      %8187 = sbr.rel (0) target = $region73
    $region72: #{tpu_custom_call.1} parent=1 // pred_region
      %s8189 = ssub.s32 32, 32
      %8190 = vsyncadd [#allocation13], %s8189
      %s8192 = sshll.u32 [#allocation12], 4
      %s8193 = int_to_ptr.vmem [resolvable:$true] %s8192
      %8195 = dma.vmem_to_hbm [thread:$0]  %s8193, 32, %s12, [#allocation13]
    $region73: #{tpu_custom_call.1} parent=1 // pred_fallthru
      _
    // Predicated region
    $region74: #{tpu_custom_call.1} parent=1 // pred_check
      _
    $region75: #{tpu_custom_call.1} parent=1 // pred_check_branch
      %8197 = sbr.rel (0) target = $region77
    $region76: #{tpu_custom_call.1} parent=1 // pred_region
      %8198 = dma.done [#allocation4], 64
    $region77: #{tpu_custom_call.1} parent=1 // pred_fallthru
      _
    // Predicated region
    $region78: #{tpu_custom_call.1} parent=1 // pred_check
      _
    $region79: #{tpu_custom_call.1} parent=1 // pred_check_branch
      %8200 = sbr.rel (0) target = $region81
    $region80: #{tpu_custom_call.1} parent=1 // pred_region
      %8201 = dma.done [#allocation13], 32
    $region81: #{tpu_custom_call.1} parent=1 // pred_fallthru
      _
    %8202 = vsyncpa [#allocation3], 1
    %8203 = vsyncpa [#allocation6], 1
    %8204 = vsyncpa [#allocation9], 1
    %8205 = vsyncpa [#allocation4], 1
    %8206 = vsyncpa [#allocation13], 1

</llo_original>
